<compile_context>
chip_gen: v7x
topology: tpu7x:2x2x1
jax: 0.10.0
libtpu: 0.0.40
codegen_flags: <defaults>
</compile_context>

<pallas_src>
import jax
import jax.numpy as jnp
from jax import lax
from jax.experimental import pallas as pl
from jax.experimental.pallas import tpu as pltpu

# ------------------------- configuration (small synthetic shapes) -------------------------
VOCAB = 16          # len(labels.labels_map)    -- synthetic
SOS = 1             # labels.labels_map['<sos>'] -- synthetic
EOS = 2             # labels.labels_map['<eos>'] -- synthetic

NOTE_EMB = 16       # note_emb_size
HIDDEN = 32         # hidden_size
H2 = 2 * HIDDEN     # GRU hidden size / encoder feature size
MAX_STEPS = 8       # max_steps

B = 2               # batch
ENC_LEN = 8         # encoder sequence length

VMEM = pl.BlockSpec(memory_space=pltpu.MemorySpace.VMEM)


# --------------------------------- fused decoder kernel -----------------------------------
def _note_decoder_kernel(enc_ref, h0_ref, emb_ref,
                         w_h_ref, w_e_ref, ab_ref, v_ref,
                         w_ih_tok_ref, w_ih_ctx_ref, w_hh_ref,
                         out_w_h_ref, out_w_c_ref, out_b_ref,
                         probs_ref, lens_ref):
    """Whole NoteDecoder.decode_notes loop (inference) in one VMEM-resident kernel.

    probs_ref: (max_steps, B, vocab)  -- step-major so each step stores probs_ref[t]=(B,vocab)
    lens_ref : (B, 1) int32
    """
    enc = enc_ref[...]                       # (B, L, 2H)
    emb = emb_ref[...]                       # (V, E)
    w_h = w_h_ref[...]                       # (2H, H)  attn Linear block acting on hidden
    w_e = w_e_ref[...]                       # (2H, H)  attn Linear block acting on encoder
    attn_b = ab_ref[...]                     # (1, H)
    v = v_ref[...]                           # (1, H)
    w_ih_tok = w_ih_tok_ref[...]             # (E,  3*2H)  gate-fused [r|z|n]
    w_ih_ctx = w_ih_ctx_ref[...]             # (2H, 3*2H)
    w_hh = w_hh_ref[...]                     # (2H, 3*2H)
    out_w_h = out_w_h_ref[...]               # (2H, V)
    out_w_c = out_w_c_ref[...]               # (2H, V)
    out_b = out_b_ref[...]                   # (1, V)

    bsz, seq_len, d2h = enc.shape
    vocab, e_dim = emb.shape
    hdim = w_h.shape[1]
    hg = d2h                                 # per-gate width == 2H

    # Encoder-side attention projection is hidden-independent -> hoist out of the loop.
    enc2 = enc.reshape(bsz * seq_len, d2h)
    eproj = (jnp.dot(enc2, w_e, preferred_element_type=jnp.float32) + attn_b
             ).reshape(bsz, seq_len, hdim)   # (B, L, H)
    v_b = v[None, :, :]                      # (1, 1, H)

    vocab_iota = lax.broadcasted_iota(jnp.int32, (bsz, vocab), 1)

    # <sos> token embedding (F.dropout(p=0.1) is identity in eval/inference mode).
    token0 = jnp.broadcast_to(emb_ref[pl.ds(SOS, 1), :], (bsz, e_dim))
    h0 = h0_ref[...]                         # (B, 2H)
    eos0 = jnp.zeros((bsz, 1), jnp.float32)
    lens0 = jnp.full((bsz, 1), MAX_STEPS, jnp.int32)

    def step(t, carry):
        token, h, eos_f, lens = carry
        # PyTorch: "if EOS_labels.sum() == batch_size: break"  (checked at loop top)
        done = jnp.sum(eos_f, axis=0, keepdims=True) >= bsz              # (1, 1) bool

        # ---- AttentionLayer + bmm context (fully batched, L on the lane axis) ----
        hproj = jnp.dot(h, w_h, preferred_element_type=jnp.float32)      # (B, H)
        energy = jnp.tanh(eproj + hproj[:, None, :])                     # (B, L, H)
        att = jnp.sum(energy * v_b, axis=-1)                             # (B, L)
        att = jnp.exp(att - jnp.max(att, axis=-1, keepdims=True))
        attw = att / jnp.sum(att, axis=-1, keepdims=True)                # softmax over L
        ctx = jnp.sum(attw[:, :, None] * enc, axis=1)                    # (B, 2H)

        # ---- GRU cell (PyTorch gate order r, z, n; biases zero per init_gru) ----
        gi = (jnp.dot(token, w_ih_tok, preferred_element_type=jnp.float32)
              + jnp.dot(ctx, w_ih_ctx, preferred_element_type=jnp.float32))  # (B, 3*2H)
        gh = jnp.dot(h, w_hh, preferred_element_type=jnp.float32)            # (B, 3*2H)
        r = jax.nn.sigmoid(gi[:, :hg] + gh[:, :hg])
        z = jax.nn.sigmoid(gi[:, hg:2 * hg] + gh[:, hg:2 * hg])
        n = jnp.tanh(gi[:, 2 * hg:] + r * gh[:, 2 * hg:])
        h_new = (1.0 - z) * n + z * h                                    # (B, 2H)

        # ---- out Linear(cat([output, context])) + log_softmax ----
        logits = (jnp.dot(h_new, out_w_h, preferred_element_type=jnp.float32)
                  + jnp.dot(ctx, out_w_c, preferred_element_type=jnp.float32)
                  + out_b)                                               # (B, V)
        s = logits - jnp.max(logits, axis=-1, keepdims=True)
        prob = s - jnp.log(jnp.sum(jnp.exp(s), axis=-1, keepdims=True))

        # score_probs rows stay exactly zero once the PyTorch loop would have broken.
        probs_ref[t] = jnp.where(done, 0.0, prob)

        # ---- greedy argmax (first max index), EOS / length bookkeeping, feedback ----
        max_v = jnp.max(prob, axis=-1, keepdims=True)
        next_id = jnp.min(jnp.where(prob == max_v, vocab_iota, vocab),
                          axis=-1, keepdims=True)                        # (B, 1) int32
        hit = next_id == EOS                                             # (B, 1) bool
        onehot = (vocab_iota == next_id).astype(jnp.float32)             # (B, V)
        token_new = jnp.dot(onehot, emb, preferred_element_type=jnp.float32)  # (B, E)

        # Matches the reference exactly: lengths are (re)written whenever argmax == EOS
        # while the loop is still running (the PyTorch code has no per-sample guard).
        upd = jnp.logical_and(hit, jnp.logical_not(done))
        lens = jnp.where(upd, t + 1, lens)
        eos_f = jnp.where(done, eos_f, jnp.maximum(eos_f, hit.astype(jnp.float32)))
        token = jnp.where(done, token, token_new)
        h = jnp.where(done, h, h_new)
        return token, h, eos_f, lens

    carry = (token0, h0, eos0, lens0)
    carry = lax.fori_loop(0, MAX_STEPS, step, carry, unroll=True)
    lens_ref[...] = carry[3]


# --------------------------------------- wrapper ------------------------------------------
def note_decoder_forward(params, encoder_outputs, hidden):
    """NoteDecoder.forward in inference mode -> (score_probs, lengths)."""
    bsz = encoder_outputs.shape[0]
    h0 = hidden[0]                                               # (1, B, 2H) -> (B, 2H)
    probs_tbv, lens = pl.pallas_call(
        _note_decoder_kernel,
        out_shape=(jax.ShapeDtypeStruct((MAX_STEPS, bsz, VOCAB), jnp.float32),
                   jax.ShapeDtypeStruct((bsz, 1), jnp.int32)),
        in_specs=[VMEM] * 13,
        out_specs=(VMEM, VMEM),
    )(encoder_outputs, h0, params['emb'],
      params['attn_w_h'], params['attn_w_e'], params['attn_b'], params['attn_v'],
      params['w_ih_tok'], params['w_ih_ctx'], params['w_hh'],
      params['out_w_h'], params['out_w_c'], params['out_b'])
    # (max_steps, B, V) -> (B, max_steps, V), matching PyTorch score_probs layout.
    return jnp.transpose(probs_tbv, (1, 0, 2)), lens[:, 0]


# -------------------------------- parameter initialisation --------------------------------
def init_params(key):
    ks = jax.random.split(key, 9)

    def rnd(k, shape, scale=0.1):
        return (scale * jax.random.normal(k, shape)).astype(jnp.float32)

    return {
        # nn.Embedding(vocab_size, note_emb_size)
        'emb': rnd(ks[0], (VOCAB, NOTE_EMB), 0.3),
        # AttentionLayer: attn = Linear(4H, H) on cat([hidden_rep, encoder]); split into the
        # column blocks acting on the hidden state (w_h) and the encoder outputs (w_e) of the
        # SAME single Linear; bias = 0 (init_layer).  v = Linear(H, 1, bias=False).
        'attn_w_h': rnd(ks[1], (H2, HIDDEN)),
        'attn_w_e': rnd(ks[2], (H2, HIDDEN)),
        'attn_b': jnp.zeros((1, HIDDEN), jnp.float32),
        'attn_v': rnd(ks[3], (1, HIDDEN)),
        # nn.GRU(note_emb + 2H, 2H): gate-fused transposed weights, columns ordered [r|z|n];
        # W_ih split into token / context row blocks (== Linear on cat); biases 0 (init_gru).
        'w_ih_tok': rnd(ks[4], (NOTE_EMB, 3 * H2)),
        'w_ih_ctx': rnd(ks[5], (H2, 3 * H2)),
        'w_hh': rnd(ks[6], (H2, 3 * H2)),
        # out = Linear(4H, vocab) split into [output | context] row blocks; bias = 0.
        'out_w_h': rnd(ks[7], (H2, VOCAB)),
        'out_w_c': rnd(ks[8], (H2, VOCAB)),
        'out_b': jnp.zeros((1, VOCAB), jnp.float32),
    }


# ----------------------- pure-JAX reference for a single decode step ----------------------
def _first_step_ref(p, enc, hidden):
    """Log-probs of decode step t=0 (no autoregressive feedback involved)."""
    h = hidden[0]
    bsz = enc.shape[0]
    token = jnp.broadcast_to(p['emb'][SOS], (bsz, NOTE_EMB))
    hproj = token @ jnp.zeros((NOTE_EMB, HIDDEN)) if False else h @ p['attn_w_h']
    eproj = jnp.einsum('bld,dh->blh', enc, p['attn_w_e']) + p['attn_b'][None]
    energy = jnp.tanh(eproj + hproj[:, None, :])
    att = jnp.sum(energy * p['attn_v'][None], axis=-1)
    attw = jax.nn.softmax(att, axis=-1)
    ctx = jnp.einsum('bl,bld->bd', attw, enc)
    gi = token @ p['w_ih_tok'] + ctx @ p['w_ih_ctx']
    gh = h @ p['w_hh']
    r = jax.nn.sigmoid(gi[:, :H2] + gh[:, :H2])
    z = jax.nn.sigmoid(gi[:, H2:2 * H2] + gh[:, H2:2 * H2])
    n = jnp.tanh(gi[:, 2 * H2:] + r * gh[:, 2 * H2:])
    h_new = (1.0 - z) * n + z * h
    logits = h_new @ p['out_w_h'] + ctx @ p['out_w_c'] + p['out_b']
    return jax.nn.log_softmax(logits, axis=-1)


# ----------------------------------------- main -------------------------------------------
if __name__ == "__main__":
    key = jax.random.PRNGKey(0)
    kp, ke, kh = jax.random.split(key, 3)
    params = init_params(kp)

    encoder_outputs = 0.5 * jax.random.normal(ke, (B, ENC_LEN, H2), jnp.float32)
    hidden = 0.5 * jax.random.normal(kh, (1, B, H2), jnp.float32)

    fwd = jax.jit(note_decoder_forward)
    score_probs, lengths = fwd(params, encoder_outputs, hidden)
    jax.block_until_ready((score_probs, lengths))

    # shape / dtype / sanity checks
    assert score_probs.shape == (B, MAX_STEPS, VOCAB)
    assert lengths.shape == (B,) and lengths.dtype == jnp.int32
    assert bool(jnp.all(jnp.isfinite(score_probs)))
    assert bool(jnp.all((lengths >= 1) & (lengths <= MAX_STEPS)))

    # first decode step matches a pure-JAX reference (no autoregressive feedback at t=0,
    # so only matmul-precision-level differences are expected)
    ref0 = _first_step_ref(params, encoder_outputs, hidden)
    assert bool(jnp.max(jnp.abs(score_probs[:, 0, :] - ref0)) < 5e-2)

    # t=0 rows are valid log-softmax distributions
    assert bool(jnp.max(jnp.abs(jnp.sum(jnp.exp(score_probs[:, 0, :]), axis=-1) - 1.0)) < 1e-3)

    print("KERNEL_OK")
</pallas_src>

<mosaic_0001>
module attributes {stable_mosaic.version = 11 : i64} {
  func.func @_note_decoder_kernel(%arg0: memref<2x8x64xf32, #tpu.memory_space<vmem>>, %arg1: memref<2x64xf32, #tpu.memory_space<vmem>>, %arg2: memref<16x16xf32, #tpu.memory_space<vmem>>, %arg3: memref<64x32xf32, #tpu.memory_space<vmem>>, %arg4: memref<64x32xf32, #tpu.memory_space<vmem>>, %arg5: memref<1x32xf32, #tpu.memory_space<vmem>>, %arg6: memref<1x32xf32, #tpu.memory_space<vmem>>, %arg7: memref<16x192xf32, #tpu.memory_space<vmem>>, %arg8: memref<64x192xf32, #tpu.memory_space<vmem>>, %arg9: memref<64x192xf32, #tpu.memory_space<vmem>>, %arg10: memref<64x16xf32, #tpu.memory_space<vmem>>, %arg11: memref<64x16xf32, #tpu.memory_space<vmem>>, %arg12: memref<1x16xf32, #tpu.memory_space<vmem>>, %arg13: memref<8x2x16xf32, #tpu.memory_space<vmem>>, %arg14: memref<2x1xi32, #tpu.memory_space<vmem>>) attributes {dimension_semantics = [], scalar_prefetch = 0 : i64, scratch_operands = 0 : i64, tpu.core_type = #tpu.core_type<tc>} {
    %c0 = arith.constant 0 : index
    %c0_0 = arith.constant 0 : index
    %c0_1 = arith.constant 0 : index
    %0 = vector.load %arg0[%c0, %c0_0, %c0_1] : memref<2x8x64xf32, #tpu.memory_space<vmem>>, vector<2x8x64xf32>
    %c0_2 = arith.constant 0 : index
    %c0_3 = arith.constant 0 : index
    %1 = vector.load %arg2[%c0_2, %c0_3] : memref<16x16xf32, #tpu.memory_space<vmem>>, vector<16x16xf32>
    %c0_4 = arith.constant 0 : index
    %c0_5 = arith.constant 0 : index
    %2 = vector.load %arg3[%c0_4, %c0_5] : memref<64x32xf32, #tpu.memory_space<vmem>>, vector<64x32xf32>
    %c0_6 = arith.constant 0 : index
    %c0_7 = arith.constant 0 : index
    %3 = vector.load %arg4[%c0_6, %c0_7] : memref<64x32xf32, #tpu.memory_space<vmem>>, vector<64x32xf32>
    %c0_8 = arith.constant 0 : index
    %c0_9 = arith.constant 0 : index
    %4 = vector.load %arg5[%c0_8, %c0_9] : memref<1x32xf32, #tpu.memory_space<vmem>>, vector<1x32xf32>
    %c0_10 = arith.constant 0 : index
    %c0_11 = arith.constant 0 : index
    %5 = vector.load %arg6[%c0_10, %c0_11] : memref<1x32xf32, #tpu.memory_space<vmem>>, vector<1x32xf32>
    %c0_12 = arith.constant 0 : index
    %c0_13 = arith.constant 0 : index
    %6 = vector.load %arg7[%c0_12, %c0_13] : memref<16x192xf32, #tpu.memory_space<vmem>>, vector<16x192xf32>
    %c0_14 = arith.constant 0 : index
    %c0_15 = arith.constant 0 : index
    %7 = vector.load %arg8[%c0_14, %c0_15] : memref<64x192xf32, #tpu.memory_space<vmem>>, vector<64x192xf32>
    %c0_16 = arith.constant 0 : index
    %c0_17 = arith.constant 0 : index
    %8 = vector.load %arg9[%c0_16, %c0_17] : memref<64x192xf32, #tpu.memory_space<vmem>>, vector<64x192xf32>
    %c0_18 = arith.constant 0 : index
    %c0_19 = arith.constant 0 : index
    %9 = vector.load %arg10[%c0_18, %c0_19] : memref<64x16xf32, #tpu.memory_space<vmem>>, vector<64x16xf32>
    %c0_20 = arith.constant 0 : index
    %c0_21 = arith.constant 0 : index
    %10 = vector.load %arg11[%c0_20, %c0_21] : memref<64x16xf32, #tpu.memory_space<vmem>>, vector<64x16xf32>
    %c0_22 = arith.constant 0 : index
    %c0_23 = arith.constant 0 : index
    %11 = vector.load %arg12[%c0_22, %c0_23] : memref<1x16xf32, #tpu.memory_space<vmem>>, vector<1x16xf32>
    %12 = vector.shape_cast %0 : vector<2x8x64xf32> to vector<16x64xf32>
    %cst = arith.constant dense<0.000000e+00> : vector<16x32xf32>
    %13 = tpu.matmul %12, %3, %cst {dimension_numbers = #tpu.dot_dimension_numbers<[1], [0], [0], [1], [0, 0, 1, 1], [], []>} : vector<16x64xf32>, vector<64x32xf32>, vector<16x32xf32> -> vector<16x32xf32>
    %14 = vector.broadcast %4 : vector<1x32xf32> to vector<16x32xf32>
    %15 = arith.addf %13, %14 : vector<16x32xf32>
    %16 = vector.shape_cast %15 : vector<16x32xf32> to vector<2x8x32xf32>
    %17 = vector.shape_cast %5 : vector<1x32xf32> to vector<1x1x32xf32>
    %18 = tpu.iota {dimensions = array<i32: 1>} : vector<2x16xi32>
    %c1 = arith.constant 1 : index
    %c0_24 = arith.constant 0 : index
    %19 = vector.load %arg2[%c1, %c0_24] : memref<16x16xf32, #tpu.memory_space<vmem>>, vector<1x16xf32>
    %20 = vector.shape_cast %19 : vector<1x16xf32> to vector<1x16xf32>
    %21 = vector.broadcast %20 : vector<1x16xf32> to vector<2x16xf32>
    %c0_25 = arith.constant 0 : index
    %c0_26 = arith.constant 0 : index
    %22 = vector.load %arg1[%c0_25, %c0_26] : memref<2x64xf32, #tpu.memory_space<vmem>>, vector<2x64xf32>
    %cst_27 = arith.constant 0.000000e+00 : f32
    %23 = vector.broadcast %cst_27 : f32 to vector<2x1xf32>
    %c8_i32 = arith.constant 8 : i32
    %24 = vector.broadcast %c8_i32 : i32 to vector<2x1xi32>
    %c0_i32 = arith.constant 0 : i32
    %cst_28 = arith.constant dense<0.000000e+00> : vector<1xf32>
    %25 = vector.multi_reduction <add>, %23, %cst_28 [0] : vector<2x1xf32> to vector<1xf32>
    %26 = vector.shape_cast %25 : vector<1xf32> to vector<1x1xf32>
    %cst_29 = arith.constant 2.000000e+00 : f32
    %27 = vector.broadcast %cst_29 : f32 to vector<1x1xf32>
    %28 = arith.cmpf oge, %26, %27 : vector<1x1xf32>
    %cst_30 = arith.constant dense<0.000000e+00> : vector<2x32xf32>
    %29 = tpu.matmul %22, %2, %cst_30 {dimension_numbers = #tpu.dot_dimension_numbers<[1], [0], [0], [1], [0, 0, 1, 1], [], []>} : vector<2x64xf32>, vector<64x32xf32>, vector<2x32xf32> -> vector<2x32xf32>
    %30 = vector.shape_cast %29 : vector<2x32xf32> to vector<2x1x32xf32>
    %31 = vector.broadcast %30 : vector<2x1x32xf32> to vector<2x8x32xf32>
    %32 = arith.addf %16, %31 : vector<2x8x32xf32>
    %33 = math.tanh %32 : vector<2x8x32xf32>
    %34 = vector.broadcast %17 : vector<1x1x32xf32> to vector<2x8x32xf32>
    %35 = arith.mulf %33, %34 : vector<2x8x32xf32>
    %cst_31 = arith.constant dense<0.000000e+00> : vector<2x8xf32>
    %36 = vector.multi_reduction <add>, %35, %cst_31 [2] : vector<2x8x32xf32> to vector<2x8xf32>
    %cst_32 = arith.constant dense<0xFF800000> : vector<2xf32>
    %37 = vector.multi_reduction <maximumf>, %36, %cst_32 [1] : vector<2x8xf32> to vector<2xf32>
    %38 = vector.shape_cast %37 : vector<2xf32> to vector<2x1xf32>
    %39 = vector.broadcast %38 : vector<2x1xf32> to vector<2x8xf32>
    %40 = arith.subf %36, %39 : vector<2x8xf32>
    %41 = math.exp %40 : vector<2x8xf32>
    %cst_33 = arith.constant dense<0.000000e+00> : vector<2xf32>
    %42 = vector.multi_reduction <add>, %41, %cst_33 [1] : vector<2x8xf32> to vector<2xf32>
    %43 = vector.shape_cast %42 : vector<2xf32> to vector<2x1xf32>
    %44 = vector.broadcast %43 : vector<2x1xf32> to vector<2x8xf32>
    %45 = arith.divf %41, %44 : vector<2x8xf32>
    %46 = vector.shape_cast %45 : vector<2x8xf32> to vector<2x8x1xf32>
    %47 = vector.broadcast %46 : vector<2x8x1xf32> to vector<2x8x64xf32>
    %48 = arith.mulf %47, %0 : vector<2x8x64xf32>
    %cst_34 = arith.constant dense<0.000000e+00> : vector<2x64xf32>
    %49 = vector.multi_reduction <add>, %48, %cst_34 [1] : vector<2x8x64xf32> to vector<2x64xf32>
    %cst_35 = arith.constant dense<0.000000e+00> : vector<2x192xf32>
    %50 = tpu.matmul %21, %6, %cst_35 {dimension_numbers = #tpu.dot_dimension_numbers<[1], [0], [0], [1], [0, 0, 1, 1], [], []>} : vector<2x16xf32>, vector<16x192xf32>, vector<2x192xf32> -> vector<2x192xf32>
    %cst_36 = arith.constant dense<0.000000e+00> : vector<2x192xf32>
    %51 = tpu.matmul %49, %7, %cst_36 {dimension_numbers = #tpu.dot_dimension_numbers<[1], [0], [0], [1], [0, 0, 1, 1], [], []>} : vector<2x64xf32>, vector<64x192xf32>, vector<2x192xf32> -> vector<2x192xf32>
    %52 = arith.addf %50, %51 : vector<2x192xf32>
    %cst_37 = arith.constant dense<0.000000e+00> : vector<2x192xf32>
    %53 = tpu.matmul %22, %8, %cst_37 {dimension_numbers = #tpu.dot_dimension_numbers<[1], [0], [0], [1], [0, 0, 1, 1], [], []>} : vector<2x64xf32>, vector<64x192xf32>, vector<2x192xf32> -> vector<2x192xf32>
    %54 = vector.extract_strided_slice %52 {offsets = [0, 0], sizes = [2, 64], strides = [1, 1]} : vector<2x192xf32> to vector<2x64xf32>
    %55 = vector.extract_strided_slice %53 {offsets = [0, 0], sizes = [2, 64], strides = [1, 1]} : vector<2x192xf32> to vector<2x64xf32>
    %56 = arith.addf %54, %55 : vector<2x64xf32>
    %57 = arith.negf %56 : vector<2x64xf32>
    %58 = math.exp %57 : vector<2x64xf32>
    %cst_38 = arith.constant 1.000000e+00 : f32
    %59 = vector.broadcast %cst_38 : f32 to vector<2x64xf32>
    %60 = arith.addf %59, %58 : vector<2x64xf32>
    %61 = arith.divf %59, %60 : vector<2x64xf32>
    %62 = vector.extract_strided_slice %52 {offsets = [0, 64], sizes = [2, 64], strides = [1, 1]} : vector<2x192xf32> to vector<2x64xf32>
    %63 = vector.extract_strided_slice %53 {offsets = [0, 64], sizes = [2, 64], strides = [1, 1]} : vector<2x192xf32> to vector<2x64xf32>
    %64 = arith.addf %62, %63 : vector<2x64xf32>
    %65 = arith.negf %64 : vector<2x64xf32>
    %66 = math.exp %65 : vector<2x64xf32>
    %cst_39 = arith.constant 1.000000e+00 : f32
    %67 = vector.broadcast %cst_39 : f32 to vector<2x64xf32>
    %68 = arith.addf %67, %66 : vector<2x64xf32>
    %69 = arith.divf %67, %68 : vector<2x64xf32>
    %70 = vector.extract_strided_slice %52 {offsets = [0, 128], sizes = [2, 64], strides = [1, 1]} : vector<2x192xf32> to vector<2x64xf32>
    %71 = vector.extract_strided_slice %53 {offsets = [0, 128], sizes = [2, 64], strides = [1, 1]} : vector<2x192xf32> to vector<2x64xf32>
    %72 = arith.mulf %61, %71 : vector<2x64xf32>
    %73 = arith.addf %70, %72 : vector<2x64xf32>
    %74 = math.tanh %73 : vector<2x64xf32>
    %cst_40 = arith.constant 1.000000e+00 : f32
    %75 = vector.broadcast %cst_40 : f32 to vector<2x64xf32>
    %76 = arith.subf %75, %69 : vector<2x64xf32>
    %77 = arith.mulf %76, %74 : vector<2x64xf32>
    %78 = arith.mulf %69, %22 : vector<2x64xf32>
    %79 = arith.addf %77, %78 : vector<2x64xf32>
    %cst_41 = arith.constant dense<0.000000e+00> : vector<2x16xf32>
    %80 = tpu.matmul %79, %9, %cst_41 {dimension_numbers = #tpu.dot_dimension_numbers<[1], [0], [0], [1], [0, 0, 1, 1], [], []>} : vector<2x64xf32>, vector<64x16xf32>, vector<2x16xf32> -> vector<2x16xf32>
    %cst_42 = arith.constant dense<0.000000e+00> : vector<2x16xf32>
    %81 = tpu.matmul %49, %10, %cst_42 {dimension_numbers = #tpu.dot_dimension_numbers<[1], [0], [0], [1], [0, 0, 1, 1], [], []>} : vector<2x64xf32>, vector<64x16xf32>, vector<2x16xf32> -> vector<2x16xf32>
    %82 = arith.addf %80, %81 : vector<2x16xf32>
    %83 = vector.broadcast %11 : vector<1x16xf32> to vector<2x16xf32>
    %84 = arith.addf %82, %83 : vector<2x16xf32>
    %cst_43 = arith.constant dense<0xFF800000> : vector<2xf32>
    %85 = vector.multi_reduction <maximumf>, %84, %cst_43 [1] : vector<2x16xf32> to vector<2xf32>
    %86 = vector.shape_cast %85 : vector<2xf32> to vector<2x1xf32>
    %87 = vector.broadcast %86 : vector<2x1xf32> to vector<2x16xf32>
    %88 = arith.subf %84, %87 : vector<2x16xf32>
    %89 = math.exp %88 : vector<2x16xf32>
    %cst_44 = arith.constant dense<0.000000e+00> : vector<2xf32>
    %90 = vector.multi_reduction <add>, %89, %cst_44 [1] : vector<2x16xf32> to vector<2xf32>
    %91 = vector.shape_cast %90 : vector<2xf32> to vector<2x1xf32>
    %92 = math.log %91 : vector<2x1xf32>
    %93 = vector.broadcast %92 : vector<2x1xf32> to vector<2x16xf32>
    %94 = arith.subf %88, %93 : vector<2x16xf32>
    %cst_45 = arith.constant 0.000000e+00 : f32
    %95 = vector.shape_cast %28 : vector<1x1xi1> to vector<1x1xi1>
    %96 = vector.broadcast %95 : vector<1x1xi1> to vector<2x16xi1>
    %97 = vector.broadcast %cst_45 : f32 to vector<2x16xf32>
    %98 = arith.select %96, %97, %94 : vector<2x16xi1>, vector<2x16xf32>
    %99 = arith.index_cast %c0_i32 : i32 to index
    %c0_46 = arith.constant 0 : index
    %c0_47 = arith.constant 0 : index
    %100 = vector.load %arg13[%99, %c0_46, %c0_47] : memref<8x2x16xf32, #tpu.memory_space<vmem>>, vector<1x2x16xf32>
    %101 = vector.shape_cast %100 : vector<1x2x16xf32> to vector<2x16xf32>
    %102 = vector.shape_cast %98 : vector<2x16xf32> to vector<1x2x16xf32>
    tpu.vector_store %arg13[%99, %c0_46, %c0_47], %102 {strides = array<i32>} : memref<8x2x16xf32, #tpu.memory_space<vmem>>, vector<1x2x16xf32>,
    %cst_48 = arith.constant dense<0xFF800000> : vector<2xf32>
    %103 = vector.multi_reduction <maximumf>, %94, %cst_48 [1] : vector<2x16xf32> to vector<2xf32>
    %104 = vector.shape_cast %103 : vector<2xf32> to vector<2x1xf32>
    %105 = vector.broadcast %104 : vector<2x1xf32> to vector<2x16xf32>
    %106 = arith.cmpf oeq, %94, %105 : vector<2x16xf32>
    %c16_i32 = arith.constant 16 : i32
    %107 = vector.broadcast %c16_i32 : i32 to vector<2x16xi32>
    %108 = arith.select %106, %18, %107 : vector<2x16xi1>, vector<2x16xi32>
    %cst_49 = arith.constant dense<2147483647> : vector<2xi32>
    %109 = vector.multi_reduction <minsi>, %108, %cst_49 [1] : vector<2x16xi32> to vector<2xi32>
    %110 = vector.shape_cast %109 : vector<2xi32> to vector<2x1xi32>
    %c2_i32 = arith.constant 2 : i32
    %111 = vector.broadcast %c2_i32 : i32 to vector<2x1xi32>
    %112 = arith.cmpi eq, %110, %111 : vector<2x1xi32>
    %113 = vector.broadcast %110 : vector<2x1xi32> to vector<2x16xi32>
    %114 = arith.cmpi eq, %18, %113 : vector<2x16xi32>
    %115 = arith.extui %114 : vector<2x16xi1> to vector<2x16xi32>
    %116 = arith.sitofp %115 : vector<2x16xi32> to vector<2x16xf32>
    %cst_50 = arith.constant dense<0.000000e+00> : vector<2x16xf32>
    %117 = tpu.matmul %116, %1, %cst_50 {dimension_numbers = #tpu.dot_dimension_numbers<[1], [0], [0], [1], [0, 0, 1, 1], [], []>} : vector<2x16xf32>, vector<16x16xf32>, vector<2x16xf32> -> vector<2x16xf32>
    %cst_51 = arith.constant dense<true> : vector<1x1xi1>
    %118 = arith.xori %28, %cst_51 : vector<1x1xi1>
    %119 = vector.broadcast %118 : vector<1x1xi1> to vector<2x1xi1>
    %120 = arith.andi %112, %119 : vector<2x1xi1>
    %c1_i32 = arith.constant 1 : i32
    %121 = arith.addi %c0_i32, %c1_i32 : i32
    %122 = vector.broadcast %121 : i32 to vector<2x1xi32>
    %123 = arith.select %120, %122, %24 : vector<2x1xi1>, vector<2x1xi32>
    %124 = arith.extui %112 : vector<2x1xi1> to vector<2x1xi32>
    %125 = arith.sitofp %124 : vector<2x1xi32> to vector<2x1xf32>
    %126 = arith.maximumf %23, %125 : vector<2x1xf32>
    %127 = vector.shape_cast %28 : vector<1x1xi1> to vector<1x1xi1>
    %128 = vector.broadcast %127 : vector<1x1xi1> to vector<2x1xi1>
    %129 = arith.select %128, %23, %126 : vector<2x1xi1>, vector<2x1xf32>
    %130 = vector.shape_cast %28 : vector<1x1xi1> to vector<1x1xi1>
    %131 = vector.broadcast %130 : vector<1x1xi1> to vector<2x16xi1>
    %132 = arith.select %131, %21, %117 : vector<2x16xi1>, vector<2x16xf32>
    %133 = vector.shape_cast %28 : vector<1x1xi1> to vector<1x1xi1>
    %134 = vector.broadcast %133 : vector<1x1xi1> to vector<2x64xi1>
    %135 = arith.select %134, %22, %79 : vector<2x64xi1>, vector<2x64xf32>
    %c1_i32_52 = arith.constant 1 : i32
    %cst_53 = arith.constant dense<0.000000e+00> : vector<1xf32>
    %136 = vector.multi_reduction <add>, %129, %cst_53 [0] : vector<2x1xf32> to vector<1xf32>
    %137 = vector.shape_cast %136 : vector<1xf32> to vector<1x1xf32>
    %cst_54 = arith.constant 2.000000e+00 : f32
    %138 = vector.broadcast %cst_54 : f32 to vector<1x1xf32>
    %139 = arith.cmpf oge, %137, %138 : vector<1x1xf32>
    %cst_55 = arith.constant dense<0.000000e+00> : vector<2x32xf32>
    %140 = tpu.matmul %135, %2, %cst_55 {dimension_numbers = #tpu.dot_dimension_numbers<[1], [0], [0], [1], [0, 0, 1, 1], [], []>} : vector<2x64xf32>, vector<64x32xf32>, vector<2x32xf32> -> vector<2x32xf32>
    %141 = vector.shape_cast %140 : vector<2x32xf32> to vector<2x1x32xf32>
    %142 = vector.broadcast %141 : vector<2x1x32xf32> to vector<2x8x32xf32>
    %143 = arith.addf %16, %142 : vector<2x8x32xf32>
    %144 = math.tanh %143 : vector<2x8x32xf32>
    %145 = vector.broadcast %17 : vector<1x1x32xf32> to vector<2x8x32xf32>
    %146 = arith.mulf %144, %145 : vector<2x8x32xf32>
    %cst_56 = arith.constant dense<0.000000e+00> : vector<2x8xf32>
    %147 = vector.multi_reduction <add>, %146, %cst_56 [2] : vector<2x8x32xf32> to vector<2x8xf32>
    %cst_57 = arith.constant dense<0xFF800000> : vector<2xf32>
    %148 = vector.multi_reduction <maximumf>, %147, %cst_57 [1] : vector<2x8xf32> to vector<2xf32>
    %149 = vector.shape_cast %148 : vector<2xf32> to vector<2x1xf32>
    %150 = vector.broadcast %149 : vector<2x1xf32> to vector<2x8xf32>
    %151 = arith.subf %147, %150 : vector<2x8xf32>
    %152 = math.exp %151 : vector<2x8xf32>
    %cst_58 = arith.constant dense<0.000000e+00> : vector<2xf32>
    %153 = vector.multi_reduction <add>, %152, %cst_58 [1] : vector<2x8xf32> to vector<2xf32>
    %154 = vector.shape_cast %153 : vector<2xf32> to vector<2x1xf32>
    %155 = vector.broadcast %154 : vector<2x1xf32> to vector<2x8xf32>
    %156 = arith.divf %152, %155 : vector<2x8xf32>
    %157 = vector.shape_cast %156 : vector<2x8xf32> to vector<2x8x1xf32>
    %158 = vector.broadcast %157 : vector<2x8x1xf32> to vector<2x8x64xf32>
    %159 = arith.mulf %158, %0 : vector<2x8x64xf32>
    %cst_59 = arith.constant dense<0.000000e+00> : vector<2x64xf32>
    %160 = vector.multi_reduction <add>, %159, %cst_59 [1] : vector<2x8x64xf32> to vector<2x64xf32>
    %cst_60 = arith.constant dense<0.000000e+00> : vector<2x192xf32>
    %161 = tpu.matmul %132, %6, %cst_60 {dimension_numbers = #tpu.dot_dimension_numbers<[1], [0], [0], [1], [0, 0, 1, 1], [], []>} : vector<2x16xf32>, vector<16x192xf32>, vector<2x192xf32> -> vector<2x192xf32>
    %cst_61 = arith.constant dense<0.000000e+00> : vector<2x192xf32>
    %162 = tpu.matmul %160, %7, %cst_61 {dimension_numbers = #tpu.dot_dimension_numbers<[1], [0], [0], [1], [0, 0, 1, 1], [], []>} : vector<2x64xf32>, vector<64x192xf32>, vector<2x192xf32> -> vector<2x192xf32>
    %163 = arith.addf %161, %162 : vector<2x192xf32>
    %cst_62 = arith.constant dense<0.000000e+00> : vector<2x192xf32>
    %164 = tpu.matmul %135, %8, %cst_62 {dimension_numbers = #tpu.dot_dimension_numbers<[1], [0], [0], [1], [0, 0, 1, 1], [], []>} : vector<2x64xf32>, vector<64x192xf32>, vector<2x192xf32> -> vector<2x192xf32>
    %165 = vector.extract_strided_slice %163 {offsets = [0, 0], sizes = [2, 64], strides = [1, 1]} : vector<2x192xf32> to vector<2x64xf32>
    %166 = vector.extract_strided_slice %164 {offsets = [0, 0], sizes = [2, 64], strides = [1, 1]} : vector<2x192xf32> to vector<2x64xf32>
    %167 = arith.addf %165, %166 : vector<2x64xf32>
    %168 = arith.negf %167 : vector<2x64xf32>
    %169 = math.exp %168 : vector<2x64xf32>
    %cst_63 = arith.constant 1.000000e+00 : f32
    %170 = vector.broadcast %cst_63 : f32 to vector<2x64xf32>
    %171 = arith.addf %170, %169 : vector<2x64xf32>
    %172 = arith.divf %170, %171 : vector<2x64xf32>
    %173 = vector.extract_strided_slice %163 {offsets = [0, 64], sizes = [2, 64], strides = [1, 1]} : vector<2x192xf32> to vector<2x64xf32>
    %174 = vector.extract_strided_slice %164 {offsets = [0, 64], sizes = [2, 64], strides = [1, 1]} : vector<2x192xf32> to vector<2x64xf32>
    %175 = arith.addf %173, %174 : vector<2x64xf32>
    %176 = arith.negf %175 : vector<2x64xf32>
    %177 = math.exp %176 : vector<2x64xf32>
    %cst_64 = arith.constant 1.000000e+00 : f32
    %178 = vector.broadcast %cst_64 : f32 to vector<2x64xf32>
    %179 = arith.addf %178, %177 : vector<2x64xf32>
    %180 = arith.divf %178, %179 : vector<2x64xf32>
    %181 = vector.extract_strided_slice %163 {offsets = [0, 128], sizes = [2, 64], strides = [1, 1]} : vector<2x192xf32> to vector<2x64xf32>
    %182 = vector.extract_strided_slice %164 {offsets = [0, 128], sizes = [2, 64], strides = [1, 1]} : vector<2x192xf32> to vector<2x64xf32>
    %183 = arith.mulf %172, %182 : vector<2x64xf32>
    %184 = arith.addf %181, %183 : vector<2x64xf32>
    %185 = math.tanh %184 : vector<2x64xf32>
    %cst_65 = arith.constant 1.000000e+00 : f32
    %186 = vector.broadcast %cst_65 : f32 to vector<2x64xf32>
    %187 = arith.subf %186, %180 : vector<2x64xf32>
    %188 = arith.mulf %187, %185 : vector<2x64xf32>
    %189 = arith.mulf %180, %135 : vector<2x64xf32>
    %190 = arith.addf %188, %189 : vector<2x64xf32>
    %cst_66 = arith.constant dense<0.000000e+00> : vector<2x16xf32>
    %191 = tpu.matmul %190, %9, %cst_66 {dimension_numbers = #tpu.dot_dimension_numbers<[1], [0], [0], [1], [0, 0, 1, 1], [], []>} : vector<2x64xf32>, vector<64x16xf32>, vector<2x16xf32> -> vector<2x16xf32>
    %cst_67 = arith.constant dense<0.000000e+00> : vector<2x16xf32>
    %192 = tpu.matmul %160, %10, %cst_67 {dimension_numbers = #tpu.dot_dimension_numbers<[1], [0], [0], [1], [0, 0, 1, 1], [], []>} : vector<2x64xf32>, vector<64x16xf32>, vector<2x16xf32> -> vector<2x16xf32>
    %193 = arith.addf %191, %192 : vector<2x16xf32>
    %194 = vector.broadcast %11 : vector<1x16xf32> to vector<2x16xf32>
    %195 = arith.addf %193, %194 : vector<2x16xf32>
    %cst_68 = arith.constant dense<0xFF800000> : vector<2xf32>
    %196 = vector.multi_reduction <maximumf>, %195, %cst_68 [1] : vector<2x16xf32> to vector<2xf32>
    %197 = vector.shape_cast %196 : vector<2xf32> to vector<2x1xf32>
    %198 = vector.broadcast %197 : vector<2x1xf32> to vector<2x16xf32>
    %199 = arith.subf %195, %198 : vector<2x16xf32>
    %200 = math.exp %199 : vector<2x16xf32>
    %cst_69 = arith.constant dense<0.000000e+00> : vector<2xf32>
    %201 = vector.multi_reduction <add>, %200, %cst_69 [1] : vector<2x16xf32> to vector<2xf32>
    %202 = vector.shape_cast %201 : vector<2xf32> to vector<2x1xf32>
    %203 = math.log %202 : vector<2x1xf32>
    %204 = vector.broadcast %203 : vector<2x1xf32> to vector<2x16xf32>
    %205 = arith.subf %199, %204 : vector<2x16xf32>
    %cst_70 = arith.constant 0.000000e+00 : f32
    %206 = vector.shape_cast %139 : vector<1x1xi1> to vector<1x1xi1>
    %207 = vector.broadcast %206 : vector<1x1xi1> to vector<2x16xi1>
    %208 = vector.broadcast %cst_70 : f32 to vector<2x16xf32>
    %209 = arith.select %207, %208, %205 : vector<2x16xi1>, vector<2x16xf32>
    %210 = arith.index_cast %c1_i32_52 : i32 to index
    %c0_71 = arith.constant 0 : index
    %c0_72 = arith.constant 0 : index
    %211 = vector.load %arg13[%210, %c0_71, %c0_72] : memref<8x2x16xf32, #tpu.memory_space<vmem>>, vector<1x2x16xf32>
    %212 = vector.shape_cast %211 : vector<1x2x16xf32> to vector<2x16xf32>
    %213 = vector.shape_cast %209 : vector<2x16xf32> to vector<1x2x16xf32>
    tpu.vector_store %arg13[%210, %c0_71, %c0_72], %213 {strides = array<i32>} : memref<8x2x16xf32, #tpu.memory_space<vmem>>, vector<1x2x16xf32>,
    %cst_73 = arith.constant dense<0xFF800000> : vector<2xf32>
    %214 = vector.multi_reduction <maximumf>, %205, %cst_73 [1] : vector<2x16xf32> to vector<2xf32>
    %215 = vector.shape_cast %214 : vector<2xf32> to vector<2x1xf32>
    %216 = vector.broadcast %215 : vector<2x1xf32> to vector<2x16xf32>
    %217 = arith.cmpf oeq, %205, %216 : vector<2x16xf32>
    %c16_i32_74 = arith.constant 16 : i32
    %218 = vector.broadcast %c16_i32_74 : i32 to vector<2x16xi32>
    %219 = arith.select %217, %18, %218 : vector<2x16xi1>, vector<2x16xi32>
    %cst_75 = arith.constant dense<2147483647> : vector<2xi32>
    %220 = vector.multi_reduction <minsi>, %219, %cst_75 [1] : vector<2x16xi32> to vector<2xi32>
    %221 = vector.shape_cast %220 : vector<2xi32> to vector<2x1xi32>
    %c2_i32_76 = arith.constant 2 : i32
    %222 = vector.broadcast %c2_i32_76 : i32 to vector<2x1xi32>
    %223 = arith.cmpi eq, %221, %222 : vector<2x1xi32>
    %224 = vector.broadcast %221 : vector<2x1xi32> to vector<2x16xi32>
    %225 = arith.cmpi eq, %18, %224 : vector<2x16xi32>
    %226 = arith.extui %225 : vector<2x16xi1> to vector<2x16xi32>
    %227 = arith.sitofp %226 : vector<2x16xi32> to vector<2x16xf32>
    %cst_77 = arith.constant dense<0.000000e+00> : vector<2x16xf32>
    %228 = tpu.matmul %227, %1, %cst_77 {dimension_numbers = #tpu.dot_dimension_numbers<[1], [0], [0], [1], [0, 0, 1, 1], [], []>} : vector<2x16xf32>, vector<16x16xf32>, vector<2x16xf32> -> vector<2x16xf32>
    %cst_78 = arith.constant dense<true> : vector<1x1xi1>
    %229 = arith.xori %139, %cst_78 : vector<1x1xi1>
    %230 = vector.broadcast %229 : vector<1x1xi1> to vector<2x1xi1>
    %231 = arith.andi %223, %230 : vector<2x1xi1>
    %c1_i32_79 = arith.constant 1 : i32
    %232 = arith.addi %c1_i32_52, %c1_i32_79 : i32
    %233 = vector.broadcast %232 : i32 to vector<2x1xi32>
    %234 = arith.select %231, %233, %123 : vector<2x1xi1>, vector<2x1xi32>
    %235 = arith.extui %223 : vector<2x1xi1> to vector<2x1xi32>
    %236 = arith.sitofp %235 : vector<2x1xi32> to vector<2x1xf32>
    %237 = arith.maximumf %129, %236 : vector<2x1xf32>
    %238 = vector.shape_cast %139 : vector<1x1xi1> to vector<1x1xi1>
    %239 = vector.broadcast %238 : vector<1x1xi1> to vector<2x1xi1>
    %240 = arith.select %239, %129, %237 : vector<2x1xi1>, vector<2x1xf32>
    %241 = vector.shape_cast %139 : vector<1x1xi1> to vector<1x1xi1>
    %242 = vector.broadcast %241 : vector<1x1xi1> to vector<2x16xi1>
    %243 = arith.select %242, %132, %228 : vector<2x16xi1>, vector<2x16xf32>
    %244 = vector.shape_cast %139 : vector<1x1xi1> to vector<1x1xi1>
    %245 = vector.broadcast %244 : vector<1x1xi1> to vector<2x64xi1>
    %246 = arith.select %245, %135, %190 : vector<2x64xi1>, vector<2x64xf32>
    %c2_i32_80 = arith.constant 2 : i32
    %cst_81 = arith.constant dense<0.000000e+00> : vector<1xf32>
    %247 = vector.multi_reduction <add>, %240, %cst_81 [0] : vector<2x1xf32> to vector<1xf32>
    %248 = vector.shape_cast %247 : vector<1xf32> to vector<1x1xf32>
    %cst_82 = arith.constant 2.000000e+00 : f32
    %249 = vector.broadcast %cst_82 : f32 to vector<1x1xf32>
    %250 = arith.cmpf oge, %248, %249 : vector<1x1xf32>
    %cst_83 = arith.constant dense<0.000000e+00> : vector<2x32xf32>
    %251 = tpu.matmul %246, %2, %cst_83 {dimension_numbers = #tpu.dot_dimension_numbers<[1], [0], [0], [1], [0, 0, 1, 1], [], []>} : vector<2x64xf32>, vector<64x32xf32>, vector<2x32xf32> -> vector<2x32xf32>
    %252 = vector.shape_cast %251 : vector<2x32xf32> to vector<2x1x32xf32>
    %253 = vector.broadcast %252 : vector<2x1x32xf32> to vector<2x8x32xf32>
    %254 = arith.addf %16, %253 : vector<2x8x32xf32>
    %255 = math.tanh %254 : vector<2x8x32xf32>
    %256 = vector.broadcast %17 : vector<1x1x32xf32> to vector<2x8x32xf32>
    %257 = arith.mulf %255, %256 : vector<2x8x32xf32>
    %cst_84 = arith.constant dense<0.000000e+00> : vector<2x8xf32>
    %258 = vector.multi_reduction <add>, %257, %cst_84 [2] : vector<2x8x32xf32> to vector<2x8xf32>
    %cst_85 = arith.constant dense<0xFF800000> : vector<2xf32>
    %259 = vector.multi_reduction <maximumf>, %258, %cst_85 [1] : vector<2x8xf32> to vector<2xf32>
    %260 = vector.shape_cast %259 : vector<2xf32> to vector<2x1xf32>
    %261 = vector.broadcast %260 : vector<2x1xf32> to vector<2x8xf32>
    %262 = arith.subf %258, %261 : vector<2x8xf32>
    %263 = math.exp %262 : vector<2x8xf32>
    %cst_86 = arith.constant dense<0.000000e+00> : vector<2xf32>
    %264 = vector.multi_reduction <add>, %263, %cst_86 [1] : vector<2x8xf32> to vector<2xf32>
    %265 = vector.shape_cast %264 : vector<2xf32> to vector<2x1xf32>
    %266 = vector.broadcast %265 : vector<2x1xf32> to vector<2x8xf32>
    %267 = arith.divf %263, %266 : vector<2x8xf32>
    %268 = vector.shape_cast %267 : vector<2x8xf32> to vector<2x8x1xf32>
    %269 = vector.broadcast %268 : vector<2x8x1xf32> to vector<2x8x64xf32>
    %270 = arith.mulf %269, %0 : vector<2x8x64xf32>
    %cst_87 = arith.constant dense<0.000000e+00> : vector<2x64xf32>
    %271 = vector.multi_reduction <add>, %270, %cst_87 [1] : vector<2x8x64xf32> to vector<2x64xf32>
    %cst_88 = arith.constant dense<0.000000e+00> : vector<2x192xf32>
    %272 = tpu.matmul %243, %6, %cst_88 {dimension_numbers = #tpu.dot_dimension_numbers<[1], [0], [0], [1], [0, 0, 1, 1], [], []>} : vector<2x16xf32>, vector<16x192xf32>, vector<2x192xf32> -> vector<2x192xf32>
    %cst_89 = arith.constant dense<0.000000e+00> : vector<2x192xf32>
    %273 = tpu.matmul %271, %7, %cst_89 {dimension_numbers = #tpu.dot_dimension_numbers<[1], [0], [0], [1], [0, 0, 1, 1], [], []>} : vector<2x64xf32>, vector<64x192xf32>, vector<2x192xf32> -> vector<2x192xf32>
    %274 = arith.addf %272, %273 : vector<2x192xf32>
    %cst_90 = arith.constant dense<0.000000e+00> : vector<2x192xf32>
    %275 = tpu.matmul %246, %8, %cst_90 {dimension_numbers = #tpu.dot_dimension_numbers<[1], [0], [0], [1], [0, 0, 1, 1], [], []>} : vector<2x64xf32>, vector<64x192xf32>, vector<2x192xf32> -> vector<2x192xf32>
    %276 = vector.extract_strided_slice %274 {offsets = [0, 0], sizes = [2, 64], strides = [1, 1]} : vector<2x192xf32> to vector<2x64xf32>
    %277 = vector.extract_strided_slice %275 {offsets = [0, 0], sizes = [2, 64], strides = [1, 1]} : vector<2x192xf32> to vector<2x64xf32>
    %278 = arith.addf %276, %277 : vector<2x64xf32>
    %279 = arith.negf %278 : vector<2x64xf32>
    %280 = math.exp %279 : vector<2x64xf32>
    %cst_91 = arith.constant 1.000000e+00 : f32
    %281 = vector.broadcast %cst_91 : f32 to vector<2x64xf32>
    %282 = arith.addf %281, %280 : vector<2x64xf32>
    %283 = arith.divf %281, %282 : vector<2x64xf32>
    %284 = vector.extract_strided_slice %274 {offsets = [0, 64], sizes = [2, 64], strides = [1, 1]} : vector<2x192xf32> to vector<2x64xf32>
    %285 = vector.extract_strided_slice %275 {offsets = [0, 64], sizes = [2, 64], strides = [1, 1]} : vector<2x192xf32> to vector<2x64xf32>
    %286 = arith.addf %284, %285 : vector<2x64xf32>
    %287 = arith.negf %286 : vector<2x64xf32>
    %288 = math.exp %287 : vector<2x64xf32>
    %cst_92 = arith.constant 1.000000e+00 : f32
    %289 = vector.broadcast %cst_92 : f32 to vector<2x64xf32>
    %290 = arith.addf %289, %288 : vector<2x64xf32>
    %291 = arith.divf %289, %290 : vector<2x64xf32>
    %292 = vector.extract_strided_slice %274 {offsets = [0, 128], sizes = [2, 64], strides = [1, 1]} : vector<2x192xf32> to vector<2x64xf32>
    %293 = vector.extract_strided_slice %275 {offsets = [0, 128], sizes = [2, 64], strides = [1, 1]} : vector<2x192xf32> to vector<2x64xf32>
    %294 = arith.mulf %283, %293 : vector<2x64xf32>
    %295 = arith.addf %292, %294 : vector<2x64xf32>
    %296 = math.tanh %295 : vector<2x64xf32>
    %cst_93 = arith.constant 1.000000e+00 : f32
    %297 = vector.broadcast %cst_93 : f32 to vector<2x64xf32>
    %298 = arith.subf %297, %291 : vector<2x64xf32>
    %299 = arith.mulf %298, %296 : vector<2x64xf32>
    %300 = arith.mulf %291, %246 : vector<2x64xf32>
    %301 = arith.addf %299, %300 : vector<2x64xf32>
    %cst_94 = arith.constant dense<0.000000e+00> : vector<2x16xf32>
    %302 = tpu.matmul %301, %9, %cst_94 {dimension_numbers = #tpu.dot_dimension_numbers<[1], [0], [0], [1], [0, 0, 1, 1], [], []>} : vector<2x64xf32>, vector<64x16xf32>, vector<2x16xf32> -> vector<2x16xf32>
    %cst_95 = arith.constant dense<0.000000e+00> : vector<2x16xf32>
    %303 = tpu.matmul %271, %10, %cst_95 {dimension_numbers = #tpu.dot_dimension_numbers<[1], [0], [0], [1], [0, 0, 1, 1], [], []>} : vector<2x64xf32>, vector<64x16xf32>, vector<2x16xf32> -> vector<2x16xf32>
    %304 = arith.addf %302, %303 : vector<2x16xf32>
    %305 = vector.broadcast %11 : vector<1x16xf32> to vector<2x16xf32>
    %306 = arith.addf %304, %305 : vector<2x16xf32>
    %cst_96 = arith.constant dense<0xFF800000> : vector<2xf32>
    %307 = vector.multi_reduction <maximumf>, %306, %cst_96 [1] : vector<2x16xf32> to vector<2xf32>
    %308 = vector.shape_cast %307 : vector<2xf32> to vector<2x1xf32>
    %309 = vector.broadcast %308 : vector<2x1xf32> to vector<2x16xf32>
    %310 = arith.subf %306, %309 : vector<2x16xf32>
    %311 = math.exp %310 : vector<2x16xf32>
    %cst_97 = arith.constant dense<0.000000e+00> : vector<2xf32>
    %312 = vector.multi_reduction <add>, %311, %cst_97 [1] : vector<2x16xf32> to vector<2xf32>
    %313 = vector.shape_cast %312 : vector<2xf32> to vector<2x1xf32>
    %314 = math.log %313 : vector<2x1xf32>
    %315 = vector.broadcast %314 : vector<2x1xf32> to vector<2x16xf32>
    %316 = arith.subf %310, %315 : vector<2x16xf32>
    %cst_98 = arith.constant 0.000000e+00 : f32
    %317 = vector.shape_cast %250 : vector<1x1xi1> to vector<1x1xi1>
    %318 = vector.broadcast %317 : vector<1x1xi1> to vector<2x16xi1>
    %319 = vector.broadcast %cst_98 : f32 to vector<2x16xf32>
    %320 = arith.select %318, %319, %316 : vector<2x16xi1>, vector<2x16xf32>
    %321 = arith.index_cast %c2_i32_80 : i32 to index
    %c0_99 = arith.constant 0 : index
    %c0_100 = arith.constant 0 : index
    %322 = vector.load %arg13[%321, %c0_99, %c0_100] : memref<8x2x16xf32, #tpu.memory_space<vmem>>, vector<1x2x16xf32>
    %323 = vector.shape_cast %322 : vector<1x2x16xf32> to vector<2x16xf32>
    %324 = vector.shape_cast %320 : vector<2x16xf32> to vector<1x2x16xf32>
    tpu.vector_store %arg13[%321, %c0_99, %c0_100], %324 {strides = array<i32>} : memref<8x2x16xf32, #tpu.memory_space<vmem>>, vector<1x2x16xf32>,
    %cst_101 = arith.constant dense<0xFF800000> : vector<2xf32>
    %325 = vector.multi_reduction <maximumf>, %316, %cst_101 [1] : vector<2x16xf32> to vector<2xf32>
    %326 = vector.shape_cast %325 : vector<2xf32> to vector<2x1xf32>
    %327 = vector.broadcast %326 : vector<2x1xf32> to vector<2x16xf32>
    %328 = arith.cmpf oeq, %316, %327 : vector<2x16xf32>
    %c16_i32_102 = arith.constant 16 : i32
    %329 = vector.broadcast %c16_i32_102 : i32 to vector<2x16xi32>
    %330 = arith.select %328, %18, %329 : vector<2x16xi1>, vector<2x16xi32>
    %cst_103 = arith.constant dense<2147483647> : vector<2xi32>
    %331 = vector.multi_reduction <minsi>, %330, %cst_103 [1] : vector<2x16xi32> to vector<2xi32>
    %332 = vector.shape_cast %331 : vector<2xi32> to vector<2x1xi32>
    %c2_i32_104 = arith.constant 2 : i32
    %333 = vector.broadcast %c2_i32_104 : i32 to vector<2x1xi32>
    %334 = arith.cmpi eq, %332, %333 : vector<2x1xi32>
    %335 = vector.broadcast %332 : vector<2x1xi32> to vector<2x16xi32>
    %336 = arith.cmpi eq, %18, %335 : vector<2x16xi32>
    %337 = arith.extui %336 : vector<2x16xi1> to vector<2x16xi32>
    %338 = arith.sitofp %337 : vector<2x16xi32> to vector<2x16xf32>
    %cst_105 = arith.constant dense<0.000000e+00> : vector<2x16xf32>
    %339 = tpu.matmul %338, %1, %cst_105 {dimension_numbers = #tpu.dot_dimension_numbers<[1], [0], [0], [1], [0, 0, 1, 1], [], []>} : vector<2x16xf32>, vector<16x16xf32>, vector<2x16xf32> -> vector<2x16xf32>
    %cst_106 = arith.constant dense<true> : vector<1x1xi1>
    %340 = arith.xori %250, %cst_106 : vector<1x1xi1>
    %341 = vector.broadcast %340 : vector<1x1xi1> to vector<2x1xi1>
    %342 = arith.andi %334, %341 : vector<2x1xi1>
    %c1_i32_107 = arith.constant 1 : i32
    %343 = arith.addi %c2_i32_80, %c1_i32_107 : i32
    %344 = vector.broadcast %343 : i32 to vector<2x1xi32>
    %345 = arith.select %342, %344, %234 : vector<2x1xi1>, vector<2x1xi32>
    %346 = arith.extui %334 : vector<2x1xi1> to vector<2x1xi32>
    %347 = arith.sitofp %346 : vector<2x1xi32> to vector<2x1xf32>
    %348 = arith.maximumf %240, %347 : vector<2x1xf32>
    %349 = vector.shape_cast %250 : vector<1x1xi1> to vector<1x1xi1>
    %350 = vector.broadcast %349 : vector<1x1xi1> to vector<2x1xi1>
    %351 = arith.select %350, %240, %348 : vector<2x1xi1>, vector<2x1xf32>
    %352 = vector.shape_cast %250 : vector<1x1xi1> to vector<1x1xi1>
    %353 = vector.broadcast %352 : vector<1x1xi1> to vector<2x16xi1>
    %354 = arith.select %353, %243, %339 : vector<2x16xi1>, vector<2x16xf32>
    %355 = vector.shape_cast %250 : vector<1x1xi1> to vector<1x1xi1>
    %356 = vector.broadcast %355 : vector<1x1xi1> to vector<2x64xi1>
    %357 = arith.select %356, %246, %301 : vector<2x64xi1>, vector<2x64xf32>
    %c3_i32 = arith.constant 3 : i32
    %cst_108 = arith.constant dense<0.000000e+00> : vector<1xf32>
    %358 = vector.multi_reduction <add>, %351, %cst_108 [0] : vector<2x1xf32> to vector<1xf32>
    %359 = vector.shape_cast %358 : vector<1xf32> to vector<1x1xf32>
    %cst_109 = arith.constant 2.000000e+00 : f32
    %360 = vector.broadcast %cst_109 : f32 to vector<1x1xf32>
    %361 = arith.cmpf oge, %359, %360 : vector<1x1xf32>
    %cst_110 = arith.constant dense<0.000000e+00> : vector<2x32xf32>
    %362 = tpu.matmul %357, %2, %cst_110 {dimension_numbers = #tpu.dot_dimension_numbers<[1], [0], [0], [1], [0, 0, 1, 1], [], []>} : vector<2x64xf32>, vector<64x32xf32>, vector<2x32xf32> -> vector<2x32xf32>
    %363 = vector.shape_cast %362 : vector<2x32xf32> to vector<2x1x32xf32>
    %364 = vector.broadcast %363 : vector<2x1x32xf32> to vector<2x8x32xf32>
    %365 = arith.addf %16, %364 : vector<2x8x32xf32>
    %366 = math.tanh %365 : vector<2x8x32xf32>
    %367 = vector.broadcast %17 : vector<1x1x32xf32> to vector<2x8x32xf32>
    %368 = arith.mulf %366, %367 : vector<2x8x32xf32>
    %cst_111 = arith.constant dense<0.000000e+00> : vector<2x8xf32>
    %369 = vector.multi_reduction <add>, %368, %cst_111 [2] : vector<2x8x32xf32> to vector<2x8xf32>
    %cst_112 = arith.constant dense<0xFF800000> : vector<2xf32>
    %370 = vector.multi_reduction <maximumf>, %369, %cst_112 [1] : vector<2x8xf32> to vector<2xf32>
    %371 = vector.shape_cast %370 : vector<2xf32> to vector<2x1xf32>
    %372 = vector.broadcast %371 : vector<2x1xf32> to vector<2x8xf32>
    %373 = arith.subf %369, %372 : vector<2x8xf32>
    %374 = math.exp %373 : vector<2x8xf32>
    %cst_113 = arith.constant dense<0.000000e+00> : vector<2xf32>
    %375 = vector.multi_reduction <add>, %374, %cst_113 [1] : vector<2x8xf32> to vector<2xf32>
    %376 = vector.shape_cast %375 : vector<2xf32> to vector<2x1xf32>
    %377 = vector.broadcast %376 : vector<2x1xf32> to vector<2x8xf32>
    %378 = arith.divf %374, %377 : vector<2x8xf32>
    %379 = vector.shape_cast %378 : vector<2x8xf32> to vector<2x8x1xf32>
    %380 = vector.broadcast %379 : vector<2x8x1xf32> to vector<2x8x64xf32>
    %381 = arith.mulf %380, %0 : vector<2x8x64xf32>
    %cst_114 = arith.constant dense<0.000000e+00> : vector<2x64xf32>
    %382 = vector.multi_reduction <add>, %381, %cst_114 [1] : vector<2x8x64xf32> to vector<2x64xf32>
    %cst_115 = arith.constant dense<0.000000e+00> : vector<2x192xf32>
    %383 = tpu.matmul %354, %6, %cst_115 {dimension_numbers = #tpu.dot_dimension_numbers<[1], [0], [0], [1], [0, 0, 1, 1], [], []>} : vector<2x16xf32>, vector<16x192xf32>, vector<2x192xf32> -> vector<2x192xf32>
    %cst_116 = arith.constant dense<0.000000e+00> : vector<2x192xf32>
    %384 = tpu.matmul %382, %7, %cst_116 {dimension_numbers = #tpu.dot_dimension_numbers<[1], [0], [0], [1], [0, 0, 1, 1], [], []>} : vector<2x64xf32>, vector<64x192xf32>, vector<2x192xf32> -> vector<2x192xf32>
    %385 = arith.addf %383, %384 : vector<2x192xf32>
    %cst_117 = arith.constant dense<0.000000e+00> : vector<2x192xf32>
    %386 = tpu.matmul %357, %8, %cst_117 {dimension_numbers = #tpu.dot_dimension_numbers<[1], [0], [0], [1], [0, 0, 1, 1], [], []>} : vector<2x64xf32>, vector<64x192xf32>, vector<2x192xf32> -> vector<2x192xf32>
    %387 = vector.extract_strided_slice %385 {offsets = [0, 0], sizes = [2, 64], strides = [1, 1]} : vector<2x192xf32> to vector<2x64xf32>
    %388 = vector.extract_strided_slice %386 {offsets = [0, 0], sizes = [2, 64], strides = [1, 1]} : vector<2x192xf32> to vector<2x64xf32>
    %389 = arith.addf %387, %388 : vector<2x64xf32>
    %390 = arith.negf %389 : vector<2x64xf32>
    %391 = math.exp %390 : vector<2x64xf32>
    %cst_118 = arith.constant 1.000000e+00 : f32
    %392 = vector.broadcast %cst_118 : f32 to vector<2x64xf32>
    %393 = arith.addf %392, %391 : vector<2x64xf32>
    %394 = arith.divf %392, %393 : vector<2x64xf32>
    %395 = vector.extract_strided_slice %385 {offsets = [0, 64], sizes = [2, 64], strides = [1, 1]} : vector<2x192xf32> to vector<2x64xf32>
    %396 = vector.extract_strided_slice %386 {offsets = [0, 64], sizes = [2, 64], strides = [1, 1]} : vector<2x192xf32> to vector<2x64xf32>
    %397 = arith.addf %395, %396 : vector<2x64xf32>
    %398 = arith.negf %397 : vector<2x64xf32>
    %399 = math.exp %398 : vector<2x64xf32>
    %cst_119 = arith.constant 1.000000e+00 : f32
    %400 = vector.broadcast %cst_119 : f32 to vector<2x64xf32>
    %401 = arith.addf %400, %399 : vector<2x64xf32>
    %402 = arith.divf %400, %401 : vector<2x64xf32>
    %403 = vector.extract_strided_slice %385 {offsets = [0, 128], sizes = [2, 64], strides = [1, 1]} : vector<2x192xf32> to vector<2x64xf32>
    %404 = vector.extract_strided_slice %386 {offsets = [0, 128], sizes = [2, 64], strides = [1, 1]} : vector<2x192xf32> to vector<2x64xf32>
    %405 = arith.mulf %394, %404 : vector<2x64xf32>
    %406 = arith.addf %403, %405 : vector<2x64xf32>
    %407 = math.tanh %406 : vector<2x64xf32>
    %cst_120 = arith.constant 1.000000e+00 : f32
    %408 = vector.broadcast %cst_120 : f32 to vector<2x64xf32>
    %409 = arith.subf %408, %402 : vector<2x64xf32>
    %410 = arith.mulf %409, %407 : vector<2x64xf32>
    %411 = arith.mulf %402, %357 : vector<2x64xf32>
    %412 = arith.addf %410, %411 : vector<2x64xf32>
    %cst_121 = arith.constant dense<0.000000e+00> : vector<2x16xf32>
    %413 = tpu.matmul %412, %9, %cst_121 {dimension_numbers = #tpu.dot_dimension_numbers<[1], [0], [0], [1], [0, 0, 1, 1], [], []>} : vector<2x64xf32>, vector<64x16xf32>, vector<2x16xf32> -> vector<2x16xf32>
    %cst_122 = arith.constant dense<0.000000e+00> : vector<2x16xf32>
    %414 = tpu.matmul %382, %10, %cst_122 {dimension_numbers = #tpu.dot_dimension_numbers<[1], [0], [0], [1], [0, 0, 1, 1], [], []>} : vector<2x64xf32>, vector<64x16xf32>, vector<2x16xf32> -> vector<2x16xf32>
    %415 = arith.addf %413, %414 : vector<2x16xf32>
    %416 = vector.broadcast %11 : vector<1x16xf32> to vector<2x16xf32>
    %417 = arith.addf %415, %416 : vector<2x16xf32>
    %cst_123 = arith.constant dense<0xFF800000> : vector<2xf32>
    %418 = vector.multi_reduction <maximumf>, %417, %cst_123 [1] : vector<2x16xf32> to vector<2xf32>
    %419 = vector.shape_cast %418 : vector<2xf32> to vector<2x1xf32>
    %420 = vector.broadcast %419 : vector<2x1xf32> to vector<2x16xf32>
    %421 = arith.subf %417, %420 : vector<2x16xf32>
    %422 = math.exp %421 : vector<2x16xf32>
    %cst_124 = arith.constant dense<0.000000e+00> : vector<2xf32>
    %423 = vector.multi_reduction <add>, %422, %cst_124 [1] : vector<2x16xf32> to vector<2xf32>
    %424 = vector.shape_cast %423 : vector<2xf32> to vector<2x1xf32>
    %425 = math.log %424 : vector<2x1xf32>
    %426 = vector.broadcast %425 : vector<2x1xf32> to vector<2x16xf32>
    %427 = arith.subf %421, %426 : vector<2x16xf32>
    %cst_125 = arith.constant 0.000000e+00 : f32
    %428 = vector.shape_cast %361 : vector<1x1xi1> to vector<1x1xi1>
    %429 = vector.broadcast %428 : vector<1x1xi1> to vector<2x16xi1>
    %430 = vector.broadcast %cst_125 : f32 to vector<2x16xf32>
    %431 = arith.select %429, %430, %427 : vector<2x16xi1>, vector<2x16xf32>
    %432 = arith.index_cast %c3_i32 : i32 to index
    %c0_126 = arith.constant 0 : index
    %c0_127 = arith.constant 0 : index
    %433 = vector.load %arg13[%432, %c0_126, %c0_127] : memref<8x2x16xf32, #tpu.memory_space<vmem>>, vector<1x2x16xf32>
    %434 = vector.shape_cast %433 : vector<1x2x16xf32> to vector<2x16xf32>
    %435 = vector.shape_cast %431 : vector<2x16xf32> to vector<1x2x16xf32>
    tpu.vector_store %arg13[%432, %c0_126, %c0_127], %435 {strides = array<i32>} : memref<8x2x16xf32, #tpu.memory_space<vmem>>, vector<1x2x16xf32>,
    %cst_128 = arith.constant dense<0xFF800000> : vector<2xf32>
    %436 = vector.multi_reduction <maximumf>, %427, %cst_128 [1] : vector<2x16xf32> to vector<2xf32>
    %437 = vector.shape_cast %436 : vector<2xf32> to vector<2x1xf32>
    %438 = vector.broadcast %437 : vector<2x1xf32> to vector<2x16xf32>
    %439 = arith.cmpf oeq, %427, %438 : vector<2x16xf32>
    %c16_i32_129 = arith.constant 16 : i32
    %440 = vector.broadcast %c16_i32_129 : i32 to vector<2x16xi32>
    %441 = arith.select %439, %18, %440 : vector<2x16xi1>, vector<2x16xi32>
    %cst_130 = arith.constant dense<2147483647> : vector<2xi32>
    %442 = vector.multi_reduction <minsi>, %441, %cst_130 [1] : vector<2x16xi32> to vector<2xi32>
    %443 = vector.shape_cast %442 : vector<2xi32> to vector<2x1xi32>
    %c2_i32_131 = arith.constant 2 : i32
    %444 = vector.broadcast %c2_i32_131 : i32 to vector<2x1xi32>
    %445 = arith.cmpi eq, %443, %444 : vector<2x1xi32>
    %446 = vector.broadcast %443 : vector<2x1xi32> to vector<2x16xi32>
    %447 = arith.cmpi eq, %18, %446 : vector<2x16xi32>
    %448 = arith.extui %447 : vector<2x16xi1> to vector<2x16xi32>
    %449 = arith.sitofp %448 : vector<2x16xi32> to vector<2x16xf32>
    %cst_132 = arith.constant dense<0.000000e+00> : vector<2x16xf32>
    %450 = tpu.matmul %449, %1, %cst_132 {dimension_numbers = #tpu.dot_dimension_numbers<[1], [0], [0], [1], [0, 0, 1, 1], [], []>} : vector<2x16xf32>, vector<16x16xf32>, vector<2x16xf32> -> vector<2x16xf32>
    %cst_133 = arith.constant dense<true> : vector<1x1xi1>
    %451 = arith.xori %361, %cst_133 : vector<1x1xi1>
    %452 = vector.broadcast %451 : vector<1x1xi1> to vector<2x1xi1>
    %453 = arith.andi %445, %452 : vector<2x1xi1>
    %c1_i32_134 = arith.constant 1 : i32
    %454 = arith.addi %c3_i32, %c1_i32_134 : i32
    %455 = vector.broadcast %454 : i32 to vector<2x1xi32>
    %456 = arith.select %453, %455, %345 : vector<2x1xi1>, vector<2x1xi32>
    %457 = arith.extui %445 : vector<2x1xi1> to vector<2x1xi32>
    %458 = arith.sitofp %457 : vector<2x1xi32> to vector<2x1xf32>
    %459 = arith.maximumf %351, %458 : vector<2x1xf32>
    %460 = vector.shape_cast %361 : vector<1x1xi1> to vector<1x1xi1>
    %461 = vector.broadcast %460 : vector<1x1xi1> to vector<2x1xi1>
    %462 = arith.select %461, %351, %459 : vector<2x1xi1>, vector<2x1xf32>
    %463 = vector.shape_cast %361 : vector<1x1xi1> to vector<1x1xi1>
    %464 = vector.broadcast %463 : vector<1x1xi1> to vector<2x16xi1>
    %465 = arith.select %464, %354, %450 : vector<2x16xi1>, vector<2x16xf32>
    %466 = vector.shape_cast %361 : vector<1x1xi1> to vector<1x1xi1>
    %467 = vector.broadcast %466 : vector<1x1xi1> to vector<2x64xi1>
    %468 = arith.select %467, %357, %412 : vector<2x64xi1>, vector<2x64xf32>
    %c4_i32 = arith.constant 4 : i32
    %cst_135 = arith.constant dense<0.000000e+00> : vector<1xf32>
    %469 = vector.multi_reduction <add>, %462, %cst_135 [0] : vector<2x1xf32> to vector<1xf32>
    %470 = vector.shape_cast %469 : vector<1xf32> to vector<1x1xf32>
    %cst_136 = arith.constant 2.000000e+00 : f32
    %471 = vector.broadcast %cst_136 : f32 to vector<1x1xf32>
    %472 = arith.cmpf oge, %470, %471 : vector<1x1xf32>
    %cst_137 = arith.constant dense<0.000000e+00> : vector<2x32xf32>
    %473 = tpu.matmul %468, %2, %cst_137 {dimension_numbers = #tpu.dot_dimension_numbers<[1], [0], [0], [1], [0, 0, 1, 1], [], []>} : vector<2x64xf32>, vector<64x32xf32>, vector<2x32xf32> -> vector<2x32xf32>
    %474 = vector.shape_cast %473 : vector<2x32xf32> to vector<2x1x32xf32>
    %475 = vector.broadcast %474 : vector<2x1x32xf32> to vector<2x8x32xf32>
    %476 = arith.addf %16, %475 : vector<2x8x32xf32>
    %477 = math.tanh %476 : vector<2x8x32xf32>
    %478 = vector.broadcast %17 : vector<1x1x32xf32> to vector<2x8x32xf32>
    %479 = arith.mulf %477, %478 : vector<2x8x32xf32>
    %cst_138 = arith.constant dense<0.000000e+00> : vector<2x8xf32>
    %480 = vector.multi_reduction <add>, %479, %cst_138 [2] : vector<2x8x32xf32> to vector<2x8xf32>
    %cst_139 = arith.constant dense<0xFF800000> : vector<2xf32>
    %481 = vector.multi_reduction <maximumf>, %480, %cst_139 [1] : vector<2x8xf32> to vector<2xf32>
    %482 = vector.shape_cast %481 : vector<2xf32> to vector<2x1xf32>
    %483 = vector.broadcast %482 : vector<2x1xf32> to vector<2x8xf32>
    %484 = arith.subf %480, %483 : vector<2x8xf32>
    %485 = math.exp %484 : vector<2x8xf32>
    %cst_140 = arith.constant dense<0.000000e+00> : vector<2xf32>
    %486 = vector.multi_reduction <add>, %485, %cst_140 [1] : vector<2x8xf32> to vector<2xf32>
    %487 = vector.shape_cast %486 : vector<2xf32> to vector<2x1xf32>
    %488 = vector.broadcast %487 : vector<2x1xf32> to vector<2x8xf32>
    %489 = arith.divf %485, %488 : vector<2x8xf32>
    %490 = vector.shape_cast %489 : vector<2x8xf32> to vector<2x8x1xf32>
    %491 = vector.broadcast %490 : vector<2x8x1xf32> to vector<2x8x64xf32>
    %492 = arith.mulf %491, %0 : vector<2x8x64xf32>
    %cst_141 = arith.constant dense<0.000000e+00> : vector<2x64xf32>
    %493 = vector.multi_reduction <add>, %492, %cst_141 [1] : vector<2x8x64xf32> to vector<2x64xf32>
    %cst_142 = arith.constant dense<0.000000e+00> : vector<2x192xf32>
    %494 = tpu.matmul %465, %6, %cst_142 {dimension_numbers = #tpu.dot_dimension_numbers<[1], [0], [0], [1], [0, 0, 1, 1], [], []>} : vector<2x16xf32>, vector<16x192xf32>, vector<2x192xf32> -> vector<2x192xf32>
    %cst_143 = arith.constant dense<0.000000e+00> : vector<2x192xf32>
    %495 = tpu.matmul %493, %7, %cst_143 {dimension_numbers = #tpu.dot_dimension_numbers<[1], [0], [0], [1], [0, 0, 1, 1], [], []>} : vector<2x64xf32>, vector<64x192xf32>, vector<2x192xf32> -> vector<2x192xf32>
    %496 = arith.addf %494, %495 : vector<2x192xf32>
    %cst_144 = arith.constant dense<0.000000e+00> : vector<2x192xf32>
    %497 = tpu.matmul %468, %8, %cst_144 {dimension_numbers = #tpu.dot_dimension_numbers<[1], [0], [0], [1], [0, 0, 1, 1], [], []>} : vector<2x64xf32>, vector<64x192xf32>, vector<2x192xf32> -> vector<2x192xf32>
    %498 = vector.extract_strided_slice %496 {offsets = [0, 0], sizes = [2, 64], strides = [1, 1]} : vector<2x192xf32> to vector<2x64xf32>
    %499 = vector.extract_strided_slice %497 {offsets = [0, 0], sizes = [2, 64], strides = [1, 1]} : vector<2x192xf32> to vector<2x64xf32>
    %500 = arith.addf %498, %499 : vector<2x64xf32>
    %501 = arith.negf %500 : vector<2x64xf32>
    %502 = math.exp %501 : vector<2x64xf32>
    %cst_145 = arith.constant 1.000000e+00 : f32
    %503 = vector.broadcast %cst_145 : f32 to vector<2x64xf32>
    %504 = arith.addf %503, %502 : vector<2x64xf32>
    %505 = arith.divf %503, %504 : vector<2x64xf32>
    %506 = vector.extract_strided_slice %496 {offsets = [0, 64], sizes = [2, 64], strides = [1, 1]} : vector<2x192xf32> to vector<2x64xf32>
    %507 = vector.extract_strided_slice %497 {offsets = [0, 64], sizes = [2, 64], strides = [1, 1]} : vector<2x192xf32> to vector<2x64xf32>
    %508 = arith.addf %506, %507 : vector<2x64xf32>
    %509 = arith.negf %508 : vector<2x64xf32>
    %510 = math.exp %509 : vector<2x64xf32>
    %cst_146 = arith.constant 1.000000e+00 : f32
    %511 = vector.broadcast %cst_146 : f32 to vector<2x64xf32>
    %512 = arith.addf %511, %510 : vector<2x64xf32>
    %513 = arith.divf %511, %512 : vector<2x64xf32>
    %514 = vector.extract_strided_slice %496 {offsets = [0, 128], sizes = [2, 64], strides = [1, 1]} : vector<2x192xf32> to vector<2x64xf32>
    %515 = vector.extract_strided_slice %497 {offsets = [0, 128], sizes = [2, 64], strides = [1, 1]} : vector<2x192xf32> to vector<2x64xf32>
    %516 = arith.mulf %505, %515 : vector<2x64xf32>
    %517 = arith.addf %514, %516 : vector<2x64xf32>
    %518 = math.tanh %517 : vector<2x64xf32>
    %cst_147 = arith.constant 1.000000e+00 : f32
    %519 = vector.broadcast %cst_147 : f32 to vector<2x64xf32>
    %520 = arith.subf %519, %513 : vector<2x64xf32>
    %521 = arith.mulf %520, %518 : vector<2x64xf32>
    %522 = arith.mulf %513, %468 : vector<2x64xf32>
    %523 = arith.addf %521, %522 : vector<2x64xf32>
    %cst_148 = arith.constant dense<0.000000e+00> : vector<2x16xf32>
    %524 = tpu.matmul %523, %9, %cst_148 {dimension_numbers = #tpu.dot_dimension_numbers<[1], [0], [0], [1], [0, 0, 1, 1], [], []>} : vector<2x64xf32>, vector<64x16xf32>, vector<2x16xf32> -> vector<2x16xf32>
    %cst_149 = arith.constant dense<0.000000e+00> : vector<2x16xf32>
    %525 = tpu.matmul %493, %10, %cst_149 {dimension_numbers = #tpu.dot_dimension_numbers<[1], [0], [0], [1], [0, 0, 1, 1], [], []>} : vector<2x64xf32>, vector<64x16xf32>, vector<2x16xf32> -> vector<2x16xf32>
    %526 = arith.addf %524, %525 : vector<2x16xf32>
    %527 = vector.broadcast %11 : vector<1x16xf32> to vector<2x16xf32>
    %528 = arith.addf %526, %527 : vector<2x16xf32>
    %cst_150 = arith.constant dense<0xFF800000> : vector<2xf32>
    %529 = vector.multi_reduction <maximumf>, %528, %cst_150 [1] : vector<2x16xf32> to vector<2xf32>
    %530 = vector.shape_cast %529 : vector<2xf32> to vector<2x1xf32>
    %531 = vector.broadcast %530 : vector<2x1xf32> to vector<2x16xf32>
    %532 = arith.subf %528, %531 : vector<2x16xf32>
    %533 = math.exp %532 : vector<2x16xf32>
    %cst_151 = arith.constant dense<0.000000e+00> : vector<2xf32>
    %534 = vector.multi_reduction <add>, %533, %cst_151 [1] : vector<2x16xf32> to vector<2xf32>
    %535 = vector.shape_cast %534 : vector<2xf32> to vector<2x1xf32>
    %536 = math.log %535 : vector<2x1xf32>
    %537 = vector.broadcast %536 : vector<2x1xf32> to vector<2x16xf32>
    %538 = arith.subf %532, %537 : vector<2x16xf32>
    %cst_152 = arith.constant 0.000000e+00 : f32
    %539 = vector.shape_cast %472 : vector<1x1xi1> to vector<1x1xi1>
    %540 = vector.broadcast %539 : vector<1x1xi1> to vector<2x16xi1>
    %541 = vector.broadcast %cst_152 : f32 to vector<2x16xf32>
    %542 = arith.select %540, %541, %538 : vector<2x16xi1>, vector<2x16xf32>
    %543 = arith.index_cast %c4_i32 : i32 to index
    %c0_153 = arith.constant 0 : index
    %c0_154 = arith.constant 0 : index
    %544 = vector.load %arg13[%543, %c0_153, %c0_154] : memref<8x2x16xf32, #tpu.memory_space<vmem>>, vector<1x2x16xf32>
    %545 = vector.shape_cast %544 : vector<1x2x16xf32> to vector<2x16xf32>
    %546 = vector.shape_cast %542 : vector<2x16xf32> to vector<1x2x16xf32>
    tpu.vector_store %arg13[%543, %c0_153, %c0_154], %546 {strides = array<i32>} : memref<8x2x16xf32, #tpu.memory_space<vmem>>, vector<1x2x16xf32>,
    %cst_155 = arith.constant dense<0xFF800000> : vector<2xf32>
    %547 = vector.multi_reduction <maximumf>, %538, %cst_155 [1] : vector<2x16xf32> to vector<2xf32>
    %548 = vector.shape_cast %547 : vector<2xf32> to vector<2x1xf32>
    %549 = vector.broadcast %548 : vector<2x1xf32> to vector<2x16xf32>
    %550 = arith.cmpf oeq, %538, %549 : vector<2x16xf32>
    %c16_i32_156 = arith.constant 16 : i32
    %551 = vector.broadcast %c16_i32_156 : i32 to vector<2x16xi32>
    %552 = arith.select %550, %18, %551 : vector<2x16xi1>, vector<2x16xi32>
    %cst_157 = arith.constant dense<2147483647> : vector<2xi32>
    %553 = vector.multi_reduction <minsi>, %552, %cst_157 [1] : vector<2x16xi32> to vector<2xi32>
    %554 = vector.shape_cast %553 : vector<2xi32> to vector<2x1xi32>
    %c2_i32_158 = arith.constant 2 : i32
    %555 = vector.broadcast %c2_i32_158 : i32 to vector<2x1xi32>
    %556 = arith.cmpi eq, %554, %555 : vector<2x1xi32>
    %557 = vector.broadcast %554 : vector<2x1xi32> to vector<2x16xi32>
    %558 = arith.cmpi eq, %18, %557 : vector<2x16xi32>
    %559 = arith.extui %558 : vector<2x16xi1> to vector<2x16xi32>
    %560 = arith.sitofp %559 : vector<2x16xi32> to vector<2x16xf32>
    %cst_159 = arith.constant dense<0.000000e+00> : vector<2x16xf32>
    %561 = tpu.matmul %560, %1, %cst_159 {dimension_numbers = #tpu.dot_dimension_numbers<[1], [0], [0], [1], [0, 0, 1, 1], [], []>} : vector<2x16xf32>, vector<16x16xf32>, vector<2x16xf32> -> vector<2x16xf32>
    %cst_160 = arith.constant dense<true> : vector<1x1xi1>
    %562 = arith.xori %472, %cst_160 : vector<1x1xi1>
    %563 = vector.broadcast %562 : vector<1x1xi1> to vector<2x1xi1>
    %564 = arith.andi %556, %563 : vector<2x1xi1>
    %c1_i32_161 = arith.constant 1 : i32
    %565 = arith.addi %c4_i32, %c1_i32_161 : i32
    %566 = vector.broadcast %565 : i32 to vector<2x1xi32>
    %567 = arith.select %564, %566, %456 : vector<2x1xi1>, vector<2x1xi32>
    %568 = arith.extui %556 : vector<2x1xi1> to vector<2x1xi32>
    %569 = arith.sitofp %568 : vector<2x1xi32> to vector<2x1xf32>
    %570 = arith.maximumf %462, %569 : vector<2x1xf32>
    %571 = vector.shape_cast %472 : vector<1x1xi1> to vector<1x1xi1>
    %572 = vector.broadcast %571 : vector<1x1xi1> to vector<2x1xi1>
    %573 = arith.select %572, %462, %570 : vector<2x1xi1>, vector<2x1xf32>
    %574 = vector.shape_cast %472 : vector<1x1xi1> to vector<1x1xi1>
    %575 = vector.broadcast %574 : vector<1x1xi1> to vector<2x16xi1>
    %576 = arith.select %575, %465, %561 : vector<2x16xi1>, vector<2x16xf32>
    %577 = vector.shape_cast %472 : vector<1x1xi1> to vector<1x1xi1>
    %578 = vector.broadcast %577 : vector<1x1xi1> to vector<2x64xi1>
    %579 = arith.select %578, %468, %523 : vector<2x64xi1>, vector<2x64xf32>
    %c5_i32 = arith.constant 5 : i32
    %cst_162 = arith.constant dense<0.000000e+00> : vector<1xf32>
    %580 = vector.multi_reduction <add>, %573, %cst_162 [0] : vector<2x1xf32> to vector<1xf32>
    %581 = vector.shape_cast %580 : vector<1xf32> to vector<1x1xf32>
    %cst_163 = arith.constant 2.000000e+00 : f32
    %582 = vector.broadcast %cst_163 : f32 to vector<1x1xf32>
    %583 = arith.cmpf oge, %581, %582 : vector<1x1xf32>
    %cst_164 = arith.constant dense<0.000000e+00> : vector<2x32xf32>
    %584 = tpu.matmul %579, %2, %cst_164 {dimension_numbers = #tpu.dot_dimension_numbers<[1], [0], [0], [1], [0, 0, 1, 1], [], []>} : vector<2x64xf32>, vector<64x32xf32>, vector<2x32xf32> -> vector<2x32xf32>
    %585 = vector.shape_cast %584 : vector<2x32xf32> to vector<2x1x32xf32>
    %586 = vector.broadcast %585 : vector<2x1x32xf32> to vector<2x8x32xf32>
    %587 = arith.addf %16, %586 : vector<2x8x32xf32>
    %588 = math.tanh %587 : vector<2x8x32xf32>
    %589 = vector.broadcast %17 : vector<1x1x32xf32> to vector<2x8x32xf32>
    %590 = arith.mulf %588, %589 : vector<2x8x32xf32>
    %cst_165 = arith.constant dense<0.000000e+00> : vector<2x8xf32>
    %591 = vector.multi_reduction <add>, %590, %cst_165 [2] : vector<2x8x32xf32> to vector<2x8xf32>
    %cst_166 = arith.constant dense<0xFF800000> : vector<2xf32>
    %592 = vector.multi_reduction <maximumf>, %591, %cst_166 [1] : vector<2x8xf32> to vector<2xf32>
    %593 = vector.shape_cast %592 : vector<2xf32> to vector<2x1xf32>
    %594 = vector.broadcast %593 : vector<2x1xf32> to vector<2x8xf32>
    %595 = arith.subf %591, %594 : vector<2x8xf32>
    %596 = math.exp %595 : vector<2x8xf32>
    %cst_167 = arith.constant dense<0.000000e+00> : vector<2xf32>
    %597 = vector.multi_reduction <add>, %596, %cst_167 [1] : vector<2x8xf32> to vector<2xf32>
    %598 = vector.shape_cast %597 : vector<2xf32> to vector<2x1xf32>
    %599 = vector.broadcast %598 : vector<2x1xf32> to vector<2x8xf32>
    %600 = arith.divf %596, %599 : vector<2x8xf32>
    %601 = vector.shape_cast %600 : vector<2x8xf32> to vector<2x8x1xf32>
    %602 = vector.broadcast %601 : vector<2x8x1xf32> to vector<2x8x64xf32>
    %603 = arith.mulf %602, %0 : vector<2x8x64xf32>
    %cst_168 = arith.constant dense<0.000000e+00> : vector<2x64xf32>
    %604 = vector.multi_reduction <add>, %603, %cst_168 [1] : vector<2x8x64xf32> to vector<2x64xf32>
    %cst_169 = arith.constant dense<0.000000e+00> : vector<2x192xf32>
    %605 = tpu.matmul %576, %6, %cst_169 {dimension_numbers = #tpu.dot_dimension_numbers<[1], [0], [0], [1], [0, 0, 1, 1], [], []>} : vector<2x16xf32>, vector<16x192xf32>, vector<2x192xf32> -> vector<2x192xf32>
    %cst_170 = arith.constant dense<0.000000e+00> : vector<2x192xf32>
    %606 = tpu.matmul %604, %7, %cst_170 {dimension_numbers = #tpu.dot_dimension_numbers<[1], [0], [0], [1], [0, 0, 1, 1], [], []>} : vector<2x64xf32>, vector<64x192xf32>, vector<2x192xf32> -> vector<2x192xf32>
    %607 = arith.addf %605, %606 : vector<2x192xf32>
    %cst_171 = arith.constant dense<0.000000e+00> : vector<2x192xf32>
    %608 = tpu.matmul %579, %8, %cst_171 {dimension_numbers = #tpu.dot_dimension_numbers<[1], [0], [0], [1], [0, 0, 1, 1], [], []>} : vector<2x64xf32>, vector<64x192xf32>, vector<2x192xf32> -> vector<2x192xf32>
    %609 = vector.extract_strided_slice %607 {offsets = [0, 0], sizes = [2, 64], strides = [1, 1]} : vector<2x192xf32> to vector<2x64xf32>
    %610 = vector.extract_strided_slice %608 {offsets = [0, 0], sizes = [2, 64], strides = [1, 1]} : vector<2x192xf32> to vector<2x64xf32>
    %611 = arith.addf %609, %610 : vector<2x64xf32>
    %612 = arith.negf %611 : vector<2x64xf32>
    %613 = math.exp %612 : vector<2x64xf32>
    %cst_172 = arith.constant 1.000000e+00 : f32
    %614 = vector.broadcast %cst_172 : f32 to vector<2x64xf32>
    %615 = arith.addf %614, %613 : vector<2x64xf32>
    %616 = arith.divf %614, %615 : vector<2x64xf32>
    %617 = vector.extract_strided_slice %607 {offsets = [0, 64], sizes = [2, 64], strides = [1, 1]} : vector<2x192xf32> to vector<2x64xf32>
    %618 = vector.extract_strided_slice %608 {offsets = [0, 64], sizes = [2, 64], strides = [1, 1]} : vector<2x192xf32> to vector<2x64xf32>
    %619 = arith.addf %617, %618 : vector<2x64xf32>
    %620 = arith.negf %619 : vector<2x64xf32>
    %621 = math.exp %620 : vector<2x64xf32>
    %cst_173 = arith.constant 1.000000e+00 : f32
    %622 = vector.broadcast %cst_173 : f32 to vector<2x64xf32>
    %623 = arith.addf %622, %621 : vector<2x64xf32>
    %624 = arith.divf %622, %623 : vector<2x64xf32>
    %625 = vector.extract_strided_slice %607 {offsets = [0, 128], sizes = [2, 64], strides = [1, 1]} : vector<2x192xf32> to vector<2x64xf32>
    %626 = vector.extract_strided_slice %608 {offsets = [0, 128], sizes = [2, 64], strides = [1, 1]} : vector<2x192xf32> to vector<2x64xf32>
    %627 = arith.mulf %616, %626 : vector<2x64xf32>
    %628 = arith.addf %625, %627 : vector<2x64xf32>
    %629 = math.tanh %628 : vector<2x64xf32>
    %cst_174 = arith.constant 1.000000e+00 : f32
    %630 = vector.broadcast %cst_174 : f32 to vector<2x64xf32>
    %631 = arith.subf %630, %624 : vector<2x64xf32>
    %632 = arith.mulf %631, %629 : vector<2x64xf32>
    %633 = arith.mulf %624, %579 : vector<2x64xf32>
    %634 = arith.addf %632, %633 : vector<2x64xf32>
    %cst_175 = arith.constant dense<0.000000e+00> : vector<2x16xf32>
    %635 = tpu.matmul %634, %9, %cst_175 {dimension_numbers = #tpu.dot_dimension_numbers<[1], [0], [0], [1], [0, 0, 1, 1], [], []>} : vector<2x64xf32>, vector<64x16xf32>, vector<2x16xf32> -> vector<2x16xf32>
    %cst_176 = arith.constant dense<0.000000e+00> : vector<2x16xf32>
    %636 = tpu.matmul %604, %10, %cst_176 {dimension_numbers = #tpu.dot_dimension_numbers<[1], [0], [0], [1], [0, 0, 1, 1], [], []>} : vector<2x64xf32>, vector<64x16xf32>, vector<2x16xf32> -> vector<2x16xf32>
    %637 = arith.addf %635, %636 : vector<2x16xf32>
    %638 = vector.broadcast %11 : vector<1x16xf32> to vector<2x16xf32>
    %639 = arith.addf %637, %638 : vector<2x16xf32>
    %cst_177 = arith.constant dense<0xFF800000> : vector<2xf32>
    %640 = vector.multi_reduction <maximumf>, %639, %cst_177 [1] : vector<2x16xf32> to vector<2xf32>
    %641 = vector.shape_cast %640 : vector<2xf32> to vector<2x1xf32>
    %642 = vector.broadcast %641 : vector<2x1xf32> to vector<2x16xf32>
    %643 = arith.subf %639, %642 : vector<2x16xf32>
    %644 = math.exp %643 : vector<2x16xf32>
    %cst_178 = arith.constant dense<0.000000e+00> : vector<2xf32>
    %645 = vector.multi_reduction <add>, %644, %cst_178 [1] : vector<2x16xf32> to vector<2xf32>
    %646 = vector.shape_cast %645 : vector<2xf32> to vector<2x1xf32>
    %647 = math.log %646 : vector<2x1xf32>
    %648 = vector.broadcast %647 : vector<2x1xf32> to vector<2x16xf32>
    %649 = arith.subf %643, %648 : vector<2x16xf32>
    %cst_179 = arith.constant 0.000000e+00 : f32
    %650 = vector.shape_cast %583 : vector<1x1xi1> to vector<1x1xi1>
    %651 = vector.broadcast %650 : vector<1x1xi1> to vector<2x16xi1>
    %652 = vector.broadcast %cst_179 : f32 to vector<2x16xf32>
    %653 = arith.select %651, %652, %649 : vector<2x16xi1>, vector<2x16xf32>
    %654 = arith.index_cast %c5_i32 : i32 to index
    %c0_180 = arith.constant 0 : index
    %c0_181 = arith.constant 0 : index
    %655 = vector.load %arg13[%654, %c0_180, %c0_181] : memref<8x2x16xf32, #tpu.memory_space<vmem>>, vector<1x2x16xf32>
    %656 = vector.shape_cast %655 : vector<1x2x16xf32> to vector<2x16xf32>
    %657 = vector.shape_cast %653 : vector<2x16xf32> to vector<1x2x16xf32>
    tpu.vector_store %arg13[%654, %c0_180, %c0_181], %657 {strides = array<i32>} : memref<8x2x16xf32, #tpu.memory_space<vmem>>, vector<1x2x16xf32>,
    %cst_182 = arith.constant dense<0xFF800000> : vector<2xf32>
    %658 = vector.multi_reduction <maximumf>, %649, %cst_182 [1] : vector<2x16xf32> to vector<2xf32>
    %659 = vector.shape_cast %658 : vector<2xf32> to vector<2x1xf32>
    %660 = vector.broadcast %659 : vector<2x1xf32> to vector<2x16xf32>
    %661 = arith.cmpf oeq, %649, %660 : vector<2x16xf32>
    %c16_i32_183 = arith.constant 16 : i32
    %662 = vector.broadcast %c16_i32_183 : i32 to vector<2x16xi32>
    %663 = arith.select %661, %18, %662 : vector<2x16xi1>, vector<2x16xi32>
    %cst_184 = arith.constant dense<2147483647> : vector<2xi32>
    %664 = vector.multi_reduction <minsi>, %663, %cst_184 [1] : vector<2x16xi32> to vector<2xi32>
    %665 = vector.shape_cast %664 : vector<2xi32> to vector<2x1xi32>
    %c2_i32_185 = arith.constant 2 : i32
    %666 = vector.broadcast %c2_i32_185 : i32 to vector<2x1xi32>
    %667 = arith.cmpi eq, %665, %666 : vector<2x1xi32>
    %668 = vector.broadcast %665 : vector<2x1xi32> to vector<2x16xi32>
    %669 = arith.cmpi eq, %18, %668 : vector<2x16xi32>
    %670 = arith.extui %669 : vector<2x16xi1> to vector<2x16xi32>
    %671 = arith.sitofp %670 : vector<2x16xi32> to vector<2x16xf32>
    %cst_186 = arith.constant dense<0.000000e+00> : vector<2x16xf32>
    %672 = tpu.matmul %671, %1, %cst_186 {dimension_numbers = #tpu.dot_dimension_numbers<[1], [0], [0], [1], [0, 0, 1, 1], [], []>} : vector<2x16xf32>, vector<16x16xf32>, vector<2x16xf32> -> vector<2x16xf32>
    %cst_187 = arith.constant dense<true> : vector<1x1xi1>
    %673 = arith.xori %583, %cst_187 : vector<1x1xi1>
    %674 = vector.broadcast %673 : vector<1x1xi1> to vector<2x1xi1>
    %675 = arith.andi %667, %674 : vector<2x1xi1>
    %c1_i32_188 = arith.constant 1 : i32
    %676 = arith.addi %c5_i32, %c1_i32_188 : i32
    %677 = vector.broadcast %676 : i32 to vector<2x1xi32>
    %678 = arith.select %675, %677, %567 : vector<2x1xi1>, vector<2x1xi32>
    %679 = arith.extui %667 : vector<2x1xi1> to vector<2x1xi32>
    %680 = arith.sitofp %679 : vector<2x1xi32> to vector<2x1xf32>
    %681 = arith.maximumf %573, %680 : vector<2x1xf32>
    %682 = vector.shape_cast %583 : vector<1x1xi1> to vector<1x1xi1>
    %683 = vector.broadcast %682 : vector<1x1xi1> to vector<2x1xi1>
    %684 = arith.select %683, %573, %681 : vector<2x1xi1>, vector<2x1xf32>
    %685 = vector.shape_cast %583 : vector<1x1xi1> to vector<1x1xi1>
    %686 = vector.broadcast %685 : vector<1x1xi1> to vector<2x16xi1>
    %687 = arith.select %686, %576, %672 : vector<2x16xi1>, vector<2x16xf32>
    %688 = vector.shape_cast %583 : vector<1x1xi1> to vector<1x1xi1>
    %689 = vector.broadcast %688 : vector<1x1xi1> to vector<2x64xi1>
    %690 = arith.select %689, %579, %634 : vector<2x64xi1>, vector<2x64xf32>
    %c6_i32 = arith.constant 6 : i32
    %cst_189 = arith.constant dense<0.000000e+00> : vector<1xf32>
    %691 = vector.multi_reduction <add>, %684, %cst_189 [0] : vector<2x1xf32> to vector<1xf32>
    %692 = vector.shape_cast %691 : vector<1xf32> to vector<1x1xf32>
    %cst_190 = arith.constant 2.000000e+00 : f32
    %693 = vector.broadcast %cst_190 : f32 to vector<1x1xf32>
    %694 = arith.cmpf oge, %692, %693 : vector<1x1xf32>
    %cst_191 = arith.constant dense<0.000000e+00> : vector<2x32xf32>
    %695 = tpu.matmul %690, %2, %cst_191 {dimension_numbers = #tpu.dot_dimension_numbers<[1], [0], [0], [1], [0, 0, 1, 1], [], []>} : vector<2x64xf32>, vector<64x32xf32>, vector<2x32xf32> -> vector<2x32xf32>
    %696 = vector.shape_cast %695 : vector<2x32xf32> to vector<2x1x32xf32>
    %697 = vector.broadcast %696 : vector<2x1x32xf32> to vector<2x8x32xf32>
    %698 = arith.addf %16, %697 : vector<2x8x32xf32>
    %699 = math.tanh %698 : vector<2x8x32xf32>
    %700 = vector.broadcast %17 : vector<1x1x32xf32> to vector<2x8x32xf32>
    %701 = arith.mulf %699, %700 : vector<2x8x32xf32>
    %cst_192 = arith.constant dense<0.000000e+00> : vector<2x8xf32>
    %702 = vector.multi_reduction <add>, %701, %cst_192 [2] : vector<2x8x32xf32> to vector<2x8xf32>
    %cst_193 = arith.constant dense<0xFF800000> : vector<2xf32>
    %703 = vector.multi_reduction <maximumf>, %702, %cst_193 [1] : vector<2x8xf32> to vector<2xf32>
    %704 = vector.shape_cast %703 : vector<2xf32> to vector<2x1xf32>
    %705 = vector.broadcast %704 : vector<2x1xf32> to vector<2x8xf32>
    %706 = arith.subf %702, %705 : vector<2x8xf32>
    %707 = math.exp %706 : vector<2x8xf32>
    %cst_194 = arith.constant dense<0.000000e+00> : vector<2xf32>
    %708 = vector.multi_reduction <add>, %707, %cst_194 [1] : vector<2x8xf32> to vector<2xf32>
    %709 = vector.shape_cast %708 : vector<2xf32> to vector<2x1xf32>
    %710 = vector.broadcast %709 : vector<2x1xf32> to vector<2x8xf32>
    %711 = arith.divf %707, %710 : vector<2x8xf32>
    %712 = vector.shape_cast %711 : vector<2x8xf32> to vector<2x8x1xf32>
    %713 = vector.broadcast %712 : vector<2x8x1xf32> to vector<2x8x64xf32>
    %714 = arith.mulf %713, %0 : vector<2x8x64xf32>
    %cst_195 = arith.constant dense<0.000000e+00> : vector<2x64xf32>
    %715 = vector.multi_reduction <add>, %714, %cst_195 [1] : vector<2x8x64xf32> to vector<2x64xf32>
    %cst_196 = arith.constant dense<0.000000e+00> : vector<2x192xf32>
    %716 = tpu.matmul %687, %6, %cst_196 {dimension_numbers = #tpu.dot_dimension_numbers<[1], [0], [0], [1], [0, 0, 1, 1], [], []>} : vector<2x16xf32>, vector<16x192xf32>, vector<2x192xf32> -> vector<2x192xf32>
    %cst_197 = arith.constant dense<0.000000e+00> : vector<2x192xf32>
    %717 = tpu.matmul %715, %7, %cst_197 {dimension_numbers = #tpu.dot_dimension_numbers<[1], [0], [0], [1], [0, 0, 1, 1], [], []>} : vector<2x64xf32>, vector<64x192xf32>, vector<2x192xf32> -> vector<2x192xf32>
    %718 = arith.addf %716, %717 : vector<2x192xf32>
    %cst_198 = arith.constant dense<0.000000e+00> : vector<2x192xf32>
    %719 = tpu.matmul %690, %8, %cst_198 {dimension_numbers = #tpu.dot_dimension_numbers<[1], [0], [0], [1], [0, 0, 1, 1], [], []>} : vector<2x64xf32>, vector<64x192xf32>, vector<2x192xf32> -> vector<2x192xf32>
    %720 = vector.extract_strided_slice %718 {offsets = [0, 0], sizes = [2, 64], strides = [1, 1]} : vector<2x192xf32> to vector<2x64xf32>
    %721 = vector.extract_strided_slice %719 {offsets = [0, 0], sizes = [2, 64], strides = [1, 1]} : vector<2x192xf32> to vector<2x64xf32>
    %722 = arith.addf %720, %721 : vector<2x64xf32>
    %723 = arith.negf %722 : vector<2x64xf32>
    %724 = math.exp %723 : vector<2x64xf32>
    %cst_199 = arith.constant 1.000000e+00 : f32
    %725 = vector.broadcast %cst_199 : f32 to vector<2x64xf32>
    %726 = arith.addf %725, %724 : vector<2x64xf32>
    %727 = arith.divf %725, %726 : vector<2x64xf32>
    %728 = vector.extract_strided_slice %718 {offsets = [0, 64], sizes = [2, 64], strides = [1, 1]} : vector<2x192xf32> to vector<2x64xf32>
    %729 = vector.extract_strided_slice %719 {offsets = [0, 64], sizes = [2, 64], strides = [1, 1]} : vector<2x192xf32> to vector<2x64xf32>
    %730 = arith.addf %728, %729 : vector<2x64xf32>
    %731 = arith.negf %730 : vector<2x64xf32>
    %732 = math.exp %731 : vector<2x64xf32>
    %cst_200 = arith.constant 1.000000e+00 : f32
    %733 = vector.broadcast %cst_200 : f32 to vector<2x64xf32>
    %734 = arith.addf %733, %732 : vector<2x64xf32>
    %735 = arith.divf %733, %734 : vector<2x64xf32>
    %736 = vector.extract_strided_slice %718 {offsets = [0, 128], sizes = [2, 64], strides = [1, 1]} : vector<2x192xf32> to vector<2x64xf32>
    %737 = vector.extract_strided_slice %719 {offsets = [0, 128], sizes = [2, 64], strides = [1, 1]} : vector<2x192xf32> to vector<2x64xf32>
    %738 = arith.mulf %727, %737 : vector<2x64xf32>
    %739 = arith.addf %736, %738 : vector<2x64xf32>
    %740 = math.tanh %739 : vector<2x64xf32>
    %cst_201 = arith.constant 1.000000e+00 : f32
    %741 = vector.broadcast %cst_201 : f32 to vector<2x64xf32>
    %742 = arith.subf %741, %735 : vector<2x64xf32>
    %743 = arith.mulf %742, %740 : vector<2x64xf32>
    %744 = arith.mulf %735, %690 : vector<2x64xf32>
    %745 = arith.addf %743, %744 : vector<2x64xf32>
    %cst_202 = arith.constant dense<0.000000e+00> : vector<2x16xf32>
    %746 = tpu.matmul %745, %9, %cst_202 {dimension_numbers = #tpu.dot_dimension_numbers<[1], [0], [0], [1], [0, 0, 1, 1], [], []>} : vector<2x64xf32>, vector<64x16xf32>, vector<2x16xf32> -> vector<2x16xf32>
    %cst_203 = arith.constant dense<0.000000e+00> : vector<2x16xf32>
    %747 = tpu.matmul %715, %10, %cst_203 {dimension_numbers = #tpu.dot_dimension_numbers<[1], [0], [0], [1], [0, 0, 1, 1], [], []>} : vector<2x64xf32>, vector<64x16xf32>, vector<2x16xf32> -> vector<2x16xf32>
    %748 = arith.addf %746, %747 : vector<2x16xf32>
    %749 = vector.broadcast %11 : vector<1x16xf32> to vector<2x16xf32>
    %750 = arith.addf %748, %749 : vector<2x16xf32>
    %cst_204 = arith.constant dense<0xFF800000> : vector<2xf32>
    %751 = vector.multi_reduction <maximumf>, %750, %cst_204 [1] : vector<2x16xf32> to vector<2xf32>
    %752 = vector.shape_cast %751 : vector<2xf32> to vector<2x1xf32>
    %753 = vector.broadcast %752 : vector<2x1xf32> to vector<2x16xf32>
    %754 = arith.subf %750, %753 : vector<2x16xf32>
    %755 = math.exp %754 : vector<2x16xf32>
    %cst_205 = arith.constant dense<0.000000e+00> : vector<2xf32>
    %756 = vector.multi_reduction <add>, %755, %cst_205 [1] : vector<2x16xf32> to vector<2xf32>
    %757 = vector.shape_cast %756 : vector<2xf32> to vector<2x1xf32>
    %758 = math.log %757 : vector<2x1xf32>
    %759 = vector.broadcast %758 : vector<2x1xf32> to vector<2x16xf32>
    %760 = arith.subf %754, %759 : vector<2x16xf32>
    %cst_206 = arith.constant 0.000000e+00 : f32
    %761 = vector.shape_cast %694 : vector<1x1xi1> to vector<1x1xi1>
    %762 = vector.broadcast %761 : vector<1x1xi1> to vector<2x16xi1>
    %763 = vector.broadcast %cst_206 : f32 to vector<2x16xf32>
    %764 = arith.select %762, %763, %760 : vector<2x16xi1>, vector<2x16xf32>
    %765 = arith.index_cast %c6_i32 : i32 to index
    %c0_207 = arith.constant 0 : index
    %c0_208 = arith.constant 0 : index
    %766 = vector.load %arg13[%765, %c0_207, %c0_208] : memref<8x2x16xf32, #tpu.memory_space<vmem>>, vector<1x2x16xf32>
    %767 = vector.shape_cast %766 : vector<1x2x16xf32> to vector<2x16xf32>
    %768 = vector.shape_cast %764 : vector<2x16xf32> to vector<1x2x16xf32>
    tpu.vector_store %arg13[%765, %c0_207, %c0_208], %768 {strides = array<i32>} : memref<8x2x16xf32, #tpu.memory_space<vmem>>, vector<1x2x16xf32>,
    %cst_209 = arith.constant dense<0xFF800000> : vector<2xf32>
    %769 = vector.multi_reduction <maximumf>, %760, %cst_209 [1] : vector<2x16xf32> to vector<2xf32>
    %770 = vector.shape_cast %769 : vector<2xf32> to vector<2x1xf32>
    %771 = vector.broadcast %770 : vector<2x1xf32> to vector<2x16xf32>
    %772 = arith.cmpf oeq, %760, %771 : vector<2x16xf32>
    %c16_i32_210 = arith.constant 16 : i32
    %773 = vector.broadcast %c16_i32_210 : i32 to vector<2x16xi32>
    %774 = arith.select %772, %18, %773 : vector<2x16xi1>, vector<2x16xi32>
    %cst_211 = arith.constant dense<2147483647> : vector<2xi32>
    %775 = vector.multi_reduction <minsi>, %774, %cst_211 [1] : vector<2x16xi32> to vector<2xi32>
    %776 = vector.shape_cast %775 : vector<2xi32> to vector<2x1xi32>
    %c2_i32_212 = arith.constant 2 : i32
    %777 = vector.broadcast %c2_i32_212 : i32 to vector<2x1xi32>
    %778 = arith.cmpi eq, %776, %777 : vector<2x1xi32>
    %779 = vector.broadcast %776 : vector<2x1xi32> to vector<2x16xi32>
    %780 = arith.cmpi eq, %18, %779 : vector<2x16xi32>
    %781 = arith.extui %780 : vector<2x16xi1> to vector<2x16xi32>
    %782 = arith.sitofp %781 : vector<2x16xi32> to vector<2x16xf32>
    %cst_213 = arith.constant dense<0.000000e+00> : vector<2x16xf32>
    %783 = tpu.matmul %782, %1, %cst_213 {dimension_numbers = #tpu.dot_dimension_numbers<[1], [0], [0], [1], [0, 0, 1, 1], [], []>} : vector<2x16xf32>, vector<16x16xf32>, vector<2x16xf32> -> vector<2x16xf32>
    %cst_214 = arith.constant dense<true> : vector<1x1xi1>
    %784 = arith.xori %694, %cst_214 : vector<1x1xi1>
    %785 = vector.broadcast %784 : vector<1x1xi1> to vector<2x1xi1>
    %786 = arith.andi %778, %785 : vector<2x1xi1>
    %c1_i32_215 = arith.constant 1 : i32
    %787 = arith.addi %c6_i32, %c1_i32_215 : i32
    %788 = vector.broadcast %787 : i32 to vector<2x1xi32>
    %789 = arith.select %786, %788, %678 : vector<2x1xi1>, vector<2x1xi32>
    %790 = arith.extui %778 : vector<2x1xi1> to vector<2x1xi32>
    %791 = arith.sitofp %790 : vector<2x1xi32> to vector<2x1xf32>
    %792 = arith.maximumf %684, %791 : vector<2x1xf32>
    %793 = vector.shape_cast %694 : vector<1x1xi1> to vector<1x1xi1>
    %794 = vector.broadcast %793 : vector<1x1xi1> to vector<2x1xi1>
    %795 = arith.select %794, %684, %792 : vector<2x1xi1>, vector<2x1xf32>
    %796 = vector.shape_cast %694 : vector<1x1xi1> to vector<1x1xi1>
    %797 = vector.broadcast %796 : vector<1x1xi1> to vector<2x16xi1>
    %798 = arith.select %797, %687, %783 : vector<2x16xi1>, vector<2x16xf32>
    %799 = vector.shape_cast %694 : vector<1x1xi1> to vector<1x1xi1>
    %800 = vector.broadcast %799 : vector<1x1xi1> to vector<2x64xi1>
    %801 = arith.select %800, %690, %745 : vector<2x64xi1>, vector<2x64xf32>
    %c7_i32 = arith.constant 7 : i32
    %cst_216 = arith.constant dense<0.000000e+00> : vector<1xf32>
    %802 = vector.multi_reduction <add>, %795, %cst_216 [0] : vector<2x1xf32> to vector<1xf32>
    %803 = vector.shape_cast %802 : vector<1xf32> to vector<1x1xf32>
    %cst_217 = arith.constant 2.000000e+00 : f32
    %804 = vector.broadcast %cst_217 : f32 to vector<1x1xf32>
    %805 = arith.cmpf oge, %803, %804 : vector<1x1xf32>
    %cst_218 = arith.constant dense<0.000000e+00> : vector<2x32xf32>
    %806 = tpu.matmul %801, %2, %cst_218 {dimension_numbers = #tpu.dot_dimension_numbers<[1], [0], [0], [1], [0, 0, 1, 1], [], []>} : vector<2x64xf32>, vector<64x32xf32>, vector<2x32xf32> -> vector<2x32xf32>
    %807 = vector.shape_cast %806 : vector<2x32xf32> to vector<2x1x32xf32>
    %808 = vector.broadcast %807 : vector<2x1x32xf32> to vector<2x8x32xf32>
    %809 = arith.addf %16, %808 : vector<2x8x32xf32>
    %810 = math.tanh %809 : vector<2x8x32xf32>
    %811 = vector.broadcast %17 : vector<1x1x32xf32> to vector<2x8x32xf32>
    %812 = arith.mulf %810, %811 : vector<2x8x32xf32>
    %cst_219 = arith.constant dense<0.000000e+00> : vector<2x8xf32>
    %813 = vector.multi_reduction <add>, %812, %cst_219 [2] : vector<2x8x32xf32> to vector<2x8xf32>
    %cst_220 = arith.constant dense<0xFF800000> : vector<2xf32>
    %814 = vector.multi_reduction <maximumf>, %813, %cst_220 [1] : vector<2x8xf32> to vector<2xf32>
    %815 = vector.shape_cast %814 : vector<2xf32> to vector<2x1xf32>
    %816 = vector.broadcast %815 : vector<2x1xf32> to vector<2x8xf32>
    %817 = arith.subf %813, %816 : vector<2x8xf32>
    %818 = math.exp %817 : vector<2x8xf32>
    %cst_221 = arith.constant dense<0.000000e+00> : vector<2xf32>
    %819 = vector.multi_reduction <add>, %818, %cst_221 [1] : vector<2x8xf32> to vector<2xf32>
    %820 = vector.shape_cast %819 : vector<2xf32> to vector<2x1xf32>
    %821 = vector.broadcast %820 : vector<2x1xf32> to vector<2x8xf32>
    %822 = arith.divf %818, %821 : vector<2x8xf32>
    %823 = vector.shape_cast %822 : vector<2x8xf32> to vector<2x8x1xf32>
    %824 = vector.broadcast %823 : vector<2x8x1xf32> to vector<2x8x64xf32>
    %825 = arith.mulf %824, %0 : vector<2x8x64xf32>
    %cst_222 = arith.constant dense<0.000000e+00> : vector<2x64xf32>
    %826 = vector.multi_reduction <add>, %825, %cst_222 [1] : vector<2x8x64xf32> to vector<2x64xf32>
    %cst_223 = arith.constant dense<0.000000e+00> : vector<2x192xf32>
    %827 = tpu.matmul %798, %6, %cst_223 {dimension_numbers = #tpu.dot_dimension_numbers<[1], [0], [0], [1], [0, 0, 1, 1], [], []>} : vector<2x16xf32>, vector<16x192xf32>, vector<2x192xf32> -> vector<2x192xf32>
    %cst_224 = arith.constant dense<0.000000e+00> : vector<2x192xf32>
    %828 = tpu.matmul %826, %7, %cst_224 {dimension_numbers = #tpu.dot_dimension_numbers<[1], [0], [0], [1], [0, 0, 1, 1], [], []>} : vector<2x64xf32>, vector<64x192xf32>, vector<2x192xf32> -> vector<2x192xf32>
    %829 = arith.addf %827, %828 : vector<2x192xf32>
    %cst_225 = arith.constant dense<0.000000e+00> : vector<2x192xf32>
    %830 = tpu.matmul %801, %8, %cst_225 {dimension_numbers = #tpu.dot_dimension_numbers<[1], [0], [0], [1], [0, 0, 1, 1], [], []>} : vector<2x64xf32>, vector<64x192xf32>, vector<2x192xf32> -> vector<2x192xf32>
    %831 = vector.extract_strided_slice %829 {offsets = [0, 0], sizes = [2, 64], strides = [1, 1]} : vector<2x192xf32> to vector<2x64xf32>
    %832 = vector.extract_strided_slice %830 {offsets = [0, 0], sizes = [2, 64], strides = [1, 1]} : vector<2x192xf32> to vector<2x64xf32>
    %833 = arith.addf %831, %832 : vector<2x64xf32>
    %834 = arith.negf %833 : vector<2x64xf32>
    %835 = math.exp %834 : vector<2x64xf32>
    %cst_226 = arith.constant 1.000000e+00 : f32
    %836 = vector.broadcast %cst_226 : f32 to vector<2x64xf32>
    %837 = arith.addf %836, %835 : vector<2x64xf32>
    %838 = arith.divf %836, %837 : vector<2x64xf32>
    %839 = vector.extract_strided_slice %829 {offsets = [0, 64], sizes = [2, 64], strides = [1, 1]} : vector<2x192xf32> to vector<2x64xf32>
    %840 = vector.extract_strided_slice %830 {offsets = [0, 64], sizes = [2, 64], strides = [1, 1]} : vector<2x192xf32> to vector<2x64xf32>
    %841 = arith.addf %839, %840 : vector<2x64xf32>
    %842 = arith.negf %841 : vector<2x64xf32>
    %843 = math.exp %842 : vector<2x64xf32>
    %cst_227 = arith.constant 1.000000e+00 : f32
    %844 = vector.broadcast %cst_227 : f32 to vector<2x64xf32>
    %845 = arith.addf %844, %843 : vector<2x64xf32>
    %846 = arith.divf %844, %845 : vector<2x64xf32>
    %847 = vector.extract_strided_slice %829 {offsets = [0, 128], sizes = [2, 64], strides = [1, 1]} : vector<2x192xf32> to vector<2x64xf32>
    %848 = vector.extract_strided_slice %830 {offsets = [0, 128], sizes = [2, 64], strides = [1, 1]} : vector<2x192xf32> to vector<2x64xf32>
    %849 = arith.mulf %838, %848 : vector<2x64xf32>
    %850 = arith.addf %847, %849 : vector<2x64xf32>
    %851 = math.tanh %850 : vector<2x64xf32>
    %cst_228 = arith.constant 1.000000e+00 : f32
    %852 = vector.broadcast %cst_228 : f32 to vector<2x64xf32>
    %853 = arith.subf %852, %846 : vector<2x64xf32>
    %854 = arith.mulf %853, %851 : vector<2x64xf32>
    %855 = arith.mulf %846, %801 : vector<2x64xf32>
    %856 = arith.addf %854, %855 : vector<2x64xf32>
    %cst_229 = arith.constant dense<0.000000e+00> : vector<2x16xf32>
    %857 = tpu.matmul %856, %9, %cst_229 {dimension_numbers = #tpu.dot_dimension_numbers<[1], [0], [0], [1], [0, 0, 1, 1], [], []>} : vector<2x64xf32>, vector<64x16xf32>, vector<2x16xf32> -> vector<2x16xf32>
    %cst_230 = arith.constant dense<0.000000e+00> : vector<2x16xf32>
    %858 = tpu.matmul %826, %10, %cst_230 {dimension_numbers = #tpu.dot_dimension_numbers<[1], [0], [0], [1], [0, 0, 1, 1], [], []>} : vector<2x64xf32>, vector<64x16xf32>, vector<2x16xf32> -> vector<2x16xf32>
    %859 = arith.addf %857, %858 : vector<2x16xf32>
    %860 = vector.broadcast %11 : vector<1x16xf32> to vector<2x16xf32>
    %861 = arith.addf %859, %860 : vector<2x16xf32>
    %cst_231 = arith.constant dense<0xFF800000> : vector<2xf32>
    %862 = vector.multi_reduction <maximumf>, %861, %cst_231 [1] : vector<2x16xf32> to vector<2xf32>
    %863 = vector.shape_cast %862 : vector<2xf32> to vector<2x1xf32>
    %864 = vector.broadcast %863 : vector<2x1xf32> to vector<2x16xf32>
    %865 = arith.subf %861, %864 : vector<2x16xf32>
    %866 = math.exp %865 : vector<2x16xf32>
    %cst_232 = arith.constant dense<0.000000e+00> : vector<2xf32>
    %867 = vector.multi_reduction <add>, %866, %cst_232 [1] : vector<2x16xf32> to vector<2xf32>
    %868 = vector.shape_cast %867 : vector<2xf32> to vector<2x1xf32>
    %869 = math.log %868 : vector<2x1xf32>
    %870 = vector.broadcast %869 : vector<2x1xf32> to vector<2x16xf32>
    %871 = arith.subf %865, %870 : vector<2x16xf32>
    %cst_233 = arith.constant 0.000000e+00 : f32
    %872 = vector.shape_cast %805 : vector<1x1xi1> to vector<1x1xi1>
    %873 = vector.broadcast %872 : vector<1x1xi1> to vector<2x16xi1>
    %874 = vector.broadcast %cst_233 : f32 to vector<2x16xf32>
    %875 = arith.select %873, %874, %871 : vector<2x16xi1>, vector<2x16xf32>
    %876 = arith.index_cast %c7_i32 : i32 to index
    %c0_234 = arith.constant 0 : index
    %c0_235 = arith.constant 0 : index
    %877 = vector.load %arg13[%876, %c0_234, %c0_235] : memref<8x2x16xf32, #tpu.memory_space<vmem>>, vector<1x2x16xf32>
    %878 = vector.shape_cast %877 : vector<1x2x16xf32> to vector<2x16xf32>
    %879 = vector.shape_cast %875 : vector<2x16xf32> to vector<1x2x16xf32>
    tpu.vector_store %arg13[%876, %c0_234, %c0_235], %879 {strides = array<i32>} : memref<8x2x16xf32, #tpu.memory_space<vmem>>, vector<1x2x16xf32>,
    %cst_236 = arith.constant dense<0xFF800000> : vector<2xf32>
    %880 = vector.multi_reduction <maximumf>, %871, %cst_236 [1] : vector<2x16xf32> to vector<2xf32>
    %881 = vector.shape_cast %880 : vector<2xf32> to vector<2x1xf32>
    %882 = vector.broadcast %881 : vector<2x1xf32> to vector<2x16xf32>
    %883 = arith.cmpf oeq, %871, %882 : vector<2x16xf32>
    %c16_i32_237 = arith.constant 16 : i32
    %884 = vector.broadcast %c16_i32_237 : i32 to vector<2x16xi32>
    %885 = arith.select %883, %18, %884 : vector<2x16xi1>, vector<2x16xi32>
    %cst_238 = arith.constant dense<2147483647> : vector<2xi32>
    %886 = vector.multi_reduction <minsi>, %885, %cst_238 [1] : vector<2x16xi32> to vector<2xi32>
    %887 = vector.shape_cast %886 : vector<2xi32> to vector<2x1xi32>
    %c2_i32_239 = arith.constant 2 : i32
    %888 = vector.broadcast %c2_i32_239 : i32 to vector<2x1xi32>
    %889 = arith.cmpi eq, %887, %888 : vector<2x1xi32>
    %890 = vector.broadcast %887 : vector<2x1xi32> to vector<2x16xi32>
    %891 = arith.cmpi eq, %18, %890 : vector<2x16xi32>
    %892 = arith.extui %891 : vector<2x16xi1> to vector<2x16xi32>
    %893 = arith.sitofp %892 : vector<2x16xi32> to vector<2x16xf32>
    %cst_240 = arith.constant dense<0.000000e+00> : vector<2x16xf32>
    %894 = tpu.matmul %893, %1, %cst_240 {dimension_numbers = #tpu.dot_dimension_numbers<[1], [0], [0], [1], [0, 0, 1, 1], [], []>} : vector<2x16xf32>, vector<16x16xf32>, vector<2x16xf32> -> vector<2x16xf32>
    %cst_241 = arith.constant dense<true> : vector<1x1xi1>
    %895 = arith.xori %805, %cst_241 : vector<1x1xi1>
    %896 = vector.broadcast %895 : vector<1x1xi1> to vector<2x1xi1>
    %897 = arith.andi %889, %896 : vector<2x1xi1>
    %c1_i32_242 = arith.constant 1 : i32
    %898 = arith.addi %c7_i32, %c1_i32_242 : i32
    %899 = vector.broadcast %898 : i32 to vector<2x1xi32>
    %900 = arith.select %897, %899, %789 : vector<2x1xi1>, vector<2x1xi32>
    %901 = arith.extui %889 : vector<2x1xi1> to vector<2x1xi32>
    %902 = arith.sitofp %901 : vector<2x1xi32> to vector<2x1xf32>
    %903 = arith.maximumf %795, %902 : vector<2x1xf32>
    %904 = vector.shape_cast %805 : vector<1x1xi1> to vector<1x1xi1>
    %905 = vector.broadcast %904 : vector<1x1xi1> to vector<2x1xi1>
    %906 = arith.select %905, %795, %903 : vector<2x1xi1>, vector<2x1xf32>
    %907 = vector.shape_cast %805 : vector<1x1xi1> to vector<1x1xi1>
    %908 = vector.broadcast %907 : vector<1x1xi1> to vector<2x16xi1>
    %909 = arith.select %908, %798, %894 : vector<2x16xi1>, vector<2x16xf32>
    %910 = vector.shape_cast %805 : vector<1x1xi1> to vector<1x1xi1>
    %911 = vector.broadcast %910 : vector<1x1xi1> to vector<2x64xi1>
    %912 = arith.select %911, %801, %856 : vector<2x64xi1>, vector<2x64xf32>
    %c8_i32_243 = arith.constant 8 : i32
    %c0_244 = arith.constant 0 : index
    %c0_245 = arith.constant 0 : index
    %913 = vector.load %arg14[%c0_244, %c0_245] : memref<2x1xi32, #tpu.memory_space<vmem>>, vector<2x1xi32>
    tpu.vector_store %arg14[%c0_244, %c0_245], %900 {strides = array<i32>} : memref<2x1xi32, #tpu.memory_space<vmem>>, vector<2x1xi32>,
    return
  }
}

</mosaic_0001>

<llo_original>
// kernel: note_decoder_forward.1
$region0: #{note_decoder_forward.1}
  #allocation0 [shape = 'u32[]', space=smem, size = 0x4, offset = 0x4, fixed_abs, tag = 'smem constant byte address 0x4 - core index']
  #allocation1 [shape = 'u32[144,128]{1,0:T(1,128)}', space=vmem, size = 0x12000, scoped, tag = 'internal scratch']
  %s0 = inlined_call_operand.vmem [shape: f32[2,8,64], index: 0, kind: input, shape index: {}]
  %s1 = inlined_call_operand.vmem [shape: f32[2,64], index: 1, kind: input, shape index: {}]
  %s2 = inlined_call_operand.hbm [shape: f32[16,16], index: 2, kind: input, shape index: {}]
  %s3 = inlined_call_operand.vmem [shape: f32[64,32], index: 3, kind: input, shape index: {}]
  %s4 = inlined_call_operand.vmem [shape: f32[64,32], index: 4, kind: input, shape index: {}]
  %s5 = inlined_call_operand.vmem [shape: f32[1,32], index: 5, kind: input, shape index: {}]
  %s6 = inlined_call_operand.vmem [shape: f32[1,32], index: 6, kind: input, shape index: {}]
  %s7 = inlined_call_operand.vmem [shape: f32[16,192], index: 7, kind: input, shape index: {}]
  %s8 = inlined_call_operand.vmem [shape: f32[64,192], index: 8, kind: input, shape index: {}]
  %s9 = inlined_call_operand.vmem [shape: f32[64,192], index: 9, kind: input, shape index: {}]
  %s10 = inlined_call_operand.vmem [shape: f32[64,16], index: 10, kind: input, shape index: {}]
  %s11 = inlined_call_operand.vmem [shape: f32[64,16], index: 11, kind: input, shape index: {}]
  %s12 = inlined_call_operand.vmem [shape: f32[1,16], index: 12, kind: input, shape index: {}]
  %s13 = inlined_call_operand.vmem [shape: f32[8,2,16], index: 13, kind: output, shape index: {0}]
  %s14 = inlined_call_operand.vmem [shape: s32[2,1], index: 14, kind: output, shape index: {1}]
  %15 = xla_tuple %s13, %s14
  %s16 = sld [smem:[#allocation0]]
  $region74: #{note_decoder_forward.1} parent=0
    _
  %s18 = ssub.s32 1, %s16
  %s19 = scalar_select 0, %s18, %s16
  $region1: #{note_decoder_forward.1} parent=0
    #allocation2 [shape = 'u8[8192]{0}', space=vmem, size = 0x2000, scoped, tag = 'input window, operand 2, single buffered']
    #allocation3 [shape = 's32[1]{0}', space=sflag, size = 0x4, scoped, tag = 'scoped memory for note_decoder_forward.1']
    %20 = vsyncpa [#allocation3], 0
    // Predicated region
    $region2: #{note_decoder_forward.1} parent=1 // pred_check
      _
    $region3: #{note_decoder_forward.1} parent=1 // pred_check_branch
      %22 = sbr.rel (0) target = $region5
    $region4: #{note_decoder_forward.1} parent=1 // pred_region
      _
    $region5: #{note_decoder_forward.1} parent=1 // pred_fallthru
      _
    // Predicated region
    $region6: #{note_decoder_forward.1} parent=1 // pred_check
      _
    $region7: #{note_decoder_forward.1} parent=1 // pred_check_branch
      %24 = sbr.rel (0) target = $region9
    $region8: #{note_decoder_forward.1} parent=1 // pred_region
      _
    $region9: #{note_decoder_forward.1} parent=1 // pred_fallthru
      _
    // Predicated region
    $region10: #{note_decoder_forward.1} parent=1 // pred_check
      _
    $region11: #{note_decoder_forward.1} parent=1 // pred_check_branch
      %26 = sbr.rel (0) target = $region13
    $region12: #{note_decoder_forward.1} parent=1 // pred_region
      %s28 = ssub.s32 256, 256
      %29 = vsyncadd [#allocation3], %s28
      %s30 = sshll.u32 [#allocation2], 4
      %s31 = int_to_ptr.vmem [resolvable:$true] %s30
      %36 = dma.hbm_to_vmem [thread:$0]  %s2, 256, %s31, [#allocation3], 128, 128, 8
    $region13: #{note_decoder_forward.1} parent=1 // pred_fallthru
      _
    // Predicated region
    $region14: #{note_decoder_forward.1} parent=1 // pred_check
      _
    $region15: #{note_decoder_forward.1} parent=1 // pred_check_branch
      %38 = sbr.rel (0) target = $region17
    $region16: #{note_decoder_forward.1} parent=1 // pred_region
      _
    $region17: #{note_decoder_forward.1} parent=1 // pred_fallthru
      _
    // Predicated region
    $region18: #{note_decoder_forward.1} parent=1 // pred_check
      _
    $region19: #{note_decoder_forward.1} parent=1 // pred_check_branch
      %40 = sbr.rel (0) target = $region21
    $region20: #{note_decoder_forward.1} parent=1 // pred_region
      _
    $region21: #{note_decoder_forward.1} parent=1 // pred_fallthru
      _
    // Predicated region
    $region22: #{note_decoder_forward.1} parent=1 // pred_check
      _
    $region23: #{note_decoder_forward.1} parent=1 // pred_check_branch
      %42 = sbr.rel (0) target = $region25
    $region24: #{note_decoder_forward.1} parent=1 // pred_region
      _
    $region25: #{note_decoder_forward.1} parent=1 // pred_fallthru
      _
    // Predicated region
    $region26: #{note_decoder_forward.1} parent=1 // pred_check
      _
    $region27: #{note_decoder_forward.1} parent=1 // pred_check_branch
      %44 = sbr.rel (0) target = $region29
    $region28: #{note_decoder_forward.1} parent=1 // pred_region
      _
    $region29: #{note_decoder_forward.1} parent=1 // pred_fallthru
      _
    // Predicated region
    $region30: #{note_decoder_forward.1} parent=1 // pred_check
      _
    $region31: #{note_decoder_forward.1} parent=1 // pred_check_branch
      %46 = sbr.rel (0) target = $region33
    $region32: #{note_decoder_forward.1} parent=1 // pred_region
      _
    $region33: #{note_decoder_forward.1} parent=1 // pred_fallthru
      _
    // Predicated region
    $region34: #{note_decoder_forward.1} parent=1 // pred_check
      _
    $region35: #{note_decoder_forward.1} parent=1 // pred_check_branch
      %48 = sbr.rel (0) target = $region37
    $region36: #{note_decoder_forward.1} parent=1 // pred_region
      _
    $region37: #{note_decoder_forward.1} parent=1 // pred_fallthru
      _
    // Predicated region
    $region38: #{note_decoder_forward.1} parent=1 // pred_check
      _
    $region39: #{note_decoder_forward.1} parent=1 // pred_check_branch
      %50 = sbr.rel (0) target = $region41
    $region40: #{note_decoder_forward.1} parent=1 // pred_region
      _
    $region41: #{note_decoder_forward.1} parent=1 // pred_fallthru
      _
    // Predicated region
    $region42: #{note_decoder_forward.1} parent=1 // pred_check
      _
    $region43: #{note_decoder_forward.1} parent=1 // pred_check_branch
      %52 = sbr.rel (0) target = $region45
    $region44: #{note_decoder_forward.1} parent=1 // pred_region
      _
    $region45: #{note_decoder_forward.1} parent=1 // pred_fallthru
      _
    // Predicated region
    $region46: #{note_decoder_forward.1} parent=1 // pred_check
      _
    $region47: #{note_decoder_forward.1} parent=1 // pred_check_branch
      %54 = sbr.rel (0) target = $region49
    $region48: #{note_decoder_forward.1} parent=1 // pred_region
      _
    $region49: #{note_decoder_forward.1} parent=1 // pred_fallthru
      _
    // Predicated region
    $region50: #{note_decoder_forward.1} parent=1 // pred_check
      _
    $region51: #{note_decoder_forward.1} parent=1 // pred_check_branch
      %56 = sbr.rel (0) target = $region53
    $region52: #{note_decoder_forward.1} parent=1 // pred_region
      _
    $region53: #{note_decoder_forward.1} parent=1 // pred_fallthru
      _
    // Predicated region
    $region54: #{note_decoder_forward.1} parent=1 // pred_check
      _
    $region55: #{note_decoder_forward.1} parent=1 // pred_check_branch
      %58 = sbr.rel (0) target = $region57
    $region56: #{note_decoder_forward.1} parent=1 // pred_region
      %59 = dma.done [#allocation3], 256
    $region57: #{note_decoder_forward.1} parent=1 // pred_fallthru
      _
    %v60 = vld [vmem:[%s0] sm:$0xff]
    %v61 = vld [vmem:[%s0 + $0x8] sm:$0xff]
    %v62 = vld [vmem:[#allocation2] sm:$0xff]
    %v63 = vld [vmem:[#allocation2 + $0x8] sm:$0xff]
    %v64 = vld [vmem:[%s3] sm:$0xff]
    %v65 = vld [vmem:[%s3 + $0x8] sm:$0xff]
    %v66 = vld [vmem:[%s3 + $0x10] sm:$0xff]
    %v67 = vld [vmem:[%s3 + $0x18] sm:$0xff]
    %v68 = vld [vmem:[%s3 + $0x20] sm:$0xff]
    %v69 = vld [vmem:[%s3 + $0x28] sm:$0xff]
    %v70 = vld [vmem:[%s3 + $0x30] sm:$0xff]
    %v71 = vld [vmem:[%s3 + $0x38] sm:$0xff]
    %v72 = vld [vmem:[%s4] sm:$0xff]
    %v73 = vld [vmem:[%s4 + $0x8] sm:$0xff]
    %v74 = vld [vmem:[%s4 + $0x10] sm:$0xff]
    %v75 = vld [vmem:[%s4 + $0x18] sm:$0xff]
    %v76 = vld [vmem:[%s4 + $0x20] sm:$0xff]
    %v77 = vld [vmem:[%s4 + $0x28] sm:$0xff]
    %v78 = vld [vmem:[%s4 + $0x30] sm:$0xff]
    %v79 = vld [vmem:[%s4 + $0x38] sm:$0xff]
    %v80 = vld [vmem:[%s5] sm:$0x1]
    %v81 = vld [vmem:[%s6] sm:$0x1]
    %v82 = vld [vmem:[%s7] sm:$0xff]
    %v83 = vld [vmem:[%s7 + $0x8] sm:$0xff]
    %v84 = vld [vmem:[%s7 + $0x10] sm:$0xff]
    %v85 = vld [vmem:[%s7 + $0x18] sm:$0xff]
    %v86 = vld [vmem:[%s8] sm:$0xff]
    %v87 = vld [vmem:[%s8 + $0x8] sm:$0xff]
    %v88 = vld [vmem:[%s8 + $0x10] sm:$0xff]
    %v89 = vld [vmem:[%s8 + $0x18] sm:$0xff]
    %v90 = vld [vmem:[%s8 + $0x20] sm:$0xff]
    %v91 = vld [vmem:[%s8 + $0x28] sm:$0xff]
    %v92 = vld [vmem:[%s8 + $0x30] sm:$0xff]
    %v93 = vld [vmem:[%s8 + $0x38] sm:$0xff]
    %v94 = vld [vmem:[%s8 + $0x40] sm:$0xff]
    %v95 = vld [vmem:[%s8 + $0x48] sm:$0xff]
    %v96 = vld [vmem:[%s8 + $0x50] sm:$0xff]
    %v97 = vld [vmem:[%s8 + $0x58] sm:$0xff]
    %v98 = vld [vmem:[%s8 + $0x60] sm:$0xff]
    %v99 = vld [vmem:[%s8 + $0x68] sm:$0xff]
    %v100 = vld [vmem:[%s8 + $0x70] sm:$0xff]
    %v101 = vld [vmem:[%s8 + $0x78] sm:$0xff]
    %v102 = vld [vmem:[%s9] sm:$0xff]
    %v103 = vld [vmem:[%s9 + $0x8] sm:$0xff]
    %v104 = vld [vmem:[%s9 + $0x10] sm:$0xff]
    %v105 = vld [vmem:[%s9 + $0x18] sm:$0xff]
    %v106 = vld [vmem:[%s9 + $0x20] sm:$0xff]
    %v107 = vld [vmem:[%s9 + $0x28] sm:$0xff]
    %v108 = vld [vmem:[%s9 + $0x30] sm:$0xff]
    %v109 = vld [vmem:[%s9 + $0x38] sm:$0xff]
    %v110 = vld [vmem:[%s9 + $0x40] sm:$0xff]
    %v111 = vld [vmem:[%s9 + $0x48] sm:$0xff]
    %v112 = vld [vmem:[%s9 + $0x50] sm:$0xff]
    %v113 = vld [vmem:[%s9 + $0x58] sm:$0xff]
    %v114 = vld [vmem:[%s9 + $0x60] sm:$0xff]
    %v115 = vld [vmem:[%s9 + $0x68] sm:$0xff]
    %v116 = vld [vmem:[%s9 + $0x70] sm:$0xff]
    %v117 = vld [vmem:[%s9 + $0x78] sm:$0xff]
    %v118 = vld [vmem:[%s10] sm:$0xff]
    %v119 = vld [vmem:[%s10 + $0x8] sm:$0xff]
    %v120 = vld [vmem:[%s10 + $0x10] sm:$0xff]
    %v121 = vld [vmem:[%s10 + $0x18] sm:$0xff]
    %v122 = vld [vmem:[%s10 + $0x20] sm:$0xff]
    %v123 = vld [vmem:[%s10 + $0x28] sm:$0xff]
    %v124 = vld [vmem:[%s10 + $0x30] sm:$0xff]
    %v125 = vld [vmem:[%s10 + $0x38] sm:$0xff]
    %v126 = vld [vmem:[%s11] sm:$0xff]
    %v127 = vld [vmem:[%s11 + $0x8] sm:$0xff]
    %v128 = vld [vmem:[%s11 + $0x10] sm:$0xff]
    %v129 = vld [vmem:[%s11 + $0x18] sm:$0xff]
    %v130 = vld [vmem:[%s11 + $0x20] sm:$0xff]
    %v131 = vld [vmem:[%s11 + $0x28] sm:$0xff]
    %v132 = vld [vmem:[%s11 + $0x30] sm:$0xff]
    %v133 = vld [vmem:[%s11 + $0x38] sm:$0xff]
    %v134 = vld [vmem:[%s12] sm:$0x1]
    %v136 = vlaneseq
    %v137 = vshrl.u32 %v136, 7
    %v138 = vsub.s32 0, %v137
    %v139 = vrot.slane %v80, %v138
    %vm141 = vcmask 523264
    %v143 = vsel %vm141, %v60, 0
    %v146 = vsel %vm141, %v61, 0
    %148 = vmatprep.subr.mxu0 0.0
    %149 = vmatpush1.msra.mxu0 %v72
    %150 = vmatprep.subr.mxu0 0.0
    %151 = vmatpush1.msra.mxu0 %v73
    %152 = vmatprep.subr.mxu0 0.0
    %153 = vmatpush1.msra.mxu0 %v74
    %154 = vmatprep.subr.mxu0 0.0
    %155 = vmatpush1.msra.mxu0 %v75
    %156 = vmatprep.subr.mxu0 0.0
    %157 = vmatpush1.msra.mxu0 %v76
    %158 = vmatprep.subr.mxu0 0.0
    %159 = vmatpush1.msra.mxu0 %v77
    %160 = vmatprep.subr.mxu0 0.0
    %161 = vmatpush1.msra.mxu0 %v78
    %162 = vmatprep.subr.mxu0 0.0
    %163 = vmatpush1.msra.mxu0 %v79
    %164 = vmatprep.subr.mxu0 0.0
    %165 = vmatpush1.msra.mxu0 0.0
    %166 = vmatprep.subr.mxu0 0.0
    %167 = vmatpush1.msra.mxu0 0.0
    %168 = vmatprep.subr.mxu0 0.0
    %169 = vmatpush1.msra.mxu0 0.0
    %170 = vmatprep.subr.mxu0 0.0
    %171 = vmatpush1.msra.mxu0 0.0
    %172 = vmatprep.subr.mxu0 0.0
    %173 = vmatpush1.msra.mxu0 0.0
    %174 = vmatprep.subr.mxu0 0.0
    %175 = vmatpush1.msra.mxu0 0.0
    %176 = vmatprep.subr.mxu0 0.0
    %177 = vmatpush1.msra.mxu0 0.0
    %178 = vmatprep.subr.mxu0 0.0
    %179 = vmatpush1.msra.mxu0 0.0
    %180 = vmatprep.subr.mxu0 0.0
    %181 = vmatpush1.msra.mxu0 0.0
    %182 = vmatprep.subr.mxu0 0.0
    %183 = vmatpush1.msra.mxu0 0.0
    %184 = vmatprep.subr.mxu0 0.0
    %185 = vmatpush1.msra.mxu0 0.0
    %186 = vmatprep.subr.mxu0 0.0
    %187 = vmatpush1.msra.mxu0 0.0
    %188 = vmatprep.subr.mxu0 0.0
    %189 = vmatpush1.msra.mxu0 0.0
    %190 = vmatprep.subr.mxu0 0.0
    %191 = vmatpush1.msra.mxu0 0.0
    %192 = vmatprep.subr.mxu0 0.0
    %193 = vmatpush1.msra.mxu0 0.0
    %194 = vmatprep.subr.mxu0 0.0
    %195 = vmatpush1.msra.mxu0 0.0
    %196 = vmatprep.subr.mxu0 0.0
    %197 = vmatpush1.msra.mxu0 0.0
    %198 = vmatprep.subr.mxu0 0.0
    %199 = vmatpush1.msra.mxu0 0.0
    %200 = vmatprep.subr.mxu0 0.0
    %201 = vmatpush1.msra.mxu0 0.0
    %202 = vmatprep.subr.mxu0 0.0
    %203 = vmatpush1.msra.mxu0 0.0
    %204 = vmatprep.subr.mxu0 0.0
    %205 = vmatpush1.msra.mxu0 0.0
    %206 = vmatprep.subr.mxu0 0.0
    %207 = vmatpush1.msra.mxu0 0.0
    %208 = vmatprep.subr.mxu0 0.0
    %209 = vmatpush1.msra.mxu0 0.0
    %210 = vmatprep.subr.mxu0 0.0
    %211 = vmatpush1.msra.mxu0 0.0
    %212 = vmatprep.mubr.f32.mxu0 0.0
    %213 = vmatmul.mubr.f32.gmra.mrb[0].mxu0 %v143
    %v214 = vpop.f32.mrb[0].mxu0
    %v215 = vadd.f32 %v139, %v214
    %v216 = vpop.f32.mrb[0].mxu0
    %217 = vmatprep.mubr.f32.mxu0 0.0
    %218 = vmatmul.mubr.f32.gmra.mrb[0].mxu0 %v146
    %v219 = vpop.f32.mrb[0].mxu0
    %v220 = vadd.f32 %v139, %v219
    %v221 = vpop.f32.mrb[0].mxu0
    %222 = vdwg.mxu0
    %v223 = vlaneseq
    %v224 = vand.u32 %v223, 127
    %v225 = vld [vmem:[#allocation2 + $0x1] sm:$0x1]
    %v226 = vlaneseq
    %v227 = vshrl.u32 %v226, 7
    %v228 = vsub.s32 0, %v227
    %v229 = vrot.slane %v225, %v228
    %v230 = vld [vmem:[%s1] sm:$0x3]
    %vm231 = vcmp.ge.f32.partialorder 0.0, 2.0
    %v233 = vsel %vm141, %v230, 0
    %235 = vmatprep.subr.mxu0 0.0
    %236 = vmatpush1.msra.mxu0 %v64
    %237 = vmatprep.subr.mxu0 0.0
    %238 = vmatpush1.msra.mxu0 %v65
    %239 = vmatprep.subr.mxu0 0.0
    %240 = vmatpush1.msra.mxu0 %v66
    %241 = vmatprep.subr.mxu0 0.0
    %242 = vmatpush1.msra.mxu0 %v67
    %243 = vmatprep.subr.mxu0 0.0
    %244 = vmatpush1.msra.mxu0 %v68
    %245 = vmatprep.subr.mxu0 0.0
    %246 = vmatpush1.msra.mxu0 %v69
    %247 = vmatprep.subr.mxu0 0.0
    %248 = vmatpush1.msra.mxu0 %v70
    %249 = vmatprep.subr.mxu0 0.0
    %250 = vmatpush1.msra.mxu0 %v71
    %251 = vmatprep.subr.mxu0 0.0
    %252 = vmatpush1.msra.mxu0 0.0
    %253 = vmatprep.subr.mxu0 0.0
    %254 = vmatpush1.msra.mxu0 0.0
    %255 = vmatprep.subr.mxu0 0.0
    %256 = vmatpush1.msra.mxu0 0.0
    %257 = vmatprep.subr.mxu0 0.0
    %258 = vmatpush1.msra.mxu0 0.0
    %259 = vmatprep.subr.mxu0 0.0
    %260 = vmatpush1.msra.mxu0 0.0
    %261 = vmatprep.subr.mxu0 0.0
    %262 = vmatpush1.msra.mxu0 0.0
    %263 = vmatprep.subr.mxu0 0.0
    %264 = vmatpush1.msra.mxu0 0.0
    %265 = vmatprep.subr.mxu0 0.0
    %266 = vmatpush1.msra.mxu0 0.0
    %267 = vmatprep.subr.mxu0 0.0
    %268 = vmatpush1.msra.mxu0 0.0
    %269 = vmatprep.subr.mxu0 0.0
    %270 = vmatpush1.msra.mxu0 0.0
    %271 = vmatprep.subr.mxu0 0.0
    %272 = vmatpush1.msra.mxu0 0.0
    %273 = vmatprep.subr.mxu0 0.0
    %274 = vmatpush1.msra.mxu0 0.0
    %275 = vmatprep.subr.mxu0 0.0
    %276 = vmatpush1.msra.mxu0 0.0
    %277 = vmatprep.subr.mxu0 0.0
    %278 = vmatpush1.msra.mxu0 0.0
    %279 = vmatprep.subr.mxu0 0.0
    %280 = vmatpush1.msra.mxu0 0.0
    %281 = vmatprep.subr.mxu0 0.0
    %282 = vmatpush1.msra.mxu0 0.0
    %283 = vmatprep.subr.mxu0 0.0
    %284 = vmatpush1.msra.mxu0 0.0
    %285 = vmatprep.subr.mxu0 0.0
    %286 = vmatpush1.msra.mxu0 0.0
    %287 = vmatprep.subr.mxu0 0.0
    %288 = vmatpush1.msra.mxu0 0.0
    %289 = vmatprep.subr.mxu0 0.0
    %290 = vmatpush1.msra.mxu0 0.0
    %291 = vmatprep.subr.mxu0 0.0
    %292 = vmatpush1.msra.mxu0 0.0
    %293 = vmatprep.subr.mxu0 0.0
    %294 = vmatpush1.msra.mxu0 0.0
    %295 = vmatprep.subr.mxu0 0.0
    %296 = vmatpush1.msra.mxu0 0.0
    %297 = vmatprep.subr.mxu0 0.0
    %298 = vmatpush1.msra.mxu0 0.0
    %299 = vmatprep.mubr.f32.mxu0 0.0
    %300 = vmatmul.mubr.f32.gmra.mrb[0].mxu0 %v233
    %v301 = vpop.f32.mrb[0].mxu0
    %v302 = vadd.f32 0.0, %v301
    %v303 = vpop.f32.mrb[0].mxu0
    %304 = vdwg.mxu0
    %v307 = vunpack.c.l.s4 1966171168
    %v308 = vunpack.c.0.s8 %v307
    %v309 = vlaneseq
    %v310 = vshrl.u32 %v309, 7
    %v311 = vsub.s32 %v308, %v310
    %v312 = vrot.slane %v302, %v311
    %v313 = vcombine.high %v312, %v312
    %v315 = vunpack.c.l.s4 1966171168
    %v316 = vunpack.c.0.s8 %v315
    %v317 = vlaneseq
    %v318 = vshrl.u32 %v317, 7
    %v319 = vsub.s32 %v316, %v318
    %v320 = vrot.slane %v312, %v319
    %v322 = vunpack.c.l.s4 1966171168
    %v323 = vunpack.c.0.s8 %v322
    %v324 = vlaneseq
    %v325 = vshrl.u32 %v324, 7
    %v326 = vsub.s32 %v323, %v325
    %v327 = vrot.slane %v313, %v326
    %v328 = vlaneseq
    %v329 = vshrl.u32 %v328, 7
    %v330 = vsub.s32 0, %v329
    %v331 = vrot.slane %v320, %v330
    %v332 = vlaneseq
    %v333 = vshrl.u32 %v332, 7
    %v334 = vsub.s32 0, %v333
    %v335 = vrot.slane %v327, %v334
    %v338 = vadd.f32 %v215, %v331
    %v339 = vadd.f32 %v220, %v335
    %v340 = vtanh.pop %v338
    %v341 = vtanh.pop %v339
    %v343 = vlaneseq
    %v344 = vshrl.u32 %v343, 7
    %v345 = vsub.s32 0, %v344
    %v346 = vrot.slane %v81, %v345
    %v348 = vmul.f32 %v340, %v346
    %v349 = vmul.f32 %v341, %v346
    %vm350 = vcmask 261120
    %v351 = vsel %vm350, %v348, 0.0
    %352 = vadd.xlane.f32.xlu0 %v351
    %v353 = vpop.xlane.xlu0 %352
    %v354 = vsel %vm350, %v349, 0.0
    %355 = vadd.xlane.f32.xlu0 %v354
    %v356 = vpop.xlane.xlu0 %355
    %v359 = vlaneseq
    %v360 = vshrl.u32 %v359, 7
    %v361 = vsub.s32 %v224, %v360
    %v362 = vrot.slane %v353, %v361
    %v363 = vlaneseq
    %v364 = vshrl.u32 %v363, 7
    %v365 = vsub.s32 %v224, %v364
    %v366 = vrot.slane %v356, %v365
    %vm367 = vcmask 1041409
    %v368 = vsel %vm367, %v366, %v362
    %vm370 = vcmask 58368
    %v371 = vsel %vm370, %v368, -inf
    %372 = vmax.xlane.f32.xlu0 %v371
    %v373 = vpop.xlane.xlu0 %372
    %v375 = vlaneseq
    %v376 = vshrl.u32 %v375, 7
    %v377 = vsub.s32 0, %v376
    %v378 = vrot.slane %v373, %v377
    %v379 = vlaneseq
    %v380 = vshrl.u32 %v379, 7
    %v381 = vsub.s32 1, %v380
    %v382 = vrot.slane %v373, %v381
    %v385 = vsub.f32 %v353, %v378
    %v386 = vsub.f32 %v356, %v382
    %v387 = vmul.f32 %v385, 1.442695
    %v388 = vpow.pop %v387
    %v389 = vmul.f32 %v386, 1.442695
    %v390 = vpow.pop %v389
    %393 = vset.pattern.permute.xlu0 0
    %394 = vperm.xlu0 %393, %v388
    %v395 = vpop.permute.xlu0 %394
    %396 = vset.pattern.permute.xlu0 0
    %397 = vperm.xlu0 %396, %v390
    %v398 = vpop.permute.xlu0 %397
    %v399 = vlaneseq
    %v400 = vshrl.u32 %v399, 7
    %v401 = vsub.s32 %v224, %v400
    %v402 = vrot.slane %v395, %v401
    %v403 = vlaneseq
    %v404 = vshrl.u32 %v403, 7
    %v405 = vsub.s32 %v224, %v404
    %v406 = vrot.slane %v398, %v405
    %v407 = vsel %vm367, %v406, %v402
    %v409 = vsel %vm370, %v407, 0.0
    %410 = vadd.xlane.f32.xlu0 %v409
    %v411 = vpop.xlane.xlu0 %410
    %v413 = vlaneseq
    %v414 = vshrl.u32 %v413, 7
    %v415 = vsub.s32 0, %v414
    %v416 = vrot.slane %v411, %v415
    %v417 = vlaneseq
    %v418 = vshrl.u32 %v417, 7
    %v419 = vsub.s32 1, %v418
    %v420 = vrot.slane %v411, %v419
    %v423 = vrcp.pop %v416
    %v424 = vmul.f32 %v388, %v423
    %v425 = vrcp.pop %v420
    %v426 = vmul.f32 %v390, %v425
    %428 = vset.pattern.permute.xlu0 0
    %429 = vperm.xlu0 %428, %v424
    %v430 = vpop.permute.xlu0 %429
    %433 = vset.pattern.permute.xlu0 0
    %434 = vperm.xlu0 %433, %v426
    %v435 = vpop.permute.xlu0 %434
    %v437 = vmul.f32 %v430, %v60
    %v438 = vmul.f32 %v435, %v61
    %v439 = vsel %vm141, %v437, 0.0
    %v440 = vrot.slane %v439, 4
    %v441 = vadd.f32 %v439, %v440
    %v442 = vrot.slane %v441, 2
    %v443 = vadd.f32 %v441, %v442
    %v444 = vrot.slane %v443, 1
    %v445 = vadd.f32 %v443, %v444
    %v446 = vsel %vm141, %v438, 0.0
    %v447 = vrot.slane %v446, 4
    %v448 = vadd.f32 %v446, %v447
    %v449 = vrot.slane %v448, 2
    %v450 = vadd.f32 %v448, %v449
    %v451 = vrot.slane %v450, 1
    %v452 = vadd.f32 %v450, %v451
    %v455 = vsel %vm367, %v452, %v445
    %v456 = vsel %vm141, %v455, 0
    %458 = vmatprep.subr.mxu0 %v87
    %459 = vmatpush1.msra.mxu0 %v86
    %460 = vmatprep.subr.mxu0 %v89
    %461 = vmatpush1.msra.mxu0 %v88
    %462 = vmatprep.subr.mxu0 %v91
    %463 = vmatpush1.msra.mxu0 %v90
    %464 = vmatprep.subr.mxu0 %v93
    %465 = vmatpush1.msra.mxu0 %v92
    %466 = vmatprep.subr.mxu0 %v95
    %467 = vmatpush1.msra.mxu0 %v94
    %468 = vmatprep.subr.mxu0 %v97
    %469 = vmatpush1.msra.mxu0 %v96
    %470 = vmatprep.subr.mxu0 %v99
    %471 = vmatpush1.msra.mxu0 %v98
    %472 = vmatprep.subr.mxu0 %v101
    %473 = vmatpush1.msra.mxu0 %v100
    %474 = vmatprep.subr.mxu0 0.0
    %475 = vmatpush1.msra.mxu0 0.0
    %476 = vmatprep.subr.mxu0 0.0
    %477 = vmatpush1.msra.mxu0 0.0
    %478 = vmatprep.subr.mxu0 0.0
    %479 = vmatpush1.msra.mxu0 0.0
    %480 = vmatprep.subr.mxu0 0.0
    %481 = vmatpush1.msra.mxu0 0.0
    %482 = vmatprep.subr.mxu0 0.0
    %483 = vmatpush1.msra.mxu0 0.0
    %484 = vmatprep.subr.mxu0 0.0
    %485 = vmatpush1.msra.mxu0 0.0
    %486 = vmatprep.subr.mxu0 0.0
    %487 = vmatpush1.msra.mxu0 0.0
    %488 = vmatprep.subr.mxu0 0.0
    %489 = vmatpush1.msra.mxu0 0.0
    %490 = vmatprep.subr.mxu0 0.0
    %491 = vmatpush1.msra.mxu0 0.0
    %492 = vmatprep.subr.mxu0 0.0
    %493 = vmatpush1.msra.mxu0 0.0
    %494 = vmatprep.subr.mxu0 0.0
    %495 = vmatpush1.msra.mxu0 0.0
    %496 = vmatprep.subr.mxu0 0.0
    %497 = vmatpush1.msra.mxu0 0.0
    %498 = vmatprep.subr.mxu0 0.0
    %499 = vmatpush1.msra.mxu0 0.0
    %500 = vmatprep.subr.mxu0 0.0
    %501 = vmatpush1.msra.mxu0 0.0
    %502 = vmatprep.subr.mxu0 0.0
    %503 = vmatpush1.msra.mxu0 0.0
    %504 = vmatprep.subr.mxu0 0.0
    %505 = vmatpush1.msra.mxu0 0.0
    %506 = vmatprep.subr.mxu0 0.0
    %507 = vmatpush1.msra.mxu0 0.0
    %508 = vmatprep.subr.mxu0 0.0
    %509 = vmatpush1.msra.mxu0 0.0
    %510 = vmatprep.subr.mxu0 0.0
    %511 = vmatpush1.msra.mxu0 0.0
    %512 = vmatprep.subr.mxu0 0.0
    %513 = vmatpush1.msra.mxu0 0.0
    %514 = vmatprep.subr.mxu0 0.0
    %515 = vmatpush1.msra.mxu0 0.0
    %516 = vmatprep.subr.mxu0 0.0
    %517 = vmatpush1.msra.mxu0 0.0
    %518 = vmatprep.subr.mxu0 0.0
    %519 = vmatpush1.msra.mxu0 0.0
    %520 = vmatprep.subr.mxu0 0.0
    %521 = vmatpush1.msra.mxu0 0.0
    %522 = vmatprep.mubr.f32.mxu0 0.0
    %523 = vmatmul.mubr.f32.gmra.mrb[0].mxu0 %v456
    %v524 = vpop.f32.mrb[0].mxu0
    %v525 = vadd.f32 0.0, %v524
    %v526 = vpop.f32.mrb[0].mxu0
    %v527 = vadd.f32 0.0, %v526
    %528 = vdwg.mxu0
    %vm529 = vcmask 130048
    %v531 = vsel %vm529, %v229, 0
    %533 = vmatprep.subr.mxu0 %v83
    %534 = vmatpush1.msra.mxu0 %v82
    %535 = vmatprep.subr.mxu0 %v85
    %536 = vmatpush1.msra.mxu0 %v84
    %537 = vmatprep.subr.mxu0 0.0
    %538 = vmatpush1.msra.mxu0 0.0
    %539 = vmatprep.subr.mxu0 0.0
    %540 = vmatpush1.msra.mxu0 0.0
    %541 = vmatprep.subr.mxu0 0.0
    %542 = vmatpush1.msra.mxu0 0.0
    %543 = vmatprep.subr.mxu0 0.0
    %544 = vmatpush1.msra.mxu0 0.0
    %545 = vmatprep.subr.mxu0 0.0
    %546 = vmatpush1.msra.mxu0 0.0
    %547 = vmatprep.subr.mxu0 0.0
    %548 = vmatpush1.msra.mxu0 0.0
    %549 = vmatprep.subr.mxu0 0.0
    %550 = vmatpush1.msra.mxu0 0.0
    %551 = vmatprep.subr.mxu0 0.0
    %552 = vmatpush1.msra.mxu0 0.0
    %553 = vmatprep.subr.mxu0 0.0
    %554 = vmatpush1.msra.mxu0 0.0
    %555 = vmatprep.subr.mxu0 0.0
    %556 = vmatpush1.msra.mxu0 0.0
    %557 = vmatprep.subr.mxu0 0.0
    %558 = vmatpush1.msra.mxu0 0.0
    %559 = vmatprep.subr.mxu0 0.0
    %560 = vmatpush1.msra.mxu0 0.0
    %561 = vmatprep.subr.mxu0 0.0
    %562 = vmatpush1.msra.mxu0 0.0
    %563 = vmatprep.subr.mxu0 0.0
    %564 = vmatpush1.msra.mxu0 0.0
    %565 = vmatprep.subr.mxu0 0.0
    %566 = vmatpush1.msra.mxu0 0.0
    %567 = vmatprep.subr.mxu0 0.0
    %568 = vmatpush1.msra.mxu0 0.0
    %569 = vmatprep.subr.mxu0 0.0
    %570 = vmatpush1.msra.mxu0 0.0
    %571 = vmatprep.subr.mxu0 0.0
    %572 = vmatpush1.msra.mxu0 0.0
    %573 = vmatprep.subr.mxu0 0.0
    %574 = vmatpush1.msra.mxu0 0.0
    %575 = vmatprep.subr.mxu0 0.0
    %576 = vmatpush1.msra.mxu0 0.0
    %577 = vmatprep.subr.mxu0 0.0
    %578 = vmatpush1.msra.mxu0 0.0
    %579 = vmatprep.subr.mxu0 0.0
    %580 = vmatpush1.msra.mxu0 0.0
    %581 = vmatprep.subr.mxu0 0.0
    %582 = vmatpush1.msra.mxu0 0.0
    %583 = vmatprep.subr.mxu0 0.0
    %584 = vmatpush1.msra.mxu0 0.0
    %585 = vmatprep.subr.mxu0 0.0
    %586 = vmatpush1.msra.mxu0 0.0
    %587 = vmatprep.subr.mxu0 0.0
    %588 = vmatpush1.msra.mxu0 0.0
    %589 = vmatprep.subr.mxu0 0.0
    %590 = vmatpush1.msra.mxu0 0.0
    %591 = vmatprep.subr.mxu0 0.0
    %592 = vmatpush1.msra.mxu0 0.0
    %593 = vmatprep.subr.mxu0 0.0
    %594 = vmatpush1.msra.mxu0 0.0
    %595 = vmatprep.subr.mxu0 0.0
    %596 = vmatpush1.msra.mxu0 0.0
    %597 = vmatprep.mubr.f32.mxu0 0.0
    %598 = vmatmul.mubr.f32.gmra.mrb[0].mxu0 %v531
    %v599 = vpop.f32.mrb[0].mxu0
    %v600 = vadd.f32 %v525, %v599
    %v601 = vpop.f32.mrb[0].mxu0
    %v602 = vadd.f32 %v527, %v601
    %603 = vdwg.mxu0
    %604 = vmatprep.subr.mxu0 %v103
    %605 = vmatpush1.msra.mxu0 %v102
    %606 = vmatprep.subr.mxu0 %v105
    %607 = vmatpush1.msra.mxu0 %v104
    %608 = vmatprep.subr.mxu0 %v107
    %609 = vmatpush1.msra.mxu0 %v106
    %610 = vmatprep.subr.mxu0 %v109
    %611 = vmatpush1.msra.mxu0 %v108
    %612 = vmatprep.subr.mxu0 %v111
    %613 = vmatpush1.msra.mxu0 %v110
    %614 = vmatprep.subr.mxu0 %v113
    %615 = vmatpush1.msra.mxu0 %v112
    %616 = vmatprep.subr.mxu0 %v115
    %617 = vmatpush1.msra.mxu0 %v114
    %618 = vmatprep.subr.mxu0 %v117
    %619 = vmatpush1.msra.mxu0 %v116
    %620 = vmatprep.subr.mxu0 0.0
    %621 = vmatpush1.msra.mxu0 0.0
    %622 = vmatprep.subr.mxu0 0.0
    %623 = vmatpush1.msra.mxu0 0.0
    %624 = vmatprep.subr.mxu0 0.0
    %625 = vmatpush1.msra.mxu0 0.0
    %626 = vmatprep.subr.mxu0 0.0
    %627 = vmatpush1.msra.mxu0 0.0
    %628 = vmatprep.subr.mxu0 0.0
    %629 = vmatpush1.msra.mxu0 0.0
    %630 = vmatprep.subr.mxu0 0.0
    %631 = vmatpush1.msra.mxu0 0.0
    %632 = vmatprep.subr.mxu0 0.0
    %633 = vmatpush1.msra.mxu0 0.0
    %634 = vmatprep.subr.mxu0 0.0
    %635 = vmatpush1.msra.mxu0 0.0
    %636 = vmatprep.subr.mxu0 0.0
    %637 = vmatpush1.msra.mxu0 0.0
    %638 = vmatprep.subr.mxu0 0.0
    %639 = vmatpush1.msra.mxu0 0.0
    %640 = vmatprep.subr.mxu0 0.0
    %641 = vmatpush1.msra.mxu0 0.0
    %642 = vmatprep.subr.mxu0 0.0
    %643 = vmatpush1.msra.mxu0 0.0
    %644 = vmatprep.subr.mxu0 0.0
    %645 = vmatpush1.msra.mxu0 0.0
    %646 = vmatprep.subr.mxu0 0.0
    %647 = vmatpush1.msra.mxu0 0.0
    %648 = vmatprep.subr.mxu0 0.0
    %649 = vmatpush1.msra.mxu0 0.0
    %650 = vmatprep.subr.mxu0 0.0
    %651 = vmatpush1.msra.mxu0 0.0
    %652 = vmatprep.subr.mxu0 0.0
    %653 = vmatpush1.msra.mxu0 0.0
    %654 = vmatprep.subr.mxu0 0.0
    %655 = vmatpush1.msra.mxu0 0.0
    %656 = vmatprep.subr.mxu0 0.0
    %657 = vmatpush1.msra.mxu0 0.0
    %658 = vmatprep.subr.mxu0 0.0
    %659 = vmatpush1.msra.mxu0 0.0
    %660 = vmatprep.subr.mxu0 0.0
    %661 = vmatpush1.msra.mxu0 0.0
    %662 = vmatprep.subr.mxu0 0.0
    %663 = vmatpush1.msra.mxu0 0.0
    %664 = vmatprep.subr.mxu0 0.0
    %665 = vmatpush1.msra.mxu0 0.0
    %666 = vmatprep.subr.mxu0 0.0
    %667 = vmatpush1.msra.mxu0 0.0
    %668 = vmatprep.mubr.f32.mxu0 0.0
    %669 = vmatmul.mubr.f32.gmra.mrb[0].mxu0 %v233
    %v670 = vpop.f32.mrb[0].mxu0
    %v671 = vadd.f32 0.0, %v670
    %v672 = vpop.f32.mrb[0].mxu0
    %v673 = vadd.f32 0.0, %v672
    %674 = vdwg.mxu0
    %v675 = vadd.f32 %v600, %v671
    %v676 = vxor.u32 %v675, 2147483648
    %v677 = vmul.f32 %v676, 1.442695
    %v678 = vpow.pop %v677
    %v679 = vadd.f32 %v678, 1.0
    %v680 = vrcp.pop %v679
    %v681 = vmul.f32 1.0, %v680
    %v682 = vmul.f32 %v681, %v673
    %v683 = vadd.f32 %v602, %v682
    %v684 = vtanh.pop %v683
    %v685 = vsub.f32 1.0, %v681
    %687 = vrot.lane.b32.xlu0 %v684, 64
    %v688 = vpop.permute.xlu0 %687
    %v690 = vmul.f32 %v685, %v688
    %691 = vrot.lane.b32.xlu0 %v230, 64
    %v692 = vpop.permute.xlu0 %691
    %v694 = vmul.f32 %v681, %v692
    %v695 = vadd.f32 %v690, %v694
    %696 = vmatprep.subr.mxu0 0.0
    %697 = vmatpush1.msra.mxu0 %v126
    %698 = vmatprep.subr.mxu0 0.0
    %699 = vmatpush1.msra.mxu0 %v127
    %700 = vmatprep.subr.mxu0 0.0
    %701 = vmatpush1.msra.mxu0 %v128
    %702 = vmatprep.subr.mxu0 0.0
    %703 = vmatpush1.msra.mxu0 %v129
    %704 = vmatprep.subr.mxu0 0.0
    %705 = vmatpush1.msra.mxu0 %v130
    %706 = vmatprep.subr.mxu0 0.0
    %707 = vmatpush1.msra.mxu0 %v131
    %708 = vmatprep.subr.mxu0 0.0
    %709 = vmatpush1.msra.mxu0 %v132
    %710 = vmatprep.subr.mxu0 0.0
    %711 = vmatpush1.msra.mxu0 %v133
    %712 = vmatprep.subr.mxu0 0.0
    %713 = vmatpush1.msra.mxu0 0.0
    %714 = vmatprep.subr.mxu0 0.0
    %715 = vmatpush1.msra.mxu0 0.0
    %716 = vmatprep.subr.mxu0 0.0
    %717 = vmatpush1.msra.mxu0 0.0
    %718 = vmatprep.subr.mxu0 0.0
    %719 = vmatpush1.msra.mxu0 0.0
    %720 = vmatprep.subr.mxu0 0.0
    %721 = vmatpush1.msra.mxu0 0.0
    %722 = vmatprep.subr.mxu0 0.0
    %723 = vmatpush1.msra.mxu0 0.0
    %724 = vmatprep.subr.mxu0 0.0
    %725 = vmatpush1.msra.mxu0 0.0
    %726 = vmatprep.subr.mxu0 0.0
    %727 = vmatpush1.msra.mxu0 0.0
    %728 = vmatprep.subr.mxu0 0.0
    %729 = vmatpush1.msra.mxu0 0.0
    %730 = vmatprep.subr.mxu0 0.0
    %731 = vmatpush1.msra.mxu0 0.0
    %732 = vmatprep.subr.mxu0 0.0
    %733 = vmatpush1.msra.mxu0 0.0
    %734 = vmatprep.subr.mxu0 0.0
    %735 = vmatpush1.msra.mxu0 0.0
    %736 = vmatprep.subr.mxu0 0.0
    %737 = vmatpush1.msra.mxu0 0.0
    %738 = vmatprep.subr.mxu0 0.0
    %739 = vmatpush1.msra.mxu0 0.0
    %740 = vmatprep.subr.mxu0 0.0
    %741 = vmatpush1.msra.mxu0 0.0
    %742 = vmatprep.subr.mxu0 0.0
    %743 = vmatpush1.msra.mxu0 0.0
    %744 = vmatprep.subr.mxu0 0.0
    %745 = vmatpush1.msra.mxu0 0.0
    %746 = vmatprep.subr.mxu0 0.0
    %747 = vmatpush1.msra.mxu0 0.0
    %748 = vmatprep.subr.mxu0 0.0
    %749 = vmatpush1.msra.mxu0 0.0
    %750 = vmatprep.subr.mxu0 0.0
    %751 = vmatpush1.msra.mxu0 0.0
    %752 = vmatprep.subr.mxu0 0.0
    %753 = vmatpush1.msra.mxu0 0.0
    %754 = vmatprep.subr.mxu0 0.0
    %755 = vmatpush1.msra.mxu0 0.0
    %756 = vmatprep.subr.mxu0 0.0
    %757 = vmatpush1.msra.mxu0 0.0
    %758 = vmatprep.subr.mxu0 0.0
    %759 = vmatpush1.msra.mxu0 0.0
    %760 = vmatprep.mubr.f32.mxu0 0.0
    %761 = vmatmul.mubr.f32.gmra.mrb[0].mxu0 %v456
    %v762 = vpop.f32.mrb[0].mxu0
    %v763 = vadd.f32 0.0, %v762
    %v764 = vpop.f32.mrb[0].mxu0
    %765 = vdwg.mxu0
    %767 = vrot.lane.b32.xlu0 %v695, 64
    %v768 = vpop.permute.xlu0 %767
    %v769 = vsel %vm141, %v768, 0
    %771 = vmatprep.subr.mxu0 0.0
    %772 = vmatpush1.msra.mxu0 %v118
    %773 = vmatprep.subr.mxu0 0.0
    %774 = vmatpush1.msra.mxu0 %v119
    %775 = vmatprep.subr.mxu0 0.0
    %776 = vmatpush1.msra.mxu0 %v120
    %777 = vmatprep.subr.mxu0 0.0
    %778 = vmatpush1.msra.mxu0 %v121
    %779 = vmatprep.subr.mxu0 0.0
    %780 = vmatpush1.msra.mxu0 %v122
    %781 = vmatprep.subr.mxu0 0.0
    %782 = vmatpush1.msra.mxu0 %v123
    %783 = vmatprep.subr.mxu0 0.0
    %784 = vmatpush1.msra.mxu0 %v124
    %785 = vmatprep.subr.mxu0 0.0
    %786 = vmatpush1.msra.mxu0 %v125
    %787 = vmatprep.subr.mxu0 0.0
    %788 = vmatpush1.msra.mxu0 0.0
    %789 = vmatprep.subr.mxu0 0.0
    %790 = vmatpush1.msra.mxu0 0.0
    %791 = vmatprep.subr.mxu0 0.0
    %792 = vmatpush1.msra.mxu0 0.0
    %793 = vmatprep.subr.mxu0 0.0
    %794 = vmatpush1.msra.mxu0 0.0
    %795 = vmatprep.subr.mxu0 0.0
    %796 = vmatpush1.msra.mxu0 0.0
    %797 = vmatprep.subr.mxu0 0.0
    %798 = vmatpush1.msra.mxu0 0.0
    %799 = vmatprep.subr.mxu0 0.0
    %800 = vmatpush1.msra.mxu0 0.0
    %801 = vmatprep.subr.mxu0 0.0
    %802 = vmatpush1.msra.mxu0 0.0
    %803 = vmatprep.subr.mxu0 0.0
    %804 = vmatpush1.msra.mxu0 0.0
    %805 = vmatprep.subr.mxu0 0.0
    %806 = vmatpush1.msra.mxu0 0.0
    %807 = vmatprep.subr.mxu0 0.0
    %808 = vmatpush1.msra.mxu0 0.0
    %809 = vmatprep.subr.mxu0 0.0
    %810 = vmatpush1.msra.mxu0 0.0
    %811 = vmatprep.subr.mxu0 0.0
    %812 = vmatpush1.msra.mxu0 0.0
    %813 = vmatprep.subr.mxu0 0.0
    %814 = vmatpush1.msra.mxu0 0.0
    %815 = vmatprep.subr.mxu0 0.0
    %816 = vmatpush1.msra.mxu0 0.0
    %817 = vmatprep.subr.mxu0 0.0
    %818 = vmatpush1.msra.mxu0 0.0
    %819 = vmatprep.subr.mxu0 0.0
    %820 = vmatpush1.msra.mxu0 0.0
    %821 = vmatprep.subr.mxu0 0.0
    %822 = vmatpush1.msra.mxu0 0.0
    %823 = vmatprep.subr.mxu0 0.0
    %824 = vmatpush1.msra.mxu0 0.0
    %825 = vmatprep.subr.mxu0 0.0
    %826 = vmatpush1.msra.mxu0 0.0
    %827 = vmatprep.subr.mxu0 0.0
    %828 = vmatpush1.msra.mxu0 0.0
    %829 = vmatprep.subr.mxu0 0.0
    %830 = vmatpush1.msra.mxu0 0.0
    %831 = vmatprep.subr.mxu0 0.0
    %832 = vmatpush1.msra.mxu0 0.0
    %833 = vmatprep.subr.mxu0 0.0
    %834 = vmatpush1.msra.mxu0 0.0
    %835 = vmatprep.mubr.f32.mxu0 0.0
    %836 = vmatmul.mubr.f32.gmra.mrb[0].mxu0 %v769
    %v837 = vpop.f32.mrb[0].mxu0
    %v838 = vadd.f32 %v763, %v837
    %v839 = vpop.f32.mrb[0].mxu0
    %840 = vdwg.mxu0
    %v842 = vlaneseq
    %v843 = vshrl.u32 %v842, 7
    %v844 = vsub.s32 0, %v843
    %v845 = vrot.slane %v134, %v844
    %v847 = vadd.f32 %v838, %v845
    %vm848 = vcmask 123904
    %v849 = vsel %vm848, %v847, -inf
    %850 = vmax.xlane.f32.xlu0 %v849
    %v851 = vpop.xlane.xlu0 %850
    %v852 = vsub.f32 %v847, %v851
    %v853 = vmul.f32 %v852, 1.442695
    %v854 = vpow.pop %v853
    %v855 = vsel %vm848, %v854, 0.0
    %856 = vadd.xlane.f32.xlu0 %v855
    %v857 = vpop.xlane.xlu0 %856
    %v858 = vlog2.pop %v857
    %v859 = vmul.f32 %v858, 0.6931472
    %v860 = vsub.f32 %v852, %v859
    %v861 = vsel %vm231, 1, 0
    %vm862 = vcmp.eq.s32.totalorder %v861, 1
    %v863 = vsel %vm862, 0.0, %v860
    %864 = vst.msk [vmem:[%s13] sm:$0x3] %vm848, %v863
    %v865 = vsel %vm848, %v860, -inf
    %866 = vmax.xlane.f32.xlu0 %v865
    %v867 = vpop.xlane.xlu0 %866
    %vm868 = vcmp.eq.f32.partialorder %v860, %v867
    %v869 = vsel %vm868, %v224, 16
    %v870 = vsel %vm848, %v869, 2147483647
    %v871 = vand.u32 %v870, 65535
    %v872 = vshra.s32 %v870, 16
    %v873 = vcvt.s32.f32 %v871
    %v874 = vcvt.s32.f32 %v872
    %875 = vmin.xlane.f32.xlu0 %v874
    %v876 = vpop.xlane.xlu0 %875
    %vm877 = vcmp.eq.f32.partialorder %v874, %v876
    %v878 = vsel %vm877, %v873, inf
    %879 = vmin.xlane.f32.xlu0 %v878
    %v880 = vpop.xlane.xlu0 %879
    %v881 = vcvt.f32.s32 %v880
    %v882 = vcvt.f32.s32 %v876
    %v883 = vshll.u32 %v882, 16
    %v884 = vadd.s32 %v883, %v881
    %vm885 = vcmp.eq.s32.totalorder %v884, 2
    %vm886 = vcmp.eq.s32.totalorder %v224, %v884
    %v887 = vsel %vm886, 1, 0
    %v888 = vcvt.s32.f32 %v887
    %v890 = vsel %vm529, %v888, 0
    %892 = vmatprep.subr.mxu0 0.0
    %893 = vmatpush1.msra.mxu0 %v62
    %894 = vmatprep.subr.mxu0 0.0
    %895 = vmatpush1.msra.mxu0 %v63
    %896 = vmatprep.subr.mxu0 0.0
    %897 = vmatpush1.msra.mxu0 0.0
    %898 = vmatprep.subr.mxu0 0.0
    %899 = vmatpush1.msra.mxu0 0.0
    %900 = vmatprep.subr.mxu0 0.0
    %901 = vmatpush1.msra.mxu0 0.0
    %902 = vmatprep.subr.mxu0 0.0
    %903 = vmatpush1.msra.mxu0 0.0
    %904 = vmatprep.subr.mxu0 0.0
    %905 = vmatpush1.msra.mxu0 0.0
    %906 = vmatprep.subr.mxu0 0.0
    %907 = vmatpush1.msra.mxu0 0.0
    %908 = vmatprep.subr.mxu0 0.0
    %909 = vmatpush1.msra.mxu0 0.0
    %910 = vmatprep.subr.mxu0 0.0
    %911 = vmatpush1.msra.mxu0 0.0
    %912 = vmatprep.subr.mxu0 0.0
    %913 = vmatpush1.msra.mxu0 0.0
    %914 = vmatprep.subr.mxu0 0.0
    %915 = vmatpush1.msra.mxu0 0.0
    %916 = vmatprep.subr.mxu0 0.0
    %917 = vmatpush1.msra.mxu0 0.0
    %918 = vmatprep.subr.mxu0 0.0
    %919 = vmatpush1.msra.mxu0 0.0
    %920 = vmatprep.subr.mxu0 0.0
    %921 = vmatpush1.msra.mxu0 0.0
    %922 = vmatprep.subr.mxu0 0.0
    %923 = vmatpush1.msra.mxu0 0.0
    %924 = vmatprep.subr.mxu0 0.0
    %925 = vmatpush1.msra.mxu0 0.0
    %926 = vmatprep.subr.mxu0 0.0
    %927 = vmatpush1.msra.mxu0 0.0
    %928 = vmatprep.subr.mxu0 0.0
    %929 = vmatpush1.msra.mxu0 0.0
    %930 = vmatprep.subr.mxu0 0.0
    %931 = vmatpush1.msra.mxu0 0.0
    %932 = vmatprep.subr.mxu0 0.0
    %933 = vmatpush1.msra.mxu0 0.0
    %934 = vmatprep.subr.mxu0 0.0
    %935 = vmatpush1.msra.mxu0 0.0
    %936 = vmatprep.subr.mxu0 0.0
    %937 = vmatpush1.msra.mxu0 0.0
    %938 = vmatprep.subr.mxu0 0.0
    %939 = vmatpush1.msra.mxu0 0.0
    %940 = vmatprep.subr.mxu0 0.0
    %941 = vmatpush1.msra.mxu0 0.0
    %942 = vmatprep.subr.mxu0 0.0
    %943 = vmatpush1.msra.mxu0 0.0
    %944 = vmatprep.subr.mxu0 0.0
    %945 = vmatpush1.msra.mxu0 0.0
    %946 = vmatprep.subr.mxu0 0.0
    %947 = vmatpush1.msra.mxu0 0.0
    %948 = vmatprep.subr.mxu0 0.0
    %949 = vmatpush1.msra.mxu0 0.0
    %950 = vmatprep.subr.mxu0 0.0
    %951 = vmatpush1.msra.mxu0 0.0
    %952 = vmatprep.subr.mxu0 0.0
    %953 = vmatpush1.msra.mxu0 0.0
    %954 = vmatprep.subr.mxu0 0.0
    %955 = vmatpush1.msra.mxu0 0.0
    %956 = vmatprep.mubr.f32.mxu0 0.0
    %957 = vmatmul.mubr.f32.gmra.mrb[0].mxu0 %v890
    %v958 = vpop.f32.mrb[0].mxu0
    %v959 = vadd.f32 0.0, %v958
    %v960 = vpop.f32.mrb[0].mxu0
    %961 = vdwg.mxu0
    %vm962 = vmxor %vm231, 1
    %v963 = vsel %vm962, 1, 0
    %vm964 = vcmp.eq.s32.totalorder %v963, 1
    %vm965 = vmand %vm885, %vm964
    %v966 = vsel %vm965, 1, 8
    %v967 = vsel %vm885, 1, 0
    %v968 = vcvt.s32.f32 %v967
    %v969 = vmax.f32 %v968, 0.0
    %v970 = vsel %vm862, 0.0, %v969
    %v971 = vsel %vm862, %v229, %v959
    %v973 = vsel %vm862, %v230, %v768
    %vm974 = vcmask 1041408
    %v975 = vsel %vm974, %v970, 0.0
    %v976 = vrot.slane %v975, 4
    %v977 = vadd.f32 %v975, %v976
    %v978 = vrot.slane %v977, 2
    %v979 = vadd.f32 %v977, %v978
    %v980 = vrot.slane %v979, 1
    %v981 = vadd.f32 %v979, %v980
    %vm982 = vcmp.ge.f32.partialorder %v981, 2.0
    %v984 = vsel %vm141, %v973, 0
    %986 = vmatprep.subr.mxu0 0.0
    %987 = vmatpush1.msra.mxu0 %v64
    %988 = vmatprep.subr.mxu0 0.0
    %989 = vmatpush1.msra.mxu0 %v65
    %990 = vmatprep.subr.mxu0 0.0
    %991 = vmatpush1.msra.mxu0 %v66
    %992 = vmatprep.subr.mxu0 0.0
    %993 = vmatpush1.msra.mxu0 %v67
    %994 = vmatprep.subr.mxu0 0.0
    %995 = vmatpush1.msra.mxu0 %v68
    %996 = vmatprep.subr.mxu0 0.0
    %997 = vmatpush1.msra.mxu0 %v69
    %998 = vmatprep.subr.mxu0 0.0
    %999 = vmatpush1.msra.mxu0 %v70
    %1000 = vmatprep.subr.mxu0 0.0
    %1001 = vmatpush1.msra.mxu0 %v71
    %1002 = vmatprep.subr.mxu0 0.0
    %1003 = vmatpush1.msra.mxu0 0.0
    %1004 = vmatprep.subr.mxu0 0.0
    %1005 = vmatpush1.msra.mxu0 0.0
    %1006 = vmatprep.subr.mxu0 0.0
    %1007 = vmatpush1.msra.mxu0 0.0
    %1008 = vmatprep.subr.mxu0 0.0
    %1009 = vmatpush1.msra.mxu0 0.0
    %1010 = vmatprep.subr.mxu0 0.0
    %1011 = vmatpush1.msra.mxu0 0.0
    %1012 = vmatprep.subr.mxu0 0.0
    %1013 = vmatpush1.msra.mxu0 0.0
    %1014 = vmatprep.subr.mxu0 0.0
    %1015 = vmatpush1.msra.mxu0 0.0
    %1016 = vmatprep.subr.mxu0 0.0
    %1017 = vmatpush1.msra.mxu0 0.0
    %1018 = vmatprep.subr.mxu0 0.0
    %1019 = vmatpush1.msra.mxu0 0.0
    %1020 = vmatprep.subr.mxu0 0.0
    %1021 = vmatpush1.msra.mxu0 0.0
    %1022 = vmatprep.subr.mxu0 0.0
    %1023 = vmatpush1.msra.mxu0 0.0
    %1024 = vmatprep.subr.mxu0 0.0
    %1025 = vmatpush1.msra.mxu0 0.0
    %1026 = vmatprep.subr.mxu0 0.0
    %1027 = vmatpush1.msra.mxu0 0.0
    %1028 = vmatprep.subr.mxu0 0.0
    %1029 = vmatpush1.msra.mxu0 0.0
    %1030 = vmatprep.subr.mxu0 0.0
    %1031 = vmatpush1.msra.mxu0 0.0
    %1032 = vmatprep.subr.mxu0 0.0
    %1033 = vmatpush1.msra.mxu0 0.0
    %1034 = vmatprep.subr.mxu0 0.0
    %1035 = vmatpush1.msra.mxu0 0.0
    %1036 = vmatprep.subr.mxu0 0.0
    %1037 = vmatpush1.msra.mxu0 0.0
    %1038 = vmatprep.subr.mxu0 0.0
    %1039 = vmatpush1.msra.mxu0 0.0
    %1040 = vmatprep.subr.mxu0 0.0
    %1041 = vmatpush1.msra.mxu0 0.0
    %1042 = vmatprep.subr.mxu0 0.0
    %1043 = vmatpush1.msra.mxu0 0.0
    %1044 = vmatprep.subr.mxu0 0.0
    %1045 = vmatpush1.msra.mxu0 0.0
    %1046 = vmatprep.subr.mxu0 0.0
    %1047 = vmatpush1.msra.mxu0 0.0
    %1048 = vmatprep.subr.mxu0 0.0
    %1049 = vmatpush1.msra.mxu0 0.0
    %1050 = vmatprep.mubr.f32.mxu0 0.0
    %1051 = vmatmul.mubr.f32.gmra.mrb[0].mxu0 %v984
    %v1052 = vpop.f32.mrb[0].mxu0
    %v1053 = vadd.f32 0.0, %v1052
    %v1054 = vpop.f32.mrb[0].mxu0
    %1055 = vdwg.mxu0
    %v1058 = vunpack.c.l.s4 1966171168
    %v1059 = vunpack.c.0.s8 %v1058
    %v1060 = vlaneseq
    %v1061 = vshrl.u32 %v1060, 7
    %v1062 = vsub.s32 %v1059, %v1061
    %v1063 = vrot.slane %v1053, %v1062
    %v1064 = vcombine.high %v1063, %v1063
    %v1066 = vunpack.c.l.s4 1966171168
    %v1067 = vunpack.c.0.s8 %v1066
    %v1068 = vlaneseq
    %v1069 = vshrl.u32 %v1068, 7
    %v1070 = vsub.s32 %v1067, %v1069
    %v1071 = vrot.slane %v1063, %v1070
    %v1073 = vunpack.c.l.s4 1966171168
    %v1074 = vunpack.c.0.s8 %v1073
    %v1075 = vlaneseq
    %v1076 = vshrl.u32 %v1075, 7
    %v1077 = vsub.s32 %v1074, %v1076
    %v1078 = vrot.slane %v1064, %v1077
    %v1079 = vlaneseq
    %v1080 = vshrl.u32 %v1079, 7
    %v1081 = vsub.s32 0, %v1080
    %v1082 = vrot.slane %v1071, %v1081
    %v1083 = vlaneseq
    %v1084 = vshrl.u32 %v1083, 7
    %v1085 = vsub.s32 0, %v1084
    %v1086 = vrot.slane %v1078, %v1085
    %v1089 = vadd.f32 %v215, %v1082
    %v1090 = vadd.f32 %v220, %v1086
    %v1091 = vtanh.pop %v1089
    %v1092 = vtanh.pop %v1090
    %v1093 = vmul.f32 %v1091, %v346
    %v1094 = vmul.f32 %v1092, %v346
    %v1095 = vsel %vm350, %v1093, 0.0
    %1096 = vadd.xlane.f32.xlu0 %v1095
    %v1097 = vpop.xlane.xlu0 %1096
    %v1098 = vsel %vm350, %v1094, 0.0
    %1099 = vadd.xlane.f32.xlu0 %v1098
    %v1100 = vpop.xlane.xlu0 %1099
    %v1103 = vlaneseq
    %v1104 = vshrl.u32 %v1103, 7
    %v1105 = vsub.s32 %v224, %v1104
    %v1106 = vrot.slane %v1097, %v1105
    %v1107 = vlaneseq
    %v1108 = vshrl.u32 %v1107, 7
    %v1109 = vsub.s32 %v224, %v1108
    %v1110 = vrot.slane %v1100, %v1109
    %v1111 = vsel %vm367, %v1110, %v1106
    %v1113 = vsel %vm370, %v1111, -inf
    %1114 = vmax.xlane.f32.xlu0 %v1113
    %v1115 = vpop.xlane.xlu0 %1114
    %v1117 = vlaneseq
    %v1118 = vshrl.u32 %v1117, 7
    %v1119 = vsub.s32 0, %v1118
    %v1120 = vrot.slane %v1115, %v1119
    %v1121 = vlaneseq
    %v1122 = vshrl.u32 %v1121, 7
    %v1123 = vsub.s32 1, %v1122
    %v1124 = vrot.slane %v1115, %v1123
    %v1127 = vsub.f32 %v1097, %v1120
    %v1128 = vsub.f32 %v1100, %v1124
    %v1129 = vmul.f32 %v1127, 1.442695
    %v1130 = vpow.pop %v1129
    %v1131 = vmul.f32 %v1128, 1.442695
    %v1132 = vpow.pop %v1131
    %1135 = vset.pattern.permute.xlu0 0
    %1136 = vperm.xlu0 %1135, %v1130
    %v1137 = vpop.permute.xlu0 %1136
    %1138 = vset.pattern.permute.xlu0 0
    %1139 = vperm.xlu0 %1138, %v1132
    %v1140 = vpop.permute.xlu0 %1139
    %v1141 = vlaneseq
    %v1142 = vshrl.u32 %v1141, 7
    %v1143 = vsub.s32 %v224, %v1142
    %v1144 = vrot.slane %v1137, %v1143
    %v1145 = vlaneseq
    %v1146 = vshrl.u32 %v1145, 7
    %v1147 = vsub.s32 %v224, %v1146
    %v1148 = vrot.slane %v1140, %v1147
    %v1149 = vsel %vm367, %v1148, %v1144
    %v1151 = vsel %vm370, %v1149, 0.0
    %1152 = vadd.xlane.f32.xlu0 %v1151
    %v1153 = vpop.xlane.xlu0 %1152
    %v1155 = vlaneseq
    %v1156 = vshrl.u32 %v1155, 7
    %v1157 = vsub.s32 0, %v1156
    %v1158 = vrot.slane %v1153, %v1157
    %v1159 = vlaneseq
    %v1160 = vshrl.u32 %v1159, 7
    %v1161 = vsub.s32 1, %v1160
    %v1162 = vrot.slane %v1153, %v1161
    %v1165 = vrcp.pop %v1158
    %v1166 = vmul.f32 %v1130, %v1165
    %v1167 = vrcp.pop %v1162
    %v1168 = vmul.f32 %v1132, %v1167
    %1170 = vset.pattern.permute.xlu0 0
    %1171 = vperm.xlu0 %1170, %v1166
    %v1172 = vpop.permute.xlu0 %1171
    %1175 = vset.pattern.permute.xlu0 0
    %1176 = vperm.xlu0 %1175, %v1168
    %v1177 = vpop.permute.xlu0 %1176
    %v1179 = vmul.f32 %v1172, %v60
    %v1180 = vmul.f32 %v1177, %v61
    %v1181 = vsel %vm141, %v1179, 0.0
    %v1182 = vrot.slane %v1181, 4
    %v1183 = vadd.f32 %v1181, %v1182
    %v1184 = vrot.slane %v1183, 2
    %v1185 = vadd.f32 %v1183, %v1184
    %v1186 = vrot.slane %v1185, 1
    %v1187 = vadd.f32 %v1185, %v1186
    %v1188 = vsel %vm141, %v1180, 0.0
    %v1189 = vrot.slane %v1188, 4
    %v1190 = vadd.f32 %v1188, %v1189
    %v1191 = vrot.slane %v1190, 2
    %v1192 = vadd.f32 %v1190, %v1191
    %v1193 = vrot.slane %v1192, 1
    %v1194 = vadd.f32 %v1192, %v1193
    %v1197 = vsel %vm367, %v1194, %v1187
    %v1198 = vsel %vm141, %v1197, 0
    %1200 = vmatprep.subr.mxu0 %v87
    %1201 = vmatpush1.msra.mxu0 %v86
    %1202 = vmatprep.subr.mxu0 %v89
    %1203 = vmatpush1.msra.mxu0 %v88
    %1204 = vmatprep.subr.mxu0 %v91
    %1205 = vmatpush1.msra.mxu0 %v90
    %1206 = vmatprep.subr.mxu0 %v93
    %1207 = vmatpush1.msra.mxu0 %v92
    %1208 = vmatprep.subr.mxu0 %v95
    %1209 = vmatpush1.msra.mxu0 %v94
    %1210 = vmatprep.subr.mxu0 %v97
    %1211 = vmatpush1.msra.mxu0 %v96
    %1212 = vmatprep.subr.mxu0 %v99
    %1213 = vmatpush1.msra.mxu0 %v98
    %1214 = vmatprep.subr.mxu0 %v101
    %1215 = vmatpush1.msra.mxu0 %v100
    %1216 = vmatprep.subr.mxu0 0.0
    %1217 = vmatpush1.msra.mxu0 0.0
    %1218 = vmatprep.subr.mxu0 0.0
    %1219 = vmatpush1.msra.mxu0 0.0
    %1220 = vmatprep.subr.mxu0 0.0
    %1221 = vmatpush1.msra.mxu0 0.0
    %1222 = vmatprep.subr.mxu0 0.0
    %1223 = vmatpush1.msra.mxu0 0.0
    %1224 = vmatprep.subr.mxu0 0.0
    %1225 = vmatpush1.msra.mxu0 0.0
    %1226 = vmatprep.subr.mxu0 0.0
    %1227 = vmatpush1.msra.mxu0 0.0
    %1228 = vmatprep.subr.mxu0 0.0
    %1229 = vmatpush1.msra.mxu0 0.0
    %1230 = vmatprep.subr.mxu0 0.0
    %1231 = vmatpush1.msra.mxu0 0.0
    %1232 = vmatprep.subr.mxu0 0.0
    %1233 = vmatpush1.msra.mxu0 0.0
    %1234 = vmatprep.subr.mxu0 0.0
    %1235 = vmatpush1.msra.mxu0 0.0
    %1236 = vmatprep.subr.mxu0 0.0
    %1237 = vmatpush1.msra.mxu0 0.0
    %1238 = vmatprep.subr.mxu0 0.0
    %1239 = vmatpush1.msra.mxu0 0.0
    %1240 = vmatprep.subr.mxu0 0.0
    %1241 = vmatpush1.msra.mxu0 0.0
    %1242 = vmatprep.subr.mxu0 0.0
    %1243 = vmatpush1.msra.mxu0 0.0
    %1244 = vmatprep.subr.mxu0 0.0
    %1245 = vmatpush1.msra.mxu0 0.0
    %1246 = vmatprep.subr.mxu0 0.0
    %1247 = vmatpush1.msra.mxu0 0.0
    %1248 = vmatprep.subr.mxu0 0.0
    %1249 = vmatpush1.msra.mxu0 0.0
    %1250 = vmatprep.subr.mxu0 0.0
    %1251 = vmatpush1.msra.mxu0 0.0
    %1252 = vmatprep.subr.mxu0 0.0
    %1253 = vmatpush1.msra.mxu0 0.0
    %1254 = vmatprep.subr.mxu0 0.0
    %1255 = vmatpush1.msra.mxu0 0.0
    %1256 = vmatprep.subr.mxu0 0.0
    %1257 = vmatpush1.msra.mxu0 0.0
    %1258 = vmatprep.subr.mxu0 0.0
    %1259 = vmatpush1.msra.mxu0 0.0
    %1260 = vmatprep.subr.mxu0 0.0
    %1261 = vmatpush1.msra.mxu0 0.0
    %1262 = vmatprep.subr.mxu0 0.0
    %1263 = vmatpush1.msra.mxu0 0.0
    %1264 = vmatprep.mubr.f32.mxu0 0.0
    %1265 = vmatmul.mubr.f32.gmra.mrb[0].mxu0 %v1198
    %v1266 = vpop.f32.mrb[0].mxu0
    %v1267 = vadd.f32 0.0, %v1266
    %v1268 = vpop.f32.mrb[0].mxu0
    %v1269 = vadd.f32 0.0, %v1268
    %1270 = vdwg.mxu0
    %v1272 = vsel %vm529, %v971, 0
    %1274 = vmatprep.subr.mxu0 %v83
    %1275 = vmatpush1.msra.mxu0 %v82
    %1276 = vmatprep.subr.mxu0 %v85
    %1277 = vmatpush1.msra.mxu0 %v84
    %1278 = vmatprep.subr.mxu0 0.0
    %1279 = vmatpush1.msra.mxu0 0.0
    %1280 = vmatprep.subr.mxu0 0.0
    %1281 = vmatpush1.msra.mxu0 0.0
    %1282 = vmatprep.subr.mxu0 0.0
    %1283 = vmatpush1.msra.mxu0 0.0
    %1284 = vmatprep.subr.mxu0 0.0
    %1285 = vmatpush1.msra.mxu0 0.0
    %1286 = vmatprep.subr.mxu0 0.0
    %1287 = vmatpush1.msra.mxu0 0.0
    %1288 = vmatprep.subr.mxu0 0.0
    %1289 = vmatpush1.msra.mxu0 0.0
    %1290 = vmatprep.subr.mxu0 0.0
    %1291 = vmatpush1.msra.mxu0 0.0
    %1292 = vmatprep.subr.mxu0 0.0
    %1293 = vmatpush1.msra.mxu0 0.0
    %1294 = vmatprep.subr.mxu0 0.0
    %1295 = vmatpush1.msra.mxu0 0.0
    %1296 = vmatprep.subr.mxu0 0.0
    %1297 = vmatpush1.msra.mxu0 0.0
    %1298 = vmatprep.subr.mxu0 0.0
    %1299 = vmatpush1.msra.mxu0 0.0
    %1300 = vmatprep.subr.mxu0 0.0
    %1301 = vmatpush1.msra.mxu0 0.0
    %1302 = vmatprep.subr.mxu0 0.0
    %1303 = vmatpush1.msra.mxu0 0.0
    %1304 = vmatprep.subr.mxu0 0.0
    %1305 = vmatpush1.msra.mxu0 0.0
    %1306 = vmatprep.subr.mxu0 0.0
    %1307 = vmatpush1.msra.mxu0 0.0
    %1308 = vmatprep.subr.mxu0 0.0
    %1309 = vmatpush1.msra.mxu0 0.0
    %1310 = vmatprep.subr.mxu0 0.0
    %1311 = vmatpush1.msra.mxu0 0.0
    %1312 = vmatprep.subr.mxu0 0.0
    %1313 = vmatpush1.msra.mxu0 0.0
    %1314 = vmatprep.subr.mxu0 0.0
    %1315 = vmatpush1.msra.mxu0 0.0
    %1316 = vmatprep.subr.mxu0 0.0
    %1317 = vmatpush1.msra.mxu0 0.0
    %1318 = vmatprep.subr.mxu0 0.0
    %1319 = vmatpush1.msra.mxu0 0.0
    %1320 = vmatprep.subr.mxu0 0.0
    %1321 = vmatpush1.msra.mxu0 0.0
    %1322 = vmatprep.subr.mxu0 0.0
    %1323 = vmatpush1.msra.mxu0 0.0
    %1324 = vmatprep.subr.mxu0 0.0
    %1325 = vmatpush1.msra.mxu0 0.0
    %1326 = vmatprep.subr.mxu0 0.0
    %1327 = vmatpush1.msra.mxu0 0.0
    %1328 = vmatprep.subr.mxu0 0.0
    %1329 = vmatpush1.msra.mxu0 0.0
    %1330 = vmatprep.subr.mxu0 0.0
    %1331 = vmatpush1.msra.mxu0 0.0
    %1332 = vmatprep.subr.mxu0 0.0
    %1333 = vmatpush1.msra.mxu0 0.0
    %1334 = vmatprep.subr.mxu0 0.0
    %1335 = vmatpush1.msra.mxu0 0.0
    %1336 = vmatprep.subr.mxu0 0.0
    %1337 = vmatpush1.msra.mxu0 0.0
    %1338 = vmatprep.mubr.f32.mxu0 0.0
    %1339 = vmatmul.mubr.f32.gmra.mrb[0].mxu0 %v1272
    %v1340 = vpop.f32.mrb[0].mxu0
    %v1341 = vadd.f32 %v1267, %v1340
    %v1342 = vpop.f32.mrb[0].mxu0
    %v1343 = vadd.f32 %v1269, %v1342
    %1344 = vdwg.mxu0
    %1345 = vmatprep.subr.mxu0 %v103
    %1346 = vmatpush1.msra.mxu0 %v102
    %1347 = vmatprep.subr.mxu0 %v105
    %1348 = vmatpush1.msra.mxu0 %v104
    %1349 = vmatprep.subr.mxu0 %v107
    %1350 = vmatpush1.msra.mxu0 %v106
    %1351 = vmatprep.subr.mxu0 %v109
    %1352 = vmatpush1.msra.mxu0 %v108
    %1353 = vmatprep.subr.mxu0 %v111
    %1354 = vmatpush1.msra.mxu0 %v110
    %1355 = vmatprep.subr.mxu0 %v113
    %1356 = vmatpush1.msra.mxu0 %v112
    %1357 = vmatprep.subr.mxu0 %v115
    %1358 = vmatpush1.msra.mxu0 %v114
    %1359 = vmatprep.subr.mxu0 %v117
    %1360 = vmatpush1.msra.mxu0 %v116
    %1361 = vmatprep.subr.mxu0 0.0
    %1362 = vmatpush1.msra.mxu0 0.0
    %1363 = vmatprep.subr.mxu0 0.0
    %1364 = vmatpush1.msra.mxu0 0.0
    %1365 = vmatprep.subr.mxu0 0.0
    %1366 = vmatpush1.msra.mxu0 0.0
    %1367 = vmatprep.subr.mxu0 0.0
    %1368 = vmatpush1.msra.mxu0 0.0
    %1369 = vmatprep.subr.mxu0 0.0
    %1370 = vmatpush1.msra.mxu0 0.0
    %1371 = vmatprep.subr.mxu0 0.0
    %1372 = vmatpush1.msra.mxu0 0.0
    %1373 = vmatprep.subr.mxu0 0.0
    %1374 = vmatpush1.msra.mxu0 0.0
    %1375 = vmatprep.subr.mxu0 0.0
    %1376 = vmatpush1.msra.mxu0 0.0
    %1377 = vmatprep.subr.mxu0 0.0
    %1378 = vmatpush1.msra.mxu0 0.0
    %1379 = vmatprep.subr.mxu0 0.0
    %1380 = vmatpush1.msra.mxu0 0.0
    %1381 = vmatprep.subr.mxu0 0.0
    %1382 = vmatpush1.msra.mxu0 0.0
    %1383 = vmatprep.subr.mxu0 0.0
    %1384 = vmatpush1.msra.mxu0 0.0
    %1385 = vmatprep.subr.mxu0 0.0
    %1386 = vmatpush1.msra.mxu0 0.0
    %1387 = vmatprep.subr.mxu0 0.0
    %1388 = vmatpush1.msra.mxu0 0.0
    %1389 = vmatprep.subr.mxu0 0.0
    %1390 = vmatpush1.msra.mxu0 0.0
    %1391 = vmatprep.subr.mxu0 0.0
    %1392 = vmatpush1.msra.mxu0 0.0
    %1393 = vmatprep.subr.mxu0 0.0
    %1394 = vmatpush1.msra.mxu0 0.0
    %1395 = vmatprep.subr.mxu0 0.0
    %1396 = vmatpush1.msra.mxu0 0.0
    %1397 = vmatprep.subr.mxu0 0.0
    %1398 = vmatpush1.msra.mxu0 0.0
    %1399 = vmatprep.subr.mxu0 0.0
    %1400 = vmatpush1.msra.mxu0 0.0
    %1401 = vmatprep.subr.mxu0 0.0
    %1402 = vmatpush1.msra.mxu0 0.0
    %1403 = vmatprep.subr.mxu0 0.0
    %1404 = vmatpush1.msra.mxu0 0.0
    %1405 = vmatprep.subr.mxu0 0.0
    %1406 = vmatpush1.msra.mxu0 0.0
    %1407 = vmatprep.subr.mxu0 0.0
    %1408 = vmatpush1.msra.mxu0 0.0
    %1409 = vmatprep.mubr.f32.mxu0 0.0
    %1410 = vmatmul.mubr.f32.gmra.mrb[0].mxu0 %v984
    %v1411 = vpop.f32.mrb[0].mxu0
    %v1412 = vadd.f32 0.0, %v1411
    %v1413 = vpop.f32.mrb[0].mxu0
    %v1414 = vadd.f32 0.0, %v1413
    %1415 = vdwg.mxu0
    %v1416 = vadd.f32 %v1341, %v1412
    %v1417 = vxor.u32 %v1416, 2147483648
    %v1418 = vmul.f32 %v1417, 1.442695
    %v1419 = vpow.pop %v1418
    %v1420 = vadd.f32 %v1419, 1.0
    %v1421 = vrcp.pop %v1420
    %v1422 = vmul.f32 1.0, %v1421
    %v1423 = vmul.f32 %v1422, %v1414
    %v1424 = vadd.f32 %v1343, %v1423
    %v1425 = vtanh.pop %v1424
    %v1426 = vsub.f32 1.0, %v1422
    %1428 = vrot.lane.b32.xlu0 %v1425, 64
    %v1429 = vpop.permute.xlu0 %1428
    %v1431 = vmul.f32 %v1426, %v1429
    %1432 = vrot.lane.b32.xlu0 %v973, 64
    %v1433 = vpop.permute.xlu0 %1432
    %v1435 = vmul.f32 %v1422, %v1433
    %v1436 = vadd.f32 %v1431, %v1435
    %1437 = vmatprep.subr.mxu0 0.0
    %1438 = vmatpush1.msra.mxu0 %v126
    %1439 = vmatprep.subr.mxu0 0.0
    %1440 = vmatpush1.msra.mxu0 %v127
    %1441 = vmatprep.subr.mxu0 0.0
    %1442 = vmatpush1.msra.mxu0 %v128
    %1443 = vmatprep.subr.mxu0 0.0
    %1444 = vmatpush1.msra.mxu0 %v129
    %1445 = vmatprep.subr.mxu0 0.0
    %1446 = vmatpush1.msra.mxu0 %v130
    %1447 = vmatprep.subr.mxu0 0.0
    %1448 = vmatpush1.msra.mxu0 %v131
    %1449 = vmatprep.subr.mxu0 0.0
    %1450 = vmatpush1.msra.mxu0 %v132
    %1451 = vmatprep.subr.mxu0 0.0
    %1452 = vmatpush1.msra.mxu0 %v133
    %1453 = vmatprep.subr.mxu0 0.0
    %1454 = vmatpush1.msra.mxu0 0.0
    %1455 = vmatprep.subr.mxu0 0.0
    %1456 = vmatpush1.msra.mxu0 0.0
    %1457 = vmatprep.subr.mxu0 0.0
    %1458 = vmatpush1.msra.mxu0 0.0
    %1459 = vmatprep.subr.mxu0 0.0
    %1460 = vmatpush1.msra.mxu0 0.0
    %1461 = vmatprep.subr.mxu0 0.0
    %1462 = vmatpush1.msra.mxu0 0.0
    %1463 = vmatprep.subr.mxu0 0.0
    %1464 = vmatpush1.msra.mxu0 0.0
    %1465 = vmatprep.subr.mxu0 0.0
    %1466 = vmatpush1.msra.mxu0 0.0
    %1467 = vmatprep.subr.mxu0 0.0
    %1468 = vmatpush1.msra.mxu0 0.0
    %1469 = vmatprep.subr.mxu0 0.0
    %1470 = vmatpush1.msra.mxu0 0.0
    %1471 = vmatprep.subr.mxu0 0.0
    %1472 = vmatpush1.msra.mxu0 0.0
    %1473 = vmatprep.subr.mxu0 0.0
    %1474 = vmatpush1.msra.mxu0 0.0
    %1475 = vmatprep.subr.mxu0 0.0
    %1476 = vmatpush1.msra.mxu0 0.0
    %1477 = vmatprep.subr.mxu0 0.0
    %1478 = vmatpush1.msra.mxu0 0.0
    %1479 = vmatprep.subr.mxu0 0.0
    %1480 = vmatpush1.msra.mxu0 0.0
    %1481 = vmatprep.subr.mxu0 0.0
    %1482 = vmatpush1.msra.mxu0 0.0
    %1483 = vmatprep.subr.mxu0 0.0
    %1484 = vmatpush1.msra.mxu0 0.0
    %1485 = vmatprep.subr.mxu0 0.0
    %1486 = vmatpush1.msra.mxu0 0.0
    %1487 = vmatprep.subr.mxu0 0.0
    %1488 = vmatpush1.msra.mxu0 0.0
    %1489 = vmatprep.subr.mxu0 0.0
    %1490 = vmatpush1.msra.mxu0 0.0
    %1491 = vmatprep.subr.mxu0 0.0
    %1492 = vmatpush1.msra.mxu0 0.0
    %1493 = vmatprep.subr.mxu0 0.0
    %1494 = vmatpush1.msra.mxu0 0.0
    %1495 = vmatprep.subr.mxu0 0.0
    %1496 = vmatpush1.msra.mxu0 0.0
    %1497 = vmatprep.subr.mxu0 0.0
    %1498 = vmatpush1.msra.mxu0 0.0
    %1499 = vmatprep.subr.mxu0 0.0
    %1500 = vmatpush1.msra.mxu0 0.0
    %1501 = vmatprep.mubr.f32.mxu0 0.0
    %1502 = vmatmul.mubr.f32.gmra.mrb[0].mxu0 %v1198
    %v1503 = vpop.f32.mrb[0].mxu0
    %v1504 = vadd.f32 0.0, %v1503
    %v1505 = vpop.f32.mrb[0].mxu0
    %1506 = vdwg.mxu0
    %1508 = vrot.lane.b32.xlu0 %v1436, 64
    %v1509 = vpop.permute.xlu0 %1508
    %v1510 = vsel %vm141, %v1509, 0
    %1512 = vmatprep.subr.mxu0 0.0
    %1513 = vmatpush1.msra.mxu0 %v118
    %1514 = vmatprep.subr.mxu0 0.0
    %1515 = vmatpush1.msra.mxu0 %v119
    %1516 = vmatprep.subr.mxu0 0.0
    %1517 = vmatpush1.msra.mxu0 %v120
    %1518 = vmatprep.subr.mxu0 0.0
    %1519 = vmatpush1.msra.mxu0 %v121
    %1520 = vmatprep.subr.mxu0 0.0
    %1521 = vmatpush1.msra.mxu0 %v122
    %1522 = vmatprep.subr.mxu0 0.0
    %1523 = vmatpush1.msra.mxu0 %v123
    %1524 = vmatprep.subr.mxu0 0.0
    %1525 = vmatpush1.msra.mxu0 %v124
    %1526 = vmatprep.subr.mxu0 0.0
    %1527 = vmatpush1.msra.mxu0 %v125
    %1528 = vmatprep.subr.mxu0 0.0
    %1529 = vmatpush1.msra.mxu0 0.0
    %1530 = vmatprep.subr.mxu0 0.0
    %1531 = vmatpush1.msra.mxu0 0.0
    %1532 = vmatprep.subr.mxu0 0.0
    %1533 = vmatpush1.msra.mxu0 0.0
    %1534 = vmatprep.subr.mxu0 0.0
    %1535 = vmatpush1.msra.mxu0 0.0
    %1536 = vmatprep.subr.mxu0 0.0
    %1537 = vmatpush1.msra.mxu0 0.0
    %1538 = vmatprep.subr.mxu0 0.0
    %1539 = vmatpush1.msra.mxu0 0.0
    %1540 = vmatprep.subr.mxu0 0.0
    %1541 = vmatpush1.msra.mxu0 0.0
    %1542 = vmatprep.subr.mxu0 0.0
    %1543 = vmatpush1.msra.mxu0 0.0
    %1544 = vmatprep.subr.mxu0 0.0
    %1545 = vmatpush1.msra.mxu0 0.0
    %1546 = vmatprep.subr.mxu0 0.0
    %1547 = vmatpush1.msra.mxu0 0.0
    %1548 = vmatprep.subr.mxu0 0.0
    %1549 = vmatpush1.msra.mxu0 0.0
    %1550 = vmatprep.subr.mxu0 0.0
    %1551 = vmatpush1.msra.mxu0 0.0
    %1552 = vmatprep.subr.mxu0 0.0
    %1553 = vmatpush1.msra.mxu0 0.0
    %1554 = vmatprep.subr.mxu0 0.0
    %1555 = vmatpush1.msra.mxu0 0.0
    %1556 = vmatprep.subr.mxu0 0.0
    %1557 = vmatpush1.msra.mxu0 0.0
    %1558 = vmatprep.subr.mxu0 0.0
    %1559 = vmatpush1.msra.mxu0 0.0
    %1560 = vmatprep.subr.mxu0 0.0
    %1561 = vmatpush1.msra.mxu0 0.0
    %1562 = vmatprep.subr.mxu0 0.0
    %1563 = vmatpush1.msra.mxu0 0.0
    %1564 = vmatprep.subr.mxu0 0.0
    %1565 = vmatpush1.msra.mxu0 0.0
    %1566 = vmatprep.subr.mxu0 0.0
    %1567 = vmatpush1.msra.mxu0 0.0
    %1568 = vmatprep.subr.mxu0 0.0
    %1569 = vmatpush1.msra.mxu0 0.0
    %1570 = vmatprep.subr.mxu0 0.0
    %1571 = vmatpush1.msra.mxu0 0.0
    %1572 = vmatprep.subr.mxu0 0.0
    %1573 = vmatpush1.msra.mxu0 0.0
    %1574 = vmatprep.subr.mxu0 0.0
    %1575 = vmatpush1.msra.mxu0 0.0
    %1576 = vmatprep.mubr.f32.mxu0 0.0
    %1577 = vmatmul.mubr.f32.gmra.mrb[0].mxu0 %v1510
    %v1578 = vpop.f32.mrb[0].mxu0
    %v1579 = vadd.f32 %v1504, %v1578
    %v1580 = vpop.f32.mrb[0].mxu0
    %1581 = vdwg.mxu0
    %v1582 = vadd.f32 %v1579, %v845
    %v1583 = vsel %vm848, %v1582, -inf
    %1584 = vmax.xlane.f32.xlu0 %v1583
    %v1585 = vpop.xlane.xlu0 %1584
    %v1586 = vsub.f32 %v1582, %v1585
    %v1587 = vmul.f32 %v1586, 1.442695
    %v1588 = vpow.pop %v1587
    %v1589 = vsel %vm848, %v1588, 0.0
    %1590 = vadd.xlane.f32.xlu0 %v1589
    %v1591 = vpop.xlane.xlu0 %1590
    %v1592 = vlog2.pop %v1591
    %v1593 = vmul.f32 %v1592, 0.6931472
    %v1594 = vsub.f32 %v1586, %v1593
    %v1595 = vsel %vm982, 1, 0
    %vm1596 = vcmp.eq.s32.totalorder %v1595, 1
    %v1597 = vsel %vm1596, 0.0, %v1594
    %s1598 = scalar_lea.vmem %s13, 2
    %1599 = vst.msk [vmem:[%s1598] sm:$0x3] %vm848, %v1597
    %v1600 = vsel %vm848, %v1594, -inf
    %1601 = vmax.xlane.f32.xlu0 %v1600
    %v1602 = vpop.xlane.xlu0 %1601
    %vm1603 = vcmp.eq.f32.partialorder %v1594, %v1602
    %v1604 = vsel %vm1603, %v224, 16
    %v1605 = vsel %vm848, %v1604, 2147483647
    %v1606 = vand.u32 %v1605, 65535
    %v1607 = vshra.s32 %v1605, 16
    %v1608 = vcvt.s32.f32 %v1606
    %v1609 = vcvt.s32.f32 %v1607
    %1610 = vmin.xlane.f32.xlu0 %v1609
    %v1611 = vpop.xlane.xlu0 %1610
    %vm1612 = vcmp.eq.f32.partialorder %v1609, %v1611
    %v1613 = vsel %vm1612, %v1608, inf
    %1614 = vmin.xlane.f32.xlu0 %v1613
    %v1615 = vpop.xlane.xlu0 %1614
    %v1616 = vcvt.f32.s32 %v1615
    %v1617 = vcvt.f32.s32 %v1611
    %v1618 = vshll.u32 %v1617, 16
    %v1619 = vadd.s32 %v1618, %v1616
    %vm1620 = vcmp.eq.s32.totalorder %v1619, 2
    %vm1621 = vcmp.eq.s32.totalorder %v224, %v1619
    %v1622 = vsel %vm1621, 1, 0
    %v1623 = vcvt.s32.f32 %v1622
    %v1625 = vsel %vm529, %v1623, 0
    %1627 = vmatprep.subr.mxu0 0.0
    %1628 = vmatpush1.msra.mxu0 %v62
    %1629 = vmatprep.subr.mxu0 0.0
    %1630 = vmatpush1.msra.mxu0 %v63
    %1631 = vmatprep.subr.mxu0 0.0
    %1632 = vmatpush1.msra.mxu0 0.0
    %1633 = vmatprep.subr.mxu0 0.0
    %1634 = vmatpush1.msra.mxu0 0.0
    %1635 = vmatprep.subr.mxu0 0.0
    %1636 = vmatpush1.msra.mxu0 0.0
    %1637 = vmatprep.subr.mxu0 0.0
    %1638 = vmatpush1.msra.mxu0 0.0
    %1639 = vmatprep.subr.mxu0 0.0
    %1640 = vmatpush1.msra.mxu0 0.0
    %1641 = vmatprep.subr.mxu0 0.0
    %1642 = vmatpush1.msra.mxu0 0.0
    %1643 = vmatprep.subr.mxu0 0.0
    %1644 = vmatpush1.msra.mxu0 0.0
    %1645 = vmatprep.subr.mxu0 0.0
    %1646 = vmatpush1.msra.mxu0 0.0
    %1647 = vmatprep.subr.mxu0 0.0
    %1648 = vmatpush1.msra.mxu0 0.0
    %1649 = vmatprep.subr.mxu0 0.0
    %1650 = vmatpush1.msra.mxu0 0.0
    %1651 = vmatprep.subr.mxu0 0.0
    %1652 = vmatpush1.msra.mxu0 0.0
    %1653 = vmatprep.subr.mxu0 0.0
    %1654 = vmatpush1.msra.mxu0 0.0
    %1655 = vmatprep.subr.mxu0 0.0
    %1656 = vmatpush1.msra.mxu0 0.0
    %1657 = vmatprep.subr.mxu0 0.0
    %1658 = vmatpush1.msra.mxu0 0.0
    %1659 = vmatprep.subr.mxu0 0.0
    %1660 = vmatpush1.msra.mxu0 0.0
    %1661 = vmatprep.subr.mxu0 0.0
    %1662 = vmatpush1.msra.mxu0 0.0
    %1663 = vmatprep.subr.mxu0 0.0
    %1664 = vmatpush1.msra.mxu0 0.0
    %1665 = vmatprep.subr.mxu0 0.0
    %1666 = vmatpush1.msra.mxu0 0.0
    %1667 = vmatprep.subr.mxu0 0.0
    %1668 = vmatpush1.msra.mxu0 0.0
    %1669 = vmatprep.subr.mxu0 0.0
    %1670 = vmatpush1.msra.mxu0 0.0
    %1671 = vmatprep.subr.mxu0 0.0
    %1672 = vmatpush1.msra.mxu0 0.0
    %1673 = vmatprep.subr.mxu0 0.0
    %1674 = vmatpush1.msra.mxu0 0.0
    %1675 = vmatprep.subr.mxu0 0.0
    %1676 = vmatpush1.msra.mxu0 0.0
    %1677 = vmatprep.subr.mxu0 0.0
    %1678 = vmatpush1.msra.mxu0 0.0
    %1679 = vmatprep.subr.mxu0 0.0
    %1680 = vmatpush1.msra.mxu0 0.0
    %1681 = vmatprep.subr.mxu0 0.0
    %1682 = vmatpush1.msra.mxu0 0.0
    %1683 = vmatprep.subr.mxu0 0.0
    %1684 = vmatpush1.msra.mxu0 0.0
    %1685 = vmatprep.subr.mxu0 0.0
    %1686 = vmatpush1.msra.mxu0 0.0
    %1687 = vmatprep.subr.mxu0 0.0
    %1688 = vmatpush1.msra.mxu0 0.0
    %1689 = vmatprep.subr.mxu0 0.0
    %1690 = vmatpush1.msra.mxu0 0.0
    %1691 = vmatprep.mubr.f32.mxu0 0.0
    %1692 = vmatmul.mubr.f32.gmra.mrb[0].mxu0 %v1625
    %v1693 = vpop.f32.mrb[0].mxu0
    %v1694 = vadd.f32 0.0, %v1693
    %v1695 = vpop.f32.mrb[0].mxu0
    %1696 = vdwg.mxu0
    %vm1697 = vmxor %vm982, 1
    %v1698 = vsel %vm1697, 1, 0
    %vm1699 = vcmp.eq.s32.totalorder %v1698, 1
    %vm1700 = vmand %vm1620, %vm1699
    %v1701 = vsel %vm1700, 2, %v966
    %v1702 = vsel %vm1620, 1, 0
    %v1703 = vcvt.s32.f32 %v1702
    %v1704 = vmax.f32 %v970, %v1703
    %v1705 = vsel %vm1596, %v970, %v1704
    %v1706 = vsel %vm1596, %v971, %v1694
    %v1708 = vsel %vm1596, %v973, %v1509
    %v1709 = vsel %vm974, %v1705, 0.0
    %v1710 = vrot.slane %v1709, 4
    %v1711 = vadd.f32 %v1709, %v1710
    %v1712 = vrot.slane %v1711, 2
    %v1713 = vadd.f32 %v1711, %v1712
    %v1714 = vrot.slane %v1713, 1
    %v1715 = vadd.f32 %v1713, %v1714
    %vm1716 = vcmp.ge.f32.partialorder %v1715, 2.0
    %v1718 = vsel %vm141, %v1708, 0
    %1720 = vmatprep.subr.mxu0 0.0
    %1721 = vmatpush1.msra.mxu0 %v64
    %1722 = vmatprep.subr.mxu0 0.0
    %1723 = vmatpush1.msra.mxu0 %v65
    %1724 = vmatprep.subr.mxu0 0.0
    %1725 = vmatpush1.msra.mxu0 %v66
    %1726 = vmatprep.subr.mxu0 0.0
    %1727 = vmatpush1.msra.mxu0 %v67
    %1728 = vmatprep.subr.mxu0 0.0
    %1729 = vmatpush1.msra.mxu0 %v68
    %1730 = vmatprep.subr.mxu0 0.0
    %1731 = vmatpush1.msra.mxu0 %v69
    %1732 = vmatprep.subr.mxu0 0.0
    %1733 = vmatpush1.msra.mxu0 %v70
    %1734 = vmatprep.subr.mxu0 0.0
    %1735 = vmatpush1.msra.mxu0 %v71
    %1736 = vmatprep.subr.mxu0 0.0
    %1737 = vmatpush1.msra.mxu0 0.0
    %1738 = vmatprep.subr.mxu0 0.0
    %1739 = vmatpush1.msra.mxu0 0.0
    %1740 = vmatprep.subr.mxu0 0.0
    %1741 = vmatpush1.msra.mxu0 0.0
    %1742 = vmatprep.subr.mxu0 0.0
    %1743 = vmatpush1.msra.mxu0 0.0
    %1744 = vmatprep.subr.mxu0 0.0
    %1745 = vmatpush1.msra.mxu0 0.0
    %1746 = vmatprep.subr.mxu0 0.0
    %1747 = vmatpush1.msra.mxu0 0.0
    %1748 = vmatprep.subr.mxu0 0.0
    %1749 = vmatpush1.msra.mxu0 0.0
    %1750 = vmatprep.subr.mxu0 0.0
    %1751 = vmatpush1.msra.mxu0 0.0
    %1752 = vmatprep.subr.mxu0 0.0
    %1753 = vmatpush1.msra.mxu0 0.0
    %1754 = vmatprep.subr.mxu0 0.0
    %1755 = vmatpush1.msra.mxu0 0.0
    %1756 = vmatprep.subr.mxu0 0.0
    %1757 = vmatpush1.msra.mxu0 0.0
    %1758 = vmatprep.subr.mxu0 0.0
    %1759 = vmatpush1.msra.mxu0 0.0
    %1760 = vmatprep.subr.mxu0 0.0
    %1761 = vmatpush1.msra.mxu0 0.0
    %1762 = vmatprep.subr.mxu0 0.0
    %1763 = vmatpush1.msra.mxu0 0.0
    %1764 = vmatprep.subr.mxu0 0.0
    %1765 = vmatpush1.msra.mxu0 0.0
    %1766 = vmatprep.subr.mxu0 0.0
    %1767 = vmatpush1.msra.mxu0 0.0
    %1768 = vmatprep.subr.mxu0 0.0
    %1769 = vmatpush1.msra.mxu0 0.0
    %1770 = vmatprep.subr.mxu0 0.0
    %1771 = vmatpush1.msra.mxu0 0.0
    %1772 = vmatprep.subr.mxu0 0.0
    %1773 = vmatpush1.msra.mxu0 0.0
    %1774 = vmatprep.subr.mxu0 0.0
    %1775 = vmatpush1.msra.mxu0 0.0
    %1776 = vmatprep.subr.mxu0 0.0
    %1777 = vmatpush1.msra.mxu0 0.0
    %1778 = vmatprep.subr.mxu0 0.0
    %1779 = vmatpush1.msra.mxu0 0.0
    %1780 = vmatprep.subr.mxu0 0.0
    %1781 = vmatpush1.msra.mxu0 0.0
    %1782 = vmatprep.subr.mxu0 0.0
    %1783 = vmatpush1.msra.mxu0 0.0
    %1784 = vmatprep.mubr.f32.mxu0 0.0
    %1785 = vmatmul.mubr.f32.gmra.mrb[0].mxu0 %v1718
    %v1786 = vpop.f32.mrb[0].mxu0
    %v1787 = vadd.f32 0.0, %v1786
    %v1788 = vpop.f32.mrb[0].mxu0
    %1789 = vdwg.mxu0
    %v1792 = vunpack.c.l.s4 1966171168
    %v1793 = vunpack.c.0.s8 %v1792
    %v1794 = vlaneseq
    %v1795 = vshrl.u32 %v1794, 7
    %v1796 = vsub.s32 %v1793, %v1795
    %v1797 = vrot.slane %v1787, %v1796
    %v1798 = vcombine.high %v1797, %v1797
    %v1800 = vunpack.c.l.s4 1966171168
    %v1801 = vunpack.c.0.s8 %v1800
    %v1802 = vlaneseq
    %v1803 = vshrl.u32 %v1802, 7
    %v1804 = vsub.s32 %v1801, %v1803
    %v1805 = vrot.slane %v1797, %v1804
    %v1807 = vunpack.c.l.s4 1966171168
    %v1808 = vunpack.c.0.s8 %v1807
    %v1809 = vlaneseq
    %v1810 = vshrl.u32 %v1809, 7
    %v1811 = vsub.s32 %v1808, %v1810
    %v1812 = vrot.slane %v1798, %v1811
    %v1813 = vlaneseq
    %v1814 = vshrl.u32 %v1813, 7
    %v1815 = vsub.s32 0, %v1814
    %v1816 = vrot.slane %v1805, %v1815
    %v1817 = vlaneseq
    %v1818 = vshrl.u32 %v1817, 7
    %v1819 = vsub.s32 0, %v1818
    %v1820 = vrot.slane %v1812, %v1819
    %v1823 = vadd.f32 %v215, %v1816
    %v1824 = vadd.f32 %v220, %v1820
    %v1825 = vtanh.pop %v1823
    %v1826 = vtanh.pop %v1824
    %v1827 = vmul.f32 %v1825, %v346
    %v1828 = vmul.f32 %v1826, %v346
    %v1829 = vsel %vm350, %v1827, 0.0
    %1830 = vadd.xlane.f32.xlu0 %v1829
    %v1831 = vpop.xlane.xlu0 %1830
    %v1832 = vsel %vm350, %v1828, 0.0
    %1833 = vadd.xlane.f32.xlu0 %v1832
    %v1834 = vpop.xlane.xlu0 %1833
    %v1837 = vlaneseq
    %v1838 = vshrl.u32 %v1837, 7
    %v1839 = vsub.s32 %v224, %v1838
    %v1840 = vrot.slane %v1831, %v1839
    %v1841 = vlaneseq
    %v1842 = vshrl.u32 %v1841, 7
    %v1843 = vsub.s32 %v224, %v1842
    %v1844 = vrot.slane %v1834, %v1843
    %v1845 = vsel %vm367, %v1844, %v1840
    %v1847 = vsel %vm370, %v1845, -inf
    %1848 = vmax.xlane.f32.xlu0 %v1847
    %v1849 = vpop.xlane.xlu0 %1848
    %v1851 = vlaneseq
    %v1852 = vshrl.u32 %v1851, 7
    %v1853 = vsub.s32 0, %v1852
    %v1854 = vrot.slane %v1849, %v1853
    %v1855 = vlaneseq
    %v1856 = vshrl.u32 %v1855, 7
    %v1857 = vsub.s32 1, %v1856
    %v1858 = vrot.slane %v1849, %v1857
    %v1861 = vsub.f32 %v1831, %v1854
    %v1862 = vsub.f32 %v1834, %v1858
    %v1863 = vmul.f32 %v1861, 1.442695
    %v1864 = vpow.pop %v1863
    %v1865 = vmul.f32 %v1862, 1.442695
    %v1866 = vpow.pop %v1865
    %1869 = vset.pattern.permute.xlu0 0
    %1870 = vperm.xlu0 %1869, %v1864
    %v1871 = vpop.permute.xlu0 %1870
    %1872 = vset.pattern.permute.xlu0 0
    %1873 = vperm.xlu0 %1872, %v1866
    %v1874 = vpop.permute.xlu0 %1873
    %v1875 = vlaneseq
    %v1876 = vshrl.u32 %v1875, 7
    %v1877 = vsub.s32 %v224, %v1876
    %v1878 = vrot.slane %v1871, %v1877
    %v1879 = vlaneseq
    %v1880 = vshrl.u32 %v1879, 7
    %v1881 = vsub.s32 %v224, %v1880
    %v1882 = vrot.slane %v1874, %v1881
    %v1883 = vsel %vm367, %v1882, %v1878
    %v1885 = vsel %vm370, %v1883, 0.0
    %1886 = vadd.xlane.f32.xlu0 %v1885
    %v1887 = vpop.xlane.xlu0 %1886
    %v1889 = vlaneseq
    %v1890 = vshrl.u32 %v1889, 7
    %v1891 = vsub.s32 0, %v1890
    %v1892 = vrot.slane %v1887, %v1891
    %v1893 = vlaneseq
    %v1894 = vshrl.u32 %v1893, 7
    %v1895 = vsub.s32 1, %v1894
    %v1896 = vrot.slane %v1887, %v1895
    %v1899 = vrcp.pop %v1892
    %v1900 = vmul.f32 %v1864, %v1899
    %v1901 = vrcp.pop %v1896
    %v1902 = vmul.f32 %v1866, %v1901
    %1904 = vset.pattern.permute.xlu0 0
    %1905 = vperm.xlu0 %1904, %v1900
    %v1906 = vpop.permute.xlu0 %1905
    %1909 = vset.pattern.permute.xlu0 0
    %1910 = vperm.xlu0 %1909, %v1902
    %v1911 = vpop.permute.xlu0 %1910
    %v1913 = vmul.f32 %v1906, %v60
    %v1914 = vmul.f32 %v1911, %v61
    %v1915 = vsel %vm141, %v1913, 0.0
    %v1916 = vrot.slane %v1915, 4
    %v1917 = vadd.f32 %v1915, %v1916
    %v1918 = vrot.slane %v1917, 2
    %v1919 = vadd.f32 %v1917, %v1918
    %v1920 = vrot.slane %v1919, 1
    %v1921 = vadd.f32 %v1919, %v1920
    %v1922 = vsel %vm141, %v1914, 0.0
    %v1923 = vrot.slane %v1922, 4
    %v1924 = vadd.f32 %v1922, %v1923
    %v1925 = vrot.slane %v1924, 2
    %v1926 = vadd.f32 %v1924, %v1925
    %v1927 = vrot.slane %v1926, 1
    %v1928 = vadd.f32 %v1926, %v1927
    %v1931 = vsel %vm367, %v1928, %v1921
    %v1932 = vsel %vm141, %v1931, 0
    %1934 = vmatprep.subr.mxu0 %v87
    %1935 = vmatpush1.msra.mxu0 %v86
    %1936 = vmatprep.subr.mxu0 %v89
    %1937 = vmatpush1.msra.mxu0 %v88
    %1938 = vmatprep.subr.mxu0 %v91
    %1939 = vmatpush1.msra.mxu0 %v90
    %1940 = vmatprep.subr.mxu0 %v93
    %1941 = vmatpush1.msra.mxu0 %v92
    %1942 = vmatprep.subr.mxu0 %v95
    %1943 = vmatpush1.msra.mxu0 %v94
    %1944 = vmatprep.subr.mxu0 %v97
    %1945 = vmatpush1.msra.mxu0 %v96
    %1946 = vmatprep.subr.mxu0 %v99
    %1947 = vmatpush1.msra.mxu0 %v98
    %1948 = vmatprep.subr.mxu0 %v101
    %1949 = vmatpush1.msra.mxu0 %v100
    %1950 = vmatprep.subr.mxu0 0.0
    %1951 = vmatpush1.msra.mxu0 0.0
    %1952 = vmatprep.subr.mxu0 0.0
    %1953 = vmatpush1.msra.mxu0 0.0
    %1954 = vmatprep.subr.mxu0 0.0
    %1955 = vmatpush1.msra.mxu0 0.0
    %1956 = vmatprep.subr.mxu0 0.0
    %1957 = vmatpush1.msra.mxu0 0.0
    %1958 = vmatprep.subr.mxu0 0.0
    %1959 = vmatpush1.msra.mxu0 0.0
    %1960 = vmatprep.subr.mxu0 0.0
    %1961 = vmatpush1.msra.mxu0 0.0
    %1962 = vmatprep.subr.mxu0 0.0
    %1963 = vmatpush1.msra.mxu0 0.0
    %1964 = vmatprep.subr.mxu0 0.0
    %1965 = vmatpush1.msra.mxu0 0.0
    %1966 = vmatprep.subr.mxu0 0.0
    %1967 = vmatpush1.msra.mxu0 0.0
    %1968 = vmatprep.subr.mxu0 0.0
    %1969 = vmatpush1.msra.mxu0 0.0
    %1970 = vmatprep.subr.mxu0 0.0
    %1971 = vmatpush1.msra.mxu0 0.0
    %1972 = vmatprep.subr.mxu0 0.0
    %1973 = vmatpush1.msra.mxu0 0.0
    %1974 = vmatprep.subr.mxu0 0.0
    %1975 = vmatpush1.msra.mxu0 0.0
    %1976 = vmatprep.subr.mxu0 0.0
    %1977 = vmatpush1.msra.mxu0 0.0
    %1978 = vmatprep.subr.mxu0 0.0
    %1979 = vmatpush1.msra.mxu0 0.0
    %1980 = vmatprep.subr.mxu0 0.0
    %1981 = vmatpush1.msra.mxu0 0.0
    %1982 = vmatprep.subr.mxu0 0.0
    %1983 = vmatpush1.msra.mxu0 0.0
    %1984 = vmatprep.subr.mxu0 0.0
    %1985 = vmatpush1.msra.mxu0 0.0
    %1986 = vmatprep.subr.mxu0 0.0
    %1987 = vmatpush1.msra.mxu0 0.0
    %1988 = vmatprep.subr.mxu0 0.0
    %1989 = vmatpush1.msra.mxu0 0.0
    %1990 = vmatprep.subr.mxu0 0.0
    %1991 = vmatpush1.msra.mxu0 0.0
    %1992 = vmatprep.subr.mxu0 0.0
    %1993 = vmatpush1.msra.mxu0 0.0
    %1994 = vmatprep.subr.mxu0 0.0
    %1995 = vmatpush1.msra.mxu0 0.0
    %1996 = vmatprep.subr.mxu0 0.0
    %1997 = vmatpush1.msra.mxu0 0.0
    %1998 = vmatprep.mubr.f32.mxu0 0.0
    %1999 = vmatmul.mubr.f32.gmra.mrb[0].mxu0 %v1932
    %v2000 = vpop.f32.mrb[0].mxu0
    %v2001 = vadd.f32 0.0, %v2000
    %v2002 = vpop.f32.mrb[0].mxu0
    %v2003 = vadd.f32 0.0, %v2002
    %2004 = vdwg.mxu0
    %v2006 = vsel %vm529, %v1706, 0
    %2008 = vmatprep.subr.mxu0 %v83
    %2009 = vmatpush1.msra.mxu0 %v82
    %2010 = vmatprep.subr.mxu0 %v85
    %2011 = vmatpush1.msra.mxu0 %v84
    %2012 = vmatprep.subr.mxu0 0.0
    %2013 = vmatpush1.msra.mxu0 0.0
    %2014 = vmatprep.subr.mxu0 0.0
    %2015 = vmatpush1.msra.mxu0 0.0
    %2016 = vmatprep.subr.mxu0 0.0
    %2017 = vmatpush1.msra.mxu0 0.0
    %2018 = vmatprep.subr.mxu0 0.0
    %2019 = vmatpush1.msra.mxu0 0.0
    %2020 = vmatprep.subr.mxu0 0.0
    %2021 = vmatpush1.msra.mxu0 0.0
    %2022 = vmatprep.subr.mxu0 0.0
    %2023 = vmatpush1.msra.mxu0 0.0
    %2024 = vmatprep.subr.mxu0 0.0
    %2025 = vmatpush1.msra.mxu0 0.0
    %2026 = vmatprep.subr.mxu0 0.0
    %2027 = vmatpush1.msra.mxu0 0.0
    %2028 = vmatprep.subr.mxu0 0.0
    %2029 = vmatpush1.msra.mxu0 0.0
    %2030 = vmatprep.subr.mxu0 0.0
    %2031 = vmatpush1.msra.mxu0 0.0
    %2032 = vmatprep.subr.mxu0 0.0
    %2033 = vmatpush1.msra.mxu0 0.0
    %2034 = vmatprep.subr.mxu0 0.0
    %2035 = vmatpush1.msra.mxu0 0.0
    %2036 = vmatprep.subr.mxu0 0.0
    %2037 = vmatpush1.msra.mxu0 0.0
    %2038 = vmatprep.subr.mxu0 0.0
    %2039 = vmatpush1.msra.mxu0 0.0
    %2040 = vmatprep.subr.mxu0 0.0
    %2041 = vmatpush1.msra.mxu0 0.0
    %2042 = vmatprep.subr.mxu0 0.0
    %2043 = vmatpush1.msra.mxu0 0.0
    %2044 = vmatprep.subr.mxu0 0.0
    %2045 = vmatpush1.msra.mxu0 0.0
    %2046 = vmatprep.subr.mxu0 0.0
    %2047 = vmatpush1.msra.mxu0 0.0
    %2048 = vmatprep.subr.mxu0 0.0
    %2049 = vmatpush1.msra.mxu0 0.0
    %2050 = vmatprep.subr.mxu0 0.0
    %2051 = vmatpush1.msra.mxu0 0.0
    %2052 = vmatprep.subr.mxu0 0.0
    %2053 = vmatpush1.msra.mxu0 0.0
    %2054 = vmatprep.subr.mxu0 0.0
    %2055 = vmatpush1.msra.mxu0 0.0
    %2056 = vmatprep.subr.mxu0 0.0
    %2057 = vmatpush1.msra.mxu0 0.0
    %2058 = vmatprep.subr.mxu0 0.0
    %2059 = vmatpush1.msra.mxu0 0.0
    %2060 = vmatprep.subr.mxu0 0.0
    %2061 = vmatpush1.msra.mxu0 0.0
    %2062 = vmatprep.subr.mxu0 0.0
    %2063 = vmatpush1.msra.mxu0 0.0
    %2064 = vmatprep.subr.mxu0 0.0
    %2065 = vmatpush1.msra.mxu0 0.0
    %2066 = vmatprep.subr.mxu0 0.0
    %2067 = vmatpush1.msra.mxu0 0.0
    %2068 = vmatprep.subr.mxu0 0.0
    %2069 = vmatpush1.msra.mxu0 0.0
    %2070 = vmatprep.subr.mxu0 0.0
    %2071 = vmatpush1.msra.mxu0 0.0
    %2072 = vmatprep.mubr.f32.mxu0 0.0
    %2073 = vmatmul.mubr.f32.gmra.mrb[0].mxu0 %v2006
    %v2074 = vpop.f32.mrb[0].mxu0
    %v2075 = vadd.f32 %v2001, %v2074
    %v2076 = vpop.f32.mrb[0].mxu0
    %v2077 = vadd.f32 %v2003, %v2076
    %2078 = vdwg.mxu0
    %2079 = vmatprep.subr.mxu0 %v103
    %2080 = vmatpush1.msra.mxu0 %v102
    %2081 = vmatprep.subr.mxu0 %v105
    %2082 = vmatpush1.msra.mxu0 %v104
    %2083 = vmatprep.subr.mxu0 %v107
    %2084 = vmatpush1.msra.mxu0 %v106
    %2085 = vmatprep.subr.mxu0 %v109
    %2086 = vmatpush1.msra.mxu0 %v108
    %2087 = vmatprep.subr.mxu0 %v111
    %2088 = vmatpush1.msra.mxu0 %v110
    %2089 = vmatprep.subr.mxu0 %v113
    %2090 = vmatpush1.msra.mxu0 %v112
    %2091 = vmatprep.subr.mxu0 %v115
    %2092 = vmatpush1.msra.mxu0 %v114
    %2093 = vmatprep.subr.mxu0 %v117
    %2094 = vmatpush1.msra.mxu0 %v116
    %2095 = vmatprep.subr.mxu0 0.0
    %2096 = vmatpush1.msra.mxu0 0.0
    %2097 = vmatprep.subr.mxu0 0.0
    %2098 = vmatpush1.msra.mxu0 0.0
    %2099 = vmatprep.subr.mxu0 0.0
    %2100 = vmatpush1.msra.mxu0 0.0
    %2101 = vmatprep.subr.mxu0 0.0
    %2102 = vmatpush1.msra.mxu0 0.0
    %2103 = vmatprep.subr.mxu0 0.0
    %2104 = vmatpush1.msra.mxu0 0.0
    %2105 = vmatprep.subr.mxu0 0.0
    %2106 = vmatpush1.msra.mxu0 0.0
    %2107 = vmatprep.subr.mxu0 0.0
    %2108 = vmatpush1.msra.mxu0 0.0
    %2109 = vmatprep.subr.mxu0 0.0
    %2110 = vmatpush1.msra.mxu0 0.0
    %2111 = vmatprep.subr.mxu0 0.0
    %2112 = vmatpush1.msra.mxu0 0.0
    %2113 = vmatprep.subr.mxu0 0.0
    %2114 = vmatpush1.msra.mxu0 0.0
    %2115 = vmatprep.subr.mxu0 0.0
    %2116 = vmatpush1.msra.mxu0 0.0
    %2117 = vmatprep.subr.mxu0 0.0
    %2118 = vmatpush1.msra.mxu0 0.0
    %2119 = vmatprep.subr.mxu0 0.0
    %2120 = vmatpush1.msra.mxu0 0.0
    %2121 = vmatprep.subr.mxu0 0.0
    %2122 = vmatpush1.msra.mxu0 0.0
    %2123 = vmatprep.subr.mxu0 0.0
    %2124 = vmatpush1.msra.mxu0 0.0
    %2125 = vmatprep.subr.mxu0 0.0
    %2126 = vmatpush1.msra.mxu0 0.0
    %2127 = vmatprep.subr.mxu0 0.0
    %2128 = vmatpush1.msra.mxu0 0.0
    %2129 = vmatprep.subr.mxu0 0.0
    %2130 = vmatpush1.msra.mxu0 0.0
    %2131 = vmatprep.subr.mxu0 0.0
    %2132 = vmatpush1.msra.mxu0 0.0
    %2133 = vmatprep.subr.mxu0 0.0
    %2134 = vmatpush1.msra.mxu0 0.0
    %2135 = vmatprep.subr.mxu0 0.0
    %2136 = vmatpush1.msra.mxu0 0.0
    %2137 = vmatprep.subr.mxu0 0.0
    %2138 = vmatpush1.msra.mxu0 0.0
    %2139 = vmatprep.subr.mxu0 0.0
    %2140 = vmatpush1.msra.mxu0 0.0
    %2141 = vmatprep.subr.mxu0 0.0
    %2142 = vmatpush1.msra.mxu0 0.0
    %2143 = vmatprep.mubr.f32.mxu0 0.0
    %2144 = vmatmul.mubr.f32.gmra.mrb[0].mxu0 %v1718
    %v2145 = vpop.f32.mrb[0].mxu0
    %v2146 = vadd.f32 0.0, %v2145
    %v2147 = vpop.f32.mrb[0].mxu0
    %v2148 = vadd.f32 0.0, %v2147
    %2149 = vdwg.mxu0
    %v2150 = vadd.f32 %v2075, %v2146
    %v2151 = vxor.u32 %v2150, 2147483648
    %v2152 = vmul.f32 %v2151, 1.442695
    %v2153 = vpow.pop %v2152
    %v2154 = vadd.f32 %v2153, 1.0
    %v2155 = vrcp.pop %v2154
    %v2156 = vmul.f32 1.0, %v2155
    %v2157 = vmul.f32 %v2156, %v2148
    %v2158 = vadd.f32 %v2077, %v2157
    %v2159 = vtanh.pop %v2158
    %v2160 = vsub.f32 1.0, %v2156
    %2162 = vrot.lane.b32.xlu0 %v2159, 64
    %v2163 = vpop.permute.xlu0 %2162
    %v2165 = vmul.f32 %v2160, %v2163
    %2166 = vrot.lane.b32.xlu0 %v1708, 64
    %v2167 = vpop.permute.xlu0 %2166
    %v2169 = vmul.f32 %v2156, %v2167
    %v2170 = vadd.f32 %v2165, %v2169
    %2171 = vmatprep.subr.mxu0 0.0
    %2172 = vmatpush1.msra.mxu0 %v126
    %2173 = vmatprep.subr.mxu0 0.0
    %2174 = vmatpush1.msra.mxu0 %v127
    %2175 = vmatprep.subr.mxu0 0.0
    %2176 = vmatpush1.msra.mxu0 %v128
    %2177 = vmatprep.subr.mxu0 0.0
    %2178 = vmatpush1.msra.mxu0 %v129
    %2179 = vmatprep.subr.mxu0 0.0
    %2180 = vmatpush1.msra.mxu0 %v130
    %2181 = vmatprep.subr.mxu0 0.0
    %2182 = vmatpush1.msra.mxu0 %v131
    %2183 = vmatprep.subr.mxu0 0.0
    %2184 = vmatpush1.msra.mxu0 %v132
    %2185 = vmatprep.subr.mxu0 0.0
    %2186 = vmatpush1.msra.mxu0 %v133
    %2187 = vmatprep.subr.mxu0 0.0
    %2188 = vmatpush1.msra.mxu0 0.0
    %2189 = vmatprep.subr.mxu0 0.0
    %2190 = vmatpush1.msra.mxu0 0.0
    %2191 = vmatprep.subr.mxu0 0.0
    %2192 = vmatpush1.msra.mxu0 0.0
    %2193 = vmatprep.subr.mxu0 0.0
    %2194 = vmatpush1.msra.mxu0 0.0
    %2195 = vmatprep.subr.mxu0 0.0
    %2196 = vmatpush1.msra.mxu0 0.0
    %2197 = vmatprep.subr.mxu0 0.0
    %2198 = vmatpush1.msra.mxu0 0.0
    %2199 = vmatprep.subr.mxu0 0.0
    %2200 = vmatpush1.msra.mxu0 0.0
    %2201 = vmatprep.subr.mxu0 0.0
    %2202 = vmatpush1.msra.mxu0 0.0
    %2203 = vmatprep.subr.mxu0 0.0
    %2204 = vmatpush1.msra.mxu0 0.0
    %2205 = vmatprep.subr.mxu0 0.0
    %2206 = vmatpush1.msra.mxu0 0.0
    %2207 = vmatprep.subr.mxu0 0.0
    %2208 = vmatpush1.msra.mxu0 0.0
    %2209 = vmatprep.subr.mxu0 0.0
    %2210 = vmatpush1.msra.mxu0 0.0
    %2211 = vmatprep.subr.mxu0 0.0
    %2212 = vmatpush1.msra.mxu0 0.0
    %2213 = vmatprep.subr.mxu0 0.0
    %2214 = vmatpush1.msra.mxu0 0.0
    %2215 = vmatprep.subr.mxu0 0.0
    %2216 = vmatpush1.msra.mxu0 0.0
    %2217 = vmatprep.subr.mxu0 0.0
    %2218 = vmatpush1.msra.mxu0 0.0
    %2219 = vmatprep.subr.mxu0 0.0
    %2220 = vmatpush1.msra.mxu0 0.0
    %2221 = vmatprep.subr.mxu0 0.0
    %2222 = vmatpush1.msra.mxu0 0.0
    %2223 = vmatprep.subr.mxu0 0.0
    %2224 = vmatpush1.msra.mxu0 0.0
    %2225 = vmatprep.subr.mxu0 0.0
    %2226 = vmatpush1.msra.mxu0 0.0
    %2227 = vmatprep.subr.mxu0 0.0
    %2228 = vmatpush1.msra.mxu0 0.0
    %2229 = vmatprep.subr.mxu0 0.0
    %2230 = vmatpush1.msra.mxu0 0.0
    %2231 = vmatprep.subr.mxu0 0.0
    %2232 = vmatpush1.msra.mxu0 0.0
    %2233 = vmatprep.subr.mxu0 0.0
    %2234 = vmatpush1.msra.mxu0 0.0
    %2235 = vmatprep.mubr.f32.mxu0 0.0
    %2236 = vmatmul.mubr.f32.gmra.mrb[0].mxu0 %v1932
    %v2237 = vpop.f32.mrb[0].mxu0
    %v2238 = vadd.f32 0.0, %v2237
    %v2239 = vpop.f32.mrb[0].mxu0
    %2240 = vdwg.mxu0
    %2242 = vrot.lane.b32.xlu0 %v2170, 64
    %v2243 = vpop.permute.xlu0 %2242
    %v2244 = vsel %vm141, %v2243, 0
    %2246 = vmatprep.subr.mxu0 0.0
    %2247 = vmatpush1.msra.mxu0 %v118
    %2248 = vmatprep.subr.mxu0 0.0
    %2249 = vmatpush1.msra.mxu0 %v119
    %2250 = vmatprep.subr.mxu0 0.0
    %2251 = vmatpush1.msra.mxu0 %v120
    %2252 = vmatprep.subr.mxu0 0.0
    %2253 = vmatpush1.msra.mxu0 %v121
    %2254 = vmatprep.subr.mxu0 0.0
    %2255 = vmatpush1.msra.mxu0 %v122
    %2256 = vmatprep.subr.mxu0 0.0
    %2257 = vmatpush1.msra.mxu0 %v123
    %2258 = vmatprep.subr.mxu0 0.0
    %2259 = vmatpush1.msra.mxu0 %v124
    %2260 = vmatprep.subr.mxu0 0.0
    %2261 = vmatpush1.msra.mxu0 %v125
    %2262 = vmatprep.subr.mxu0 0.0
    %2263 = vmatpush1.msra.mxu0 0.0
    %2264 = vmatprep.subr.mxu0 0.0
    %2265 = vmatpush1.msra.mxu0 0.0
    %2266 = vmatprep.subr.mxu0 0.0
    %2267 = vmatpush1.msra.mxu0 0.0
    %2268 = vmatprep.subr.mxu0 0.0
    %2269 = vmatpush1.msra.mxu0 0.0
    %2270 = vmatprep.subr.mxu0 0.0
    %2271 = vmatpush1.msra.mxu0 0.0
    %2272 = vmatprep.subr.mxu0 0.0
    %2273 = vmatpush1.msra.mxu0 0.0
    %2274 = vmatprep.subr.mxu0 0.0
    %2275 = vmatpush1.msra.mxu0 0.0
    %2276 = vmatprep.subr.mxu0 0.0
    %2277 = vmatpush1.msra.mxu0 0.0
    %2278 = vmatprep.subr.mxu0 0.0
    %2279 = vmatpush1.msra.mxu0 0.0
    %2280 = vmatprep.subr.mxu0 0.0
    %2281 = vmatpush1.msra.mxu0 0.0
    %2282 = vmatprep.subr.mxu0 0.0
    %2283 = vmatpush1.msra.mxu0 0.0
    %2284 = vmatprep.subr.mxu0 0.0
    %2285 = vmatpush1.msra.mxu0 0.0
    %2286 = vmatprep.subr.mxu0 0.0
    %2287 = vmatpush1.msra.mxu0 0.0
    %2288 = vmatprep.subr.mxu0 0.0
    %2289 = vmatpush1.msra.mxu0 0.0
    %2290 = vmatprep.subr.mxu0 0.0
    %2291 = vmatpush1.msra.mxu0 0.0
    %2292 = vmatprep.subr.mxu0 0.0
    %2293 = vmatpush1.msra.mxu0 0.0
    %2294 = vmatprep.subr.mxu0 0.0
    %2295 = vmatpush1.msra.mxu0 0.0
    %2296 = vmatprep.subr.mxu0 0.0
    %2297 = vmatpush1.msra.mxu0 0.0
    %2298 = vmatprep.subr.mxu0 0.0
    %2299 = vmatpush1.msra.mxu0 0.0
    %2300 = vmatprep.subr.mxu0 0.0
    %2301 = vmatpush1.msra.mxu0 0.0
    %2302 = vmatprep.subr.mxu0 0.0
    %2303 = vmatpush1.msra.mxu0 0.0
    %2304 = vmatprep.subr.mxu0 0.0
    %2305 = vmatpush1.msra.mxu0 0.0
    %2306 = vmatprep.subr.mxu0 0.0
    %2307 = vmatpush1.msra.mxu0 0.0
    %2308 = vmatprep.subr.mxu0 0.0
    %2309 = vmatpush1.msra.mxu0 0.0
    %2310 = vmatprep.mubr.f32.mxu0 0.0
    %2311 = vmatmul.mubr.f32.gmra.mrb[0].mxu0 %v2244
    %v2312 = vpop.f32.mrb[0].mxu0
    %v2313 = vadd.f32 %v2238, %v2312
    %v2314 = vpop.f32.mrb[0].mxu0
    %2315 = vdwg.mxu0
    %v2316 = vadd.f32 %v2313, %v845
    %v2317 = vsel %vm848, %v2316, -inf
    %2318 = vmax.xlane.f32.xlu0 %v2317
    %v2319 = vpop.xlane.xlu0 %2318
    %v2320 = vsub.f32 %v2316, %v2319
    %v2321 = vmul.f32 %v2320, 1.442695
    %v2322 = vpow.pop %v2321
    %v2323 = vsel %vm848, %v2322, 0.0
    %2324 = vadd.xlane.f32.xlu0 %v2323
    %v2325 = vpop.xlane.xlu0 %2324
    %v2326 = vlog2.pop %v2325
    %v2327 = vmul.f32 %v2326, 0.6931472
    %v2328 = vsub.f32 %v2320, %v2327
    %v2329 = vsel %vm1716, 1, 0
    %vm2330 = vcmp.eq.s32.totalorder %v2329, 1
    %v2331 = vsel %vm2330, 0.0, %v2328
    %s2332 = scalar_lea.vmem %s13, 4
    %2333 = vst.msk [vmem:[%s2332] sm:$0x3] %vm848, %v2331
    %v2334 = vsel %vm848, %v2328, -inf
    %2335 = vmax.xlane.f32.xlu0 %v2334
    %v2336 = vpop.xlane.xlu0 %2335
    %vm2337 = vcmp.eq.f32.partialorder %v2328, %v2336
    %v2338 = vsel %vm2337, %v224, 16
    %v2339 = vsel %vm848, %v2338, 2147483647
    %v2340 = vand.u32 %v2339, 65535
    %v2341 = vshra.s32 %v2339, 16
    %v2342 = vcvt.s32.f32 %v2340
    %v2343 = vcvt.s32.f32 %v2341
    %2344 = vmin.xlane.f32.xlu0 %v2343
    %v2345 = vpop.xlane.xlu0 %2344
    %vm2346 = vcmp.eq.f32.partialorder %v2343, %v2345
    %v2347 = vsel %vm2346, %v2342, inf
    %2348 = vmin.xlane.f32.xlu0 %v2347
    %v2349 = vpop.xlane.xlu0 %2348
    %v2350 = vcvt.f32.s32 %v2349
    %v2351 = vcvt.f32.s32 %v2345
    %v2352 = vshll.u32 %v2351, 16
    %v2353 = vadd.s32 %v2352, %v2350
    %vm2354 = vcmp.eq.s32.totalorder %v2353, 2
    %vm2355 = vcmp.eq.s32.totalorder %v224, %v2353
    %v2356 = vsel %vm2355, 1, 0
    %v2357 = vcvt.s32.f32 %v2356
    %v2359 = vsel %vm529, %v2357, 0
    %2361 = vmatprep.subr.mxu0 0.0
    %2362 = vmatpush1.msra.mxu0 %v62
    %2363 = vmatprep.subr.mxu0 0.0
    %2364 = vmatpush1.msra.mxu0 %v63
    %2365 = vmatprep.subr.mxu0 0.0
    %2366 = vmatpush1.msra.mxu0 0.0
    %2367 = vmatprep.subr.mxu0 0.0
    %2368 = vmatpush1.msra.mxu0 0.0
    %2369 = vmatprep.subr.mxu0 0.0
    %2370 = vmatpush1.msra.mxu0 0.0
    %2371 = vmatprep.subr.mxu0 0.0
    %2372 = vmatpush1.msra.mxu0 0.0
    %2373 = vmatprep.subr.mxu0 0.0
    %2374 = vmatpush1.msra.mxu0 0.0
    %2375 = vmatprep.subr.mxu0 0.0
    %2376 = vmatpush1.msra.mxu0 0.0
    %2377 = vmatprep.subr.mxu0 0.0
    %2378 = vmatpush1.msra.mxu0 0.0
    %2379 = vmatprep.subr.mxu0 0.0
    %2380 = vmatpush1.msra.mxu0 0.0
    %2381 = vmatprep.subr.mxu0 0.0
    %2382 = vmatpush1.msra.mxu0 0.0
    %2383 = vmatprep.subr.mxu0 0.0
    %2384 = vmatpush1.msra.mxu0 0.0
    %2385 = vmatprep.subr.mxu0 0.0
    %2386 = vmatpush1.msra.mxu0 0.0
    %2387 = vmatprep.subr.mxu0 0.0
    %2388 = vmatpush1.msra.mxu0 0.0
    %2389 = vmatprep.subr.mxu0 0.0
    %2390 = vmatpush1.msra.mxu0 0.0
    %2391 = vmatprep.subr.mxu0 0.0
    %2392 = vmatpush1.msra.mxu0 0.0
    %2393 = vmatprep.subr.mxu0 0.0
    %2394 = vmatpush1.msra.mxu0 0.0
    %2395 = vmatprep.subr.mxu0 0.0
    %2396 = vmatpush1.msra.mxu0 0.0
    %2397 = vmatprep.subr.mxu0 0.0
    %2398 = vmatpush1.msra.mxu0 0.0
    %2399 = vmatprep.subr.mxu0 0.0
    %2400 = vmatpush1.msra.mxu0 0.0
    %2401 = vmatprep.subr.mxu0 0.0
    %2402 = vmatpush1.msra.mxu0 0.0
    %2403 = vmatprep.subr.mxu0 0.0
    %2404 = vmatpush1.msra.mxu0 0.0
    %2405 = vmatprep.subr.mxu0 0.0
    %2406 = vmatpush1.msra.mxu0 0.0
    %2407 = vmatprep.subr.mxu0 0.0
    %2408 = vmatpush1.msra.mxu0 0.0
    %2409 = vmatprep.subr.mxu0 0.0
    %2410 = vmatpush1.msra.mxu0 0.0
    %2411 = vmatprep.subr.mxu0 0.0
    %2412 = vmatpush1.msra.mxu0 0.0
    %2413 = vmatprep.subr.mxu0 0.0
    %2414 = vmatpush1.msra.mxu0 0.0
    %2415 = vmatprep.subr.mxu0 0.0
    %2416 = vmatpush1.msra.mxu0 0.0
    %2417 = vmatprep.subr.mxu0 0.0
    %2418 = vmatpush1.msra.mxu0 0.0
    %2419 = vmatprep.subr.mxu0 0.0
    %2420 = vmatpush1.msra.mxu0 0.0
    %2421 = vmatprep.subr.mxu0 0.0
    %2422 = vmatpush1.msra.mxu0 0.0
    %2423 = vmatprep.subr.mxu0 0.0
    %2424 = vmatpush1.msra.mxu0 0.0
    %2425 = vmatprep.mubr.f32.mxu0 0.0
    %2426 = vmatmul.mubr.f32.gmra.mrb[0].mxu0 %v2359
    %v2427 = vpop.f32.mrb[0].mxu0
    %v2428 = vadd.f32 0.0, %v2427
    %v2429 = vpop.f32.mrb[0].mxu0
    %2430 = vdwg.mxu0
    %vm2431 = vmxor %vm1716, 1
    %v2432 = vsel %vm2431, 1, 0
    %vm2433 = vcmp.eq.s32.totalorder %v2432, 1
    %vm2434 = vmand %vm2354, %vm2433
    %v2435 = vsel %vm2434, 3, %v1701
    %v2436 = vsel %vm2354, 1, 0
    %v2437 = vcvt.s32.f32 %v2436
    %v2438 = vmax.f32 %v1705, %v2437
    %v2439 = vsel %vm2330, %v1705, %v2438
    %v2440 = vsel %vm2330, %v1706, %v2428
    %v2442 = vsel %vm2330, %v1708, %v2243
    %v2443 = vsel %vm974, %v2439, 0.0
    %v2444 = vrot.slane %v2443, 4
    %v2445 = vadd.f32 %v2443, %v2444
    %v2446 = vrot.slane %v2445, 2
    %v2447 = vadd.f32 %v2445, %v2446
    %v2448 = vrot.slane %v2447, 1
    %v2449 = vadd.f32 %v2447, %v2448
    %vm2450 = vcmp.ge.f32.partialorder %v2449, 2.0
    %v2452 = vsel %vm141, %v2442, 0
    %2454 = vmatprep.subr.mxu0 0.0
    %2455 = vmatpush1.msra.mxu0 %v64
    %2456 = vmatprep.subr.mxu0 0.0
    %2457 = vmatpush1.msra.mxu0 %v65
    %2458 = vmatprep.subr.mxu0 0.0
    %2459 = vmatpush1.msra.mxu0 %v66
    %2460 = vmatprep.subr.mxu0 0.0
    %2461 = vmatpush1.msra.mxu0 %v67
    %2462 = vmatprep.subr.mxu0 0.0
    %2463 = vmatpush1.msra.mxu0 %v68
    %2464 = vmatprep.subr.mxu0 0.0
    %2465 = vmatpush1.msra.mxu0 %v69
    %2466 = vmatprep.subr.mxu0 0.0
    %2467 = vmatpush1.msra.mxu0 %v70
    %2468 = vmatprep.subr.mxu0 0.0
    %2469 = vmatpush1.msra.mxu0 %v71
    %2470 = vmatprep.subr.mxu0 0.0
    %2471 = vmatpush1.msra.mxu0 0.0
    %2472 = vmatprep.subr.mxu0 0.0
    %2473 = vmatpush1.msra.mxu0 0.0
    %2474 = vmatprep.subr.mxu0 0.0
    %2475 = vmatpush1.msra.mxu0 0.0
    %2476 = vmatprep.subr.mxu0 0.0
    %2477 = vmatpush1.msra.mxu0 0.0
    %2478 = vmatprep.subr.mxu0 0.0
    %2479 = vmatpush1.msra.mxu0 0.0
    %2480 = vmatprep.subr.mxu0 0.0
    %2481 = vmatpush1.msra.mxu0 0.0
    %2482 = vmatprep.subr.mxu0 0.0
    %2483 = vmatpush1.msra.mxu0 0.0
    %2484 = vmatprep.subr.mxu0 0.0
    %2485 = vmatpush1.msra.mxu0 0.0
    %2486 = vmatprep.subr.mxu0 0.0
    %2487 = vmatpush1.msra.mxu0 0.0
    %2488 = vmatprep.subr.mxu0 0.0
    %2489 = vmatpush1.msra.mxu0 0.0
    %2490 = vmatprep.subr.mxu0 0.0
    %2491 = vmatpush1.msra.mxu0 0.0
    %2492 = vmatprep.subr.mxu0 0.0
    %2493 = vmatpush1.msra.mxu0 0.0
    %2494 = vmatprep.subr.mxu0 0.0
    %2495 = vmatpush1.msra.mxu0 0.0
    %2496 = vmatprep.subr.mxu0 0.0
    %2497 = vmatpush1.msra.mxu0 0.0
    %2498 = vmatprep.subr.mxu0 0.0
    %2499 = vmatpush1.msra.mxu0 0.0
    %2500 = vmatprep.subr.mxu0 0.0
    %2501 = vmatpush1.msra.mxu0 0.0
    %2502 = vmatprep.subr.mxu0 0.0
    %2503 = vmatpush1.msra.mxu0 0.0
    %2504 = vmatprep.subr.mxu0 0.0
    %2505 = vmatpush1.msra.mxu0 0.0
    %2506 = vmatprep.subr.mxu0 0.0
    %2507 = vmatpush1.msra.mxu0 0.0
    %2508 = vmatprep.subr.mxu0 0.0
    %2509 = vmatpush1.msra.mxu0 0.0
    %2510 = vmatprep.subr.mxu0 0.0
    %2511 = vmatpush1.msra.mxu0 0.0
    %2512 = vmatprep.subr.mxu0 0.0
    %2513 = vmatpush1.msra.mxu0 0.0
    %2514 = vmatprep.subr.mxu0 0.0
    %2515 = vmatpush1.msra.mxu0 0.0
    %2516 = vmatprep.subr.mxu0 0.0
    %2517 = vmatpush1.msra.mxu0 0.0
    %2518 = vmatprep.mubr.f32.mxu0 0.0
    %2519 = vmatmul.mubr.f32.gmra.mrb[0].mxu0 %v2452
    %v2520 = vpop.f32.mrb[0].mxu0
    %v2521 = vadd.f32 0.0, %v2520
    %v2522 = vpop.f32.mrb[0].mxu0
    %2523 = vdwg.mxu0
    %v2526 = vunpack.c.l.s4 1966171168
    %v2527 = vunpack.c.0.s8 %v2526
    %v2528 = vlaneseq
    %v2529 = vshrl.u32 %v2528, 7
    %v2530 = vsub.s32 %v2527, %v2529
    %v2531 = vrot.slane %v2521, %v2530
    %v2532 = vcombine.high %v2531, %v2531
    %v2534 = vunpack.c.l.s4 1966171168
    %v2535 = vunpack.c.0.s8 %v2534
    %v2536 = vlaneseq
    %v2537 = vshrl.u32 %v2536, 7
    %v2538 = vsub.s32 %v2535, %v2537
    %v2539 = vrot.slane %v2531, %v2538
    %v2541 = vunpack.c.l.s4 1966171168
    %v2542 = vunpack.c.0.s8 %v2541
    %v2543 = vlaneseq
    %v2544 = vshrl.u32 %v2543, 7
    %v2545 = vsub.s32 %v2542, %v2544
    %v2546 = vrot.slane %v2532, %v2545
    %v2547 = vlaneseq
    %v2548 = vshrl.u32 %v2547, 7
    %v2549 = vsub.s32 0, %v2548
    %v2550 = vrot.slane %v2539, %v2549
    %v2551 = vlaneseq
    %v2552 = vshrl.u32 %v2551, 7
    %v2553 = vsub.s32 0, %v2552
    %v2554 = vrot.slane %v2546, %v2553
    %v2557 = vadd.f32 %v215, %v2550
    %v2558 = vadd.f32 %v220, %v2554
    %v2559 = vtanh.pop %v2557
    %v2560 = vtanh.pop %v2558
    %v2561 = vmul.f32 %v2559, %v346
    %v2562 = vmul.f32 %v2560, %v346
    %v2563 = vsel %vm350, %v2561, 0.0
    %2564 = vadd.xlane.f32.xlu0 %v2563
    %v2565 = vpop.xlane.xlu0 %2564
    %v2566 = vsel %vm350, %v2562, 0.0
    %2567 = vadd.xlane.f32.xlu0 %v2566
    %v2568 = vpop.xlane.xlu0 %2567
    %v2571 = vlaneseq
    %v2572 = vshrl.u32 %v2571, 7
    %v2573 = vsub.s32 %v224, %v2572
    %v2574 = vrot.slane %v2565, %v2573
    %v2575 = vlaneseq
    %v2576 = vshrl.u32 %v2575, 7
    %v2577 = vsub.s32 %v224, %v2576
    %v2578 = vrot.slane %v2568, %v2577
    %v2579 = vsel %vm367, %v2578, %v2574
    %v2581 = vsel %vm370, %v2579, -inf
    %2582 = vmax.xlane.f32.xlu0 %v2581
    %v2583 = vpop.xlane.xlu0 %2582
    %v2585 = vlaneseq
    %v2586 = vshrl.u32 %v2585, 7
    %v2587 = vsub.s32 0, %v2586
    %v2588 = vrot.slane %v2583, %v2587
    %v2589 = vlaneseq
    %v2590 = vshrl.u32 %v2589, 7
    %v2591 = vsub.s32 1, %v2590
    %v2592 = vrot.slane %v2583, %v2591
    %v2595 = vsub.f32 %v2565, %v2588
    %v2596 = vsub.f32 %v2568, %v2592
    %v2597 = vmul.f32 %v2595, 1.442695
    %v2598 = vpow.pop %v2597
    %v2599 = vmul.f32 %v2596, 1.442695
    %v2600 = vpow.pop %v2599
    %2603 = vset.pattern.permute.xlu0 0
    %2604 = vperm.xlu0 %2603, %v2598
    %v2605 = vpop.permute.xlu0 %2604
    %2606 = vset.pattern.permute.xlu0 0
    %2607 = vperm.xlu0 %2606, %v2600
    %v2608 = vpop.permute.xlu0 %2607
    %v2609 = vlaneseq
    %v2610 = vshrl.u32 %v2609, 7
    %v2611 = vsub.s32 %v224, %v2610
    %v2612 = vrot.slane %v2605, %v2611
    %v2613 = vlaneseq
    %v2614 = vshrl.u32 %v2613, 7
    %v2615 = vsub.s32 %v224, %v2614
    %v2616 = vrot.slane %v2608, %v2615
    %v2617 = vsel %vm367, %v2616, %v2612
    %v2619 = vsel %vm370, %v2617, 0.0
    %2620 = vadd.xlane.f32.xlu0 %v2619
    %v2621 = vpop.xlane.xlu0 %2620
    %v2623 = vlaneseq
    %v2624 = vshrl.u32 %v2623, 7
    %v2625 = vsub.s32 0, %v2624
    %v2626 = vrot.slane %v2621, %v2625
    %v2627 = vlaneseq
    %v2628 = vshrl.u32 %v2627, 7
    %v2629 = vsub.s32 1, %v2628
    %v2630 = vrot.slane %v2621, %v2629
    %v2633 = vrcp.pop %v2626
    %v2634 = vmul.f32 %v2598, %v2633
    %v2635 = vrcp.pop %v2630
    %v2636 = vmul.f32 %v2600, %v2635
    %2638 = vset.pattern.permute.xlu0 0
    %2639 = vperm.xlu0 %2638, %v2634
    %v2640 = vpop.permute.xlu0 %2639
    %2643 = vset.pattern.permute.xlu0 0
    %2644 = vperm.xlu0 %2643, %v2636
    %v2645 = vpop.permute.xlu0 %2644
    %v2647 = vmul.f32 %v2640, %v60
    %v2648 = vmul.f32 %v2645, %v61
    %v2649 = vsel %vm141, %v2647, 0.0
    %v2650 = vrot.slane %v2649, 4
    %v2651 = vadd.f32 %v2649, %v2650
    %v2652 = vrot.slane %v2651, 2
    %v2653 = vadd.f32 %v2651, %v2652
    %v2654 = vrot.slane %v2653, 1
    %v2655 = vadd.f32 %v2653, %v2654
    %v2656 = vsel %vm141, %v2648, 0.0
    %v2657 = vrot.slane %v2656, 4
    %v2658 = vadd.f32 %v2656, %v2657
    %v2659 = vrot.slane %v2658, 2
    %v2660 = vadd.f32 %v2658, %v2659
    %v2661 = vrot.slane %v2660, 1
    %v2662 = vadd.f32 %v2660, %v2661
    %v2665 = vsel %vm367, %v2662, %v2655
    %v2666 = vsel %vm141, %v2665, 0
    %2668 = vmatprep.subr.mxu0 %v87
    %2669 = vmatpush1.msra.mxu0 %v86
    %2670 = vmatprep.subr.mxu0 %v89
    %2671 = vmatpush1.msra.mxu0 %v88
    %2672 = vmatprep.subr.mxu0 %v91
    %2673 = vmatpush1.msra.mxu0 %v90
    %2674 = vmatprep.subr.mxu0 %v93
    %2675 = vmatpush1.msra.mxu0 %v92
    %2676 = vmatprep.subr.mxu0 %v95
    %2677 = vmatpush1.msra.mxu0 %v94
    %2678 = vmatprep.subr.mxu0 %v97
    %2679 = vmatpush1.msra.mxu0 %v96
    %2680 = vmatprep.subr.mxu0 %v99
    %2681 = vmatpush1.msra.mxu0 %v98
    %2682 = vmatprep.subr.mxu0 %v101
    %2683 = vmatpush1.msra.mxu0 %v100
    %2684 = vmatprep.subr.mxu0 0.0
    %2685 = vmatpush1.msra.mxu0 0.0
    %2686 = vmatprep.subr.mxu0 0.0
    %2687 = vmatpush1.msra.mxu0 0.0
    %2688 = vmatprep.subr.mxu0 0.0
    %2689 = vmatpush1.msra.mxu0 0.0
    %2690 = vmatprep.subr.mxu0 0.0
    %2691 = vmatpush1.msra.mxu0 0.0
    %2692 = vmatprep.subr.mxu0 0.0
    %2693 = vmatpush1.msra.mxu0 0.0
    %2694 = vmatprep.subr.mxu0 0.0
    %2695 = vmatpush1.msra.mxu0 0.0
    %2696 = vmatprep.subr.mxu0 0.0
    %2697 = vmatpush1.msra.mxu0 0.0
    %2698 = vmatprep.subr.mxu0 0.0
    %2699 = vmatpush1.msra.mxu0 0.0
    %2700 = vmatprep.subr.mxu0 0.0
    %2701 = vmatpush1.msra.mxu0 0.0
    %2702 = vmatprep.subr.mxu0 0.0
    %2703 = vmatpush1.msra.mxu0 0.0
    %2704 = vmatprep.subr.mxu0 0.0
    %2705 = vmatpush1.msra.mxu0 0.0
    %2706 = vmatprep.subr.mxu0 0.0
    %2707 = vmatpush1.msra.mxu0 0.0
    %2708 = vmatprep.subr.mxu0 0.0
    %2709 = vmatpush1.msra.mxu0 0.0
    %2710 = vmatprep.subr.mxu0 0.0
    %2711 = vmatpush1.msra.mxu0 0.0
    %2712 = vmatprep.subr.mxu0 0.0
    %2713 = vmatpush1.msra.mxu0 0.0
    %2714 = vmatprep.subr.mxu0 0.0
    %2715 = vmatpush1.msra.mxu0 0.0
    %2716 = vmatprep.subr.mxu0 0.0
    %2717 = vmatpush1.msra.mxu0 0.0
    %2718 = vmatprep.subr.mxu0 0.0
    %2719 = vmatpush1.msra.mxu0 0.0
    %2720 = vmatprep.subr.mxu0 0.0
    %2721 = vmatpush1.msra.mxu0 0.0
    %2722 = vmatprep.subr.mxu0 0.0
    %2723 = vmatpush1.msra.mxu0 0.0
    %2724 = vmatprep.subr.mxu0 0.0
    %2725 = vmatpush1.msra.mxu0 0.0
    %2726 = vmatprep.subr.mxu0 0.0
    %2727 = vmatpush1.msra.mxu0 0.0
    %2728 = vmatprep.subr.mxu0 0.0
    %2729 = vmatpush1.msra.mxu0 0.0
    %2730 = vmatprep.subr.mxu0 0.0
    %2731 = vmatpush1.msra.mxu0 0.0
    %2732 = vmatprep.mubr.f32.mxu0 0.0
    %2733 = vmatmul.mubr.f32.gmra.mrb[0].mxu0 %v2666
    %v2734 = vpop.f32.mrb[0].mxu0
    %v2735 = vadd.f32 0.0, %v2734
    %v2736 = vpop.f32.mrb[0].mxu0
    %v2737 = vadd.f32 0.0, %v2736
    %2738 = vdwg.mxu0
    %v2740 = vsel %vm529, %v2440, 0
    %2742 = vmatprep.subr.mxu0 %v83
    %2743 = vmatpush1.msra.mxu0 %v82
    %2744 = vmatprep.subr.mxu0 %v85
    %2745 = vmatpush1.msra.mxu0 %v84
    %2746 = vmatprep.subr.mxu0 0.0
    %2747 = vmatpush1.msra.mxu0 0.0
    %2748 = vmatprep.subr.mxu0 0.0
    %2749 = vmatpush1.msra.mxu0 0.0
    %2750 = vmatprep.subr.mxu0 0.0
    %2751 = vmatpush1.msra.mxu0 0.0
    %2752 = vmatprep.subr.mxu0 0.0
    %2753 = vmatpush1.msra.mxu0 0.0
    %2754 = vmatprep.subr.mxu0 0.0
    %2755 = vmatpush1.msra.mxu0 0.0
    %2756 = vmatprep.subr.mxu0 0.0
    %2757 = vmatpush1.msra.mxu0 0.0
    %2758 = vmatprep.subr.mxu0 0.0
    %2759 = vmatpush1.msra.mxu0 0.0
    %2760 = vmatprep.subr.mxu0 0.0
    %2761 = vmatpush1.msra.mxu0 0.0
    %2762 = vmatprep.subr.mxu0 0.0
    %2763 = vmatpush1.msra.mxu0 0.0
    %2764 = vmatprep.subr.mxu0 0.0
    %2765 = vmatpush1.msra.mxu0 0.0
    %2766 = vmatprep.subr.mxu0 0.0
    %2767 = vmatpush1.msra.mxu0 0.0
    %2768 = vmatprep.subr.mxu0 0.0
    %2769 = vmatpush1.msra.mxu0 0.0
    %2770 = vmatprep.subr.mxu0 0.0
    %2771 = vmatpush1.msra.mxu0 0.0
    %2772 = vmatprep.subr.mxu0 0.0
    %2773 = vmatpush1.msra.mxu0 0.0
    %2774 = vmatprep.subr.mxu0 0.0
    %2775 = vmatpush1.msra.mxu0 0.0
    %2776 = vmatprep.subr.mxu0 0.0
    %2777 = vmatpush1.msra.mxu0 0.0
    %2778 = vmatprep.subr.mxu0 0.0
    %2779 = vmatpush1.msra.mxu0 0.0
    %2780 = vmatprep.subr.mxu0 0.0
    %2781 = vmatpush1.msra.mxu0 0.0
    %2782 = vmatprep.subr.mxu0 0.0
    %2783 = vmatpush1.msra.mxu0 0.0
    %2784 = vmatprep.subr.mxu0 0.0
    %2785 = vmatpush1.msra.mxu0 0.0
    %2786 = vmatprep.subr.mxu0 0.0
    %2787 = vmatpush1.msra.mxu0 0.0
    %2788 = vmatprep.subr.mxu0 0.0
    %2789 = vmatpush1.msra.mxu0 0.0
    %2790 = vmatprep.subr.mxu0 0.0
    %2791 = vmatpush1.msra.mxu0 0.0
    %2792 = vmatprep.subr.mxu0 0.0
    %2793 = vmatpush1.msra.mxu0 0.0
    %2794 = vmatprep.subr.mxu0 0.0
    %2795 = vmatpush1.msra.mxu0 0.0
    %2796 = vmatprep.subr.mxu0 0.0
    %2797 = vmatpush1.msra.mxu0 0.0
    %2798 = vmatprep.subr.mxu0 0.0
    %2799 = vmatpush1.msra.mxu0 0.0
    %2800 = vmatprep.subr.mxu0 0.0
    %2801 = vmatpush1.msra.mxu0 0.0
    %2802 = vmatprep.subr.mxu0 0.0
    %2803 = vmatpush1.msra.mxu0 0.0
    %2804 = vmatprep.subr.mxu0 0.0
    %2805 = vmatpush1.msra.mxu0 0.0
    %2806 = vmatprep.mubr.f32.mxu0 0.0
    %2807 = vmatmul.mubr.f32.gmra.mrb[0].mxu0 %v2740
    %v2808 = vpop.f32.mrb[0].mxu0
    %v2809 = vadd.f32 %v2735, %v2808
    %v2810 = vpop.f32.mrb[0].mxu0
    %v2811 = vadd.f32 %v2737, %v2810
    %2812 = vdwg.mxu0
    %2813 = vmatprep.subr.mxu0 %v103
    %2814 = vmatpush1.msra.mxu0 %v102
    %2815 = vmatprep.subr.mxu0 %v105
    %2816 = vmatpush1.msra.mxu0 %v104
    %2817 = vmatprep.subr.mxu0 %v107
    %2818 = vmatpush1.msra.mxu0 %v106
    %2819 = vmatprep.subr.mxu0 %v109
    %2820 = vmatpush1.msra.mxu0 %v108
    %2821 = vmatprep.subr.mxu0 %v111
    %2822 = vmatpush1.msra.mxu0 %v110
    %2823 = vmatprep.subr.mxu0 %v113
    %2824 = vmatpush1.msra.mxu0 %v112
    %2825 = vmatprep.subr.mxu0 %v115
    %2826 = vmatpush1.msra.mxu0 %v114
    %2827 = vmatprep.subr.mxu0 %v117
    %2828 = vmatpush1.msra.mxu0 %v116
    %2829 = vmatprep.subr.mxu0 0.0
    %2830 = vmatpush1.msra.mxu0 0.0
    %2831 = vmatprep.subr.mxu0 0.0
    %2832 = vmatpush1.msra.mxu0 0.0
    %2833 = vmatprep.subr.mxu0 0.0
    %2834 = vmatpush1.msra.mxu0 0.0
    %2835 = vmatprep.subr.mxu0 0.0
    %2836 = vmatpush1.msra.mxu0 0.0
    %2837 = vmatprep.subr.mxu0 0.0
    %2838 = vmatpush1.msra.mxu0 0.0
    %2839 = vmatprep.subr.mxu0 0.0
    %2840 = vmatpush1.msra.mxu0 0.0
    %2841 = vmatprep.subr.mxu0 0.0
    %2842 = vmatpush1.msra.mxu0 0.0
    %2843 = vmatprep.subr.mxu0 0.0
    %2844 = vmatpush1.msra.mxu0 0.0
    %2845 = vmatprep.subr.mxu0 0.0
    %2846 = vmatpush1.msra.mxu0 0.0
    %2847 = vmatprep.subr.mxu0 0.0
    %2848 = vmatpush1.msra.mxu0 0.0
    %2849 = vmatprep.subr.mxu0 0.0
    %2850 = vmatpush1.msra.mxu0 0.0
    %2851 = vmatprep.subr.mxu0 0.0
    %2852 = vmatpush1.msra.mxu0 0.0
    %2853 = vmatprep.subr.mxu0 0.0
    %2854 = vmatpush1.msra.mxu0 0.0
    %2855 = vmatprep.subr.mxu0 0.0
    %2856 = vmatpush1.msra.mxu0 0.0
    %2857 = vmatprep.subr.mxu0 0.0
    %2858 = vmatpush1.msra.mxu0 0.0
    %2859 = vmatprep.subr.mxu0 0.0
    %2860 = vmatpush1.msra.mxu0 0.0
    %2861 = vmatprep.subr.mxu0 0.0
    %2862 = vmatpush1.msra.mxu0 0.0
    %2863 = vmatprep.subr.mxu0 0.0
    %2864 = vmatpush1.msra.mxu0 0.0
    %2865 = vmatprep.subr.mxu0 0.0
    %2866 = vmatpush1.msra.mxu0 0.0
    %2867 = vmatprep.subr.mxu0 0.0
    %2868 = vmatpush1.msra.mxu0 0.0
    %2869 = vmatprep.subr.mxu0 0.0
    %2870 = vmatpush1.msra.mxu0 0.0
    %2871 = vmatprep.subr.mxu0 0.0
    %2872 = vmatpush1.msra.mxu0 0.0
    %2873 = vmatprep.subr.mxu0 0.0
    %2874 = vmatpush1.msra.mxu0 0.0
    %2875 = vmatprep.subr.mxu0 0.0
    %2876 = vmatpush1.msra.mxu0 0.0
    %2877 = vmatprep.mubr.f32.mxu0 0.0
    %2878 = vmatmul.mubr.f32.gmra.mrb[0].mxu0 %v2452
    %v2879 = vpop.f32.mrb[0].mxu0
    %v2880 = vadd.f32 0.0, %v2879
    %v2881 = vpop.f32.mrb[0].mxu0
    %v2882 = vadd.f32 0.0, %v2881
    %2883 = vdwg.mxu0
    %v2884 = vadd.f32 %v2809, %v2880
    %v2885 = vxor.u32 %v2884, 2147483648
    %v2886 = vmul.f32 %v2885, 1.442695
    %v2887 = vpow.pop %v2886
    %v2888 = vadd.f32 %v2887, 1.0
    %v2889 = vrcp.pop %v2888
    %v2890 = vmul.f32 1.0, %v2889
    %v2891 = vmul.f32 %v2890, %v2882
    %v2892 = vadd.f32 %v2811, %v2891
    %v2893 = vtanh.pop %v2892
    %v2894 = vsub.f32 1.0, %v2890
    %2896 = vrot.lane.b32.xlu0 %v2893, 64
    %v2897 = vpop.permute.xlu0 %2896
    %v2899 = vmul.f32 %v2894, %v2897
    %2900 = vrot.lane.b32.xlu0 %v2442, 64
    %v2901 = vpop.permute.xlu0 %2900
    %v2903 = vmul.f32 %v2890, %v2901
    %v2904 = vadd.f32 %v2899, %v2903
    %2905 = vmatprep.subr.mxu0 0.0
    %2906 = vmatpush1.msra.mxu0 %v126
    %2907 = vmatprep.subr.mxu0 0.0
    %2908 = vmatpush1.msra.mxu0 %v127
    %2909 = vmatprep.subr.mxu0 0.0
    %2910 = vmatpush1.msra.mxu0 %v128
    %2911 = vmatprep.subr.mxu0 0.0
    %2912 = vmatpush1.msra.mxu0 %v129
    %2913 = vmatprep.subr.mxu0 0.0
    %2914 = vmatpush1.msra.mxu0 %v130
    %2915 = vmatprep.subr.mxu0 0.0
    %2916 = vmatpush1.msra.mxu0 %v131
    %2917 = vmatprep.subr.mxu0 0.0
    %2918 = vmatpush1.msra.mxu0 %v132
    %2919 = vmatprep.subr.mxu0 0.0
    %2920 = vmatpush1.msra.mxu0 %v133
    %2921 = vmatprep.subr.mxu0 0.0
    %2922 = vmatpush1.msra.mxu0 0.0
    %2923 = vmatprep.subr.mxu0 0.0
    %2924 = vmatpush1.msra.mxu0 0.0
    %2925 = vmatprep.subr.mxu0 0.0
    %2926 = vmatpush1.msra.mxu0 0.0
    %2927 = vmatprep.subr.mxu0 0.0
    %2928 = vmatpush1.msra.mxu0 0.0
    %2929 = vmatprep.subr.mxu0 0.0
    %2930 = vmatpush1.msra.mxu0 0.0
    %2931 = vmatprep.subr.mxu0 0.0
    %2932 = vmatpush1.msra.mxu0 0.0
    %2933 = vmatprep.subr.mxu0 0.0
    %2934 = vmatpush1.msra.mxu0 0.0
    %2935 = vmatprep.subr.mxu0 0.0
    %2936 = vmatpush1.msra.mxu0 0.0
    %2937 = vmatprep.subr.mxu0 0.0
    %2938 = vmatpush1.msra.mxu0 0.0
    %2939 = vmatprep.subr.mxu0 0.0
    %2940 = vmatpush1.msra.mxu0 0.0
    %2941 = vmatprep.subr.mxu0 0.0
    %2942 = vmatpush1.msra.mxu0 0.0
    %2943 = vmatprep.subr.mxu0 0.0
    %2944 = vmatpush1.msra.mxu0 0.0
    %2945 = vmatprep.subr.mxu0 0.0
    %2946 = vmatpush1.msra.mxu0 0.0
    %2947 = vmatprep.subr.mxu0 0.0
    %2948 = vmatpush1.msra.mxu0 0.0
    %2949 = vmatprep.subr.mxu0 0.0
    %2950 = vmatpush1.msra.mxu0 0.0
    %2951 = vmatprep.subr.mxu0 0.0
    %2952 = vmatpush1.msra.mxu0 0.0
    %2953 = vmatprep.subr.mxu0 0.0
    %2954 = vmatpush1.msra.mxu0 0.0
    %2955 = vmatprep.subr.mxu0 0.0
    %2956 = vmatpush1.msra.mxu0 0.0
    %2957 = vmatprep.subr.mxu0 0.0
    %2958 = vmatpush1.msra.mxu0 0.0
    %2959 = vmatprep.subr.mxu0 0.0
    %2960 = vmatpush1.msra.mxu0 0.0
    %2961 = vmatprep.subr.mxu0 0.0
    %2962 = vmatpush1.msra.mxu0 0.0
    %2963 = vmatprep.subr.mxu0 0.0
    %2964 = vmatpush1.msra.mxu0 0.0
    %2965 = vmatprep.subr.mxu0 0.0
    %2966 = vmatpush1.msra.mxu0 0.0
    %2967 = vmatprep.subr.mxu0 0.0
    %2968 = vmatpush1.msra.mxu0 0.0
    %2969 = vmatprep.mubr.f32.mxu0 0.0
    %2970 = vmatmul.mubr.f32.gmra.mrb[0].mxu0 %v2666
    %v2971 = vpop.f32.mrb[0].mxu0
    %v2972 = vadd.f32 0.0, %v2971
    %v2973 = vpop.f32.mrb[0].mxu0
    %2974 = vdwg.mxu0
    %2976 = vrot.lane.b32.xlu0 %v2904, 64
    %v2977 = vpop.permute.xlu0 %2976
    %v2978 = vsel %vm141, %v2977, 0
    %2980 = vmatprep.subr.mxu0 0.0
    %2981 = vmatpush1.msra.mxu0 %v118
    %2982 = vmatprep.subr.mxu0 0.0
    %2983 = vmatpush1.msra.mxu0 %v119
    %2984 = vmatprep.subr.mxu0 0.0
    %2985 = vmatpush1.msra.mxu0 %v120
    %2986 = vmatprep.subr.mxu0 0.0
    %2987 = vmatpush1.msra.mxu0 %v121
    %2988 = vmatprep.subr.mxu0 0.0
    %2989 = vmatpush1.msra.mxu0 %v122
    %2990 = vmatprep.subr.mxu0 0.0
    %2991 = vmatpush1.msra.mxu0 %v123
    %2992 = vmatprep.subr.mxu0 0.0
    %2993 = vmatpush1.msra.mxu0 %v124
    %2994 = vmatprep.subr.mxu0 0.0
    %2995 = vmatpush1.msra.mxu0 %v125
    %2996 = vmatprep.subr.mxu0 0.0
    %2997 = vmatpush1.msra.mxu0 0.0
    %2998 = vmatprep.subr.mxu0 0.0
    %2999 = vmatpush1.msra.mxu0 0.0
    %3000 = vmatprep.subr.mxu0 0.0
    %3001 = vmatpush1.msra.mxu0 0.0
    %3002 = vmatprep.subr.mxu0 0.0
    %3003 = vmatpush1.msra.mxu0 0.0
    %3004 = vmatprep.subr.mxu0 0.0
    %3005 = vmatpush1.msra.mxu0 0.0
    %3006 = vmatprep.subr.mxu0 0.0
    %3007 = vmatpush1.msra.mxu0 0.0
    %3008 = vmatprep.subr.mxu0 0.0
    %3009 = vmatpush1.msra.mxu0 0.0
    %3010 = vmatprep.subr.mxu0 0.0
    %3011 = vmatpush1.msra.mxu0 0.0
    %3012 = vmatprep.subr.mxu0 0.0
    %3013 = vmatpush1.msra.mxu0 0.0
    %3014 = vmatprep.subr.mxu0 0.0
    %3015 = vmatpush1.msra.mxu0 0.0
    %3016 = vmatprep.subr.mxu0 0.0
    %3017 = vmatpush1.msra.mxu0 0.0
    %3018 = vmatprep.subr.mxu0 0.0
    %3019 = vmatpush1.msra.mxu0 0.0
    %3020 = vmatprep.subr.mxu0 0.0
    %3021 = vmatpush1.msra.mxu0 0.0
    %3022 = vmatprep.subr.mxu0 0.0
    %3023 = vmatpush1.msra.mxu0 0.0
    %3024 = vmatprep.subr.mxu0 0.0
    %3025 = vmatpush1.msra.mxu0 0.0
    %3026 = vmatprep.subr.mxu0 0.0
    %3027 = vmatpush1.msra.mxu0 0.0
    %3028 = vmatprep.subr.mxu0 0.0
    %3029 = vmatpush1.msra.mxu0 0.0
    %3030 = vmatprep.subr.mxu0 0.0
    %3031 = vmatpush1.msra.mxu0 0.0
    %3032 = vmatprep.subr.mxu0 0.0
    %3033 = vmatpush1.msra.mxu0 0.0
    %3034 = vmatprep.subr.mxu0 0.0
    %3035 = vmatpush1.msra.mxu0 0.0
    %3036 = vmatprep.subr.mxu0 0.0
    %3037 = vmatpush1.msra.mxu0 0.0
    %3038 = vmatprep.subr.mxu0 0.0
    %3039 = vmatpush1.msra.mxu0 0.0
    %3040 = vmatprep.subr.mxu0 0.0
    %3041 = vmatpush1.msra.mxu0 0.0
    %3042 = vmatprep.subr.mxu0 0.0
    %3043 = vmatpush1.msra.mxu0 0.0
    %3044 = vmatprep.mubr.f32.mxu0 0.0
    %3045 = vmatmul.mubr.f32.gmra.mrb[0].mxu0 %v2978
    %v3046 = vpop.f32.mrb[0].mxu0
    %v3047 = vadd.f32 %v2972, %v3046
    %v3048 = vpop.f32.mrb[0].mxu0
    %3049 = vdwg.mxu0
    %v3050 = vadd.f32 %v3047, %v845
    %v3051 = vsel %vm848, %v3050, -inf
    %3052 = vmax.xlane.f32.xlu0 %v3051
    %v3053 = vpop.xlane.xlu0 %3052
    %v3054 = vsub.f32 %v3050, %v3053
    %v3055 = vmul.f32 %v3054, 1.442695
    %v3056 = vpow.pop %v3055
    %v3057 = vsel %vm848, %v3056, 0.0
    %3058 = vadd.xlane.f32.xlu0 %v3057
    %v3059 = vpop.xlane.xlu0 %3058
    %v3060 = vlog2.pop %v3059
    %v3061 = vmul.f32 %v3060, 0.6931472
    %v3062 = vsub.f32 %v3054, %v3061
    %v3063 = vsel %vm2450, 1, 0
    %vm3064 = vcmp.eq.s32.totalorder %v3063, 1
    %v3065 = vsel %vm3064, 0.0, %v3062
    %s3066 = scalar_lea.vmem %s13, 6
    %3067 = vst.msk [vmem:[%s3066] sm:$0x3] %vm848, %v3065
    %v3068 = vsel %vm848, %v3062, -inf
    %3069 = vmax.xlane.f32.xlu0 %v3068
    %v3070 = vpop.xlane.xlu0 %3069
    %vm3071 = vcmp.eq.f32.partialorder %v3062, %v3070
    %v3072 = vsel %vm3071, %v224, 16
    %v3073 = vsel %vm848, %v3072, 2147483647
    %v3074 = vand.u32 %v3073, 65535
    %v3075 = vshra.s32 %v3073, 16
    %v3076 = vcvt.s32.f32 %v3074
    %v3077 = vcvt.s32.f32 %v3075
    %3078 = vmin.xlane.f32.xlu0 %v3077
    %v3079 = vpop.xlane.xlu0 %3078
    %vm3080 = vcmp.eq.f32.partialorder %v3077, %v3079
    %v3081 = vsel %vm3080, %v3076, inf
    %3082 = vmin.xlane.f32.xlu0 %v3081
    %v3083 = vpop.xlane.xlu0 %3082
    %v3084 = vcvt.f32.s32 %v3083
    %v3085 = vcvt.f32.s32 %v3079
    %v3086 = vshll.u32 %v3085, 16
    %v3087 = vadd.s32 %v3086, %v3084
    %vm3088 = vcmp.eq.s32.totalorder %v3087, 2
    %vm3089 = vcmp.eq.s32.totalorder %v224, %v3087
    %v3090 = vsel %vm3089, 1, 0
    %v3091 = vcvt.s32.f32 %v3090
    %v3093 = vsel %vm529, %v3091, 0
    %3095 = vmatprep.subr.mxu0 0.0
    %3096 = vmatpush1.msra.mxu0 %v62
    %3097 = vmatprep.subr.mxu0 0.0
    %3098 = vmatpush1.msra.mxu0 %v63
    %3099 = vmatprep.subr.mxu0 0.0
    %3100 = vmatpush1.msra.mxu0 0.0
    %3101 = vmatprep.subr.mxu0 0.0
    %3102 = vmatpush1.msra.mxu0 0.0
    %3103 = vmatprep.subr.mxu0 0.0
    %3104 = vmatpush1.msra.mxu0 0.0
    %3105 = vmatprep.subr.mxu0 0.0
    %3106 = vmatpush1.msra.mxu0 0.0
    %3107 = vmatprep.subr.mxu0 0.0
    %3108 = vmatpush1.msra.mxu0 0.0
    %3109 = vmatprep.subr.mxu0 0.0
    %3110 = vmatpush1.msra.mxu0 0.0
    %3111 = vmatprep.subr.mxu0 0.0
    %3112 = vmatpush1.msra.mxu0 0.0
    %3113 = vmatprep.subr.mxu0 0.0
    %3114 = vmatpush1.msra.mxu0 0.0
    %3115 = vmatprep.subr.mxu0 0.0
    %3116 = vmatpush1.msra.mxu0 0.0
    %3117 = vmatprep.subr.mxu0 0.0
    %3118 = vmatpush1.msra.mxu0 0.0
    %3119 = vmatprep.subr.mxu0 0.0
    %3120 = vmatpush1.msra.mxu0 0.0
    %3121 = vmatprep.subr.mxu0 0.0
    %3122 = vmatpush1.msra.mxu0 0.0
    %3123 = vmatprep.subr.mxu0 0.0
    %3124 = vmatpush1.msra.mxu0 0.0
    %3125 = vmatprep.subr.mxu0 0.0
    %3126 = vmatpush1.msra.mxu0 0.0
    %3127 = vmatprep.subr.mxu0 0.0
    %3128 = vmatpush1.msra.mxu0 0.0
    %3129 = vmatprep.subr.mxu0 0.0
    %3130 = vmatpush1.msra.mxu0 0.0
    %3131 = vmatprep.subr.mxu0 0.0
    %3132 = vmatpush1.msra.mxu0 0.0
    %3133 = vmatprep.subr.mxu0 0.0
    %3134 = vmatpush1.msra.mxu0 0.0
    %3135 = vmatprep.subr.mxu0 0.0
    %3136 = vmatpush1.msra.mxu0 0.0
    %3137 = vmatprep.subr.mxu0 0.0
    %3138 = vmatpush1.msra.mxu0 0.0
    %3139 = vmatprep.subr.mxu0 0.0
    %3140 = vmatpush1.msra.mxu0 0.0
    %3141 = vmatprep.subr.mxu0 0.0
    %3142 = vmatpush1.msra.mxu0 0.0
    %3143 = vmatprep.subr.mxu0 0.0
    %3144 = vmatpush1.msra.mxu0 0.0
    %3145 = vmatprep.subr.mxu0 0.0
    %3146 = vmatpush1.msra.mxu0 0.0
    %3147 = vmatprep.subr.mxu0 0.0
    %3148 = vmatpush1.msra.mxu0 0.0
    %3149 = vmatprep.subr.mxu0 0.0
    %3150 = vmatpush1.msra.mxu0 0.0
    %3151 = vmatprep.subr.mxu0 0.0
    %3152 = vmatpush1.msra.mxu0 0.0
    %3153 = vmatprep.subr.mxu0 0.0
    %3154 = vmatpush1.msra.mxu0 0.0
    %3155 = vmatprep.subr.mxu0 0.0
    %3156 = vmatpush1.msra.mxu0 0.0
    %3157 = vmatprep.subr.mxu0 0.0
    %3158 = vmatpush1.msra.mxu0 0.0
    %3159 = vmatprep.mubr.f32.mxu0 0.0
    %3160 = vmatmul.mubr.f32.gmra.mrb[0].mxu0 %v3093
    %v3161 = vpop.f32.mrb[0].mxu0
    %v3162 = vadd.f32 0.0, %v3161
    %v3163 = vpop.f32.mrb[0].mxu0
    %3164 = vdwg.mxu0
    %vm3165 = vmxor %vm2450, 1
    %v3166 = vsel %vm3165, 1, 0
    %vm3167 = vcmp.eq.s32.totalorder %v3166, 1
    %vm3168 = vmand %vm3088, %vm3167
    %v3169 = vsel %vm3168, 4, %v2435
    %v3170 = vsel %vm3088, 1, 0
    %v3171 = vcvt.s32.f32 %v3170
    %v3172 = vmax.f32 %v2439, %v3171
    %v3173 = vsel %vm3064, %v2439, %v3172
    %v3174 = vsel %vm3064, %v2440, %v3162
    %v3176 = vsel %vm3064, %v2442, %v2977
    %v3177 = vsel %vm974, %v3173, 0.0
    %v3178 = vrot.slane %v3177, 4
    %v3179 = vadd.f32 %v3177, %v3178
    %v3180 = vrot.slane %v3179, 2
    %v3181 = vadd.f32 %v3179, %v3180
    %v3182 = vrot.slane %v3181, 1
    %v3183 = vadd.f32 %v3181, %v3182
    %vm3184 = vcmp.ge.f32.partialorder %v3183, 2.0
    %v3186 = vsel %vm141, %v3176, 0
    %3188 = vmatprep.subr.mxu0 0.0
    %3189 = vmatpush1.msra.mxu0 %v64
    %3190 = vmatprep.subr.mxu0 0.0
    %3191 = vmatpush1.msra.mxu0 %v65
    %3192 = vmatprep.subr.mxu0 0.0
    %3193 = vmatpush1.msra.mxu0 %v66
    %3194 = vmatprep.subr.mxu0 0.0
    %3195 = vmatpush1.msra.mxu0 %v67
    %3196 = vmatprep.subr.mxu0 0.0
    %3197 = vmatpush1.msra.mxu0 %v68
    %3198 = vmatprep.subr.mxu0 0.0
    %3199 = vmatpush1.msra.mxu0 %v69
    %3200 = vmatprep.subr.mxu0 0.0
    %3201 = vmatpush1.msra.mxu0 %v70
    %3202 = vmatprep.subr.mxu0 0.0
    %3203 = vmatpush1.msra.mxu0 %v71
    %3204 = vmatprep.subr.mxu0 0.0
    %3205 = vmatpush1.msra.mxu0 0.0
    %3206 = vmatprep.subr.mxu0 0.0
    %3207 = vmatpush1.msra.mxu0 0.0
    %3208 = vmatprep.subr.mxu0 0.0
    %3209 = vmatpush1.msra.mxu0 0.0
    %3210 = vmatprep.subr.mxu0 0.0
    %3211 = vmatpush1.msra.mxu0 0.0
    %3212 = vmatprep.subr.mxu0 0.0
    %3213 = vmatpush1.msra.mxu0 0.0
    %3214 = vmatprep.subr.mxu0 0.0
    %3215 = vmatpush1.msra.mxu0 0.0
    %3216 = vmatprep.subr.mxu0 0.0
    %3217 = vmatpush1.msra.mxu0 0.0
    %3218 = vmatprep.subr.mxu0 0.0
    %3219 = vmatpush1.msra.mxu0 0.0
    %3220 = vmatprep.subr.mxu0 0.0
    %3221 = vmatpush1.msra.mxu0 0.0
    %3222 = vmatprep.subr.mxu0 0.0
    %3223 = vmatpush1.msra.mxu0 0.0
    %3224 = vmatprep.subr.mxu0 0.0
    %3225 = vmatpush1.msra.mxu0 0.0
    %3226 = vmatprep.subr.mxu0 0.0
    %3227 = vmatpush1.msra.mxu0 0.0
    %3228 = vmatprep.subr.mxu0 0.0
    %3229 = vmatpush1.msra.mxu0 0.0
    %3230 = vmatprep.subr.mxu0 0.0
    %3231 = vmatpush1.msra.mxu0 0.0
    %3232 = vmatprep.subr.mxu0 0.0
    %3233 = vmatpush1.msra.mxu0 0.0
    %3234 = vmatprep.subr.mxu0 0.0
    %3235 = vmatpush1.msra.mxu0 0.0
    %3236 = vmatprep.subr.mxu0 0.0
    %3237 = vmatpush1.msra.mxu0 0.0
    %3238 = vmatprep.subr.mxu0 0.0
    %3239 = vmatpush1.msra.mxu0 0.0
    %3240 = vmatprep.subr.mxu0 0.0
    %3241 = vmatpush1.msra.mxu0 0.0
    %3242 = vmatprep.subr.mxu0 0.0
    %3243 = vmatpush1.msra.mxu0 0.0
    %3244 = vmatprep.subr.mxu0 0.0
    %3245 = vmatpush1.msra.mxu0 0.0
    %3246 = vmatprep.subr.mxu0 0.0
    %3247 = vmatpush1.msra.mxu0 0.0
    %3248 = vmatprep.subr.mxu0 0.0
    %3249 = vmatpush1.msra.mxu0 0.0
    %3250 = vmatprep.subr.mxu0 0.0
    %3251 = vmatpush1.msra.mxu0 0.0
    %3252 = vmatprep.mubr.f32.mxu0 0.0
    %3253 = vmatmul.mubr.f32.gmra.mrb[0].mxu0 %v3186
    %v3254 = vpop.f32.mrb[0].mxu0
    %v3255 = vadd.f32 0.0, %v3254
    %v3256 = vpop.f32.mrb[0].mxu0
    %3257 = vdwg.mxu0
    %v3260 = vunpack.c.l.s4 1966171168
    %v3261 = vunpack.c.0.s8 %v3260
    %v3262 = vlaneseq
    %v3263 = vshrl.u32 %v3262, 7
    %v3264 = vsub.s32 %v3261, %v3263
    %v3265 = vrot.slane %v3255, %v3264
    %v3266 = vcombine.high %v3265, %v3265
    %v3268 = vunpack.c.l.s4 1966171168
    %v3269 = vunpack.c.0.s8 %v3268
    %v3270 = vlaneseq
    %v3271 = vshrl.u32 %v3270, 7
    %v3272 = vsub.s32 %v3269, %v3271
    %v3273 = vrot.slane %v3265, %v3272
    %v3275 = vunpack.c.l.s4 1966171168
    %v3276 = vunpack.c.0.s8 %v3275
    %v3277 = vlaneseq
    %v3278 = vshrl.u32 %v3277, 7
    %v3279 = vsub.s32 %v3276, %v3278
    %v3280 = vrot.slane %v3266, %v3279
    %v3281 = vlaneseq
    %v3282 = vshrl.u32 %v3281, 7
    %v3283 = vsub.s32 0, %v3282
    %v3284 = vrot.slane %v3273, %v3283
    %v3285 = vlaneseq
    %v3286 = vshrl.u32 %v3285, 7
    %v3287 = vsub.s32 0, %v3286
    %v3288 = vrot.slane %v3280, %v3287
    %v3291 = vadd.f32 %v215, %v3284
    %v3292 = vadd.f32 %v220, %v3288
    %v3293 = vtanh.pop %v3291
    %v3294 = vtanh.pop %v3292
    %v3295 = vmul.f32 %v3293, %v346
    %v3296 = vmul.f32 %v3294, %v346
    %v3297 = vsel %vm350, %v3295, 0.0
    %3298 = vadd.xlane.f32.xlu0 %v3297
    %v3299 = vpop.xlane.xlu0 %3298
    %v3300 = vsel %vm350, %v3296, 0.0
    %3301 = vadd.xlane.f32.xlu0 %v3300
    %v3302 = vpop.xlane.xlu0 %3301
    %v3305 = vlaneseq
    %v3306 = vshrl.u32 %v3305, 7
    %v3307 = vsub.s32 %v224, %v3306
    %v3308 = vrot.slane %v3299, %v3307
    %v3309 = vlaneseq
    %v3310 = vshrl.u32 %v3309, 7
    %v3311 = vsub.s32 %v224, %v3310
    %v3312 = vrot.slane %v3302, %v3311
    %v3313 = vsel %vm367, %v3312, %v3308
    %v3315 = vsel %vm370, %v3313, -inf
    %3316 = vmax.xlane.f32.xlu0 %v3315
    %v3317 = vpop.xlane.xlu0 %3316
    %v3319 = vlaneseq
    %v3320 = vshrl.u32 %v3319, 7
    %v3321 = vsub.s32 0, %v3320
    %v3322 = vrot.slane %v3317, %v3321
    %v3323 = vlaneseq
    %v3324 = vshrl.u32 %v3323, 7
    %v3325 = vsub.s32 1, %v3324
    %v3326 = vrot.slane %v3317, %v3325
    %v3329 = vsub.f32 %v3299, %v3322
    %v3330 = vsub.f32 %v3302, %v3326
    %v3331 = vmul.f32 %v3329, 1.442695
    %v3332 = vpow.pop %v3331
    %v3333 = vmul.f32 %v3330, 1.442695
    %v3334 = vpow.pop %v3333
    %3337 = vset.pattern.permute.xlu0 0
    %3338 = vperm.xlu0 %3337, %v3332
    %v3339 = vpop.permute.xlu0 %3338
    %3340 = vset.pattern.permute.xlu0 0
    %3341 = vperm.xlu0 %3340, %v3334
    %v3342 = vpop.permute.xlu0 %3341
    %v3343 = vlaneseq
    %v3344 = vshrl.u32 %v3343, 7
    %v3345 = vsub.s32 %v224, %v3344
    %v3346 = vrot.slane %v3339, %v3345
    %v3347 = vlaneseq
    %v3348 = vshrl.u32 %v3347, 7
    %v3349 = vsub.s32 %v224, %v3348
    %v3350 = vrot.slane %v3342, %v3349
    %v3351 = vsel %vm367, %v3350, %v3346
    %v3353 = vsel %vm370, %v3351, 0.0
    %3354 = vadd.xlane.f32.xlu0 %v3353
    %v3355 = vpop.xlane.xlu0 %3354
    %v3357 = vlaneseq
    %v3358 = vshrl.u32 %v3357, 7
    %v3359 = vsub.s32 0, %v3358
    %v3360 = vrot.slane %v3355, %v3359
    %v3361 = vlaneseq
    %v3362 = vshrl.u32 %v3361, 7
    %v3363 = vsub.s32 1, %v3362
    %v3364 = vrot.slane %v3355, %v3363
    %v3367 = vrcp.pop %v3360
    %v3368 = vmul.f32 %v3332, %v3367
    %v3369 = vrcp.pop %v3364
    %v3370 = vmul.f32 %v3334, %v3369
    %3372 = vset.pattern.permute.xlu0 0
    %3373 = vperm.xlu0 %3372, %v3368
    %v3374 = vpop.permute.xlu0 %3373
    %3377 = vset.pattern.permute.xlu0 0
    %3378 = vperm.xlu0 %3377, %v3370
    %v3379 = vpop.permute.xlu0 %3378
    %v3381 = vmul.f32 %v3374, %v60
    %v3382 = vmul.f32 %v3379, %v61
    %v3383 = vsel %vm141, %v3381, 0.0
    %v3384 = vrot.slane %v3383, 4
    %v3385 = vadd.f32 %v3383, %v3384
    %v3386 = vrot.slane %v3385, 2
    %v3387 = vadd.f32 %v3385, %v3386
    %v3388 = vrot.slane %v3387, 1
    %v3389 = vadd.f32 %v3387, %v3388
    %v3390 = vsel %vm141, %v3382, 0.0
    %v3391 = vrot.slane %v3390, 4
    %v3392 = vadd.f32 %v3390, %v3391
    %v3393 = vrot.slane %v3392, 2
    %v3394 = vadd.f32 %v3392, %v3393
    %v3395 = vrot.slane %v3394, 1
    %v3396 = vadd.f32 %v3394, %v3395
    %v3399 = vsel %vm367, %v3396, %v3389
    %v3400 = vsel %vm141, %v3399, 0
    %3402 = vmatprep.subr.mxu0 %v87
    %3403 = vmatpush1.msra.mxu0 %v86
    %3404 = vmatprep.subr.mxu0 %v89
    %3405 = vmatpush1.msra.mxu0 %v88
    %3406 = vmatprep.subr.mxu0 %v91
    %3407 = vmatpush1.msra.mxu0 %v90
    %3408 = vmatprep.subr.mxu0 %v93
    %3409 = vmatpush1.msra.mxu0 %v92
    %3410 = vmatprep.subr.mxu0 %v95
    %3411 = vmatpush1.msra.mxu0 %v94
    %3412 = vmatprep.subr.mxu0 %v97
    %3413 = vmatpush1.msra.mxu0 %v96
    %3414 = vmatprep.subr.mxu0 %v99
    %3415 = vmatpush1.msra.mxu0 %v98
    %3416 = vmatprep.subr.mxu0 %v101
    %3417 = vmatpush1.msra.mxu0 %v100
    %3418 = vmatprep.subr.mxu0 0.0
    %3419 = vmatpush1.msra.mxu0 0.0
    %3420 = vmatprep.subr.mxu0 0.0
    %3421 = vmatpush1.msra.mxu0 0.0
    %3422 = vmatprep.subr.mxu0 0.0
    %3423 = vmatpush1.msra.mxu0 0.0
    %3424 = vmatprep.subr.mxu0 0.0
    %3425 = vmatpush1.msra.mxu0 0.0
    %3426 = vmatprep.subr.mxu0 0.0
    %3427 = vmatpush1.msra.mxu0 0.0
    %3428 = vmatprep.subr.mxu0 0.0
    %3429 = vmatpush1.msra.mxu0 0.0
    %3430 = vmatprep.subr.mxu0 0.0
    %3431 = vmatpush1.msra.mxu0 0.0
    %3432 = vmatprep.subr.mxu0 0.0
    %3433 = vmatpush1.msra.mxu0 0.0
    %3434 = vmatprep.subr.mxu0 0.0
    %3435 = vmatpush1.msra.mxu0 0.0
    %3436 = vmatprep.subr.mxu0 0.0
    %3437 = vmatpush1.msra.mxu0 0.0
    %3438 = vmatprep.subr.mxu0 0.0
    %3439 = vmatpush1.msra.mxu0 0.0
    %3440 = vmatprep.subr.mxu0 0.0
    %3441 = vmatpush1.msra.mxu0 0.0
    %3442 = vmatprep.subr.mxu0 0.0
    %3443 = vmatpush1.msra.mxu0 0.0
    %3444 = vmatprep.subr.mxu0 0.0
    %3445 = vmatpush1.msra.mxu0 0.0
    %3446 = vmatprep.subr.mxu0 0.0
    %3447 = vmatpush1.msra.mxu0 0.0
    %3448 = vmatprep.subr.mxu0 0.0
    %3449 = vmatpush1.msra.mxu0 0.0
    %3450 = vmatprep.subr.mxu0 0.0
    %3451 = vmatpush1.msra.mxu0 0.0
    %3452 = vmatprep.subr.mxu0 0.0
    %3453 = vmatpush1.msra.mxu0 0.0
    %3454 = vmatprep.subr.mxu0 0.0
    %3455 = vmatpush1.msra.mxu0 0.0
    %3456 = vmatprep.subr.mxu0 0.0
    %3457 = vmatpush1.msra.mxu0 0.0
    %3458 = vmatprep.subr.mxu0 0.0
    %3459 = vmatpush1.msra.mxu0 0.0
    %3460 = vmatprep.subr.mxu0 0.0
    %3461 = vmatpush1.msra.mxu0 0.0
    %3462 = vmatprep.subr.mxu0 0.0
    %3463 = vmatpush1.msra.mxu0 0.0
    %3464 = vmatprep.subr.mxu0 0.0
    %3465 = vmatpush1.msra.mxu0 0.0
    %3466 = vmatprep.mubr.f32.mxu0 0.0
    %3467 = vmatmul.mubr.f32.gmra.mrb[0].mxu0 %v3400
    %v3468 = vpop.f32.mrb[0].mxu0
    %v3469 = vadd.f32 0.0, %v3468
    %v3470 = vpop.f32.mrb[0].mxu0
    %v3471 = vadd.f32 0.0, %v3470
    %3472 = vdwg.mxu0
    %v3474 = vsel %vm529, %v3174, 0
    %3476 = vmatprep.subr.mxu0 %v83
    %3477 = vmatpush1.msra.mxu0 %v82
    %3478 = vmatprep.subr.mxu0 %v85
    %3479 = vmatpush1.msra.mxu0 %v84
    %3480 = vmatprep.subr.mxu0 0.0
    %3481 = vmatpush1.msra.mxu0 0.0
    %3482 = vmatprep.subr.mxu0 0.0
    %3483 = vmatpush1.msra.mxu0 0.0
    %3484 = vmatprep.subr.mxu0 0.0
    %3485 = vmatpush1.msra.mxu0 0.0
    %3486 = vmatprep.subr.mxu0 0.0
    %3487 = vmatpush1.msra.mxu0 0.0
    %3488 = vmatprep.subr.mxu0 0.0
    %3489 = vmatpush1.msra.mxu0 0.0
    %3490 = vmatprep.subr.mxu0 0.0
    %3491 = vmatpush1.msra.mxu0 0.0
    %3492 = vmatprep.subr.mxu0 0.0
    %3493 = vmatpush1.msra.mxu0 0.0
    %3494 = vmatprep.subr.mxu0 0.0
    %3495 = vmatpush1.msra.mxu0 0.0
    %3496 = vmatprep.subr.mxu0 0.0
    %3497 = vmatpush1.msra.mxu0 0.0
    %3498 = vmatprep.subr.mxu0 0.0
    %3499 = vmatpush1.msra.mxu0 0.0
    %3500 = vmatprep.subr.mxu0 0.0
    %3501 = vmatpush1.msra.mxu0 0.0
    %3502 = vmatprep.subr.mxu0 0.0
    %3503 = vmatpush1.msra.mxu0 0.0
    %3504 = vmatprep.subr.mxu0 0.0
    %3505 = vmatpush1.msra.mxu0 0.0
    %3506 = vmatprep.subr.mxu0 0.0
    %3507 = vmatpush1.msra.mxu0 0.0
    %3508 = vmatprep.subr.mxu0 0.0
    %3509 = vmatpush1.msra.mxu0 0.0
    %3510 = vmatprep.subr.mxu0 0.0
    %3511 = vmatpush1.msra.mxu0 0.0
    %3512 = vmatprep.subr.mxu0 0.0
    %3513 = vmatpush1.msra.mxu0 0.0
    %3514 = vmatprep.subr.mxu0 0.0
    %3515 = vmatpush1.msra.mxu0 0.0
    %3516 = vmatprep.subr.mxu0 0.0
    %3517 = vmatpush1.msra.mxu0 0.0
    %3518 = vmatprep.subr.mxu0 0.0
    %3519 = vmatpush1.msra.mxu0 0.0
    %3520 = vmatprep.subr.mxu0 0.0
    %3521 = vmatpush1.msra.mxu0 0.0
    %3522 = vmatprep.subr.mxu0 0.0
    %3523 = vmatpush1.msra.mxu0 0.0
    %3524 = vmatprep.subr.mxu0 0.0
    %3525 = vmatpush1.msra.mxu0 0.0
    %3526 = vmatprep.subr.mxu0 0.0
    %3527 = vmatpush1.msra.mxu0 0.0
    %3528 = vmatprep.subr.mxu0 0.0
    %3529 = vmatpush1.msra.mxu0 0.0
    %3530 = vmatprep.subr.mxu0 0.0
    %3531 = vmatpush1.msra.mxu0 0.0
    %3532 = vmatprep.subr.mxu0 0.0
    %3533 = vmatpush1.msra.mxu0 0.0
    %3534 = vmatprep.subr.mxu0 0.0
    %3535 = vmatpush1.msra.mxu0 0.0
    %3536 = vmatprep.subr.mxu0 0.0
    %3537 = vmatpush1.msra.mxu0 0.0
    %3538 = vmatprep.subr.mxu0 0.0
    %3539 = vmatpush1.msra.mxu0 0.0
    %3540 = vmatprep.mubr.f32.mxu0 0.0
    %3541 = vmatmul.mubr.f32.gmra.mrb[0].mxu0 %v3474
    %v3542 = vpop.f32.mrb[0].mxu0
    %v3543 = vadd.f32 %v3469, %v3542
    %v3544 = vpop.f32.mrb[0].mxu0
    %v3545 = vadd.f32 %v3471, %v3544
    %3546 = vdwg.mxu0
    %3547 = vmatprep.subr.mxu0 %v103
    %3548 = vmatpush1.msra.mxu0 %v102
    %3549 = vmatprep.subr.mxu0 %v105
    %3550 = vmatpush1.msra.mxu0 %v104
    %3551 = vmatprep.subr.mxu0 %v107
    %3552 = vmatpush1.msra.mxu0 %v106
    %3553 = vmatprep.subr.mxu0 %v109
    %3554 = vmatpush1.msra.mxu0 %v108
    %3555 = vmatprep.subr.mxu0 %v111
    %3556 = vmatpush1.msra.mxu0 %v110
    %3557 = vmatprep.subr.mxu0 %v113
    %3558 = vmatpush1.msra.mxu0 %v112
    %3559 = vmatprep.subr.mxu0 %v115
    %3560 = vmatpush1.msra.mxu0 %v114
    %3561 = vmatprep.subr.mxu0 %v117
    %3562 = vmatpush1.msra.mxu0 %v116
    %3563 = vmatprep.subr.mxu0 0.0
    %3564 = vmatpush1.msra.mxu0 0.0
    %3565 = vmatprep.subr.mxu0 0.0
    %3566 = vmatpush1.msra.mxu0 0.0
    %3567 = vmatprep.subr.mxu0 0.0
    %3568 = vmatpush1.msra.mxu0 0.0
    %3569 = vmatprep.subr.mxu0 0.0
    %3570 = vmatpush1.msra.mxu0 0.0
    %3571 = vmatprep.subr.mxu0 0.0
    %3572 = vmatpush1.msra.mxu0 0.0
    %3573 = vmatprep.subr.mxu0 0.0
    %3574 = vmatpush1.msra.mxu0 0.0
    %3575 = vmatprep.subr.mxu0 0.0
    %3576 = vmatpush1.msra.mxu0 0.0
    %3577 = vmatprep.subr.mxu0 0.0
    %3578 = vmatpush1.msra.mxu0 0.0
    %3579 = vmatprep.subr.mxu0 0.0
    %3580 = vmatpush1.msra.mxu0 0.0
    %3581 = vmatprep.subr.mxu0 0.0
    %3582 = vmatpush1.msra.mxu0 0.0
    %3583 = vmatprep.subr.mxu0 0.0
    %3584 = vmatpush1.msra.mxu0 0.0
    %3585 = vmatprep.subr.mxu0 0.0
    %3586 = vmatpush1.msra.mxu0 0.0
    %3587 = vmatprep.subr.mxu0 0.0
    %3588 = vmatpush1.msra.mxu0 0.0
    %3589 = vmatprep.subr.mxu0 0.0
    %3590 = vmatpush1.msra.mxu0 0.0
    %3591 = vmatprep.subr.mxu0 0.0
    %3592 = vmatpush1.msra.mxu0 0.0
    %3593 = vmatprep.subr.mxu0 0.0
    %3594 = vmatpush1.msra.mxu0 0.0
    %3595 = vmatprep.subr.mxu0 0.0
    %3596 = vmatpush1.msra.mxu0 0.0
    %3597 = vmatprep.subr.mxu0 0.0
    %3598 = vmatpush1.msra.mxu0 0.0
    %3599 = vmatprep.subr.mxu0 0.0
    %3600 = vmatpush1.msra.mxu0 0.0
    %3601 = vmatprep.subr.mxu0 0.0
    %3602 = vmatpush1.msra.mxu0 0.0
    %3603 = vmatprep.subr.mxu0 0.0
    %3604 = vmatpush1.msra.mxu0 0.0
    %3605 = vmatprep.subr.mxu0 0.0
    %3606 = vmatpush1.msra.mxu0 0.0
    %3607 = vmatprep.subr.mxu0 0.0
    %3608 = vmatpush1.msra.mxu0 0.0
    %3609 = vmatprep.subr.mxu0 0.0
    %3610 = vmatpush1.msra.mxu0 0.0
    %3611 = vmatprep.mubr.f32.mxu0 0.0
    %3612 = vmatmul.mubr.f32.gmra.mrb[0].mxu0 %v3186
    %v3613 = vpop.f32.mrb[0].mxu0
    %v3614 = vadd.f32 0.0, %v3613
    %v3615 = vpop.f32.mrb[0].mxu0
    %v3616 = vadd.f32 0.0, %v3615
    %3617 = vdwg.mxu0
    %v3618 = vadd.f32 %v3543, %v3614
    %v3619 = vxor.u32 %v3618, 2147483648
    %v3620 = vmul.f32 %v3619, 1.442695
    %v3621 = vpow.pop %v3620
    %v3622 = vadd.f32 %v3621, 1.0
    %v3623 = vrcp.pop %v3622
    %v3624 = vmul.f32 1.0, %v3623
    %v3625 = vmul.f32 %v3624, %v3616
    %v3626 = vadd.f32 %v3545, %v3625
    %v3627 = vtanh.pop %v3626
    %v3628 = vsub.f32 1.0, %v3624
    %3630 = vrot.lane.b32.xlu0 %v3627, 64
    %v3631 = vpop.permute.xlu0 %3630
    %v3633 = vmul.f32 %v3628, %v3631
    %3634 = vrot.lane.b32.xlu0 %v3176, 64
    %v3635 = vpop.permute.xlu0 %3634
    %v3637 = vmul.f32 %v3624, %v3635
    %v3638 = vadd.f32 %v3633, %v3637
    %3639 = vmatprep.subr.mxu0 0.0
    %3640 = vmatpush1.msra.mxu0 %v126
    %3641 = vmatprep.subr.mxu0 0.0
    %3642 = vmatpush1.msra.mxu0 %v127
    %3643 = vmatprep.subr.mxu0 0.0
    %3644 = vmatpush1.msra.mxu0 %v128
    %3645 = vmatprep.subr.mxu0 0.0
    %3646 = vmatpush1.msra.mxu0 %v129
    %3647 = vmatprep.subr.mxu0 0.0
    %3648 = vmatpush1.msra.mxu0 %v130
    %3649 = vmatprep.subr.mxu0 0.0
    %3650 = vmatpush1.msra.mxu0 %v131
    %3651 = vmatprep.subr.mxu0 0.0
    %3652 = vmatpush1.msra.mxu0 %v132
    %3653 = vmatprep.subr.mxu0 0.0
    %3654 = vmatpush1.msra.mxu0 %v133
    %3655 = vmatprep.subr.mxu0 0.0
    %3656 = vmatpush1.msra.mxu0 0.0
    %3657 = vmatprep.subr.mxu0 0.0
    %3658 = vmatpush1.msra.mxu0 0.0
    %3659 = vmatprep.subr.mxu0 0.0
    %3660 = vmatpush1.msra.mxu0 0.0
    %3661 = vmatprep.subr.mxu0 0.0
    %3662 = vmatpush1.msra.mxu0 0.0
    %3663 = vmatprep.subr.mxu0 0.0
    %3664 = vmatpush1.msra.mxu0 0.0
    %3665 = vmatprep.subr.mxu0 0.0
    %3666 = vmatpush1.msra.mxu0 0.0
    %3667 = vmatprep.subr.mxu0 0.0
    %3668 = vmatpush1.msra.mxu0 0.0
    %3669 = vmatprep.subr.mxu0 0.0
    %3670 = vmatpush1.msra.mxu0 0.0
    %3671 = vmatprep.subr.mxu0 0.0
    %3672 = vmatpush1.msra.mxu0 0.0
    %3673 = vmatprep.subr.mxu0 0.0
    %3674 = vmatpush1.msra.mxu0 0.0
    %3675 = vmatprep.subr.mxu0 0.0
    %3676 = vmatpush1.msra.mxu0 0.0
    %3677 = vmatprep.subr.mxu0 0.0
    %3678 = vmatpush1.msra.mxu0 0.0
    %3679 = vmatprep.subr.mxu0 0.0
    %3680 = vmatpush1.msra.mxu0 0.0
    %3681 = vmatprep.subr.mxu0 0.0
    %3682 = vmatpush1.msra.mxu0 0.0
    %3683 = vmatprep.subr.mxu0 0.0
    %3684 = vmatpush1.msra.mxu0 0.0
    %3685 = vmatprep.subr.mxu0 0.0
    %3686 = vmatpush1.msra.mxu0 0.0
    %3687 = vmatprep.subr.mxu0 0.0
    %3688 = vmatpush1.msra.mxu0 0.0
    %3689 = vmatprep.subr.mxu0 0.0
    %3690 = vmatpush1.msra.mxu0 0.0
    %3691 = vmatprep.subr.mxu0 0.0
    %3692 = vmatpush1.msra.mxu0 0.0
    %3693 = vmatprep.subr.mxu0 0.0
    %3694 = vmatpush1.msra.mxu0 0.0
    %3695 = vmatprep.subr.mxu0 0.0
    %3696 = vmatpush1.msra.mxu0 0.0
    %3697 = vmatprep.subr.mxu0 0.0
    %3698 = vmatpush1.msra.mxu0 0.0
    %3699 = vmatprep.subr.mxu0 0.0
    %3700 = vmatpush1.msra.mxu0 0.0
    %3701 = vmatprep.subr.mxu0 0.0
    %3702 = vmatpush1.msra.mxu0 0.0
    %3703 = vmatprep.mubr.f32.mxu0 0.0
    %3704 = vmatmul.mubr.f32.gmra.mrb[0].mxu0 %v3400
    %v3705 = vpop.f32.mrb[0].mxu0
    %v3706 = vadd.f32 0.0, %v3705
    %v3707 = vpop.f32.mrb[0].mxu0
    %3708 = vdwg.mxu0
    %3710 = vrot.lane.b32.xlu0 %v3638, 64
    %v3711 = vpop.permute.xlu0 %3710
    %v3712 = vsel %vm141, %v3711, 0
    %3714 = vmatprep.subr.mxu0 0.0
    %3715 = vmatpush1.msra.mxu0 %v118
    %3716 = vmatprep.subr.mxu0 0.0
    %3717 = vmatpush1.msra.mxu0 %v119
    %3718 = vmatprep.subr.mxu0 0.0
    %3719 = vmatpush1.msra.mxu0 %v120
    %3720 = vmatprep.subr.mxu0 0.0
    %3721 = vmatpush1.msra.mxu0 %v121
    %3722 = vmatprep.subr.mxu0 0.0
    %3723 = vmatpush1.msra.mxu0 %v122
    %3724 = vmatprep.subr.mxu0 0.0
    %3725 = vmatpush1.msra.mxu0 %v123
    %3726 = vmatprep.subr.mxu0 0.0
    %3727 = vmatpush1.msra.mxu0 %v124
    %3728 = vmatprep.subr.mxu0 0.0
    %3729 = vmatpush1.msra.mxu0 %v125
    %3730 = vmatprep.subr.mxu0 0.0
    %3731 = vmatpush1.msra.mxu0 0.0
    %3732 = vmatprep.subr.mxu0 0.0
    %3733 = vmatpush1.msra.mxu0 0.0
    %3734 = vmatprep.subr.mxu0 0.0
    %3735 = vmatpush1.msra.mxu0 0.0
    %3736 = vmatprep.subr.mxu0 0.0
    %3737 = vmatpush1.msra.mxu0 0.0
    %3738 = vmatprep.subr.mxu0 0.0
    %3739 = vmatpush1.msra.mxu0 0.0
    %3740 = vmatprep.subr.mxu0 0.0
    %3741 = vmatpush1.msra.mxu0 0.0
    %3742 = vmatprep.subr.mxu0 0.0
    %3743 = vmatpush1.msra.mxu0 0.0
    %3744 = vmatprep.subr.mxu0 0.0
    %3745 = vmatpush1.msra.mxu0 0.0
    %3746 = vmatprep.subr.mxu0 0.0
    %3747 = vmatpush1.msra.mxu0 0.0
    %3748 = vmatprep.subr.mxu0 0.0
    %3749 = vmatpush1.msra.mxu0 0.0
    %3750 = vmatprep.subr.mxu0 0.0
    %3751 = vmatpush1.msra.mxu0 0.0
    %3752 = vmatprep.subr.mxu0 0.0
    %3753 = vmatpush1.msra.mxu0 0.0
    %3754 = vmatprep.subr.mxu0 0.0
    %3755 = vmatpush1.msra.mxu0 0.0
    %3756 = vmatprep.subr.mxu0 0.0
    %3757 = vmatpush1.msra.mxu0 0.0
    %3758 = vmatprep.subr.mxu0 0.0
    %3759 = vmatpush1.msra.mxu0 0.0
    %3760 = vmatprep.subr.mxu0 0.0
    %3761 = vmatpush1.msra.mxu0 0.0
    %3762 = vmatprep.subr.mxu0 0.0
    %3763 = vmatpush1.msra.mxu0 0.0
    %3764 = vmatprep.subr.mxu0 0.0
    %3765 = vmatpush1.msra.mxu0 0.0
    %3766 = vmatprep.subr.mxu0 0.0
    %3767 = vmatpush1.msra.mxu0 0.0
    %3768 = vmatprep.subr.mxu0 0.0
    %3769 = vmatpush1.msra.mxu0 0.0
    %3770 = vmatprep.subr.mxu0 0.0
    %3771 = vmatpush1.msra.mxu0 0.0
    %3772 = vmatprep.subr.mxu0 0.0
    %3773 = vmatpush1.msra.mxu0 0.0
    %3774 = vmatprep.subr.mxu0 0.0
    %3775 = vmatpush1.msra.mxu0 0.0
    %3776 = vmatprep.subr.mxu0 0.0
    %3777 = vmatpush1.msra.mxu0 0.0
    %3778 = vmatprep.mubr.f32.mxu0 0.0
    %3779 = vmatmul.mubr.f32.gmra.mrb[0].mxu0 %v3712
    %v3780 = vpop.f32.mrb[0].mxu0
    %v3781 = vadd.f32 %v3706, %v3780
    %v3782 = vpop.f32.mrb[0].mxu0
    %3783 = vdwg.mxu0
    %v3784 = vadd.f32 %v3781, %v845
    %v3785 = vsel %vm848, %v3784, -inf
    %3786 = vmax.xlane.f32.xlu0 %v3785
    %v3787 = vpop.xlane.xlu0 %3786
    %v3788 = vsub.f32 %v3784, %v3787
    %v3789 = vmul.f32 %v3788, 1.442695
    %v3790 = vpow.pop %v3789
    %v3791 = vsel %vm848, %v3790, 0.0
    %3792 = vadd.xlane.f32.xlu0 %v3791
    %v3793 = vpop.xlane.xlu0 %3792
    %v3794 = vlog2.pop %v3793
    %v3795 = vmul.f32 %v3794, 0.6931472
    %v3796 = vsub.f32 %v3788, %v3795
    %v3797 = vsel %vm3184, 1, 0
    %vm3798 = vcmp.eq.s32.totalorder %v3797, 1
    %v3799 = vsel %vm3798, 0.0, %v3796
    %s3800 = scalar_lea.vmem %s13, 8
    %3801 = vst.msk [vmem:[%s3800] sm:$0x3] %vm848, %v3799
    %v3802 = vsel %vm848, %v3796, -inf
    %3803 = vmax.xlane.f32.xlu0 %v3802
    %v3804 = vpop.xlane.xlu0 %3803
    %vm3805 = vcmp.eq.f32.partialorder %v3796, %v3804
    %v3806 = vsel %vm3805, %v224, 16
    %v3807 = vsel %vm848, %v3806, 2147483647
    %v3808 = vand.u32 %v3807, 65535
    %v3809 = vshra.s32 %v3807, 16
    %v3810 = vcvt.s32.f32 %v3808
    %v3811 = vcvt.s32.f32 %v3809
    %3812 = vmin.xlane.f32.xlu0 %v3811
    %v3813 = vpop.xlane.xlu0 %3812
    %vm3814 = vcmp.eq.f32.partialorder %v3811, %v3813
    %v3815 = vsel %vm3814, %v3810, inf
    %3816 = vmin.xlane.f32.xlu0 %v3815
    %v3817 = vpop.xlane.xlu0 %3816
    %v3818 = vcvt.f32.s32 %v3817
    %v3819 = vcvt.f32.s32 %v3813
    %v3820 = vshll.u32 %v3819, 16
    %v3821 = vadd.s32 %v3820, %v3818
    %vm3822 = vcmp.eq.s32.totalorder %v3821, 2
    %vm3823 = vcmp.eq.s32.totalorder %v224, %v3821
    %v3824 = vsel %vm3823, 1, 0
    %v3825 = vcvt.s32.f32 %v3824
    %v3827 = vsel %vm529, %v3825, 0
    %3829 = vmatprep.subr.mxu0 0.0
    %3830 = vmatpush1.msra.mxu0 %v62
    %3831 = vmatprep.subr.mxu0 0.0
    %3832 = vmatpush1.msra.mxu0 %v63
    %3833 = vmatprep.subr.mxu0 0.0
    %3834 = vmatpush1.msra.mxu0 0.0
    %3835 = vmatprep.subr.mxu0 0.0
    %3836 = vmatpush1.msra.mxu0 0.0
    %3837 = vmatprep.subr.mxu0 0.0
    %3838 = vmatpush1.msra.mxu0 0.0
    %3839 = vmatprep.subr.mxu0 0.0
    %3840 = vmatpush1.msra.mxu0 0.0
    %3841 = vmatprep.subr.mxu0 0.0
    %3842 = vmatpush1.msra.mxu0 0.0
    %3843 = vmatprep.subr.mxu0 0.0
    %3844 = vmatpush1.msra.mxu0 0.0
    %3845 = vmatprep.subr.mxu0 0.0
    %3846 = vmatpush1.msra.mxu0 0.0
    %3847 = vmatprep.subr.mxu0 0.0
    %3848 = vmatpush1.msra.mxu0 0.0
    %3849 = vmatprep.subr.mxu0 0.0
    %3850 = vmatpush1.msra.mxu0 0.0
    %3851 = vmatprep.subr.mxu0 0.0
    %3852 = vmatpush1.msra.mxu0 0.0
    %3853 = vmatprep.subr.mxu0 0.0
    %3854 = vmatpush1.msra.mxu0 0.0
    %3855 = vmatprep.subr.mxu0 0.0
    %3856 = vmatpush1.msra.mxu0 0.0
    %3857 = vmatprep.subr.mxu0 0.0
    %3858 = vmatpush1.msra.mxu0 0.0
    %3859 = vmatprep.subr.mxu0 0.0
    %3860 = vmatpush1.msra.mxu0 0.0
    %3861 = vmatprep.subr.mxu0 0.0
    %3862 = vmatpush1.msra.mxu0 0.0
    %3863 = vmatprep.subr.mxu0 0.0
    %3864 = vmatpush1.msra.mxu0 0.0
    %3865 = vmatprep.subr.mxu0 0.0
    %3866 = vmatpush1.msra.mxu0 0.0
    %3867 = vmatprep.subr.mxu0 0.0
    %3868 = vmatpush1.msra.mxu0 0.0
    %3869 = vmatprep.subr.mxu0 0.0
    %3870 = vmatpush1.msra.mxu0 0.0
    %3871 = vmatprep.subr.mxu0 0.0
    %3872 = vmatpush1.msra.mxu0 0.0
    %3873 = vmatprep.subr.mxu0 0.0
    %3874 = vmatpush1.msra.mxu0 0.0
    %3875 = vmatprep.subr.mxu0 0.0
    %3876 = vmatpush1.msra.mxu0 0.0
    %3877 = vmatprep.subr.mxu0 0.0
    %3878 = vmatpush1.msra.mxu0 0.0
    %3879 = vmatprep.subr.mxu0 0.0
    %3880 = vmatpush1.msra.mxu0 0.0
    %3881 = vmatprep.subr.mxu0 0.0
    %3882 = vmatpush1.msra.mxu0 0.0
    %3883 = vmatprep.subr.mxu0 0.0
    %3884 = vmatpush1.msra.mxu0 0.0
    %3885 = vmatprep.subr.mxu0 0.0
    %3886 = vmatpush1.msra.mxu0 0.0
    %3887 = vmatprep.subr.mxu0 0.0
    %3888 = vmatpush1.msra.mxu0 0.0
    %3889 = vmatprep.subr.mxu0 0.0
    %3890 = vmatpush1.msra.mxu0 0.0
    %3891 = vmatprep.subr.mxu0 0.0
    %3892 = vmatpush1.msra.mxu0 0.0
    %3893 = vmatprep.mubr.f32.mxu0 0.0
    %3894 = vmatmul.mubr.f32.gmra.mrb[0].mxu0 %v3827
    %v3895 = vpop.f32.mrb[0].mxu0
    %v3896 = vadd.f32 0.0, %v3895
    %v3897 = vpop.f32.mrb[0].mxu0
    %3898 = vdwg.mxu0
    %vm3899 = vmxor %vm3184, 1
    %v3900 = vsel %vm3899, 1, 0
    %vm3901 = vcmp.eq.s32.totalorder %v3900, 1
    %vm3902 = vmand %vm3822, %vm3901
    %v3903 = vsel %vm3902, 5, %v3169
    %v3904 = vsel %vm3822, 1, 0
    %v3905 = vcvt.s32.f32 %v3904
    %v3906 = vmax.f32 %v3173, %v3905
    %v3907 = vsel %vm3798, %v3173, %v3906
    %v3908 = vsel %vm3798, %v3174, %v3896
    %v3910 = vsel %vm3798, %v3176, %v3711
    %v3911 = vsel %vm974, %v3907, 0.0
    %v3912 = vrot.slane %v3911, 4
    %v3913 = vadd.f32 %v3911, %v3912
    %v3914 = vrot.slane %v3913, 2
    %v3915 = vadd.f32 %v3913, %v3914
    %v3916 = vrot.slane %v3915, 1
    %v3917 = vadd.f32 %v3915, %v3916
    %vm3918 = vcmp.ge.f32.partialorder %v3917, 2.0
    %v3920 = vsel %vm141, %v3910, 0
    %3922 = vmatprep.subr.mxu0 0.0
    %3923 = vmatpush1.msra.mxu0 %v64
    %3924 = vmatprep.subr.mxu0 0.0
    %3925 = vmatpush1.msra.mxu0 %v65
    %3926 = vmatprep.subr.mxu0 0.0
    %3927 = vmatpush1.msra.mxu0 %v66
    %3928 = vmatprep.subr.mxu0 0.0
    %3929 = vmatpush1.msra.mxu0 %v67
    %3930 = vmatprep.subr.mxu0 0.0
    %3931 = vmatpush1.msra.mxu0 %v68
    %3932 = vmatprep.subr.mxu0 0.0
    %3933 = vmatpush1.msra.mxu0 %v69
    %3934 = vmatprep.subr.mxu0 0.0
    %3935 = vmatpush1.msra.mxu0 %v70
    %3936 = vmatprep.subr.mxu0 0.0
    %3937 = vmatpush1.msra.mxu0 %v71
    %3938 = vmatprep.subr.mxu0 0.0
    %3939 = vmatpush1.msra.mxu0 0.0
    %3940 = vmatprep.subr.mxu0 0.0
    %3941 = vmatpush1.msra.mxu0 0.0
    %3942 = vmatprep.subr.mxu0 0.0
    %3943 = vmatpush1.msra.mxu0 0.0
    %3944 = vmatprep.subr.mxu0 0.0
    %3945 = vmatpush1.msra.mxu0 0.0
    %3946 = vmatprep.subr.mxu0 0.0
    %3947 = vmatpush1.msra.mxu0 0.0
    %3948 = vmatprep.subr.mxu0 0.0
    %3949 = vmatpush1.msra.mxu0 0.0
    %3950 = vmatprep.subr.mxu0 0.0
    %3951 = vmatpush1.msra.mxu0 0.0
    %3952 = vmatprep.subr.mxu0 0.0
    %3953 = vmatpush1.msra.mxu0 0.0
    %3954 = vmatprep.subr.mxu0 0.0
    %3955 = vmatpush1.msra.mxu0 0.0
    %3956 = vmatprep.subr.mxu0 0.0
    %3957 = vmatpush1.msra.mxu0 0.0
    %3958 = vmatprep.subr.mxu0 0.0
    %3959 = vmatpush1.msra.mxu0 0.0
    %3960 = vmatprep.subr.mxu0 0.0
    %3961 = vmatpush1.msra.mxu0 0.0
    %3962 = vmatprep.subr.mxu0 0.0
    %3963 = vmatpush1.msra.mxu0 0.0
    %3964 = vmatprep.subr.mxu0 0.0
    %3965 = vmatpush1.msra.mxu0 0.0
    %3966 = vmatprep.subr.mxu0 0.0
    %3967 = vmatpush1.msra.mxu0 0.0
    %3968 = vmatprep.subr.mxu0 0.0
    %3969 = vmatpush1.msra.mxu0 0.0
    %3970 = vmatprep.subr.mxu0 0.0
    %3971 = vmatpush1.msra.mxu0 0.0
    %3972 = vmatprep.subr.mxu0 0.0
    %3973 = vmatpush1.msra.mxu0 0.0
    %3974 = vmatprep.subr.mxu0 0.0
    %3975 = vmatpush1.msra.mxu0 0.0
    %3976 = vmatprep.subr.mxu0 0.0
    %3977 = vmatpush1.msra.mxu0 0.0
    %3978 = vmatprep.subr.mxu0 0.0
    %3979 = vmatpush1.msra.mxu0 0.0
    %3980 = vmatprep.subr.mxu0 0.0
    %3981 = vmatpush1.msra.mxu0 0.0
    %3982 = vmatprep.subr.mxu0 0.0
    %3983 = vmatpush1.msra.mxu0 0.0
    %3984 = vmatprep.subr.mxu0 0.0
    %3985 = vmatpush1.msra.mxu0 0.0
    %3986 = vmatprep.mubr.f32.mxu0 0.0
    %3987 = vmatmul.mubr.f32.gmra.mrb[0].mxu0 %v3920
    %v3988 = vpop.f32.mrb[0].mxu0
    %v3989 = vadd.f32 0.0, %v3988
    %v3990 = vpop.f32.mrb[0].mxu0
    %3991 = vdwg.mxu0
    %v3994 = vunpack.c.l.s4 1966171168
    %v3995 = vunpack.c.0.s8 %v3994
    %v3996 = vlaneseq
    %v3997 = vshrl.u32 %v3996, 7
    %v3998 = vsub.s32 %v3995, %v3997
    %v3999 = vrot.slane %v3989, %v3998
    %v4000 = vcombine.high %v3999, %v3999
    %v4002 = vunpack.c.l.s4 1966171168
    %v4003 = vunpack.c.0.s8 %v4002
    %v4004 = vlaneseq
    %v4005 = vshrl.u32 %v4004, 7
    %v4006 = vsub.s32 %v4003, %v4005
    %v4007 = vrot.slane %v3999, %v4006
    %v4009 = vunpack.c.l.s4 1966171168
    %v4010 = vunpack.c.0.s8 %v4009
    %v4011 = vlaneseq
    %v4012 = vshrl.u32 %v4011, 7
    %v4013 = vsub.s32 %v4010, %v4012
    %v4014 = vrot.slane %v4000, %v4013
    %v4015 = vlaneseq
    %v4016 = vshrl.u32 %v4015, 7
    %v4017 = vsub.s32 0, %v4016
    %v4018 = vrot.slane %v4007, %v4017
    %v4019 = vlaneseq
    %v4020 = vshrl.u32 %v4019, 7
    %v4021 = vsub.s32 0, %v4020
    %v4022 = vrot.slane %v4014, %v4021
    %v4025 = vadd.f32 %v215, %v4018
    %v4026 = vadd.f32 %v220, %v4022
    %v4027 = vtanh.pop %v4025
    %v4028 = vtanh.pop %v4026
    %v4029 = vmul.f32 %v4027, %v346
    %v4030 = vmul.f32 %v4028, %v346
    %v4031 = vsel %vm350, %v4029, 0.0
    %4032 = vadd.xlane.f32.xlu0 %v4031
    %v4033 = vpop.xlane.xlu0 %4032
    %v4034 = vsel %vm350, %v4030, 0.0
    %4035 = vadd.xlane.f32.xlu0 %v4034
    %v4036 = vpop.xlane.xlu0 %4035
    %v4039 = vlaneseq
    %v4040 = vshrl.u32 %v4039, 7
    %v4041 = vsub.s32 %v224, %v4040
    %v4042 = vrot.slane %v4033, %v4041
    %v4043 = vlaneseq
    %v4044 = vshrl.u32 %v4043, 7
    %v4045 = vsub.s32 %v224, %v4044
    %v4046 = vrot.slane %v4036, %v4045
    %v4047 = vsel %vm367, %v4046, %v4042
    %v4049 = vsel %vm370, %v4047, -inf
    %4050 = vmax.xlane.f32.xlu0 %v4049
    %v4051 = vpop.xlane.xlu0 %4050
    %v4053 = vlaneseq
    %v4054 = vshrl.u32 %v4053, 7
    %v4055 = vsub.s32 0, %v4054
    %v4056 = vrot.slane %v4051, %v4055
    %v4057 = vlaneseq
    %v4058 = vshrl.u32 %v4057, 7
    %v4059 = vsub.s32 1, %v4058
    %v4060 = vrot.slane %v4051, %v4059
    %v4063 = vsub.f32 %v4033, %v4056
    %v4064 = vsub.f32 %v4036, %v4060
    %v4065 = vmul.f32 %v4063, 1.442695
    %v4066 = vpow.pop %v4065
    %v4067 = vmul.f32 %v4064, 1.442695
    %v4068 = vpow.pop %v4067
    %4071 = vset.pattern.permute.xlu0 0
    %4072 = vperm.xlu0 %4071, %v4066
    %v4073 = vpop.permute.xlu0 %4072
    %4074 = vset.pattern.permute.xlu0 0
    %4075 = vperm.xlu0 %4074, %v4068
    %v4076 = vpop.permute.xlu0 %4075
    %v4077 = vlaneseq
    %v4078 = vshrl.u32 %v4077, 7
    %v4079 = vsub.s32 %v224, %v4078
    %v4080 = vrot.slane %v4073, %v4079
    %v4081 = vlaneseq
    %v4082 = vshrl.u32 %v4081, 7
    %v4083 = vsub.s32 %v224, %v4082
    %v4084 = vrot.slane %v4076, %v4083
    %v4085 = vsel %vm367, %v4084, %v4080
    %v4087 = vsel %vm370, %v4085, 0.0
    %4088 = vadd.xlane.f32.xlu0 %v4087
    %v4089 = vpop.xlane.xlu0 %4088
    %v4091 = vlaneseq
    %v4092 = vshrl.u32 %v4091, 7
    %v4093 = vsub.s32 0, %v4092
    %v4094 = vrot.slane %v4089, %v4093
    %v4095 = vlaneseq
    %v4096 = vshrl.u32 %v4095, 7
    %v4097 = vsub.s32 1, %v4096
    %v4098 = vrot.slane %v4089, %v4097
    %v4101 = vrcp.pop %v4094
    %v4102 = vmul.f32 %v4066, %v4101
    %v4103 = vrcp.pop %v4098
    %v4104 = vmul.f32 %v4068, %v4103
    %4106 = vset.pattern.permute.xlu0 0
    %4107 = vperm.xlu0 %4106, %v4102
    %v4108 = vpop.permute.xlu0 %4107
    %4111 = vset.pattern.permute.xlu0 0
    %4112 = vperm.xlu0 %4111, %v4104
    %v4113 = vpop.permute.xlu0 %4112
    %v4115 = vmul.f32 %v4108, %v60
    %v4116 = vmul.f32 %v4113, %v61
    %v4117 = vsel %vm141, %v4115, 0.0
    %v4118 = vrot.slane %v4117, 4
    %v4119 = vadd.f32 %v4117, %v4118
    %v4120 = vrot.slane %v4119, 2
    %v4121 = vadd.f32 %v4119, %v4120
    %v4122 = vrot.slane %v4121, 1
    %v4123 = vadd.f32 %v4121, %v4122
    %v4124 = vsel %vm141, %v4116, 0.0
    %v4125 = vrot.slane %v4124, 4
    %v4126 = vadd.f32 %v4124, %v4125
    %v4127 = vrot.slane %v4126, 2
    %v4128 = vadd.f32 %v4126, %v4127
    %v4129 = vrot.slane %v4128, 1
    %v4130 = vadd.f32 %v4128, %v4129
    %v4133 = vsel %vm367, %v4130, %v4123
    %v4134 = vsel %vm141, %v4133, 0
    %4136 = vmatprep.subr.mxu0 %v87
    %4137 = vmatpush1.msra.mxu0 %v86
    %4138 = vmatprep.subr.mxu0 %v89
    %4139 = vmatpush1.msra.mxu0 %v88
    %4140 = vmatprep.subr.mxu0 %v91
    %4141 = vmatpush1.msra.mxu0 %v90
    %4142 = vmatprep.subr.mxu0 %v93
    %4143 = vmatpush1.msra.mxu0 %v92
    %4144 = vmatprep.subr.mxu0 %v95
    %4145 = vmatpush1.msra.mxu0 %v94
    %4146 = vmatprep.subr.mxu0 %v97
    %4147 = vmatpush1.msra.mxu0 %v96
    %4148 = vmatprep.subr.mxu0 %v99
    %4149 = vmatpush1.msra.mxu0 %v98
    %4150 = vmatprep.subr.mxu0 %v101
    %4151 = vmatpush1.msra.mxu0 %v100
    %4152 = vmatprep.subr.mxu0 0.0
    %4153 = vmatpush1.msra.mxu0 0.0
    %4154 = vmatprep.subr.mxu0 0.0
    %4155 = vmatpush1.msra.mxu0 0.0
    %4156 = vmatprep.subr.mxu0 0.0
    %4157 = vmatpush1.msra.mxu0 0.0
    %4158 = vmatprep.subr.mxu0 0.0
    %4159 = vmatpush1.msra.mxu0 0.0
    %4160 = vmatprep.subr.mxu0 0.0
    %4161 = vmatpush1.msra.mxu0 0.0
    %4162 = vmatprep.subr.mxu0 0.0
    %4163 = vmatpush1.msra.mxu0 0.0
    %4164 = vmatprep.subr.mxu0 0.0
    %4165 = vmatpush1.msra.mxu0 0.0
    %4166 = vmatprep.subr.mxu0 0.0
    %4167 = vmatpush1.msra.mxu0 0.0
    %4168 = vmatprep.subr.mxu0 0.0
    %4169 = vmatpush1.msra.mxu0 0.0
    %4170 = vmatprep.subr.mxu0 0.0
    %4171 = vmatpush1.msra.mxu0 0.0
    %4172 = vmatprep.subr.mxu0 0.0
    %4173 = vmatpush1.msra.mxu0 0.0
    %4174 = vmatprep.subr.mxu0 0.0
    %4175 = vmatpush1.msra.mxu0 0.0
    %4176 = vmatprep.subr.mxu0 0.0
    %4177 = vmatpush1.msra.mxu0 0.0
    %4178 = vmatprep.subr.mxu0 0.0
    %4179 = vmatpush1.msra.mxu0 0.0
    %4180 = vmatprep.subr.mxu0 0.0
    %4181 = vmatpush1.msra.mxu0 0.0
    %4182 = vmatprep.subr.mxu0 0.0
    %4183 = vmatpush1.msra.mxu0 0.0
    %4184 = vmatprep.subr.mxu0 0.0
    %4185 = vmatpush1.msra.mxu0 0.0
    %4186 = vmatprep.subr.mxu0 0.0
    %4187 = vmatpush1.msra.mxu0 0.0
    %4188 = vmatprep.subr.mxu0 0.0
    %4189 = vmatpush1.msra.mxu0 0.0
    %4190 = vmatprep.subr.mxu0 0.0
    %4191 = vmatpush1.msra.mxu0 0.0
    %4192 = vmatprep.subr.mxu0 0.0
    %4193 = vmatpush1.msra.mxu0 0.0
    %4194 = vmatprep.subr.mxu0 0.0
    %4195 = vmatpush1.msra.mxu0 0.0
    %4196 = vmatprep.subr.mxu0 0.0
    %4197 = vmatpush1.msra.mxu0 0.0
    %4198 = vmatprep.subr.mxu0 0.0
    %4199 = vmatpush1.msra.mxu0 0.0
    %4200 = vmatprep.mubr.f32.mxu0 0.0
    %4201 = vmatmul.mubr.f32.gmra.mrb[0].mxu0 %v4134
    %v4202 = vpop.f32.mrb[0].mxu0
    %v4203 = vadd.f32 0.0, %v4202
    %v4204 = vpop.f32.mrb[0].mxu0
    %v4205 = vadd.f32 0.0, %v4204
    %4206 = vdwg.mxu0
    %v4208 = vsel %vm529, %v3908, 0
    %4210 = vmatprep.subr.mxu0 %v83
    %4211 = vmatpush1.msra.mxu0 %v82
    %4212 = vmatprep.subr.mxu0 %v85
    %4213 = vmatpush1.msra.mxu0 %v84
    %4214 = vmatprep.subr.mxu0 0.0
    %4215 = vmatpush1.msra.mxu0 0.0
    %4216 = vmatprep.subr.mxu0 0.0
    %4217 = vmatpush1.msra.mxu0 0.0
    %4218 = vmatprep.subr.mxu0 0.0
    %4219 = vmatpush1.msra.mxu0 0.0
    %4220 = vmatprep.subr.mxu0 0.0
    %4221 = vmatpush1.msra.mxu0 0.0
    %4222 = vmatprep.subr.mxu0 0.0
    %4223 = vmatpush1.msra.mxu0 0.0
    %4224 = vmatprep.subr.mxu0 0.0
    %4225 = vmatpush1.msra.mxu0 0.0
    %4226 = vmatprep.subr.mxu0 0.0
    %4227 = vmatpush1.msra.mxu0 0.0
    %4228 = vmatprep.subr.mxu0 0.0
    %4229 = vmatpush1.msra.mxu0 0.0
    %4230 = vmatprep.subr.mxu0 0.0
    %4231 = vmatpush1.msra.mxu0 0.0
    %4232 = vmatprep.subr.mxu0 0.0
    %4233 = vmatpush1.msra.mxu0 0.0
    %4234 = vmatprep.subr.mxu0 0.0
    %4235 = vmatpush1.msra.mxu0 0.0
    %4236 = vmatprep.subr.mxu0 0.0
    %4237 = vmatpush1.msra.mxu0 0.0
    %4238 = vmatprep.subr.mxu0 0.0
    %4239 = vmatpush1.msra.mxu0 0.0
    %4240 = vmatprep.subr.mxu0 0.0
    %4241 = vmatpush1.msra.mxu0 0.0
    %4242 = vmatprep.subr.mxu0 0.0
    %4243 = vmatpush1.msra.mxu0 0.0
    %4244 = vmatprep.subr.mxu0 0.0
    %4245 = vmatpush1.msra.mxu0 0.0
    %4246 = vmatprep.subr.mxu0 0.0
    %4247 = vmatpush1.msra.mxu0 0.0
    %4248 = vmatprep.subr.mxu0 0.0
    %4249 = vmatpush1.msra.mxu0 0.0
    %4250 = vmatprep.subr.mxu0 0.0
    %4251 = vmatpush1.msra.mxu0 0.0
    %4252 = vmatprep.subr.mxu0 0.0
    %4253 = vmatpush1.msra.mxu0 0.0
    %4254 = vmatprep.subr.mxu0 0.0
    %4255 = vmatpush1.msra.mxu0 0.0
    %4256 = vmatprep.subr.mxu0 0.0
    %4257 = vmatpush1.msra.mxu0 0.0
    %4258 = vmatprep.subr.mxu0 0.0
    %4259 = vmatpush1.msra.mxu0 0.0
    %4260 = vmatprep.subr.mxu0 0.0
    %4261 = vmatpush1.msra.mxu0 0.0
    %4262 = vmatprep.subr.mxu0 0.0
    %4263 = vmatpush1.msra.mxu0 0.0
    %4264 = vmatprep.subr.mxu0 0.0
    %4265 = vmatpush1.msra.mxu0 0.0
    %4266 = vmatprep.subr.mxu0 0.0
    %4267 = vmatpush1.msra.mxu0 0.0
    %4268 = vmatprep.subr.mxu0 0.0
    %4269 = vmatpush1.msra.mxu0 0.0
    %4270 = vmatprep.subr.mxu0 0.0
    %4271 = vmatpush1.msra.mxu0 0.0
    %4272 = vmatprep.subr.mxu0 0.0
    %4273 = vmatpush1.msra.mxu0 0.0
    %4274 = vmatprep.mubr.f32.mxu0 0.0
    %4275 = vmatmul.mubr.f32.gmra.mrb[0].mxu0 %v4208
    %v4276 = vpop.f32.mrb[0].mxu0
    %v4277 = vadd.f32 %v4203, %v4276
    %v4278 = vpop.f32.mrb[0].mxu0
    %v4279 = vadd.f32 %v4205, %v4278
    %4280 = vdwg.mxu0
    %4281 = vmatprep.subr.mxu0 %v103
    %4282 = vmatpush1.msra.mxu0 %v102
    %4283 = vmatprep.subr.mxu0 %v105
    %4284 = vmatpush1.msra.mxu0 %v104
    %4285 = vmatprep.subr.mxu0 %v107
    %4286 = vmatpush1.msra.mxu0 %v106
    %4287 = vmatprep.subr.mxu0 %v109
    %4288 = vmatpush1.msra.mxu0 %v108
    %4289 = vmatprep.subr.mxu0 %v111
    %4290 = vmatpush1.msra.mxu0 %v110
    %4291 = vmatprep.subr.mxu0 %v113
    %4292 = vmatpush1.msra.mxu0 %v112
    %4293 = vmatprep.subr.mxu0 %v115
    %4294 = vmatpush1.msra.mxu0 %v114
    %4295 = vmatprep.subr.mxu0 %v117
    %4296 = vmatpush1.msra.mxu0 %v116
    %4297 = vmatprep.subr.mxu0 0.0
    %4298 = vmatpush1.msra.mxu0 0.0
    %4299 = vmatprep.subr.mxu0 0.0
    %4300 = vmatpush1.msra.mxu0 0.0
    %4301 = vmatprep.subr.mxu0 0.0
    %4302 = vmatpush1.msra.mxu0 0.0
    %4303 = vmatprep.subr.mxu0 0.0
    %4304 = vmatpush1.msra.mxu0 0.0
    %4305 = vmatprep.subr.mxu0 0.0
    %4306 = vmatpush1.msra.mxu0 0.0
    %4307 = vmatprep.subr.mxu0 0.0
    %4308 = vmatpush1.msra.mxu0 0.0
    %4309 = vmatprep.subr.mxu0 0.0
    %4310 = vmatpush1.msra.mxu0 0.0
    %4311 = vmatprep.subr.mxu0 0.0
    %4312 = vmatpush1.msra.mxu0 0.0
    %4313 = vmatprep.subr.mxu0 0.0
    %4314 = vmatpush1.msra.mxu0 0.0
    %4315 = vmatprep.subr.mxu0 0.0
    %4316 = vmatpush1.msra.mxu0 0.0
    %4317 = vmatprep.subr.mxu0 0.0
    %4318 = vmatpush1.msra.mxu0 0.0
    %4319 = vmatprep.subr.mxu0 0.0
    %4320 = vmatpush1.msra.mxu0 0.0
    %4321 = vmatprep.subr.mxu0 0.0
    %4322 = vmatpush1.msra.mxu0 0.0
    %4323 = vmatprep.subr.mxu0 0.0
    %4324 = vmatpush1.msra.mxu0 0.0
    %4325 = vmatprep.subr.mxu0 0.0
    %4326 = vmatpush1.msra.mxu0 0.0
    %4327 = vmatprep.subr.mxu0 0.0
    %4328 = vmatpush1.msra.mxu0 0.0
    %4329 = vmatprep.subr.mxu0 0.0
    %4330 = vmatpush1.msra.mxu0 0.0
    %4331 = vmatprep.subr.mxu0 0.0
    %4332 = vmatpush1.msra.mxu0 0.0
    %4333 = vmatprep.subr.mxu0 0.0
    %4334 = vmatpush1.msra.mxu0 0.0
    %4335 = vmatprep.subr.mxu0 0.0
    %4336 = vmatpush1.msra.mxu0 0.0
    %4337 = vmatprep.subr.mxu0 0.0
    %4338 = vmatpush1.msra.mxu0 0.0
    %4339 = vmatprep.subr.mxu0 0.0
    %4340 = vmatpush1.msra.mxu0 0.0
    %4341 = vmatprep.subr.mxu0 0.0
    %4342 = vmatpush1.msra.mxu0 0.0
    %4343 = vmatprep.subr.mxu0 0.0
    %4344 = vmatpush1.msra.mxu0 0.0
    %4345 = vmatprep.mubr.f32.mxu0 0.0
    %4346 = vmatmul.mubr.f32.gmra.mrb[0].mxu0 %v3920
    %v4347 = vpop.f32.mrb[0].mxu0
    %v4348 = vadd.f32 0.0, %v4347
    %v4349 = vpop.f32.mrb[0].mxu0
    %v4350 = vadd.f32 0.0, %v4349
    %4351 = vdwg.mxu0
    %v4352 = vadd.f32 %v4277, %v4348
    %v4353 = vxor.u32 %v4352, 2147483648
    %v4354 = vmul.f32 %v4353, 1.442695
    %v4355 = vpow.pop %v4354
    %v4356 = vadd.f32 %v4355, 1.0
    %v4357 = vrcp.pop %v4356
    %v4358 = vmul.f32 1.0, %v4357
    %v4359 = vmul.f32 %v4358, %v4350
    %v4360 = vadd.f32 %v4279, %v4359
    %v4361 = vtanh.pop %v4360
    %v4362 = vsub.f32 1.0, %v4358
    %4364 = vrot.lane.b32.xlu0 %v4361, 64
    %v4365 = vpop.permute.xlu0 %4364
    %v4367 = vmul.f32 %v4362, %v4365
    %4368 = vrot.lane.b32.xlu0 %v3910, 64
    %v4369 = vpop.permute.xlu0 %4368
    %v4371 = vmul.f32 %v4358, %v4369
    %v4372 = vadd.f32 %v4367, %v4371
    %4373 = vmatprep.subr.mxu0 0.0
    %4374 = vmatpush1.msra.mxu0 %v126
    %4375 = vmatprep.subr.mxu0 0.0
    %4376 = vmatpush1.msra.mxu0 %v127
    %4377 = vmatprep.subr.mxu0 0.0
    %4378 = vmatpush1.msra.mxu0 %v128
    %4379 = vmatprep.subr.mxu0 0.0
    %4380 = vmatpush1.msra.mxu0 %v129
    %4381 = vmatprep.subr.mxu0 0.0
    %4382 = vmatpush1.msra.mxu0 %v130
    %4383 = vmatprep.subr.mxu0 0.0
    %4384 = vmatpush1.msra.mxu0 %v131
    %4385 = vmatprep.subr.mxu0 0.0
    %4386 = vmatpush1.msra.mxu0 %v132
    %4387 = vmatprep.subr.mxu0 0.0
    %4388 = vmatpush1.msra.mxu0 %v133
    %4389 = vmatprep.subr.mxu0 0.0
    %4390 = vmatpush1.msra.mxu0 0.0
    %4391 = vmatprep.subr.mxu0 0.0
    %4392 = vmatpush1.msra.mxu0 0.0
    %4393 = vmatprep.subr.mxu0 0.0
    %4394 = vmatpush1.msra.mxu0 0.0
    %4395 = vmatprep.subr.mxu0 0.0
    %4396 = vmatpush1.msra.mxu0 0.0
    %4397 = vmatprep.subr.mxu0 0.0
    %4398 = vmatpush1.msra.mxu0 0.0
    %4399 = vmatprep.subr.mxu0 0.0
    %4400 = vmatpush1.msra.mxu0 0.0
    %4401 = vmatprep.subr.mxu0 0.0
    %4402 = vmatpush1.msra.mxu0 0.0
    %4403 = vmatprep.subr.mxu0 0.0
    %4404 = vmatpush1.msra.mxu0 0.0
    %4405 = vmatprep.subr.mxu0 0.0
    %4406 = vmatpush1.msra.mxu0 0.0
    %4407 = vmatprep.subr.mxu0 0.0
    %4408 = vmatpush1.msra.mxu0 0.0
    %4409 = vmatprep.subr.mxu0 0.0
    %4410 = vmatpush1.msra.mxu0 0.0
    %4411 = vmatprep.subr.mxu0 0.0
    %4412 = vmatpush1.msra.mxu0 0.0
    %4413 = vmatprep.subr.mxu0 0.0
    %4414 = vmatpush1.msra.mxu0 0.0
    %4415 = vmatprep.subr.mxu0 0.0
    %4416 = vmatpush1.msra.mxu0 0.0
    %4417 = vmatprep.subr.mxu0 0.0
    %4418 = vmatpush1.msra.mxu0 0.0
    %4419 = vmatprep.subr.mxu0 0.0
    %4420 = vmatpush1.msra.mxu0 0.0
    %4421 = vmatprep.subr.mxu0 0.0
    %4422 = vmatpush1.msra.mxu0 0.0
    %4423 = vmatprep.subr.mxu0 0.0
    %4424 = vmatpush1.msra.mxu0 0.0
    %4425 = vmatprep.subr.mxu0 0.0
    %4426 = vmatpush1.msra.mxu0 0.0
    %4427 = vmatprep.subr.mxu0 0.0
    %4428 = vmatpush1.msra.mxu0 0.0
    %4429 = vmatprep.subr.mxu0 0.0
    %4430 = vmatpush1.msra.mxu0 0.0
    %4431 = vmatprep.subr.mxu0 0.0
    %4432 = vmatpush1.msra.mxu0 0.0
    %4433 = vmatprep.subr.mxu0 0.0
    %4434 = vmatpush1.msra.mxu0 0.0
    %4435 = vmatprep.subr.mxu0 0.0
    %4436 = vmatpush1.msra.mxu0 0.0
    %4437 = vmatprep.mubr.f32.mxu0 0.0
    %4438 = vmatmul.mubr.f32.gmra.mrb[0].mxu0 %v4134
    %v4439 = vpop.f32.mrb[0].mxu0
    %v4440 = vadd.f32 0.0, %v4439
    %v4441 = vpop.f32.mrb[0].mxu0
    %4442 = vdwg.mxu0
    %4444 = vrot.lane.b32.xlu0 %v4372, 64
    %v4445 = vpop.permute.xlu0 %4444
    %v4446 = vsel %vm141, %v4445, 0
    %4448 = vmatprep.subr.mxu0 0.0
    %4449 = vmatpush1.msra.mxu0 %v118
    %4450 = vmatprep.subr.mxu0 0.0
    %4451 = vmatpush1.msra.mxu0 %v119
    %4452 = vmatprep.subr.mxu0 0.0
    %4453 = vmatpush1.msra.mxu0 %v120
    %4454 = vmatprep.subr.mxu0 0.0
    %4455 = vmatpush1.msra.mxu0 %v121
    %4456 = vmatprep.subr.mxu0 0.0
    %4457 = vmatpush1.msra.mxu0 %v122
    %4458 = vmatprep.subr.mxu0 0.0
    %4459 = vmatpush1.msra.mxu0 %v123
    %4460 = vmatprep.subr.mxu0 0.0
    %4461 = vmatpush1.msra.mxu0 %v124
    %4462 = vmatprep.subr.mxu0 0.0
    %4463 = vmatpush1.msra.mxu0 %v125
    %4464 = vmatprep.subr.mxu0 0.0
    %4465 = vmatpush1.msra.mxu0 0.0
    %4466 = vmatprep.subr.mxu0 0.0
    %4467 = vmatpush1.msra.mxu0 0.0
    %4468 = vmatprep.subr.mxu0 0.0
    %4469 = vmatpush1.msra.mxu0 0.0
    %4470 = vmatprep.subr.mxu0 0.0
    %4471 = vmatpush1.msra.mxu0 0.0
    %4472 = vmatprep.subr.mxu0 0.0
    %4473 = vmatpush1.msra.mxu0 0.0
    %4474 = vmatprep.subr.mxu0 0.0
    %4475 = vmatpush1.msra.mxu0 0.0
    %4476 = vmatprep.subr.mxu0 0.0
    %4477 = vmatpush1.msra.mxu0 0.0
    %4478 = vmatprep.subr.mxu0 0.0
    %4479 = vmatpush1.msra.mxu0 0.0
    %4480 = vmatprep.subr.mxu0 0.0
    %4481 = vmatpush1.msra.mxu0 0.0
    %4482 = vmatprep.subr.mxu0 0.0
    %4483 = vmatpush1.msra.mxu0 0.0
    %4484 = vmatprep.subr.mxu0 0.0
    %4485 = vmatpush1.msra.mxu0 0.0
    %4486 = vmatprep.subr.mxu0 0.0
    %4487 = vmatpush1.msra.mxu0 0.0
    %4488 = vmatprep.subr.mxu0 0.0
    %4489 = vmatpush1.msra.mxu0 0.0
    %4490 = vmatprep.subr.mxu0 0.0
    %4491 = vmatpush1.msra.mxu0 0.0
    %4492 = vmatprep.subr.mxu0 0.0
    %4493 = vmatpush1.msra.mxu0 0.0
    %4494 = vmatprep.subr.mxu0 0.0
    %4495 = vmatpush1.msra.mxu0 0.0
    %4496 = vmatprep.subr.mxu0 0.0
    %4497 = vmatpush1.msra.mxu0 0.0
    %4498 = vmatprep.subr.mxu0 0.0
    %4499 = vmatpush1.msra.mxu0 0.0
    %4500 = vmatprep.subr.mxu0 0.0
    %4501 = vmatpush1.msra.mxu0 0.0
    %4502 = vmatprep.subr.mxu0 0.0
    %4503 = vmatpush1.msra.mxu0 0.0
    %4504 = vmatprep.subr.mxu0 0.0
    %4505 = vmatpush1.msra.mxu0 0.0
    %4506 = vmatprep.subr.mxu0 0.0
    %4507 = vmatpush1.msra.mxu0 0.0
    %4508 = vmatprep.subr.mxu0 0.0
    %4509 = vmatpush1.msra.mxu0 0.0
    %4510 = vmatprep.subr.mxu0 0.0
    %4511 = vmatpush1.msra.mxu0 0.0
    %4512 = vmatprep.mubr.f32.mxu0 0.0
    %4513 = vmatmul.mubr.f32.gmra.mrb[0].mxu0 %v4446
    %v4514 = vpop.f32.mrb[0].mxu0
    %v4515 = vadd.f32 %v4440, %v4514
    %v4516 = vpop.f32.mrb[0].mxu0
    %4517 = vdwg.mxu0
    %v4518 = vadd.f32 %v4515, %v845
    %v4519 = vsel %vm848, %v4518, -inf
    %4520 = vmax.xlane.f32.xlu0 %v4519
    %v4521 = vpop.xlane.xlu0 %4520
    %v4522 = vsub.f32 %v4518, %v4521
    %v4523 = vmul.f32 %v4522, 1.442695
    %v4524 = vpow.pop %v4523
    %v4525 = vsel %vm848, %v4524, 0.0
    %4526 = vadd.xlane.f32.xlu0 %v4525
    %v4527 = vpop.xlane.xlu0 %4526
    %v4528 = vlog2.pop %v4527
    %v4529 = vmul.f32 %v4528, 0.6931472
    %v4530 = vsub.f32 %v4522, %v4529
    %v4531 = vsel %vm3918, 1, 0
    %vm4532 = vcmp.eq.s32.totalorder %v4531, 1
    %v4533 = vsel %vm4532, 0.0, %v4530
    %s4534 = scalar_lea.vmem %s13, 10
    %4535 = vst.msk [vmem:[%s4534] sm:$0x3] %vm848, %v4533
    %v4536 = vsel %vm848, %v4530, -inf
    %4537 = vmax.xlane.f32.xlu0 %v4536
    %v4538 = vpop.xlane.xlu0 %4537
    %vm4539 = vcmp.eq.f32.partialorder %v4530, %v4538
    %v4540 = vsel %vm4539, %v224, 16
    %v4541 = vsel %vm848, %v4540, 2147483647
    %v4542 = vand.u32 %v4541, 65535
    %v4543 = vshra.s32 %v4541, 16
    %v4544 = vcvt.s32.f32 %v4542
    %v4545 = vcvt.s32.f32 %v4543
    %4546 = vmin.xlane.f32.xlu0 %v4545
    %v4547 = vpop.xlane.xlu0 %4546
    %vm4548 = vcmp.eq.f32.partialorder %v4545, %v4547
    %v4549 = vsel %vm4548, %v4544, inf
    %4550 = vmin.xlane.f32.xlu0 %v4549
    %v4551 = vpop.xlane.xlu0 %4550
    %v4552 = vcvt.f32.s32 %v4551
    %v4553 = vcvt.f32.s32 %v4547
    %v4554 = vshll.u32 %v4553, 16
    %v4555 = vadd.s32 %v4554, %v4552
    %vm4556 = vcmp.eq.s32.totalorder %v4555, 2
    %vm4557 = vcmp.eq.s32.totalorder %v224, %v4555
    %v4558 = vsel %vm4557, 1, 0
    %v4559 = vcvt.s32.f32 %v4558
    %v4561 = vsel %vm529, %v4559, 0
    %4563 = vmatprep.subr.mxu0 0.0
    %4564 = vmatpush1.msra.mxu0 %v62
    %4565 = vmatprep.subr.mxu0 0.0
    %4566 = vmatpush1.msra.mxu0 %v63
    %4567 = vmatprep.subr.mxu0 0.0
    %4568 = vmatpush1.msra.mxu0 0.0
    %4569 = vmatprep.subr.mxu0 0.0
    %4570 = vmatpush1.msra.mxu0 0.0
    %4571 = vmatprep.subr.mxu0 0.0
    %4572 = vmatpush1.msra.mxu0 0.0
    %4573 = vmatprep.subr.mxu0 0.0
    %4574 = vmatpush1.msra.mxu0 0.0
    %4575 = vmatprep.subr.mxu0 0.0
    %4576 = vmatpush1.msra.mxu0 0.0
    %4577 = vmatprep.subr.mxu0 0.0
    %4578 = vmatpush1.msra.mxu0 0.0
    %4579 = vmatprep.subr.mxu0 0.0
    %4580 = vmatpush1.msra.mxu0 0.0
    %4581 = vmatprep.subr.mxu0 0.0
    %4582 = vmatpush1.msra.mxu0 0.0
    %4583 = vmatprep.subr.mxu0 0.0
    %4584 = vmatpush1.msra.mxu0 0.0
    %4585 = vmatprep.subr.mxu0 0.0
    %4586 = vmatpush1.msra.mxu0 0.0
    %4587 = vmatprep.subr.mxu0 0.0
    %4588 = vmatpush1.msra.mxu0 0.0
    %4589 = vmatprep.subr.mxu0 0.0
    %4590 = vmatpush1.msra.mxu0 0.0
    %4591 = vmatprep.subr.mxu0 0.0
    %4592 = vmatpush1.msra.mxu0 0.0
    %4593 = vmatprep.subr.mxu0 0.0
    %4594 = vmatpush1.msra.mxu0 0.0
    %4595 = vmatprep.subr.mxu0 0.0
    %4596 = vmatpush1.msra.mxu0 0.0
    %4597 = vmatprep.subr.mxu0 0.0
    %4598 = vmatpush1.msra.mxu0 0.0
    %4599 = vmatprep.subr.mxu0 0.0
    %4600 = vmatpush1.msra.mxu0 0.0
    %4601 = vmatprep.subr.mxu0 0.0
    %4602 = vmatpush1.msra.mxu0 0.0
    %4603 = vmatprep.subr.mxu0 0.0
    %4604 = vmatpush1.msra.mxu0 0.0
    %4605 = vmatprep.subr.mxu0 0.0
    %4606 = vmatpush1.msra.mxu0 0.0
    %4607 = vmatprep.subr.mxu0 0.0
    %4608 = vmatpush1.msra.mxu0 0.0
    %4609 = vmatprep.subr.mxu0 0.0
    %4610 = vmatpush1.msra.mxu0 0.0
    %4611 = vmatprep.subr.mxu0 0.0
    %4612 = vmatpush1.msra.mxu0 0.0
    %4613 = vmatprep.subr.mxu0 0.0
    %4614 = vmatpush1.msra.mxu0 0.0
    %4615 = vmatprep.subr.mxu0 0.0
    %4616 = vmatpush1.msra.mxu0 0.0
    %4617 = vmatprep.subr.mxu0 0.0
    %4618 = vmatpush1.msra.mxu0 0.0
    %4619 = vmatprep.subr.mxu0 0.0
    %4620 = vmatpush1.msra.mxu0 0.0
    %4621 = vmatprep.subr.mxu0 0.0
    %4622 = vmatpush1.msra.mxu0 0.0
    %4623 = vmatprep.subr.mxu0 0.0
    %4624 = vmatpush1.msra.mxu0 0.0
    %4625 = vmatprep.subr.mxu0 0.0
    %4626 = vmatpush1.msra.mxu0 0.0
    %4627 = vmatprep.mubr.f32.mxu0 0.0
    %4628 = vmatmul.mubr.f32.gmra.mrb[0].mxu0 %v4561
    %v4629 = vpop.f32.mrb[0].mxu0
    %v4630 = vadd.f32 0.0, %v4629
    %v4631 = vpop.f32.mrb[0].mxu0
    %4632 = vdwg.mxu0
    %vm4633 = vmxor %vm3918, 1
    %v4634 = vsel %vm4633, 1, 0
    %vm4635 = vcmp.eq.s32.totalorder %v4634, 1
    %vm4636 = vmand %vm4556, %vm4635
    %v4637 = vsel %vm4636, 6, %v3903
    %v4638 = vsel %vm4556, 1, 0
    %v4639 = vcvt.s32.f32 %v4638
    %v4640 = vmax.f32 %v3907, %v4639
    %v4641 = vsel %vm4532, %v3907, %v4640
    %v4642 = vsel %vm4532, %v3908, %v4630
    %v4644 = vsel %vm4532, %v3910, %v4445
    %v4645 = vsel %vm974, %v4641, 0.0
    %v4646 = vrot.slane %v4645, 4
    %v4647 = vadd.f32 %v4645, %v4646
    %v4648 = vrot.slane %v4647, 2
    %v4649 = vadd.f32 %v4647, %v4648
    %v4650 = vrot.slane %v4649, 1
    %v4651 = vadd.f32 %v4649, %v4650
    %vm4652 = vcmp.ge.f32.partialorder %v4651, 2.0
    %v4654 = vsel %vm141, %v4644, 0
    %4656 = vmatprep.subr.mxu0 0.0
    %4657 = vmatpush1.msra.mxu0 %v64
    %4658 = vmatprep.subr.mxu0 0.0
    %4659 = vmatpush1.msra.mxu0 %v65
    %4660 = vmatprep.subr.mxu0 0.0
    %4661 = vmatpush1.msra.mxu0 %v66
    %4662 = vmatprep.subr.mxu0 0.0
    %4663 = vmatpush1.msra.mxu0 %v67
    %4664 = vmatprep.subr.mxu0 0.0
    %4665 = vmatpush1.msra.mxu0 %v68
    %4666 = vmatprep.subr.mxu0 0.0
    %4667 = vmatpush1.msra.mxu0 %v69
    %4668 = vmatprep.subr.mxu0 0.0
    %4669 = vmatpush1.msra.mxu0 %v70
    %4670 = vmatprep.subr.mxu0 0.0
    %4671 = vmatpush1.msra.mxu0 %v71
    %4672 = vmatprep.subr.mxu0 0.0
    %4673 = vmatpush1.msra.mxu0 0.0
    %4674 = vmatprep.subr.mxu0 0.0
    %4675 = vmatpush1.msra.mxu0 0.0
    %4676 = vmatprep.subr.mxu0 0.0
    %4677 = vmatpush1.msra.mxu0 0.0
    %4678 = vmatprep.subr.mxu0 0.0
    %4679 = vmatpush1.msra.mxu0 0.0
    %4680 = vmatprep.subr.mxu0 0.0
    %4681 = vmatpush1.msra.mxu0 0.0
    %4682 = vmatprep.subr.mxu0 0.0
    %4683 = vmatpush1.msra.mxu0 0.0
    %4684 = vmatprep.subr.mxu0 0.0
    %4685 = vmatpush1.msra.mxu0 0.0
    %4686 = vmatprep.subr.mxu0 0.0
    %4687 = vmatpush1.msra.mxu0 0.0
    %4688 = vmatprep.subr.mxu0 0.0
    %4689 = vmatpush1.msra.mxu0 0.0
    %4690 = vmatprep.subr.mxu0 0.0
    %4691 = vmatpush1.msra.mxu0 0.0
    %4692 = vmatprep.subr.mxu0 0.0
    %4693 = vmatpush1.msra.mxu0 0.0
    %4694 = vmatprep.subr.mxu0 0.0
    %4695 = vmatpush1.msra.mxu0 0.0
    %4696 = vmatprep.subr.mxu0 0.0
    %4697 = vmatpush1.msra.mxu0 0.0
    %4698 = vmatprep.subr.mxu0 0.0
    %4699 = vmatpush1.msra.mxu0 0.0
    %4700 = vmatprep.subr.mxu0 0.0
    %4701 = vmatpush1.msra.mxu0 0.0
    %4702 = vmatprep.subr.mxu0 0.0
    %4703 = vmatpush1.msra.mxu0 0.0
    %4704 = vmatprep.subr.mxu0 0.0
    %4705 = vmatpush1.msra.mxu0 0.0
    %4706 = vmatprep.subr.mxu0 0.0
    %4707 = vmatpush1.msra.mxu0 0.0
    %4708 = vmatprep.subr.mxu0 0.0
    %4709 = vmatpush1.msra.mxu0 0.0
    %4710 = vmatprep.subr.mxu0 0.0
    %4711 = vmatpush1.msra.mxu0 0.0
    %4712 = vmatprep.subr.mxu0 0.0
    %4713 = vmatpush1.msra.mxu0 0.0
    %4714 = vmatprep.subr.mxu0 0.0
    %4715 = vmatpush1.msra.mxu0 0.0
    %4716 = vmatprep.subr.mxu0 0.0
    %4717 = vmatpush1.msra.mxu0 0.0
    %4718 = vmatprep.subr.mxu0 0.0
    %4719 = vmatpush1.msra.mxu0 0.0
    %4720 = vmatprep.mubr.f32.mxu0 0.0
    %4721 = vmatmul.mubr.f32.gmra.mrb[0].mxu0 %v4654
    %v4722 = vpop.f32.mrb[0].mxu0
    %v4723 = vadd.f32 0.0, %v4722
    %v4724 = vpop.f32.mrb[0].mxu0
    %4725 = vdwg.mxu0
    %v4728 = vunpack.c.l.s4 1966171168
    %v4729 = vunpack.c.0.s8 %v4728
    %v4730 = vlaneseq
    %v4731 = vshrl.u32 %v4730, 7
    %v4732 = vsub.s32 %v4729, %v4731
    %v4733 = vrot.slane %v4723, %v4732
    %v4734 = vcombine.high %v4733, %v4733
    %v4736 = vunpack.c.l.s4 1966171168
    %v4737 = vunpack.c.0.s8 %v4736
    %v4738 = vlaneseq
    %v4739 = vshrl.u32 %v4738, 7
    %v4740 = vsub.s32 %v4737, %v4739
    %v4741 = vrot.slane %v4733, %v4740
    %v4743 = vunpack.c.l.s4 1966171168
    %v4744 = vunpack.c.0.s8 %v4743
    %v4745 = vlaneseq
    %v4746 = vshrl.u32 %v4745, 7
    %v4747 = vsub.s32 %v4744, %v4746
    %v4748 = vrot.slane %v4734, %v4747
    %v4749 = vlaneseq
    %v4750 = vshrl.u32 %v4749, 7
    %v4751 = vsub.s32 0, %v4750
    %v4752 = vrot.slane %v4741, %v4751
    %v4753 = vlaneseq
    %v4754 = vshrl.u32 %v4753, 7
    %v4755 = vsub.s32 0, %v4754
    %v4756 = vrot.slane %v4748, %v4755
    %v4759 = vadd.f32 %v215, %v4752
    %v4760 = vadd.f32 %v220, %v4756
    %v4761 = vtanh.pop %v4759
    %v4762 = vtanh.pop %v4760
    %v4763 = vmul.f32 %v4761, %v346
    %v4764 = vmul.f32 %v4762, %v346
    %v4765 = vsel %vm350, %v4763, 0.0
    %4766 = vadd.xlane.f32.xlu0 %v4765
    %v4767 = vpop.xlane.xlu0 %4766
    %v4768 = vsel %vm350, %v4764, 0.0
    %4769 = vadd.xlane.f32.xlu0 %v4768
    %v4770 = vpop.xlane.xlu0 %4769
    %v4773 = vlaneseq
    %v4774 = vshrl.u32 %v4773, 7
    %v4775 = vsub.s32 %v224, %v4774
    %v4776 = vrot.slane %v4767, %v4775
    %v4777 = vlaneseq
    %v4778 = vshrl.u32 %v4777, 7
    %v4779 = vsub.s32 %v224, %v4778
    %v4780 = vrot.slane %v4770, %v4779
    %v4781 = vsel %vm367, %v4780, %v4776
    %v4783 = vsel %vm370, %v4781, -inf
    %4784 = vmax.xlane.f32.xlu0 %v4783
    %v4785 = vpop.xlane.xlu0 %4784
    %v4787 = vlaneseq
    %v4788 = vshrl.u32 %v4787, 7
    %v4789 = vsub.s32 0, %v4788
    %v4790 = vrot.slane %v4785, %v4789
    %v4791 = vlaneseq
    %v4792 = vshrl.u32 %v4791, 7
    %v4793 = vsub.s32 1, %v4792
    %v4794 = vrot.slane %v4785, %v4793
    %v4797 = vsub.f32 %v4767, %v4790
    %v4798 = vsub.f32 %v4770, %v4794
    %v4799 = vmul.f32 %v4797, 1.442695
    %v4800 = vpow.pop %v4799
    %v4801 = vmul.f32 %v4798, 1.442695
    %v4802 = vpow.pop %v4801
    %4805 = vset.pattern.permute.xlu0 0
    %4806 = vperm.xlu0 %4805, %v4800
    %v4807 = vpop.permute.xlu0 %4806
    %4808 = vset.pattern.permute.xlu0 0
    %4809 = vperm.xlu0 %4808, %v4802
    %v4810 = vpop.permute.xlu0 %4809
    %v4811 = vlaneseq
    %v4812 = vshrl.u32 %v4811, 7
    %v4813 = vsub.s32 %v224, %v4812
    %v4814 = vrot.slane %v4807, %v4813
    %v4815 = vlaneseq
    %v4816 = vshrl.u32 %v4815, 7
    %v4817 = vsub.s32 %v224, %v4816
    %v4818 = vrot.slane %v4810, %v4817
    %v4819 = vsel %vm367, %v4818, %v4814
    %v4821 = vsel %vm370, %v4819, 0.0
    %4822 = vadd.xlane.f32.xlu0 %v4821
    %v4823 = vpop.xlane.xlu0 %4822
    %v4825 = vlaneseq
    %v4826 = vshrl.u32 %v4825, 7
    %v4827 = vsub.s32 0, %v4826
    %v4828 = vrot.slane %v4823, %v4827
    %v4829 = vlaneseq
    %v4830 = vshrl.u32 %v4829, 7
    %v4831 = vsub.s32 1, %v4830
    %v4832 = vrot.slane %v4823, %v4831
    %v4835 = vrcp.pop %v4828
    %v4836 = vmul.f32 %v4800, %v4835
    %v4837 = vrcp.pop %v4832
    %v4838 = vmul.f32 %v4802, %v4837
    %4840 = vset.pattern.permute.xlu0 0
    %4841 = vperm.xlu0 %4840, %v4836
    %v4842 = vpop.permute.xlu0 %4841
    %4845 = vset.pattern.permute.xlu0 0
    %4846 = vperm.xlu0 %4845, %v4838
    %v4847 = vpop.permute.xlu0 %4846
    %v4849 = vmul.f32 %v4842, %v60
    %v4850 = vmul.f32 %v4847, %v61
    %v4851 = vsel %vm141, %v4849, 0.0
    %v4852 = vrot.slane %v4851, 4
    %v4853 = vadd.f32 %v4851, %v4852
    %v4854 = vrot.slane %v4853, 2
    %v4855 = vadd.f32 %v4853, %v4854
    %v4856 = vrot.slane %v4855, 1
    %v4857 = vadd.f32 %v4855, %v4856
    %v4858 = vsel %vm141, %v4850, 0.0
    %v4859 = vrot.slane %v4858, 4
    %v4860 = vadd.f32 %v4858, %v4859
    %v4861 = vrot.slane %v4860, 2
    %v4862 = vadd.f32 %v4860, %v4861
    %v4863 = vrot.slane %v4862, 1
    %v4864 = vadd.f32 %v4862, %v4863
    %v4867 = vsel %vm367, %v4864, %v4857
    %v4868 = vsel %vm141, %v4867, 0
    %4870 = vmatprep.subr.mxu0 %v87
    %4871 = vmatpush1.msra.mxu0 %v86
    %4872 = vmatprep.subr.mxu0 %v89
    %4873 = vmatpush1.msra.mxu0 %v88
    %4874 = vmatprep.subr.mxu0 %v91
    %4875 = vmatpush1.msra.mxu0 %v90
    %4876 = vmatprep.subr.mxu0 %v93
    %4877 = vmatpush1.msra.mxu0 %v92
    %4878 = vmatprep.subr.mxu0 %v95
    %4879 = vmatpush1.msra.mxu0 %v94
    %4880 = vmatprep.subr.mxu0 %v97
    %4881 = vmatpush1.msra.mxu0 %v96
    %4882 = vmatprep.subr.mxu0 %v99
    %4883 = vmatpush1.msra.mxu0 %v98
    %4884 = vmatprep.subr.mxu0 %v101
    %4885 = vmatpush1.msra.mxu0 %v100
    %4886 = vmatprep.subr.mxu0 0.0
    %4887 = vmatpush1.msra.mxu0 0.0
    %4888 = vmatprep.subr.mxu0 0.0
    %4889 = vmatpush1.msra.mxu0 0.0
    %4890 = vmatprep.subr.mxu0 0.0
    %4891 = vmatpush1.msra.mxu0 0.0
    %4892 = vmatprep.subr.mxu0 0.0
    %4893 = vmatpush1.msra.mxu0 0.0
    %4894 = vmatprep.subr.mxu0 0.0
    %4895 = vmatpush1.msra.mxu0 0.0
    %4896 = vmatprep.subr.mxu0 0.0
    %4897 = vmatpush1.msra.mxu0 0.0
    %4898 = vmatprep.subr.mxu0 0.0
    %4899 = vmatpush1.msra.mxu0 0.0
    %4900 = vmatprep.subr.mxu0 0.0
    %4901 = vmatpush1.msra.mxu0 0.0
    %4902 = vmatprep.subr.mxu0 0.0
    %4903 = vmatpush1.msra.mxu0 0.0
    %4904 = vmatprep.subr.mxu0 0.0
    %4905 = vmatpush1.msra.mxu0 0.0
    %4906 = vmatprep.subr.mxu0 0.0
    %4907 = vmatpush1.msra.mxu0 0.0
    %4908 = vmatprep.subr.mxu0 0.0
    %4909 = vmatpush1.msra.mxu0 0.0
    %4910 = vmatprep.subr.mxu0 0.0
    %4911 = vmatpush1.msra.mxu0 0.0
    %4912 = vmatprep.subr.mxu0 0.0
    %4913 = vmatpush1.msra.mxu0 0.0
    %4914 = vmatprep.subr.mxu0 0.0
    %4915 = vmatpush1.msra.mxu0 0.0
    %4916 = vmatprep.subr.mxu0 0.0
    %4917 = vmatpush1.msra.mxu0 0.0
    %4918 = vmatprep.subr.mxu0 0.0
    %4919 = vmatpush1.msra.mxu0 0.0
    %4920 = vmatprep.subr.mxu0 0.0
    %4921 = vmatpush1.msra.mxu0 0.0
    %4922 = vmatprep.subr.mxu0 0.0
    %4923 = vmatpush1.msra.mxu0 0.0
    %4924 = vmatprep.subr.mxu0 0.0
    %4925 = vmatpush1.msra.mxu0 0.0
    %4926 = vmatprep.subr.mxu0 0.0
    %4927 = vmatpush1.msra.mxu0 0.0
    %4928 = vmatprep.subr.mxu0 0.0
    %4929 = vmatpush1.msra.mxu0 0.0
    %4930 = vmatprep.subr.mxu0 0.0
    %4931 = vmatpush1.msra.mxu0 0.0
    %4932 = vmatprep.subr.mxu0 0.0
    %4933 = vmatpush1.msra.mxu0 0.0
    %4934 = vmatprep.mubr.f32.mxu0 0.0
    %4935 = vmatmul.mubr.f32.gmra.mrb[0].mxu0 %v4868
    %v4936 = vpop.f32.mrb[0].mxu0
    %v4937 = vadd.f32 0.0, %v4936
    %v4938 = vpop.f32.mrb[0].mxu0
    %v4939 = vadd.f32 0.0, %v4938
    %4940 = vdwg.mxu0
    %v4942 = vsel %vm529, %v4642, 0
    %4944 = vmatprep.subr.mxu0 %v83
    %4945 = vmatpush1.msra.mxu0 %v82
    %4946 = vmatprep.subr.mxu0 %v85
    %4947 = vmatpush1.msra.mxu0 %v84
    %4948 = vmatprep.subr.mxu0 0.0
    %4949 = vmatpush1.msra.mxu0 0.0
    %4950 = vmatprep.subr.mxu0 0.0
    %4951 = vmatpush1.msra.mxu0 0.0
    %4952 = vmatprep.subr.mxu0 0.0
    %4953 = vmatpush1.msra.mxu0 0.0
    %4954 = vmatprep.subr.mxu0 0.0
    %4955 = vmatpush1.msra.mxu0 0.0
    %4956 = vmatprep.subr.mxu0 0.0
    %4957 = vmatpush1.msra.mxu0 0.0
    %4958 = vmatprep.subr.mxu0 0.0
    %4959 = vmatpush1.msra.mxu0 0.0
    %4960 = vmatprep.subr.mxu0 0.0
    %4961 = vmatpush1.msra.mxu0 0.0
    %4962 = vmatprep.subr.mxu0 0.0
    %4963 = vmatpush1.msra.mxu0 0.0
    %4964 = vmatprep.subr.mxu0 0.0
    %4965 = vmatpush1.msra.mxu0 0.0
    %4966 = vmatprep.subr.mxu0 0.0
    %4967 = vmatpush1.msra.mxu0 0.0
    %4968 = vmatprep.subr.mxu0 0.0
    %4969 = vmatpush1.msra.mxu0 0.0
    %4970 = vmatprep.subr.mxu0 0.0
    %4971 = vmatpush1.msra.mxu0 0.0
    %4972 = vmatprep.subr.mxu0 0.0
    %4973 = vmatpush1.msra.mxu0 0.0
    %4974 = vmatprep.subr.mxu0 0.0
    %4975 = vmatpush1.msra.mxu0 0.0
    %4976 = vmatprep.subr.mxu0 0.0
    %4977 = vmatpush1.msra.mxu0 0.0
    %4978 = vmatprep.subr.mxu0 0.0
    %4979 = vmatpush1.msra.mxu0 0.0
    %4980 = vmatprep.subr.mxu0 0.0
    %4981 = vmatpush1.msra.mxu0 0.0
    %4982 = vmatprep.subr.mxu0 0.0
    %4983 = vmatpush1.msra.mxu0 0.0
    %4984 = vmatprep.subr.mxu0 0.0
    %4985 = vmatpush1.msra.mxu0 0.0
    %4986 = vmatprep.subr.mxu0 0.0
    %4987 = vmatpush1.msra.mxu0 0.0
    %4988 = vmatprep.subr.mxu0 0.0
    %4989 = vmatpush1.msra.mxu0 0.0
    %4990 = vmatprep.subr.mxu0 0.0
    %4991 = vmatpush1.msra.mxu0 0.0
    %4992 = vmatprep.subr.mxu0 0.0
    %4993 = vmatpush1.msra.mxu0 0.0
    %4994 = vmatprep.subr.mxu0 0.0
    %4995 = vmatpush1.msra.mxu0 0.0
    %4996 = vmatprep.subr.mxu0 0.0
    %4997 = vmatpush1.msra.mxu0 0.0
    %4998 = vmatprep.subr.mxu0 0.0
    %4999 = vmatpush1.msra.mxu0 0.0
    %5000 = vmatprep.subr.mxu0 0.0
    %5001 = vmatpush1.msra.mxu0 0.0
    %5002 = vmatprep.subr.mxu0 0.0
    %5003 = vmatpush1.msra.mxu0 0.0
    %5004 = vmatprep.subr.mxu0 0.0
    %5005 = vmatpush1.msra.mxu0 0.0
    %5006 = vmatprep.subr.mxu0 0.0
    %5007 = vmatpush1.msra.mxu0 0.0
    %5008 = vmatprep.mubr.f32.mxu0 0.0
    %5009 = vmatmul.mubr.f32.gmra.mrb[0].mxu0 %v4942
    %v5010 = vpop.f32.mrb[0].mxu0
    %v5011 = vadd.f32 %v4937, %v5010
    %v5012 = vpop.f32.mrb[0].mxu0
    %v5013 = vadd.f32 %v4939, %v5012
    %5014 = vdwg.mxu0
    %5015 = vmatprep.subr.mxu0 %v103
    %5016 = vmatpush1.msra.mxu0 %v102
    %5017 = vmatprep.subr.mxu0 %v105
    %5018 = vmatpush1.msra.mxu0 %v104
    %5019 = vmatprep.subr.mxu0 %v107
    %5020 = vmatpush1.msra.mxu0 %v106
    %5021 = vmatprep.subr.mxu0 %v109
    %5022 = vmatpush1.msra.mxu0 %v108
    %5023 = vmatprep.subr.mxu0 %v111
    %5024 = vmatpush1.msra.mxu0 %v110
    %5025 = vmatprep.subr.mxu0 %v113
    %5026 = vmatpush1.msra.mxu0 %v112
    %5027 = vmatprep.subr.mxu0 %v115
    %5028 = vmatpush1.msra.mxu0 %v114
    %5029 = vmatprep.subr.mxu0 %v117
    %5030 = vmatpush1.msra.mxu0 %v116
    %5031 = vmatprep.subr.mxu0 0.0
    %5032 = vmatpush1.msra.mxu0 0.0
    %5033 = vmatprep.subr.mxu0 0.0
    %5034 = vmatpush1.msra.mxu0 0.0
    %5035 = vmatprep.subr.mxu0 0.0
    %5036 = vmatpush1.msra.mxu0 0.0
    %5037 = vmatprep.subr.mxu0 0.0
    %5038 = vmatpush1.msra.mxu0 0.0
    %5039 = vmatprep.subr.mxu0 0.0
    %5040 = vmatpush1.msra.mxu0 0.0
    %5041 = vmatprep.subr.mxu0 0.0
    %5042 = vmatpush1.msra.mxu0 0.0
    %5043 = vmatprep.subr.mxu0 0.0
    %5044 = vmatpush1.msra.mxu0 0.0
    %5045 = vmatprep.subr.mxu0 0.0
    %5046 = vmatpush1.msra.mxu0 0.0
    %5047 = vmatprep.subr.mxu0 0.0
    %5048 = vmatpush1.msra.mxu0 0.0
    %5049 = vmatprep.subr.mxu0 0.0
    %5050 = vmatpush1.msra.mxu0 0.0
    %5051 = vmatprep.subr.mxu0 0.0
    %5052 = vmatpush1.msra.mxu0 0.0
    %5053 = vmatprep.subr.mxu0 0.0
    %5054 = vmatpush1.msra.mxu0 0.0
    %5055 = vmatprep.subr.mxu0 0.0
    %5056 = vmatpush1.msra.mxu0 0.0
    %5057 = vmatprep.subr.mxu0 0.0
    %5058 = vmatpush1.msra.mxu0 0.0
    %5059 = vmatprep.subr.mxu0 0.0
    %5060 = vmatpush1.msra.mxu0 0.0
    %5061 = vmatprep.subr.mxu0 0.0
    %5062 = vmatpush1.msra.mxu0 0.0
    %5063 = vmatprep.subr.mxu0 0.0
    %5064 = vmatpush1.msra.mxu0 0.0
    %5065 = vmatprep.subr.mxu0 0.0
    %5066 = vmatpush1.msra.mxu0 0.0
    %5067 = vmatprep.subr.mxu0 0.0
    %5068 = vmatpush1.msra.mxu0 0.0
    %5069 = vmatprep.subr.mxu0 0.0
    %5070 = vmatpush1.msra.mxu0 0.0
    %5071 = vmatprep.subr.mxu0 0.0
    %5072 = vmatpush1.msra.mxu0 0.0
    %5073 = vmatprep.subr.mxu0 0.0
    %5074 = vmatpush1.msra.mxu0 0.0
    %5075 = vmatprep.subr.mxu0 0.0
    %5076 = vmatpush1.msra.mxu0 0.0
    %5077 = vmatprep.subr.mxu0 0.0
    %5078 = vmatpush1.msra.mxu0 0.0
    %5079 = vmatprep.mubr.f32.mxu0 0.0
    %5080 = vmatmul.mubr.f32.gmra.mrb[0].mxu0 %v4654
    %v5081 = vpop.f32.mrb[0].mxu0
    %v5082 = vadd.f32 0.0, %v5081
    %v5083 = vpop.f32.mrb[0].mxu0
    %v5084 = vadd.f32 0.0, %v5083
    %5085 = vdwg.mxu0
    %v5086 = vadd.f32 %v5011, %v5082
    %v5087 = vxor.u32 %v5086, 2147483648
    %v5088 = vmul.f32 %v5087, 1.442695
    %v5089 = vpow.pop %v5088
    %v5090 = vadd.f32 %v5089, 1.0
    %v5091 = vrcp.pop %v5090
    %v5092 = vmul.f32 1.0, %v5091
    %v5093 = vmul.f32 %v5092, %v5084
    %v5094 = vadd.f32 %v5013, %v5093
    %v5095 = vtanh.pop %v5094
    %v5096 = vsub.f32 1.0, %v5092
    %5098 = vrot.lane.b32.xlu0 %v5095, 64
    %v5099 = vpop.permute.xlu0 %5098
    %v5101 = vmul.f32 %v5096, %v5099
    %5102 = vrot.lane.b32.xlu0 %v4644, 64
    %v5103 = vpop.permute.xlu0 %5102
    %v5105 = vmul.f32 %v5092, %v5103
    %v5106 = vadd.f32 %v5101, %v5105
    %5107 = vmatprep.subr.mxu0 0.0
    %5108 = vmatpush1.msra.mxu0 %v126
    %5109 = vmatprep.subr.mxu0 0.0
    %5110 = vmatpush1.msra.mxu0 %v127
    %5111 = vmatprep.subr.mxu0 0.0
    %5112 = vmatpush1.msra.mxu0 %v128
    %5113 = vmatprep.subr.mxu0 0.0
    %5114 = vmatpush1.msra.mxu0 %v129
    %5115 = vmatprep.subr.mxu0 0.0
    %5116 = vmatpush1.msra.mxu0 %v130
    %5117 = vmatprep.subr.mxu0 0.0
    %5118 = vmatpush1.msra.mxu0 %v131
    %5119 = vmatprep.subr.mxu0 0.0
    %5120 = vmatpush1.msra.mxu0 %v132
    %5121 = vmatprep.subr.mxu0 0.0
    %5122 = vmatpush1.msra.mxu0 %v133
    %5123 = vmatprep.subr.mxu0 0.0
    %5124 = vmatpush1.msra.mxu0 0.0
    %5125 = vmatprep.subr.mxu0 0.0
    %5126 = vmatpush1.msra.mxu0 0.0
    %5127 = vmatprep.subr.mxu0 0.0
    %5128 = vmatpush1.msra.mxu0 0.0
    %5129 = vmatprep.subr.mxu0 0.0
    %5130 = vmatpush1.msra.mxu0 0.0
    %5131 = vmatprep.subr.mxu0 0.0
    %5132 = vmatpush1.msra.mxu0 0.0
    %5133 = vmatprep.subr.mxu0 0.0
    %5134 = vmatpush1.msra.mxu0 0.0
    %5135 = vmatprep.subr.mxu0 0.0
    %5136 = vmatpush1.msra.mxu0 0.0
    %5137 = vmatprep.subr.mxu0 0.0
    %5138 = vmatpush1.msra.mxu0 0.0
    %5139 = vmatprep.subr.mxu0 0.0
    %5140 = vmatpush1.msra.mxu0 0.0
    %5141 = vmatprep.subr.mxu0 0.0
    %5142 = vmatpush1.msra.mxu0 0.0
    %5143 = vmatprep.subr.mxu0 0.0
    %5144 = vmatpush1.msra.mxu0 0.0
    %5145 = vmatprep.subr.mxu0 0.0
    %5146 = vmatpush1.msra.mxu0 0.0
    %5147 = vmatprep.subr.mxu0 0.0
    %5148 = vmatpush1.msra.mxu0 0.0
    %5149 = vmatprep.subr.mxu0 0.0
    %5150 = vmatpush1.msra.mxu0 0.0
    %5151 = vmatprep.subr.mxu0 0.0
    %5152 = vmatpush1.msra.mxu0 0.0
    %5153 = vmatprep.subr.mxu0 0.0
    %5154 = vmatpush1.msra.mxu0 0.0
    %5155 = vmatprep.subr.mxu0 0.0
    %5156 = vmatpush1.msra.mxu0 0.0
    %5157 = vmatprep.subr.mxu0 0.0
    %5158 = vmatpush1.msra.mxu0 0.0
    %5159 = vmatprep.subr.mxu0 0.0
    %5160 = vmatpush1.msra.mxu0 0.0
    %5161 = vmatprep.subr.mxu0 0.0
    %5162 = vmatpush1.msra.mxu0 0.0
    %5163 = vmatprep.subr.mxu0 0.0
    %5164 = vmatpush1.msra.mxu0 0.0
    %5165 = vmatprep.subr.mxu0 0.0
    %5166 = vmatpush1.msra.mxu0 0.0
    %5167 = vmatprep.subr.mxu0 0.0
    %5168 = vmatpush1.msra.mxu0 0.0
    %5169 = vmatprep.subr.mxu0 0.0
    %5170 = vmatpush1.msra.mxu0 0.0
    %5171 = vmatprep.mubr.f32.mxu0 0.0
    %5172 = vmatmul.mubr.f32.gmra.mrb[0].mxu0 %v4868
    %v5173 = vpop.f32.mrb[0].mxu0
    %v5174 = vadd.f32 0.0, %v5173
    %v5175 = vpop.f32.mrb[0].mxu0
    %5176 = vdwg.mxu0
    %5178 = vrot.lane.b32.xlu0 %v5106, 64
    %v5179 = vpop.permute.xlu0 %5178
    %v5180 = vsel %vm141, %v5179, 0
    %5182 = vmatprep.subr.mxu0 0.0
    %5183 = vmatpush1.msra.mxu0 %v118
    %5184 = vmatprep.subr.mxu0 0.0
    %5185 = vmatpush1.msra.mxu0 %v119
    %5186 = vmatprep.subr.mxu0 0.0
    %5187 = vmatpush1.msra.mxu0 %v120
    %5188 = vmatprep.subr.mxu0 0.0
    %5189 = vmatpush1.msra.mxu0 %v121
    %5190 = vmatprep.subr.mxu0 0.0
    %5191 = vmatpush1.msra.mxu0 %v122
    %5192 = vmatprep.subr.mxu0 0.0
    %5193 = vmatpush1.msra.mxu0 %v123
    %5194 = vmatprep.subr.mxu0 0.0
    %5195 = vmatpush1.msra.mxu0 %v124
    %5196 = vmatprep.subr.mxu0 0.0
    %5197 = vmatpush1.msra.mxu0 %v125
    %5198 = vmatprep.subr.mxu0 0.0
    %5199 = vmatpush1.msra.mxu0 0.0
    %5200 = vmatprep.subr.mxu0 0.0
    %5201 = vmatpush1.msra.mxu0 0.0
    %5202 = vmatprep.subr.mxu0 0.0
    %5203 = vmatpush1.msra.mxu0 0.0
    %5204 = vmatprep.subr.mxu0 0.0
    %5205 = vmatpush1.msra.mxu0 0.0
    %5206 = vmatprep.subr.mxu0 0.0
    %5207 = vmatpush1.msra.mxu0 0.0
    %5208 = vmatprep.subr.mxu0 0.0
    %5209 = vmatpush1.msra.mxu0 0.0
    %5210 = vmatprep.subr.mxu0 0.0
    %5211 = vmatpush1.msra.mxu0 0.0
    %5212 = vmatprep.subr.mxu0 0.0
    %5213 = vmatpush1.msra.mxu0 0.0
    %5214 = vmatprep.subr.mxu0 0.0
    %5215 = vmatpush1.msra.mxu0 0.0
    %5216 = vmatprep.subr.mxu0 0.0
    %5217 = vmatpush1.msra.mxu0 0.0
    %5218 = vmatprep.subr.mxu0 0.0
    %5219 = vmatpush1.msra.mxu0 0.0
    %5220 = vmatprep.subr.mxu0 0.0
    %5221 = vmatpush1.msra.mxu0 0.0
    %5222 = vmatprep.subr.mxu0 0.0
    %5223 = vmatpush1.msra.mxu0 0.0
    %5224 = vmatprep.subr.mxu0 0.0
    %5225 = vmatpush1.msra.mxu0 0.0
    %5226 = vmatprep.subr.mxu0 0.0
    %5227 = vmatpush1.msra.mxu0 0.0
    %5228 = vmatprep.subr.mxu0 0.0
    %5229 = vmatpush1.msra.mxu0 0.0
    %5230 = vmatprep.subr.mxu0 0.0
    %5231 = vmatpush1.msra.mxu0 0.0
    %5232 = vmatprep.subr.mxu0 0.0
    %5233 = vmatpush1.msra.mxu0 0.0
    %5234 = vmatprep.subr.mxu0 0.0
    %5235 = vmatpush1.msra.mxu0 0.0
    %5236 = vmatprep.subr.mxu0 0.0
    %5237 = vmatpush1.msra.mxu0 0.0
    %5238 = vmatprep.subr.mxu0 0.0
    %5239 = vmatpush1.msra.mxu0 0.0
    %5240 = vmatprep.subr.mxu0 0.0
    %5241 = vmatpush1.msra.mxu0 0.0
    %5242 = vmatprep.subr.mxu0 0.0
    %5243 = vmatpush1.msra.mxu0 0.0
    %5244 = vmatprep.subr.mxu0 0.0
    %5245 = vmatpush1.msra.mxu0 0.0
    %5246 = vmatprep.mubr.f32.mxu0 0.0
    %5247 = vmatmul.mubr.f32.gmra.mrb[0].mxu0 %v5180
    %v5248 = vpop.f32.mrb[0].mxu0
    %v5249 = vadd.f32 %v5174, %v5248
    %v5250 = vpop.f32.mrb[0].mxu0
    %5251 = vdwg.mxu0
    %v5252 = vadd.f32 %v5249, %v845
    %v5253 = vsel %vm848, %v5252, -inf
    %5254 = vmax.xlane.f32.xlu0 %v5253
    %v5255 = vpop.xlane.xlu0 %5254
    %v5256 = vsub.f32 %v5252, %v5255
    %v5257 = vmul.f32 %v5256, 1.442695
    %v5258 = vpow.pop %v5257
    %v5259 = vsel %vm848, %v5258, 0.0
    %5260 = vadd.xlane.f32.xlu0 %v5259
    %v5261 = vpop.xlane.xlu0 %5260
    %v5262 = vlog2.pop %v5261
    %v5263 = vmul.f32 %v5262, 0.6931472
    %v5264 = vsub.f32 %v5256, %v5263
    %v5265 = vsel %vm4652, 1, 0
    %vm5266 = vcmp.eq.s32.totalorder %v5265, 1
    %v5267 = vsel %vm5266, 0.0, %v5264
    %s5268 = scalar_lea.vmem %s13, 12
    %5269 = vst.msk [vmem:[%s5268] sm:$0x3] %vm848, %v5267
    %v5270 = vsel %vm848, %v5264, -inf
    %5271 = vmax.xlane.f32.xlu0 %v5270
    %v5272 = vpop.xlane.xlu0 %5271
    %vm5273 = vcmp.eq.f32.partialorder %v5264, %v5272
    %v5274 = vsel %vm5273, %v224, 16
    %v5275 = vsel %vm848, %v5274, 2147483647
    %v5276 = vand.u32 %v5275, 65535
    %v5277 = vshra.s32 %v5275, 16
    %v5278 = vcvt.s32.f32 %v5276
    %v5279 = vcvt.s32.f32 %v5277
    %5280 = vmin.xlane.f32.xlu0 %v5279
    %v5281 = vpop.xlane.xlu0 %5280
    %vm5282 = vcmp.eq.f32.partialorder %v5279, %v5281
    %v5283 = vsel %vm5282, %v5278, inf
    %5284 = vmin.xlane.f32.xlu0 %v5283
    %v5285 = vpop.xlane.xlu0 %5284
    %v5286 = vcvt.f32.s32 %v5285
    %v5287 = vcvt.f32.s32 %v5281
    %v5288 = vshll.u32 %v5287, 16
    %v5289 = vadd.s32 %v5288, %v5286
    %vm5290 = vcmp.eq.s32.totalorder %v5289, 2
    %vm5291 = vcmp.eq.s32.totalorder %v224, %v5289
    %v5292 = vsel %vm5291, 1, 0
    %v5293 = vcvt.s32.f32 %v5292
    %v5295 = vsel %vm529, %v5293, 0
    %5297 = vmatprep.subr.mxu0 0.0
    %5298 = vmatpush1.msra.mxu0 %v62
    %5299 = vmatprep.subr.mxu0 0.0
    %5300 = vmatpush1.msra.mxu0 %v63
    %5301 = vmatprep.subr.mxu0 0.0
    %5302 = vmatpush1.msra.mxu0 0.0
    %5303 = vmatprep.subr.mxu0 0.0
    %5304 = vmatpush1.msra.mxu0 0.0
    %5305 = vmatprep.subr.mxu0 0.0
    %5306 = vmatpush1.msra.mxu0 0.0
    %5307 = vmatprep.subr.mxu0 0.0
    %5308 = vmatpush1.msra.mxu0 0.0
    %5309 = vmatprep.subr.mxu0 0.0
    %5310 = vmatpush1.msra.mxu0 0.0
    %5311 = vmatprep.subr.mxu0 0.0
    %5312 = vmatpush1.msra.mxu0 0.0
    %5313 = vmatprep.subr.mxu0 0.0
    %5314 = vmatpush1.msra.mxu0 0.0
    %5315 = vmatprep.subr.mxu0 0.0
    %5316 = vmatpush1.msra.mxu0 0.0
    %5317 = vmatprep.subr.mxu0 0.0
    %5318 = vmatpush1.msra.mxu0 0.0
    %5319 = vmatprep.subr.mxu0 0.0
    %5320 = vmatpush1.msra.mxu0 0.0
    %5321 = vmatprep.subr.mxu0 0.0
    %5322 = vmatpush1.msra.mxu0 0.0
    %5323 = vmatprep.subr.mxu0 0.0
    %5324 = vmatpush1.msra.mxu0 0.0
    %5325 = vmatprep.subr.mxu0 0.0
    %5326 = vmatpush1.msra.mxu0 0.0
    %5327 = vmatprep.subr.mxu0 0.0
    %5328 = vmatpush1.msra.mxu0 0.0
    %5329 = vmatprep.subr.mxu0 0.0
    %5330 = vmatpush1.msra.mxu0 0.0
    %5331 = vmatprep.subr.mxu0 0.0
    %5332 = vmatpush1.msra.mxu0 0.0
    %5333 = vmatprep.subr.mxu0 0.0
    %5334 = vmatpush1.msra.mxu0 0.0
    %5335 = vmatprep.subr.mxu0 0.0
    %5336 = vmatpush1.msra.mxu0 0.0
    %5337 = vmatprep.subr.mxu0 0.0
    %5338 = vmatpush1.msra.mxu0 0.0
    %5339 = vmatprep.subr.mxu0 0.0
    %5340 = vmatpush1.msra.mxu0 0.0
    %5341 = vmatprep.subr.mxu0 0.0
    %5342 = vmatpush1.msra.mxu0 0.0
    %5343 = vmatprep.subr.mxu0 0.0
    %5344 = vmatpush1.msra.mxu0 0.0
    %5345 = vmatprep.subr.mxu0 0.0
    %5346 = vmatpush1.msra.mxu0 0.0
    %5347 = vmatprep.subr.mxu0 0.0
    %5348 = vmatpush1.msra.mxu0 0.0
    %5349 = vmatprep.subr.mxu0 0.0
    %5350 = vmatpush1.msra.mxu0 0.0
    %5351 = vmatprep.subr.mxu0 0.0
    %5352 = vmatpush1.msra.mxu0 0.0
    %5353 = vmatprep.subr.mxu0 0.0
    %5354 = vmatpush1.msra.mxu0 0.0
    %5355 = vmatprep.subr.mxu0 0.0
    %5356 = vmatpush1.msra.mxu0 0.0
    %5357 = vmatprep.subr.mxu0 0.0
    %5358 = vmatpush1.msra.mxu0 0.0
    %5359 = vmatprep.subr.mxu0 0.0
    %5360 = vmatpush1.msra.mxu0 0.0
    %5361 = vmatprep.mubr.f32.mxu0 0.0
    %5362 = vmatmul.mubr.f32.gmra.mrb[0].mxu0 %v5295
    %v5363 = vpop.f32.mrb[0].mxu0
    %v5364 = vadd.f32 0.0, %v5363
    %v5365 = vpop.f32.mrb[0].mxu0
    %5366 = vdwg.mxu0
    %vm5367 = vmxor %vm4652, 1
    %v5368 = vsel %vm5367, 1, 0
    %vm5369 = vcmp.eq.s32.totalorder %v5368, 1
    %vm5370 = vmand %vm5290, %vm5369
    %v5371 = vsel %vm5370, 7, %v4637
    %v5372 = vsel %vm5290, 1, 0
    %v5373 = vcvt.s32.f32 %v5372
    %v5374 = vmax.f32 %v4641, %v5373
    %v5375 = vsel %vm5266, %v4641, %v5374
    %v5376 = vsel %vm5266, %v4642, %v5364
    %v5378 = vsel %vm5266, %v4644, %v5179
    %v5379 = vsel %vm974, %v5375, 0.0
    %v5380 = vrot.slane %v5379, 4
    %v5381 = vadd.f32 %v5379, %v5380
    %v5382 = vrot.slane %v5381, 2
    %v5383 = vadd.f32 %v5381, %v5382
    %v5384 = vrot.slane %v5383, 1
    %v5385 = vadd.f32 %v5383, %v5384
    %vm5386 = vcmp.ge.f32.partialorder %v5385, 2.0
    %v5388 = vsel %vm141, %v5378, 0
    %5390 = vmatprep.subr.mxu0 0.0
    %5391 = vmatpush1.msra.mxu0 %v64
    %5392 = vmatprep.subr.mxu0 0.0
    %5393 = vmatpush1.msra.mxu0 %v65
    %5394 = vmatprep.subr.mxu0 0.0
    %5395 = vmatpush1.msra.mxu0 %v66
    %5396 = vmatprep.subr.mxu0 0.0
    %5397 = vmatpush1.msra.mxu0 %v67
    %5398 = vmatprep.subr.mxu0 0.0
    %5399 = vmatpush1.msra.mxu0 %v68
    %5400 = vmatprep.subr.mxu0 0.0
    %5401 = vmatpush1.msra.mxu0 %v69
    %5402 = vmatprep.subr.mxu0 0.0
    %5403 = vmatpush1.msra.mxu0 %v70
    %5404 = vmatprep.subr.mxu0 0.0
    %5405 = vmatpush1.msra.mxu0 %v71
    %5406 = vmatprep.subr.mxu0 0.0
    %5407 = vmatpush1.msra.mxu0 0.0
    %5408 = vmatprep.subr.mxu0 0.0
    %5409 = vmatpush1.msra.mxu0 0.0
    %5410 = vmatprep.subr.mxu0 0.0
    %5411 = vmatpush1.msra.mxu0 0.0
    %5412 = vmatprep.subr.mxu0 0.0
    %5413 = vmatpush1.msra.mxu0 0.0
    %5414 = vmatprep.subr.mxu0 0.0
    %5415 = vmatpush1.msra.mxu0 0.0
    %5416 = vmatprep.subr.mxu0 0.0
    %5417 = vmatpush1.msra.mxu0 0.0
    %5418 = vmatprep.subr.mxu0 0.0
    %5419 = vmatpush1.msra.mxu0 0.0
    %5420 = vmatprep.subr.mxu0 0.0
    %5421 = vmatpush1.msra.mxu0 0.0
    %5422 = vmatprep.subr.mxu0 0.0
    %5423 = vmatpush1.msra.mxu0 0.0
    %5424 = vmatprep.subr.mxu0 0.0
    %5425 = vmatpush1.msra.mxu0 0.0
    %5426 = vmatprep.subr.mxu0 0.0
    %5427 = vmatpush1.msra.mxu0 0.0
    %5428 = vmatprep.subr.mxu0 0.0
    %5429 = vmatpush1.msra.mxu0 0.0
    %5430 = vmatprep.subr.mxu0 0.0
    %5431 = vmatpush1.msra.mxu0 0.0
    %5432 = vmatprep.subr.mxu0 0.0
    %5433 = vmatpush1.msra.mxu0 0.0
    %5434 = vmatprep.subr.mxu0 0.0
    %5435 = vmatpush1.msra.mxu0 0.0
    %5436 = vmatprep.subr.mxu0 0.0
    %5437 = vmatpush1.msra.mxu0 0.0
    %5438 = vmatprep.subr.mxu0 0.0
    %5439 = vmatpush1.msra.mxu0 0.0
    %5440 = vmatprep.subr.mxu0 0.0
    %5441 = vmatpush1.msra.mxu0 0.0
    %5442 = vmatprep.subr.mxu0 0.0
    %5443 = vmatpush1.msra.mxu0 0.0
    %5444 = vmatprep.subr.mxu0 0.0
    %5445 = vmatpush1.msra.mxu0 0.0
    %5446 = vmatprep.subr.mxu0 0.0
    %5447 = vmatpush1.msra.mxu0 0.0
    %5448 = vmatprep.subr.mxu0 0.0
    %5449 = vmatpush1.msra.mxu0 0.0
    %5450 = vmatprep.subr.mxu0 0.0
    %5451 = vmatpush1.msra.mxu0 0.0
    %5452 = vmatprep.subr.mxu0 0.0
    %5453 = vmatpush1.msra.mxu0 0.0
    %5454 = vmatprep.mubr.f32.mxu0 0.0
    %5455 = vmatmul.mubr.f32.gmra.mrb[0].mxu0 %v5388
    %v5456 = vpop.f32.mrb[0].mxu0
    %v5457 = vadd.f32 0.0, %v5456
    %v5458 = vpop.f32.mrb[0].mxu0
    %5459 = vdwg.mxu0
    %v5462 = vunpack.c.l.s4 1966171168
    %v5463 = vunpack.c.0.s8 %v5462
    %v5464 = vlaneseq
    %v5465 = vshrl.u32 %v5464, 7
    %v5466 = vsub.s32 %v5463, %v5465
    %v5467 = vrot.slane %v5457, %v5466
    %v5468 = vcombine.high %v5467, %v5467
    %v5470 = vunpack.c.l.s4 1966171168
    %v5471 = vunpack.c.0.s8 %v5470
    %v5472 = vlaneseq
    %v5473 = vshrl.u32 %v5472, 7
    %v5474 = vsub.s32 %v5471, %v5473
    %v5475 = vrot.slane %v5467, %v5474
    %v5477 = vunpack.c.l.s4 1966171168
    %v5478 = vunpack.c.0.s8 %v5477
    %v5479 = vlaneseq
    %v5480 = vshrl.u32 %v5479, 7
    %v5481 = vsub.s32 %v5478, %v5480
    %v5482 = vrot.slane %v5468, %v5481
    %v5483 = vlaneseq
    %v5484 = vshrl.u32 %v5483, 7
    %v5485 = vsub.s32 0, %v5484
    %v5486 = vrot.slane %v5475, %v5485
    %v5487 = vlaneseq
    %v5488 = vshrl.u32 %v5487, 7
    %v5489 = vsub.s32 0, %v5488
    %v5490 = vrot.slane %v5482, %v5489
    %v5493 = vadd.f32 %v215, %v5486
    %v5494 = vadd.f32 %v220, %v5490
    %v5495 = vtanh.pop %v5493
    %v5496 = vtanh.pop %v5494
    %v5497 = vmul.f32 %v5495, %v346
    %v5498 = vmul.f32 %v5496, %v346
    %v5499 = vsel %vm350, %v5497, 0.0
    %5500 = vadd.xlane.f32.xlu0 %v5499
    %v5501 = vpop.xlane.xlu0 %5500
    %v5502 = vsel %vm350, %v5498, 0.0
    %5503 = vadd.xlane.f32.xlu0 %v5502
    %v5504 = vpop.xlane.xlu0 %5503
    %v5507 = vlaneseq
    %v5508 = vshrl.u32 %v5507, 7
    %v5509 = vsub.s32 %v224, %v5508
    %v5510 = vrot.slane %v5501, %v5509
    %v5511 = vlaneseq
    %v5512 = vshrl.u32 %v5511, 7
    %v5513 = vsub.s32 %v224, %v5512
    %v5514 = vrot.slane %v5504, %v5513
    %v5515 = vsel %vm367, %v5514, %v5510
    %v5517 = vsel %vm370, %v5515, -inf
    %5518 = vmax.xlane.f32.xlu0 %v5517
    %v5519 = vpop.xlane.xlu0 %5518
    %v5521 = vlaneseq
    %v5522 = vshrl.u32 %v5521, 7
    %v5523 = vsub.s32 0, %v5522
    %v5524 = vrot.slane %v5519, %v5523
    %v5525 = vlaneseq
    %v5526 = vshrl.u32 %v5525, 7
    %v5527 = vsub.s32 1, %v5526
    %v5528 = vrot.slane %v5519, %v5527
    %v5531 = vsub.f32 %v5501, %v5524
    %v5532 = vsub.f32 %v5504, %v5528
    %v5533 = vmul.f32 %v5531, 1.442695
    %v5534 = vpow.pop %v5533
    %v5535 = vmul.f32 %v5532, 1.442695
    %v5536 = vpow.pop %v5535
    %5539 = vset.pattern.permute.xlu0 0
    %5540 = vperm.xlu0 %5539, %v5534
    %v5541 = vpop.permute.xlu0 %5540
    %5542 = vset.pattern.permute.xlu0 0
    %5543 = vperm.xlu0 %5542, %v5536
    %v5544 = vpop.permute.xlu0 %5543
    %v5545 = vlaneseq
    %v5546 = vshrl.u32 %v5545, 7
    %v5547 = vsub.s32 %v224, %v5546
    %v5548 = vrot.slane %v5541, %v5547
    %v5549 = vlaneseq
    %v5550 = vshrl.u32 %v5549, 7
    %v5551 = vsub.s32 %v224, %v5550
    %v5552 = vrot.slane %v5544, %v5551
    %v5553 = vsel %vm367, %v5552, %v5548
    %v5555 = vsel %vm370, %v5553, 0.0
    %5556 = vadd.xlane.f32.xlu0 %v5555
    %v5557 = vpop.xlane.xlu0 %5556
    %v5559 = vlaneseq
    %v5560 = vshrl.u32 %v5559, 7
    %v5561 = vsub.s32 0, %v5560
    %v5562 = vrot.slane %v5557, %v5561
    %v5563 = vlaneseq
    %v5564 = vshrl.u32 %v5563, 7
    %v5565 = vsub.s32 1, %v5564
    %v5566 = vrot.slane %v5557, %v5565
    %v5569 = vrcp.pop %v5562
    %v5570 = vmul.f32 %v5534, %v5569
    %v5571 = vrcp.pop %v5566
    %v5572 = vmul.f32 %v5536, %v5571
    %5574 = vset.pattern.permute.xlu0 0
    %5575 = vperm.xlu0 %5574, %v5570
    %v5576 = vpop.permute.xlu0 %5575
    %5579 = vset.pattern.permute.xlu0 0
    %5580 = vperm.xlu0 %5579, %v5572
    %v5581 = vpop.permute.xlu0 %5580
    %v5583 = vmul.f32 %v5576, %v60
    %v5584 = vmul.f32 %v5581, %v61
    %v5585 = vsel %vm141, %v5583, 0.0
    %v5586 = vrot.slane %v5585, 4
    %v5587 = vadd.f32 %v5585, %v5586
    %v5588 = vrot.slane %v5587, 2
    %v5589 = vadd.f32 %v5587, %v5588
    %v5590 = vrot.slane %v5589, 1
    %v5591 = vadd.f32 %v5589, %v5590
    %v5592 = vsel %vm141, %v5584, 0.0
    %v5593 = vrot.slane %v5592, 4
    %v5594 = vadd.f32 %v5592, %v5593
    %v5595 = vrot.slane %v5594, 2
    %v5596 = vadd.f32 %v5594, %v5595
    %v5597 = vrot.slane %v5596, 1
    %v5598 = vadd.f32 %v5596, %v5597
    %v5601 = vsel %vm367, %v5598, %v5591
    %v5602 = vsel %vm141, %v5601, 0
    %5604 = vmatprep.subr.mxu0 %v87
    %5605 = vmatpush1.msra.mxu0 %v86
    %5606 = vmatprep.subr.mxu0 %v89
    %5607 = vmatpush1.msra.mxu0 %v88
    %5608 = vmatprep.subr.mxu0 %v91
    %5609 = vmatpush1.msra.mxu0 %v90
    %5610 = vmatprep.subr.mxu0 %v93
    %5611 = vmatpush1.msra.mxu0 %v92
    %5612 = vmatprep.subr.mxu0 %v95
    %5613 = vmatpush1.msra.mxu0 %v94
    %5614 = vmatprep.subr.mxu0 %v97
    %5615 = vmatpush1.msra.mxu0 %v96
    %5616 = vmatprep.subr.mxu0 %v99
    %5617 = vmatpush1.msra.mxu0 %v98
    %5618 = vmatprep.subr.mxu0 %v101
    %5619 = vmatpush1.msra.mxu0 %v100
    %5620 = vmatprep.subr.mxu0 0.0
    %5621 = vmatpush1.msra.mxu0 0.0
    %5622 = vmatprep.subr.mxu0 0.0
    %5623 = vmatpush1.msra.mxu0 0.0
    %5624 = vmatprep.subr.mxu0 0.0
    %5625 = vmatpush1.msra.mxu0 0.0
    %5626 = vmatprep.subr.mxu0 0.0
    %5627 = vmatpush1.msra.mxu0 0.0
    %5628 = vmatprep.subr.mxu0 0.0
    %5629 = vmatpush1.msra.mxu0 0.0
    %5630 = vmatprep.subr.mxu0 0.0
    %5631 = vmatpush1.msra.mxu0 0.0
    %5632 = vmatprep.subr.mxu0 0.0
    %5633 = vmatpush1.msra.mxu0 0.0
    %5634 = vmatprep.subr.mxu0 0.0
    %5635 = vmatpush1.msra.mxu0 0.0
    %5636 = vmatprep.subr.mxu0 0.0
    %5637 = vmatpush1.msra.mxu0 0.0
    %5638 = vmatprep.subr.mxu0 0.0
    %5639 = vmatpush1.msra.mxu0 0.0
    %5640 = vmatprep.subr.mxu0 0.0
    %5641 = vmatpush1.msra.mxu0 0.0
    %5642 = vmatprep.subr.mxu0 0.0
    %5643 = vmatpush1.msra.mxu0 0.0
    %5644 = vmatprep.subr.mxu0 0.0
    %5645 = vmatpush1.msra.mxu0 0.0
    %5646 = vmatprep.subr.mxu0 0.0
    %5647 = vmatpush1.msra.mxu0 0.0
    %5648 = vmatprep.subr.mxu0 0.0
    %5649 = vmatpush1.msra.mxu0 0.0
    %5650 = vmatprep.subr.mxu0 0.0
    %5651 = vmatpush1.msra.mxu0 0.0
    %5652 = vmatprep.subr.mxu0 0.0
    %5653 = vmatpush1.msra.mxu0 0.0
    %5654 = vmatprep.subr.mxu0 0.0
    %5655 = vmatpush1.msra.mxu0 0.0
    %5656 = vmatprep.subr.mxu0 0.0
    %5657 = vmatpush1.msra.mxu0 0.0
    %5658 = vmatprep.subr.mxu0 0.0
    %5659 = vmatpush1.msra.mxu0 0.0
    %5660 = vmatprep.subr.mxu0 0.0
    %5661 = vmatpush1.msra.mxu0 0.0
    %5662 = vmatprep.subr.mxu0 0.0
    %5663 = vmatpush1.msra.mxu0 0.0
    %5664 = vmatprep.subr.mxu0 0.0
    %5665 = vmatpush1.msra.mxu0 0.0
    %5666 = vmatprep.subr.mxu0 0.0
    %5667 = vmatpush1.msra.mxu0 0.0
    %5668 = vmatprep.mubr.f32.mxu0 0.0
    %5669 = vmatmul.mubr.f32.gmra.mrb[0].mxu0 %v5602
    %v5670 = vpop.f32.mrb[0].mxu0
    %v5671 = vadd.f32 0.0, %v5670
    %v5672 = vpop.f32.mrb[0].mxu0
    %v5673 = vadd.f32 0.0, %v5672
    %5674 = vdwg.mxu0
    %v5676 = vsel %vm529, %v5376, 0
    %5678 = vmatprep.subr.mxu0 %v83
    %5679 = vmatpush1.msra.mxu0 %v82
    %5680 = vmatprep.subr.mxu0 %v85
    %5681 = vmatpush1.msra.mxu0 %v84
    %5682 = vmatprep.subr.mxu0 0.0
    %5683 = vmatpush1.msra.mxu0 0.0
    %5684 = vmatprep.subr.mxu0 0.0
    %5685 = vmatpush1.msra.mxu0 0.0
    %5686 = vmatprep.subr.mxu0 0.0
    %5687 = vmatpush1.msra.mxu0 0.0
    %5688 = vmatprep.subr.mxu0 0.0
    %5689 = vmatpush1.msra.mxu0 0.0
    %5690 = vmatprep.subr.mxu0 0.0
    %5691 = vmatpush1.msra.mxu0 0.0
    %5692 = vmatprep.subr.mxu0 0.0
    %5693 = vmatpush1.msra.mxu0 0.0
    %5694 = vmatprep.subr.mxu0 0.0
    %5695 = vmatpush1.msra.mxu0 0.0
    %5696 = vmatprep.subr.mxu0 0.0
    %5697 = vmatpush1.msra.mxu0 0.0
    %5698 = vmatprep.subr.mxu0 0.0
    %5699 = vmatpush1.msra.mxu0 0.0
    %5700 = vmatprep.subr.mxu0 0.0
    %5701 = vmatpush1.msra.mxu0 0.0
    %5702 = vmatprep.subr.mxu0 0.0
    %5703 = vmatpush1.msra.mxu0 0.0
    %5704 = vmatprep.subr.mxu0 0.0
    %5705 = vmatpush1.msra.mxu0 0.0
    %5706 = vmatprep.subr.mxu0 0.0
    %5707 = vmatpush1.msra.mxu0 0.0
    %5708 = vmatprep.subr.mxu0 0.0
    %5709 = vmatpush1.msra.mxu0 0.0
    %5710 = vmatprep.subr.mxu0 0.0
    %5711 = vmatpush1.msra.mxu0 0.0
    %5712 = vmatprep.subr.mxu0 0.0
    %5713 = vmatpush1.msra.mxu0 0.0
    %5714 = vmatprep.subr.mxu0 0.0
    %5715 = vmatpush1.msra.mxu0 0.0
    %5716 = vmatprep.subr.mxu0 0.0
    %5717 = vmatpush1.msra.mxu0 0.0
    %5718 = vmatprep.subr.mxu0 0.0
    %5719 = vmatpush1.msra.mxu0 0.0
    %5720 = vmatprep.subr.mxu0 0.0
    %5721 = vmatpush1.msra.mxu0 0.0
    %5722 = vmatprep.subr.mxu0 0.0
    %5723 = vmatpush1.msra.mxu0 0.0
    %5724 = vmatprep.subr.mxu0 0.0
    %5725 = vmatpush1.msra.mxu0 0.0
    %5726 = vmatprep.subr.mxu0 0.0
    %5727 = vmatpush1.msra.mxu0 0.0
    %5728 = vmatprep.subr.mxu0 0.0
    %5729 = vmatpush1.msra.mxu0 0.0
    %5730 = vmatprep.subr.mxu0 0.0
    %5731 = vmatpush1.msra.mxu0 0.0
    %5732 = vmatprep.subr.mxu0 0.0
    %5733 = vmatpush1.msra.mxu0 0.0
    %5734 = vmatprep.subr.mxu0 0.0
    %5735 = vmatpush1.msra.mxu0 0.0
    %5736 = vmatprep.subr.mxu0 0.0
    %5737 = vmatpush1.msra.mxu0 0.0
    %5738 = vmatprep.subr.mxu0 0.0
    %5739 = vmatpush1.msra.mxu0 0.0
    %5740 = vmatprep.subr.mxu0 0.0
    %5741 = vmatpush1.msra.mxu0 0.0
    %5742 = vmatprep.mubr.f32.mxu0 0.0
    %5743 = vmatmul.mubr.f32.gmra.mrb[0].mxu0 %v5676
    %v5744 = vpop.f32.mrb[0].mxu0
    %v5745 = vadd.f32 %v5671, %v5744
    %v5746 = vpop.f32.mrb[0].mxu0
    %v5747 = vadd.f32 %v5673, %v5746
    %5748 = vdwg.mxu0
    %5749 = vmatprep.subr.mxu0 %v103
    %5750 = vmatpush1.msra.mxu0 %v102
    %5751 = vmatprep.subr.mxu0 %v105
    %5752 = vmatpush1.msra.mxu0 %v104
    %5753 = vmatprep.subr.mxu0 %v107
    %5754 = vmatpush1.msra.mxu0 %v106
    %5755 = vmatprep.subr.mxu0 %v109
    %5756 = vmatpush1.msra.mxu0 %v108
    %5757 = vmatprep.subr.mxu0 %v111
    %5758 = vmatpush1.msra.mxu0 %v110
    %5759 = vmatprep.subr.mxu0 %v113
    %5760 = vmatpush1.msra.mxu0 %v112
    %5761 = vmatprep.subr.mxu0 %v115
    %5762 = vmatpush1.msra.mxu0 %v114
    %5763 = vmatprep.subr.mxu0 %v117
    %5764 = vmatpush1.msra.mxu0 %v116
    %5765 = vmatprep.subr.mxu0 0.0
    %5766 = vmatpush1.msra.mxu0 0.0
    %5767 = vmatprep.subr.mxu0 0.0
    %5768 = vmatpush1.msra.mxu0 0.0
    %5769 = vmatprep.subr.mxu0 0.0
    %5770 = vmatpush1.msra.mxu0 0.0
    %5771 = vmatprep.subr.mxu0 0.0
    %5772 = vmatpush1.msra.mxu0 0.0
    %5773 = vmatprep.subr.mxu0 0.0
    %5774 = vmatpush1.msra.mxu0 0.0
    %5775 = vmatprep.subr.mxu0 0.0
    %5776 = vmatpush1.msra.mxu0 0.0
    %5777 = vmatprep.subr.mxu0 0.0
    %5778 = vmatpush1.msra.mxu0 0.0
    %5779 = vmatprep.subr.mxu0 0.0
    %5780 = vmatpush1.msra.mxu0 0.0
    %5781 = vmatprep.subr.mxu0 0.0
    %5782 = vmatpush1.msra.mxu0 0.0
    %5783 = vmatprep.subr.mxu0 0.0
    %5784 = vmatpush1.msra.mxu0 0.0
    %5785 = vmatprep.subr.mxu0 0.0
    %5786 = vmatpush1.msra.mxu0 0.0
    %5787 = vmatprep.subr.mxu0 0.0
    %5788 = vmatpush1.msra.mxu0 0.0
    %5789 = vmatprep.subr.mxu0 0.0
    %5790 = vmatpush1.msra.mxu0 0.0
    %5791 = vmatprep.subr.mxu0 0.0
    %5792 = vmatpush1.msra.mxu0 0.0
    %5793 = vmatprep.subr.mxu0 0.0
    %5794 = vmatpush1.msra.mxu0 0.0
    %5795 = vmatprep.subr.mxu0 0.0
    %5796 = vmatpush1.msra.mxu0 0.0
    %5797 = vmatprep.subr.mxu0 0.0
    %5798 = vmatpush1.msra.mxu0 0.0
    %5799 = vmatprep.subr.mxu0 0.0
    %5800 = vmatpush1.msra.mxu0 0.0
    %5801 = vmatprep.subr.mxu0 0.0
    %5802 = vmatpush1.msra.mxu0 0.0
    %5803 = vmatprep.subr.mxu0 0.0
    %5804 = vmatpush1.msra.mxu0 0.0
    %5805 = vmatprep.subr.mxu0 0.0
    %5806 = vmatpush1.msra.mxu0 0.0
    %5807 = vmatprep.subr.mxu0 0.0
    %5808 = vmatpush1.msra.mxu0 0.0
    %5809 = vmatprep.subr.mxu0 0.0
    %5810 = vmatpush1.msra.mxu0 0.0
    %5811 = vmatprep.subr.mxu0 0.0
    %5812 = vmatpush1.msra.mxu0 0.0
    %5813 = vmatprep.mubr.f32.mxu0 0.0
    %5814 = vmatmul.mubr.f32.gmra.mrb[0].mxu0 %v5388
    %v5815 = vpop.f32.mrb[0].mxu0
    %v5816 = vadd.f32 0.0, %v5815
    %v5817 = vpop.f32.mrb[0].mxu0
    %v5818 = vadd.f32 0.0, %v5817
    %5819 = vdwg.mxu0
    %v5820 = vadd.f32 %v5745, %v5816
    %v5821 = vxor.u32 %v5820, 2147483648
    %v5822 = vmul.f32 %v5821, 1.442695
    %v5823 = vpow.pop %v5822
    %v5824 = vadd.f32 %v5823, 1.0
    %v5825 = vrcp.pop %v5824
    %v5826 = vmul.f32 1.0, %v5825
    %v5827 = vmul.f32 %v5826, %v5818
    %v5828 = vadd.f32 %v5747, %v5827
    %v5829 = vtanh.pop %v5828
    %v5830 = vsub.f32 1.0, %v5826
    %5832 = vrot.lane.b32.xlu0 %v5829, 64
    %v5833 = vpop.permute.xlu0 %5832
    %v5835 = vmul.f32 %v5830, %v5833
    %5836 = vrot.lane.b32.xlu0 %v5378, 64
    %v5837 = vpop.permute.xlu0 %5836
    %v5839 = vmul.f32 %v5826, %v5837
    %v5840 = vadd.f32 %v5835, %v5839
    %5841 = vmatprep.subr.mxu0 0.0
    %5842 = vmatpush1.msra.mxu0 %v126
    %5843 = vmatprep.subr.mxu0 0.0
    %5844 = vmatpush1.msra.mxu0 %v127
    %5845 = vmatprep.subr.mxu0 0.0
    %5846 = vmatpush1.msra.mxu0 %v128
    %5847 = vmatprep.subr.mxu0 0.0
    %5848 = vmatpush1.msra.mxu0 %v129
    %5849 = vmatprep.subr.mxu0 0.0
    %5850 = vmatpush1.msra.mxu0 %v130
    %5851 = vmatprep.subr.mxu0 0.0
    %5852 = vmatpush1.msra.mxu0 %v131
    %5853 = vmatprep.subr.mxu0 0.0
    %5854 = vmatpush1.msra.mxu0 %v132
    %5855 = vmatprep.subr.mxu0 0.0
    %5856 = vmatpush1.msra.mxu0 %v133
    %5857 = vmatprep.subr.mxu0 0.0
    %5858 = vmatpush1.msra.mxu0 0.0
    %5859 = vmatprep.subr.mxu0 0.0
    %5860 = vmatpush1.msra.mxu0 0.0
    %5861 = vmatprep.subr.mxu0 0.0
    %5862 = vmatpush1.msra.mxu0 0.0
    %5863 = vmatprep.subr.mxu0 0.0
    %5864 = vmatpush1.msra.mxu0 0.0
    %5865 = vmatprep.subr.mxu0 0.0
    %5866 = vmatpush1.msra.mxu0 0.0
    %5867 = vmatprep.subr.mxu0 0.0
    %5868 = vmatpush1.msra.mxu0 0.0
    %5869 = vmatprep.subr.mxu0 0.0
    %5870 = vmatpush1.msra.mxu0 0.0
    %5871 = vmatprep.subr.mxu0 0.0
    %5872 = vmatpush1.msra.mxu0 0.0
    %5873 = vmatprep.subr.mxu0 0.0
    %5874 = vmatpush1.msra.mxu0 0.0
    %5875 = vmatprep.subr.mxu0 0.0
    %5876 = vmatpush1.msra.mxu0 0.0
    %5877 = vmatprep.subr.mxu0 0.0
    %5878 = vmatpush1.msra.mxu0 0.0
    %5879 = vmatprep.subr.mxu0 0.0
    %5880 = vmatpush1.msra.mxu0 0.0
    %5881 = vmatprep.subr.mxu0 0.0
    %5882 = vmatpush1.msra.mxu0 0.0
    %5883 = vmatprep.subr.mxu0 0.0
    %5884 = vmatpush1.msra.mxu0 0.0
    %5885 = vmatprep.subr.mxu0 0.0
    %5886 = vmatpush1.msra.mxu0 0.0
    %5887 = vmatprep.subr.mxu0 0.0
    %5888 = vmatpush1.msra.mxu0 0.0
    %5889 = vmatprep.subr.mxu0 0.0
    %5890 = vmatpush1.msra.mxu0 0.0
    %5891 = vmatprep.subr.mxu0 0.0
    %5892 = vmatpush1.msra.mxu0 0.0
    %5893 = vmatprep.subr.mxu0 0.0
    %5894 = vmatpush1.msra.mxu0 0.0
    %5895 = vmatprep.subr.mxu0 0.0
    %5896 = vmatpush1.msra.mxu0 0.0
    %5897 = vmatprep.subr.mxu0 0.0
    %5898 = vmatpush1.msra.mxu0 0.0
    %5899 = vmatprep.subr.mxu0 0.0
    %5900 = vmatpush1.msra.mxu0 0.0
    %5901 = vmatprep.subr.mxu0 0.0
    %5902 = vmatpush1.msra.mxu0 0.0
    %5903 = vmatprep.subr.mxu0 0.0
    %5904 = vmatpush1.msra.mxu0 0.0
    %5905 = vmatprep.mubr.f32.mxu0 0.0
    %5906 = vmatmul.mubr.f32.gmra.mrb[0].mxu0 %v5602
    %v5907 = vpop.f32.mrb[0].mxu0
    %v5908 = vadd.f32 0.0, %v5907
    %v5909 = vpop.f32.mrb[0].mxu0
    %5910 = vdwg.mxu0
    %5912 = vrot.lane.b32.xlu0 %v5840, 64
    %v5913 = vpop.permute.xlu0 %5912
    %v5914 = vsel %vm141, %v5913, 0
    %5916 = vmatprep.subr.mxu0 0.0
    %5917 = vmatpush1.msra.mxu0 %v118
    %5918 = vmatprep.subr.mxu0 0.0
    %5919 = vmatpush1.msra.mxu0 %v119
    %5920 = vmatprep.subr.mxu0 0.0
    %5921 = vmatpush1.msra.mxu0 %v120
    %5922 = vmatprep.subr.mxu0 0.0
    %5923 = vmatpush1.msra.mxu0 %v121
    %5924 = vmatprep.subr.mxu0 0.0
    %5925 = vmatpush1.msra.mxu0 %v122
    %5926 = vmatprep.subr.mxu0 0.0
    %5927 = vmatpush1.msra.mxu0 %v123
    %5928 = vmatprep.subr.mxu0 0.0
    %5929 = vmatpush1.msra.mxu0 %v124
    %5930 = vmatprep.subr.mxu0 0.0
    %5931 = vmatpush1.msra.mxu0 %v125
    %5932 = vmatprep.subr.mxu0 0.0
    %5933 = vmatpush1.msra.mxu0 0.0
    %5934 = vmatprep.subr.mxu0 0.0
    %5935 = vmatpush1.msra.mxu0 0.0
    %5936 = vmatprep.subr.mxu0 0.0
    %5937 = vmatpush1.msra.mxu0 0.0
    %5938 = vmatprep.subr.mxu0 0.0
    %5939 = vmatpush1.msra.mxu0 0.0
    %5940 = vmatprep.subr.mxu0 0.0
    %5941 = vmatpush1.msra.mxu0 0.0
    %5942 = vmatprep.subr.mxu0 0.0
    %5943 = vmatpush1.msra.mxu0 0.0
    %5944 = vmatprep.subr.mxu0 0.0
    %5945 = vmatpush1.msra.mxu0 0.0
    %5946 = vmatprep.subr.mxu0 0.0
    %5947 = vmatpush1.msra.mxu0 0.0
    %5948 = vmatprep.subr.mxu0 0.0
    %5949 = vmatpush1.msra.mxu0 0.0
    %5950 = vmatprep.subr.mxu0 0.0
    %5951 = vmatpush1.msra.mxu0 0.0
    %5952 = vmatprep.subr.mxu0 0.0
    %5953 = vmatpush1.msra.mxu0 0.0
    %5954 = vmatprep.subr.mxu0 0.0
    %5955 = vmatpush1.msra.mxu0 0.0
    %5956 = vmatprep.subr.mxu0 0.0
    %5957 = vmatpush1.msra.mxu0 0.0
    %5958 = vmatprep.subr.mxu0 0.0
    %5959 = vmatpush1.msra.mxu0 0.0
    %5960 = vmatprep.subr.mxu0 0.0
    %5961 = vmatpush1.msra.mxu0 0.0
    %5962 = vmatprep.subr.mxu0 0.0
    %5963 = vmatpush1.msra.mxu0 0.0
    %5964 = vmatprep.subr.mxu0 0.0
    %5965 = vmatpush1.msra.mxu0 0.0
    %5966 = vmatprep.subr.mxu0 0.0
    %5967 = vmatpush1.msra.mxu0 0.0
    %5968 = vmatprep.subr.mxu0 0.0
    %5969 = vmatpush1.msra.mxu0 0.0
    %5970 = vmatprep.subr.mxu0 0.0
    %5971 = vmatpush1.msra.mxu0 0.0
    %5972 = vmatprep.subr.mxu0 0.0
    %5973 = vmatpush1.msra.mxu0 0.0
    %5974 = vmatprep.subr.mxu0 0.0
    %5975 = vmatpush1.msra.mxu0 0.0
    %5976 = vmatprep.subr.mxu0 0.0
    %5977 = vmatpush1.msra.mxu0 0.0
    %5978 = vmatprep.subr.mxu0 0.0
    %5979 = vmatpush1.msra.mxu0 0.0
    %5980 = vmatprep.mubr.f32.mxu0 0.0
    %5981 = vmatmul.mubr.f32.gmra.mrb[0].mxu0 %v5914
    %v5982 = vpop.f32.mrb[0].mxu0
    %v5983 = vadd.f32 %v5908, %v5982
    %v5984 = vpop.f32.mrb[0].mxu0
    %5985 = vdwg.mxu0
    %v5986 = vadd.f32 %v5983, %v845
    %v5987 = vsel %vm848, %v5986, -inf
    %5988 = vmax.xlane.f32.xlu0 %v5987
    %v5989 = vpop.xlane.xlu0 %5988
    %v5990 = vsub.f32 %v5986, %v5989
    %v5991 = vmul.f32 %v5990, 1.442695
    %v5992 = vpow.pop %v5991
    %v5993 = vsel %vm848, %v5992, 0.0
    %5994 = vadd.xlane.f32.xlu0 %v5993
    %v5995 = vpop.xlane.xlu0 %5994
    %v5996 = vlog2.pop %v5995
    %v5997 = vmul.f32 %v5996, 0.6931472
    %v5998 = vsub.f32 %v5990, %v5997
    %v5999 = vsel %vm5386, 1, 0
    %vm6000 = vcmp.eq.s32.totalorder %v5999, 1
    %v6001 = vsel %vm6000, 0.0, %v5998
    %s6002 = scalar_lea.vmem %s13, 14
    %6003 = vst.msk [vmem:[%s6002] sm:$0x3] %vm848, %v6001
    %v6004 = vsel %vm848, %v5998, -inf
    %6005 = vmax.xlane.f32.xlu0 %v6004
    %v6006 = vpop.xlane.xlu0 %6005
    %vm6007 = vcmp.eq.f32.partialorder %v5998, %v6006
    %v6008 = vsel %vm6007, %v224, 16
    %v6009 = vsel %vm848, %v6008, 2147483647
    %v6010 = vand.u32 %v6009, 65535
    %v6011 = vshra.s32 %v6009, 16
    %v6012 = vcvt.s32.f32 %v6010
    %v6013 = vcvt.s32.f32 %v6011
    %6014 = vmin.xlane.f32.xlu0 %v6013
    %v6015 = vpop.xlane.xlu0 %6014
    %vm6016 = vcmp.eq.f32.partialorder %v6013, %v6015
    %v6017 = vsel %vm6016, %v6012, inf
    %6018 = vmin.xlane.f32.xlu0 %v6017
    %v6019 = vpop.xlane.xlu0 %6018
    %v6020 = vcvt.f32.s32 %v6019
    %v6021 = vcvt.f32.s32 %v6015
    %v6022 = vshll.u32 %v6021, 16
    %v6023 = vadd.s32 %v6022, %v6020
    %vm6024 = vcmp.eq.s32.totalorder %v6023, 2
    %vm6025 = vmxor %vm5386, 1
    %v6026 = vsel %vm6025, 1, 0
    %vm6027 = vcmp.eq.s32.totalorder %v6026, 1
    %vm6028 = vmand %vm6024, %vm6027
    %v6029 = vsel %vm6028, 8, %v5371
    %vm6030 = vcmask 1024
    %6031 = vst.msk [vmem:[%s14] sm:$0x3] %vm6030, %v6029
    // Predicated region
    $region58: #{note_decoder_forward.1} parent=1 // pred_check
      _
    $region59: #{note_decoder_forward.1} parent=1 // pred_check_branch
      %6033 = sbr.rel (0) target = $region61
    $region60: #{note_decoder_forward.1} parent=1 // pred_region
      _
    $region61: #{note_decoder_forward.1} parent=1 // pred_fallthru
      _
    // Predicated region
    $region62: #{note_decoder_forward.1} parent=1 // pred_check
      _
    $region63: #{note_decoder_forward.1} parent=1 // pred_check_branch
      %6035 = sbr.rel (0) target = $region65
    $region64: #{note_decoder_forward.1} parent=1 // pred_region
      _
    $region65: #{note_decoder_forward.1} parent=1 // pred_fallthru
      _
    // Predicated region
    $region66: #{note_decoder_forward.1} parent=1 // pred_check
      _
    $region67: #{note_decoder_forward.1} parent=1 // pred_check_branch
      %6037 = sbr.rel (0) target = $region69
    $region68: #{note_decoder_forward.1} parent=1 // pred_region
      _
    $region69: #{note_decoder_forward.1} parent=1 // pred_fallthru
      _
    // Predicated region
    $region70: #{note_decoder_forward.1} parent=1 // pred_check
      _
    $region71: #{note_decoder_forward.1} parent=1 // pred_check_branch
      %6039 = sbr.rel (0) target = $region73
    $region72: #{note_decoder_forward.1} parent=1 // pred_region
      _
    $region73: #{note_decoder_forward.1} parent=1 // pred_fallthru
      _
    %6040 = vsyncpa [#allocation3], 1

</llo_original>
